<compile_context>
chip_gen: v7x
topology: tpu7x:2x2x1
jax: 0.10.0
libtpu: 0.0.40
codegen_flags: <defaults>
</compile_context>

<pallas_src>
import math

import jax
import jax.numpy as jnp
from jax.experimental import pallas as pl
from jax.experimental.pallas import tpu as pltpu


def _build_pe_buffer(max_len, embedding_dim):
    """Compute the (max_len, embedding_dim) positional-encoding slab with Pallas."""
    D = embedding_dim
    S = max_len

    # Fold r consecutive rows into the lane axis when D < 128 (lane-dense stores).
    r = 1
    if D < 128 and 128 % D == 0 and S % (128 // D) == 0:
        r = 128 // D
    S_f = S // r            # folded row count
    D_f = r * D             # folded (lane) width

    # Row tile: multiple of 8, <= ~2 MiB per output tile (fits v7x scoped VMEM
    # with double-buffering), and no larger than the (8-rounded) folded extent.
    max_tile_bytes = 2 * 1024 * 1024
    tile = min(512, max(8, (max_tile_bytes // (D_f * 4)) // 8 * 8))
    tile = max(8, min(tile, ((S_f + 7) // 8) * 8))
    s_pad = pl.cdiv(S_f, tile) * tile
    grid = (s_pad // tile,)

    # (1, D_f) per-column rows, computed once outside the kernel (hoisted exp).
    col = jnp.arange(D_f, dtype=jnp.int32) % D
    pair = (col // 2).astype(jnp.float32)
    inv_freq = jnp.exp(-(2.0 * pair) * (math.log(20.0) / D)).astype(jnp.float32)[None, :]
    phase = jnp.where((col % 2) == 0, 0.0, jnp.pi / 2.0).astype(jnp.float32)[None, :]
    sub_off = (jnp.arange(D_f, dtype=jnp.int32) // D).astype(jnp.float32)[None, :]

    def kernel(inv_ref, ph_ref, off_ref, o_ref):
        rows, cols = o_ref.shape
        base = pl.program_id(0) * rows                                   # global folded-row offset
        m = jax.lax.broadcasted_iota(jnp.int32, (rows, cols), 0) + base  # folded row index
        pos = m.astype(jnp.float32) * jnp.float32(r) + off_ref[...]      # original position l
        o_ref[...] = jnp.sin(pos * inv_ref[...] + ph_ref[...])           # single EUP op / element

    row_spec = pl.BlockSpec((1, D_f), lambda i: (0, 0))
    pe_folded = pl.pallas_call(
        kernel,
        out_shape=jax.ShapeDtypeStruct((s_pad, D_f), jnp.float32),
        grid=grid,
        in_specs=[row_spec, row_spec, row_spec],
        out_specs=pl.BlockSpec((tile, D_f), lambda i: (i, 0)),
        compiler_params=pltpu.CompilerParams(dimension_semantics=("parallel",)),
    )(inv_freq, phase, sub_off)

    # Drop row padding, unfold lanes back to (S, D).
    return pe_folded[:S_f].reshape(S, D)


class PositionalEncoding:
    """JAX/Pallas equivalent of the PyTorch module: buffer at init, slice in forward."""

    def __init__(self, embedding_dim, max_len=5000):
        self.embedding_dim = embedding_dim
        self.max_len = max_len
        self.pe = _build_pe_buffer(max_len, embedding_dim)[None]  # (1, max_len, D)

    def __call__(self, x):
        seq_len = x.shape[1]
        return self.pe[:, :seq_len]


def _reference_pe(seq_len, D):
    position = jnp.arange(seq_len, dtype=jnp.float32)[:, None]
    div_term = jnp.exp(jnp.arange(0, D, 2, dtype=jnp.float32) * -(math.log(20.0) / D))
    pe = jnp.zeros((seq_len, D), dtype=jnp.float32)
    pe = pe.at[:, 0::2].set(jnp.sin(position * div_term))
    pe = pe.at[:, 1::2].set(jnp.cos(position * div_term))
    return pe[None]


if __name__ == "__main__":
    B, S, D = 2, 8, 32
    key = jax.random.PRNGKey(0)
    x = jax.random.normal(key, (B, S, D), dtype=jnp.float32)

    module = PositionalEncoding(embedding_dim=D, max_len=5000)
    out = module(x)
    out = jax.block_until_ready(out)

    assert out.shape == (1, S, D), out.shape

    # Tight check on the forward slice (small positions -> pi/2-phase error negligible).
    ref = _reference_pe(S, D)
    assert jnp.allclose(out, ref, atol=2e-5, rtol=0.0), "mismatch vs reference (forward slice)"

    # Looser check over the full buffer: sin(x + pi/2) vs cos(x) near position 5000
    # differs by f32 argument-reduction-level error (~1e-4), same order as torch f32.
    ref_full = _reference_pe(5000, D)
    assert jnp.allclose(module.pe, ref_full, atol=1e-3, rtol=0.0), "mismatch vs reference (full buffer)"

    print("KERNEL_OK")
</pallas_src>

<mosaic_0001>
module attributes {stable_mosaic.version = 11 : i64} {
  func.func @kernel(%arg0: i32, %arg1: memref<1x128xf32, #tpu.memory_space<vmem>>, %arg2: memref<1x128xf32, #tpu.memory_space<vmem>>, %arg3: memref<1x128xf32, #tpu.memory_space<vmem>>, %arg4: memref<512x128xf32, #tpu.memory_space<vmem>>) attributes {dimension_semantics = [#tpu.dimension_semantics<parallel>], iteration_bounds = array<i64: 3>, scalar_prefetch = 0 : i64, scratch_operands = 0 : i64, tpu.core_type = #tpu.core_type<tc>, window_params = [{pipeline_mode = #tpu.pipeline_mode<synchronous>, transform_indices = @transform_0, window_bounds = array<i64: 1, 128>}, {pipeline_mode = #tpu.pipeline_mode<synchronous>, transform_indices = @transform_1, window_bounds = array<i64: 1, 128>}, {pipeline_mode = #tpu.pipeline_mode<synchronous>, transform_indices = @transform_2, window_bounds = array<i64: 1, 128>}, {transform_indices = @transform_3, window_bounds = array<i64: 512, 128>}]} {
    %c512_i32 = arith.constant 512 : i32
    %0 = arith.muli %arg0, %c512_i32 : i32
    %1 = tpu.iota {dimensions = array<i32: 0>} : vector<512x128xi32>
    %2 = vector.broadcast %0 : i32 to vector<512x128xi32>
    %3 = arith.addi %1, %2 : vector<512x128xi32>
    %4 = arith.sitofp %3 : vector<512x128xi32> to vector<512x128xf32>
    %cst = arith.constant 4.000000e+00 : f32
    %5 = vector.broadcast %cst : f32 to vector<512x128xf32>
    %6 = arith.mulf %4, %5 : vector<512x128xf32>
    %c0 = arith.constant 0 : index
    %c0_0 = arith.constant 0 : index
    %7 = vector.load %arg3[%c0, %c0_0] : memref<1x128xf32, #tpu.memory_space<vmem>>, vector<1x128xf32>
    %8 = vector.broadcast %7 : vector<1x128xf32> to vector<512x128xf32>
    %9 = arith.addf %6, %8 : vector<512x128xf32>
    %c0_1 = arith.constant 0 : index
    %c0_2 = arith.constant 0 : index
    %10 = vector.load %arg1[%c0_1, %c0_2] : memref<1x128xf32, #tpu.memory_space<vmem>>, vector<1x128xf32>
    %11 = vector.broadcast %10 : vector<1x128xf32> to vector<512x128xf32>
    %12 = arith.mulf %9, %11 : vector<512x128xf32>
    %c0_3 = arith.constant 0 : index
    %c0_4 = arith.constant 0 : index
    %13 = vector.load %arg2[%c0_3, %c0_4] : memref<1x128xf32, #tpu.memory_space<vmem>>, vector<1x128xf32>
    %14 = vector.broadcast %13 : vector<1x128xf32> to vector<512x128xf32>
    %15 = arith.addf %12, %14 : vector<512x128xf32>
    %16 = math.sin %15 : vector<512x128xf32>
    %c0_5 = arith.constant 0 : index
    %c0_6 = arith.constant 0 : index
    %17 = vector.load %arg4[%c0_5, %c0_6] : memref<512x128xf32, #tpu.memory_space<vmem>>, vector<512x128xf32>
    tpu.vector_store %arg4[%c0_5, %c0_6], %16 {strides = array<i32>} : memref<512x128xf32, #tpu.memory_space<vmem>>, vector<512x128xf32>,
    return
  }
  func.func @transform_0(%arg0: i32) -> (i32, i32) {
    %c0_i32 = arith.constant 0 : i32
    %c0_i32_0 = arith.constant 0 : i32
    %c0_i32_1 = arith.constant 0 : i32
    return %c0_i32, %c0_i32_0 : i32, i32
  }
  func.func @transform_1(%arg0: i32) -> (i32, i32) {
    %c0_i32 = arith.constant 0 : i32
    %c0_i32_0 = arith.constant 0 : i32
    %c0_i32_1 = arith.constant 0 : i32
    return %c0_i32, %c0_i32_0 : i32, i32
  }
  func.func @transform_2(%arg0: i32) -> (i32, i32) {
    %c0_i32 = arith.constant 0 : i32
    %c0_i32_0 = arith.constant 0 : i32
    %c0_i32_1 = arith.constant 0 : i32
    return %c0_i32, %c0_i32_0 : i32, i32
  }
  func.func @transform_3(%arg0: i32) -> (i32, i32) {
    %c0_i32 = arith.constant 0 : i32
    %c0_i32_0 = arith.constant 0 : i32
    return %arg0, %c0_i32 : i32, i32
  }
}

</mosaic_0001>

<llo_original>
// kernel: tpu_custom_call.1
$region0: #{tpu_custom_call.1}
  #allocation0 [shape = 'u32[]', space=smem, size = 0x4, offset = 0x4, fixed_abs, tag = 'smem constant byte address 0x4 - core index']
  #allocation1 [shape = 'u32[144,128]{1,0:T(1,128)}', space=vmem, size = 0x12000, scoped, tag = 'internal scratch']
  %s0 = inlined_call_operand.hbm [shape: f32[1,128], index: 0, kind: input, shape index: {}]
  %s1 = inlined_call_operand.vmem [shape: f32[1,128], index: 1, kind: input, shape index: {}]
  %s2 = inlined_call_operand.vmem [shape: f32[1,128], index: 2, kind: input, shape index: {}]
  %s3 = inlined_call_operand.hbm [shape: f32[1536,128], index: 3, kind: output, shape index: {}]
  %s4 = sld [smem:[#allocation0]]
  $region49: #{tpu_custom_call.1} parent=0
    _
  %s6 = ssub.s32 1, %s4
  %s7 = scalar_select 0, %s6, %s4
  $region1: #{tpu_custom_call.1} parent=0
    #allocation2 [shape = 'u8[512]{0}', space=vmem, size = 0x400, scoped, tag = 'input window, operand 0, single buffered']
    #allocation3 [shape = 's32[2]{0}', space=sflag, size = 0x8, scoped, tag = 'scoped memory for tpu_custom_call.1']
    #allocation4 [shape = 's32[2]{0}', space=sflag, size = 0x8, scoped, tag = 'scoped memory for tpu_custom_call.1']
    #allocation5 [shape = 'u8[524288]{0}', space=vmem, size = 0x80000, scoped, tag = 'output window, operand 0']
    %8 = vsyncpa [#allocation3], 0
    %9 = vsyncpa [#allocation4], 0
    %s10 = scalar_lea.sflag [#allocation4], 1
    %11 = vsyncpa %s10, 0
    loop: start=0, step=1, limit=5
    $region2: #{tpu_custom_call.1} parent=1 // loop_pre_header
      _
    $region3: #{tpu_custom_call.1} parent=1 // loop_header
      %s13 = sphi 0, %s17
      %p14 = scmp.ge.s32.totalorder %s13, 5
      %s21 = sphi 0, %s21
      %s23 = sphi 0, %s21
      %s24 = sphi 0, %s23
      %s38 = sphi 0, %s24
      %s42 = sphi 0, %s42
      %s44 = sphi 0, %s42
      %s45 = sphi 0, %s44
      %s59 = sphi 0, %s45
      %s63 = sphi 0, %s63
      %s65 = sphi 0, %s63
      %s66 = sphi 0, %s65
      %s80 = sphi 0, %s66
      %s86 = sphi 0, %s88
      %s89 = sphi 0, %s86
      %s90 = sphi 0, %s89
      %s106 = sphi 0, %s90
    $region4: #{tpu_custom_call.1} parent=1 // loop_header_branch
      %16 = sbr.rel (%p14) target = $region8
    $region5: #{tpu_custom_call.1} parent=1 // loop_body
      %s18 = ssub.s32 %s13, 1
      %s19 = ssub.s32 %s13, 2
      %s20 = sadd.s32 %s13, 1
      %s22 = sadd.s32 %s21, 1
      %p25 = scmp.eq.s32.totalorder %s13, 2
      %p26 = scmp.ne.s32.totalorder %s21, %s23
      %p27 = scmp.eq.s32.totalorder %s13, 0
      %p28 = por %p26, %p27
      %p29 = scmp.ne.s32.totalorder %s21, %s23
      %p30 = scmp.eq.s32.totalorder %s18, 2
      %p31 = por %p29, %p30
      %p32 = scmp.ne.s32.totalorder %s23, %s24
      %p33 = scmp.eq.s32.totalorder %s18, 0
      %p34 = por %p32, %p33
      %p35 = scmp.ne.s32.totalorder %s23, %s24
      %p36 = scmp.eq.s32.totalorder %s19, 2
      %p37 = por %p35, %p36
      %p39 = scmp.ne.s32.totalorder %s24, %s38
      %p40 = scmp.eq.s32.totalorder %s19, 0
      %p41 = por %p39, %p40
      %s43 = sadd.s32 %s42, 1
      %p46 = scmp.eq.s32.totalorder %s13, 2
      %p47 = scmp.ne.s32.totalorder %s42, %s44
      %p48 = scmp.eq.s32.totalorder %s13, 0
      %p49 = por %p47, %p48
      %p50 = scmp.ne.s32.totalorder %s42, %s44
      %p51 = scmp.eq.s32.totalorder %s18, 2
      %p52 = por %p50, %p51
      %p53 = scmp.ne.s32.totalorder %s44, %s45
      %p54 = scmp.eq.s32.totalorder %s18, 0
      %p55 = por %p53, %p54
      %p56 = scmp.ne.s32.totalorder %s44, %s45
      %p57 = scmp.eq.s32.totalorder %s19, 2
      %p58 = por %p56, %p57
      %p60 = scmp.ne.s32.totalorder %s45, %s59
      %p61 = scmp.eq.s32.totalorder %s19, 0
      %p62 = por %p60, %p61
      %s64 = sadd.s32 %s63, 1
      %p67 = scmp.eq.s32.totalorder %s13, 2
      %p68 = scmp.ne.s32.totalorder %s63, %s65
      %p69 = scmp.eq.s32.totalorder %s13, 0
      %p70 = por %p68, %p69
      %p71 = scmp.ne.s32.totalorder %s63, %s65
      %p72 = scmp.eq.s32.totalorder %s18, 2
      %p73 = por %p71, %p72
      %p74 = scmp.ne.s32.totalorder %s65, %s66
      %p75 = scmp.eq.s32.totalorder %s18, 0
      %p76 = por %p74, %p75
      %p77 = scmp.ne.s32.totalorder %s65, %s66
      %p78 = scmp.eq.s32.totalorder %s19, 2
      %p79 = por %p77, %p78
      %p81 = scmp.ne.s32.totalorder %s66, %s80
      %p82 = scmp.eq.s32.totalorder %s19, 0
      %p83 = por %p81, %p82
      %s84 = ssub.s32 %s13, %s20
      %p85 = scmp.eq.s32.totalorder %s84, 0
      %s87 = sadd.s32 %s86, 1
      %s88 = scalar_select %p85, %s86, %s87
      %p91 = pneg %p85
      %p92 = scmp.eq.s32.totalorder %s13, 2
      %p93 = por %p91, %p92
      %p94 = scmp.ne.s32.totalorder %s86, %s89
      %p95 = scmp.eq.s32.totalorder %s13, 0
      %p96 = por %p94, %p95
      %p97 = scmp.ne.s32.totalorder %s86, %s89
      %p98 = scmp.eq.s32.totalorder %s18, 2
      %p99 = por %p97, %p98
      %p100 = scmp.ne.s32.totalorder %s89, %s90
      %p101 = scmp.eq.s32.totalorder %s18, 0
      %p102 = por %p100, %p101
      %p103 = scmp.ne.s32.totalorder %s89, %s90
      %p104 = scmp.eq.s32.totalorder %s19, 2
      %p105 = por %p103, %p104
      %p107 = scmp.ne.s32.totalorder %s90, %s106
      %p108 = scmp.eq.s32.totalorder %s19, 0
      %p109 = por %p107, %p108
      %p110 = scmp.le.s32.totalorder 1, %s13
      %p111 = scmp.lt.s32.totalorder %s13, 4
      %p112 = pnand %p110, %p111
      %p113 = pneg %p112
      // Predicated region
      $region9: #{tpu_custom_call.1} parent=5 // pred_check
        _
      $region10: #{tpu_custom_call.1} parent=5 // pred_check_branch
        %115 = sbr.rel (%p112) target = $region12
      $region11: #{tpu_custom_call.1} parent=5 // pred_region
        %s116 = ssub.s32 %s13, 1
        // Predicated region
        $region13: #{tpu_custom_call.1} parent=11 // pred_check
          %p117 = pneg %p34
        $region14: #{tpu_custom_call.1} parent=11 // pred_check_branch
          %119 = sbr.rel (%p117) target = $region16
        $region15: #{tpu_custom_call.1} parent=11 // pred_region
          %s121 = ssub.s32 16, 16
          %122 = vsyncadd [#allocation3], %s121
          %s124 = sshll.u32 [#allocation2], 4
          %s125 = int_to_ptr.vmem [resolvable:$true] %s124
          %127 = dma.hbm_to_vmem [thread:$0]  %s0, 16, %s125, [#allocation3]
        $region16: #{tpu_custom_call.1} parent=11 // pred_fallthru
          _
        // Predicated region
        $region17: #{tpu_custom_call.1} parent=11 // pred_check
          %p128 = pneg %p55
        $region18: #{tpu_custom_call.1} parent=11 // pred_check_branch
          %130 = sbr.rel (%p128) target = $region20
        $region19: #{tpu_custom_call.1} parent=11 // pred_region
          _
        $region20: #{tpu_custom_call.1} parent=11 // pred_fallthru
          _
        // Predicated region
        $region21: #{tpu_custom_call.1} parent=11 // pred_check
          %p131 = pneg %p76
        $region22: #{tpu_custom_call.1} parent=11 // pred_check_branch
          %133 = sbr.rel (%p131) target = $region24
        $region23: #{tpu_custom_call.1} parent=11 // pred_region
          _
        $region24: #{tpu_custom_call.1} parent=11 // pred_fallthru
          _
      $region12: #{tpu_custom_call.1} parent=5 // pred_fallthru
        _
      %p134 = scmp.lt.s32.totalorder %s13, 3
      // Predicated region
      $region25: #{tpu_custom_call.1} parent=5 // pred_check
        %p135 = pneg %p134
      $region26: #{tpu_custom_call.1} parent=5 // pred_check_branch
        %137 = sbr.rel (%p135) target = $region28
      $region27: #{tpu_custom_call.1} parent=5 // pred_region
        _
      $region28: #{tpu_custom_call.1} parent=5 // pred_fallthru
        _
      %p138 = scmp.le.s32.totalorder 1, %s13
      %p139 = scmp.lt.s32.totalorder %s13, 4
      %p140 = pnand %p138, %p139
      %p141 = pneg %p140
      // Predicated region
      $region29: #{tpu_custom_call.1} parent=5 // pred_check
        _
      $region30: #{tpu_custom_call.1} parent=5 // pred_check_branch
        %143 = sbr.rel (%p140) target = $region32
      $region31: #{tpu_custom_call.1} parent=5 // pred_region
        %s144 = ssub.s32 %s13, 1
        // Predicated region
        $region33: #{tpu_custom_call.1} parent=31 // pred_check
          %p145 = pneg %p34
        $region34: #{tpu_custom_call.1} parent=31 // pred_check_branch
          %147 = sbr.rel (%p145) target = $region36
        $region35: #{tpu_custom_call.1} parent=31 // pred_region
          %148 = dma.done [#allocation3], 16
        $region36: #{tpu_custom_call.1} parent=31 // pred_fallthru
          _
        %p149 = pneg %p34
        %p150 = pneg %p31
        %p151 = pneg %p55
        %p152 = pneg %p52
        %p153 = pneg %p76
        %p154 = pneg %p73
        %p155 = pneg %p102
        %p156 = pneg %p99
        %s157 = sand.u32 %s89, 1
        %s158 = scalar_lea.sflag [#allocation4], %s157
        %s159 = sand.u32 %s89, 1
        %s160 = smul.addr %s159, 512
        %s161 = scalar_lea.vmem [#allocation5], %s160
        %s162 = smul.u32 64, %s18
        %s163 = smul.u32 %s18, 512
        %v164 = vlaneseq
        %v165 = vshrl.u32 %v164, 7
        %v166 = vadd.s32 %v165, 8
        %v167 = vadd.s32 %v165, 16
        %v168 = vadd.s32 %v165, 24
        %v169 = vadd.s32 %v165, 32
        %v170 = vadd.s32 %v165, 40
        %v171 = vadd.s32 %v165, 48
        %v172 = vadd.s32 %v165, 56
        %v173 = vadd.s32 %v165, 64
        %v174 = vadd.s32 %v165, 72
        %v175 = vadd.s32 %v165, 80
        %v176 = vadd.s32 %v165, 88
        %v177 = vadd.s32 %v165, 96
        %v178 = vadd.s32 %v165, 104
        %v179 = vadd.s32 %v165, 112
        %v180 = vadd.s32 %v165, 120
        %v181 = vadd.s32 %v165, 128
        %v182 = vadd.s32 %v165, 136
        %v183 = vadd.s32 %v165, 144
        %v184 = vadd.s32 %v165, 152
        %v185 = vadd.s32 %v165, 160
        %v186 = vadd.s32 %v165, 168
        %v187 = vadd.s32 %v165, 176
        %v188 = vadd.s32 %v165, 184
        %v189 = vadd.s32 %v165, 192
        %v190 = vadd.s32 %v165, 200
        %v191 = vadd.s32 %v165, 208
        %v192 = vadd.s32 %v165, 216
        %v193 = vadd.s32 %v165, 224
        %v194 = vadd.s32 %v165, 232
        %v195 = vadd.s32 %v165, 240
        %v196 = vadd.s32 %v165, 248
        %v197 = vadd.s32 %v165, 256
        %v198 = vadd.s32 %v165, 264
        %v199 = vadd.s32 %v165, 272
        %v200 = vadd.s32 %v165, 280
        %v201 = vadd.s32 %v165, 288
        %v202 = vadd.s32 %v165, 296
        %v203 = vadd.s32 %v165, 304
        %v204 = vadd.s32 %v165, 312
        %v205 = vadd.s32 %v165, 320
        %v206 = vadd.s32 %v165, 328
        %v207 = vadd.s32 %v165, 336
        %v208 = vadd.s32 %v165, 344
        %v209 = vadd.s32 %v165, 352
        %v210 = vadd.s32 %v165, 360
        %v211 = vadd.s32 %v165, 368
        %v212 = vadd.s32 %v165, 376
        %v213 = vadd.s32 %v165, 384
        %v214 = vadd.s32 %v165, 392
        %v215 = vadd.s32 %v165, 400
        %v216 = vadd.s32 %v165, 408
        %v217 = vadd.s32 %v165, 416
        %v218 = vadd.s32 %v165, 424
        %v219 = vadd.s32 %v165, 432
        %v220 = vadd.s32 %v165, 440
        %v221 = vadd.s32 %v165, 448
        %v222 = vadd.s32 %v165, 456
        %v223 = vadd.s32 %v165, 464
        %v224 = vadd.s32 %v165, 472
        %v225 = vadd.s32 %v165, 480
        %v226 = vadd.s32 %v165, 488
        %v227 = vadd.s32 %v165, 496
        %v228 = vadd.s32 %v165, 504
        %v229 = vstv %s163
        %v230 = vadd.s32 %v165, %v229
        %v231 = vadd.s32 %v166, %v229
        %v232 = vadd.s32 %v167, %v229
        %v233 = vadd.s32 %v168, %v229
        %v234 = vadd.s32 %v169, %v229
        %v235 = vadd.s32 %v170, %v229
        %v236 = vadd.s32 %v171, %v229
        %v237 = vadd.s32 %v172, %v229
        %v238 = vadd.s32 %v173, %v229
        %v239 = vadd.s32 %v174, %v229
        %v240 = vadd.s32 %v175, %v229
        %v241 = vadd.s32 %v176, %v229
        %v242 = vadd.s32 %v177, %v229
        %v243 = vadd.s32 %v178, %v229
        %v244 = vadd.s32 %v179, %v229
        %v245 = vadd.s32 %v180, %v229
        %v246 = vadd.s32 %v181, %v229
        %v247 = vadd.s32 %v182, %v229
        %v248 = vadd.s32 %v183, %v229
        %v249 = vadd.s32 %v184, %v229
        %v250 = vadd.s32 %v185, %v229
        %v251 = vadd.s32 %v186, %v229
        %v252 = vadd.s32 %v187, %v229
        %v253 = vadd.s32 %v188, %v229
        %v254 = vadd.s32 %v189, %v229
        %v255 = vadd.s32 %v190, %v229
        %v256 = vadd.s32 %v191, %v229
        %v257 = vadd.s32 %v192, %v229
        %v258 = vadd.s32 %v193, %v229
        %v259 = vadd.s32 %v194, %v229
        %v260 = vadd.s32 %v195, %v229
        %v261 = vadd.s32 %v196, %v229
        %v262 = vadd.s32 %v197, %v229
        %v263 = vadd.s32 %v198, %v229
        %v264 = vadd.s32 %v199, %v229
        %v265 = vadd.s32 %v200, %v229
        %v266 = vadd.s32 %v201, %v229
        %v267 = vadd.s32 %v202, %v229
        %v268 = vadd.s32 %v203, %v229
        %v269 = vadd.s32 %v204, %v229
        %v270 = vadd.s32 %v205, %v229
        %v271 = vadd.s32 %v206, %v229
        %v272 = vadd.s32 %v207, %v229
        %v273 = vadd.s32 %v208, %v229
        %v274 = vadd.s32 %v209, %v229
        %v275 = vadd.s32 %v210, %v229
        %v276 = vadd.s32 %v211, %v229
        %v277 = vadd.s32 %v212, %v229
        %v278 = vadd.s32 %v213, %v229
        %v279 = vadd.s32 %v214, %v229
        %v280 = vadd.s32 %v215, %v229
        %v281 = vadd.s32 %v216, %v229
        %v282 = vadd.s32 %v217, %v229
        %v283 = vadd.s32 %v218, %v229
        %v284 = vadd.s32 %v219, %v229
        %v285 = vadd.s32 %v220, %v229
        %v286 = vadd.s32 %v221, %v229
        %v287 = vadd.s32 %v222, %v229
        %v288 = vadd.s32 %v223, %v229
        %v289 = vadd.s32 %v224, %v229
        %v290 = vadd.s32 %v225, %v229
        %v291 = vadd.s32 %v226, %v229
        %v292 = vadd.s32 %v227, %v229
        %v293 = vadd.s32 %v228, %v229
        %v294 = vcvt.s32.f32 %v230
        %v295 = vcvt.s32.f32 %v231
        %v296 = vcvt.s32.f32 %v232
        %v297 = vcvt.s32.f32 %v233
        %v298 = vcvt.s32.f32 %v234
        %v299 = vcvt.s32.f32 %v235
        %v300 = vcvt.s32.f32 %v236
        %v301 = vcvt.s32.f32 %v237
        %v302 = vcvt.s32.f32 %v238
        %v303 = vcvt.s32.f32 %v239
        %v304 = vcvt.s32.f32 %v240
        %v305 = vcvt.s32.f32 %v241
        %v306 = vcvt.s32.f32 %v242
        %v307 = vcvt.s32.f32 %v243
        %v308 = vcvt.s32.f32 %v244
        %v309 = vcvt.s32.f32 %v245
        %v310 = vcvt.s32.f32 %v246
        %v311 = vcvt.s32.f32 %v247
        %v312 = vcvt.s32.f32 %v248
        %v313 = vcvt.s32.f32 %v249
        %v314 = vcvt.s32.f32 %v250
        %v315 = vcvt.s32.f32 %v251
        %v316 = vcvt.s32.f32 %v252
        %v317 = vcvt.s32.f32 %v253
        %v318 = vcvt.s32.f32 %v254
        %v319 = vcvt.s32.f32 %v255
        %v320 = vcvt.s32.f32 %v256
        %v321 = vcvt.s32.f32 %v257
        %v322 = vcvt.s32.f32 %v258
        %v323 = vcvt.s32.f32 %v259
        %v324 = vcvt.s32.f32 %v260
        %v325 = vcvt.s32.f32 %v261
        %v326 = vcvt.s32.f32 %v262
        %v327 = vcvt.s32.f32 %v263
        %v328 = vcvt.s32.f32 %v264
        %v329 = vcvt.s32.f32 %v265
        %v330 = vcvt.s32.f32 %v266
        %v331 = vcvt.s32.f32 %v267
        %v332 = vcvt.s32.f32 %v268
        %v333 = vcvt.s32.f32 %v269
        %v334 = vcvt.s32.f32 %v270
        %v335 = vcvt.s32.f32 %v271
        %v336 = vcvt.s32.f32 %v272
        %v337 = vcvt.s32.f32 %v273
        %v338 = vcvt.s32.f32 %v274
        %v339 = vcvt.s32.f32 %v275
        %v340 = vcvt.s32.f32 %v276
        %v341 = vcvt.s32.f32 %v277
        %v342 = vcvt.s32.f32 %v278
        %v343 = vcvt.s32.f32 %v279
        %v344 = vcvt.s32.f32 %v280
        %v345 = vcvt.s32.f32 %v281
        %v346 = vcvt.s32.f32 %v282
        %v347 = vcvt.s32.f32 %v283
        %v348 = vcvt.s32.f32 %v284
        %v349 = vcvt.s32.f32 %v285
        %v350 = vcvt.s32.f32 %v286
        %v351 = vcvt.s32.f32 %v287
        %v352 = vcvt.s32.f32 %v288
        %v353 = vcvt.s32.f32 %v289
        %v354 = vcvt.s32.f32 %v290
        %v355 = vcvt.s32.f32 %v291
        %v356 = vcvt.s32.f32 %v292
        %v357 = vcvt.s32.f32 %v293
        %v358 = vmul.f32 %v294, 4.0
        %v359 = vmul.f32 %v295, 4.0
        %v360 = vmul.f32 %v296, 4.0
        %v361 = vmul.f32 %v297, 4.0
        %v362 = vmul.f32 %v298, 4.0
        %v363 = vmul.f32 %v299, 4.0
        %v364 = vmul.f32 %v300, 4.0
        %v365 = vmul.f32 %v301, 4.0
        %v366 = vmul.f32 %v302, 4.0
        %v367 = vmul.f32 %v303, 4.0
        %v368 = vmul.f32 %v304, 4.0
        %v369 = vmul.f32 %v305, 4.0
        %v370 = vmul.f32 %v306, 4.0
        %v371 = vmul.f32 %v307, 4.0
        %v372 = vmul.f32 %v308, 4.0
        %v373 = vmul.f32 %v309, 4.0
        %v374 = vmul.f32 %v310, 4.0
        %v375 = vmul.f32 %v311, 4.0
        %v376 = vmul.f32 %v312, 4.0
        %v377 = vmul.f32 %v313, 4.0
        %v378 = vmul.f32 %v314, 4.0
        %v379 = vmul.f32 %v315, 4.0
        %v380 = vmul.f32 %v316, 4.0
        %v381 = vmul.f32 %v317, 4.0
        %v382 = vmul.f32 %v318, 4.0
        %v383 = vmul.f32 %v319, 4.0
        %v384 = vmul.f32 %v320, 4.0
        %v385 = vmul.f32 %v321, 4.0
        %v386 = vmul.f32 %v322, 4.0
        %v387 = vmul.f32 %v323, 4.0
        %v388 = vmul.f32 %v324, 4.0
        %v389 = vmul.f32 %v325, 4.0
        %v390 = vmul.f32 %v326, 4.0
        %v391 = vmul.f32 %v327, 4.0
        %v392 = vmul.f32 %v328, 4.0
        %v393 = vmul.f32 %v329, 4.0
        %v394 = vmul.f32 %v330, 4.0
        %v395 = vmul.f32 %v331, 4.0
        %v396 = vmul.f32 %v332, 4.0
        %v397 = vmul.f32 %v333, 4.0
        %v398 = vmul.f32 %v334, 4.0
        %v399 = vmul.f32 %v335, 4.0
        %v400 = vmul.f32 %v336, 4.0
        %v401 = vmul.f32 %v337, 4.0
        %v402 = vmul.f32 %v338, 4.0
        %v403 = vmul.f32 %v339, 4.0
        %v404 = vmul.f32 %v340, 4.0
        %v405 = vmul.f32 %v341, 4.0
        %v406 = vmul.f32 %v342, 4.0
        %v407 = vmul.f32 %v343, 4.0
        %v408 = vmul.f32 %v344, 4.0
        %v409 = vmul.f32 %v345, 4.0
        %v410 = vmul.f32 %v346, 4.0
        %v411 = vmul.f32 %v347, 4.0
        %v412 = vmul.f32 %v348, 4.0
        %v413 = vmul.f32 %v349, 4.0
        %v414 = vmul.f32 %v350, 4.0
        %v415 = vmul.f32 %v351, 4.0
        %v416 = vmul.f32 %v352, 4.0
        %v417 = vmul.f32 %v353, 4.0
        %v418 = vmul.f32 %v354, 4.0
        %v419 = vmul.f32 %v355, 4.0
        %v420 = vmul.f32 %v356, 4.0
        %v421 = vmul.f32 %v357, 4.0
        %v422 = vld [vmem:[%s2] sm:$0x1]
        %v424 = vlaneseq
        %v425 = vshrl.u32 %v424, 7
        %v426 = vsub.s32 0, %v425
        %v427 = vrot.slane %v422, %v426
        %v429 = vadd.f32 %v358, %v427
        %v430 = vadd.f32 %v359, %v427
        %v431 = vadd.f32 %v360, %v427
        %v432 = vadd.f32 %v361, %v427
        %v433 = vadd.f32 %v362, %v427
        %v434 = vadd.f32 %v363, %v427
        %v435 = vadd.f32 %v364, %v427
        %v436 = vadd.f32 %v365, %v427
        %v437 = vadd.f32 %v366, %v427
        %v438 = vadd.f32 %v367, %v427
        %v439 = vadd.f32 %v368, %v427
        %v440 = vadd.f32 %v369, %v427
        %v441 = vadd.f32 %v370, %v427
        %v442 = vadd.f32 %v371, %v427
        %v443 = vadd.f32 %v372, %v427
        %v444 = vadd.f32 %v373, %v427
        %v445 = vadd.f32 %v374, %v427
        %v446 = vadd.f32 %v375, %v427
        %v447 = vadd.f32 %v376, %v427
        %v448 = vadd.f32 %v377, %v427
        %v449 = vadd.f32 %v378, %v427
        %v450 = vadd.f32 %v379, %v427
        %v451 = vadd.f32 %v380, %v427
        %v452 = vadd.f32 %v381, %v427
        %v453 = vadd.f32 %v382, %v427
        %v454 = vadd.f32 %v383, %v427
        %v455 = vadd.f32 %v384, %v427
        %v456 = vadd.f32 %v385, %v427
        %v457 = vadd.f32 %v386, %v427
        %v458 = vadd.f32 %v387, %v427
        %v459 = vadd.f32 %v388, %v427
        %v460 = vadd.f32 %v389, %v427
        %v461 = vadd.f32 %v390, %v427
        %v462 = vadd.f32 %v391, %v427
        %v463 = vadd.f32 %v392, %v427
        %v464 = vadd.f32 %v393, %v427
        %v465 = vadd.f32 %v394, %v427
        %v466 = vadd.f32 %v395, %v427
        %v467 = vadd.f32 %v396, %v427
        %v468 = vadd.f32 %v397, %v427
        %v469 = vadd.f32 %v398, %v427
        %v470 = vadd.f32 %v399, %v427
        %v471 = vadd.f32 %v400, %v427
        %v472 = vadd.f32 %v401, %v427
        %v473 = vadd.f32 %v402, %v427
        %v474 = vadd.f32 %v403, %v427
        %v475 = vadd.f32 %v404, %v427
        %v476 = vadd.f32 %v405, %v427
        %v477 = vadd.f32 %v406, %v427
        %v478 = vadd.f32 %v407, %v427
        %v479 = vadd.f32 %v408, %v427
        %v480 = vadd.f32 %v409, %v427
        %v481 = vadd.f32 %v410, %v427
        %v482 = vadd.f32 %v411, %v427
        %v483 = vadd.f32 %v412, %v427
        %v484 = vadd.f32 %v413, %v427
        %v485 = vadd.f32 %v414, %v427
        %v486 = vadd.f32 %v415, %v427
        %v487 = vadd.f32 %v416, %v427
        %v488 = vadd.f32 %v417, %v427
        %v489 = vadd.f32 %v418, %v427
        %v490 = vadd.f32 %v419, %v427
        %v491 = vadd.f32 %v420, %v427
        %v492 = vadd.f32 %v421, %v427
        %v493 = vld [vmem:[#allocation2] sm:$0x1]
        %v495 = vlaneseq
        %v496 = vshrl.u32 %v495, 7
        %v497 = vsub.s32 0, %v496
        %v498 = vrot.slane %v493, %v497
        %v500 = vmul.f32 %v429, %v498
        %v501 = vmul.f32 %v430, %v498
        %v502 = vmul.f32 %v431, %v498
        %v503 = vmul.f32 %v432, %v498
        %v504 = vmul.f32 %v433, %v498
        %v505 = vmul.f32 %v434, %v498
        %v506 = vmul.f32 %v435, %v498
        %v507 = vmul.f32 %v436, %v498
        %v508 = vmul.f32 %v437, %v498
        %v509 = vmul.f32 %v438, %v498
        %v510 = vmul.f32 %v439, %v498
        %v511 = vmul.f32 %v440, %v498
        %v512 = vmul.f32 %v441, %v498
        %v513 = vmul.f32 %v442, %v498
        %v514 = vmul.f32 %v443, %v498
        %v515 = vmul.f32 %v444, %v498
        %v516 = vmul.f32 %v445, %v498
        %v517 = vmul.f32 %v446, %v498
        %v518 = vmul.f32 %v447, %v498
        %v519 = vmul.f32 %v448, %v498
        %v520 = vmul.f32 %v449, %v498
        %v521 = vmul.f32 %v450, %v498
        %v522 = vmul.f32 %v451, %v498
        %v523 = vmul.f32 %v452, %v498
        %v524 = vmul.f32 %v453, %v498
        %v525 = vmul.f32 %v454, %v498
        %v526 = vmul.f32 %v455, %v498
        %v527 = vmul.f32 %v456, %v498
        %v528 = vmul.f32 %v457, %v498
        %v529 = vmul.f32 %v458, %v498
        %v530 = vmul.f32 %v459, %v498
        %v531 = vmul.f32 %v460, %v498
        %v532 = vmul.f32 %v461, %v498
        %v533 = vmul.f32 %v462, %v498
        %v534 = vmul.f32 %v463, %v498
        %v535 = vmul.f32 %v464, %v498
        %v536 = vmul.f32 %v465, %v498
        %v537 = vmul.f32 %v466, %v498
        %v538 = vmul.f32 %v467, %v498
        %v539 = vmul.f32 %v468, %v498
        %v540 = vmul.f32 %v469, %v498
        %v541 = vmul.f32 %v470, %v498
        %v542 = vmul.f32 %v471, %v498
        %v543 = vmul.f32 %v472, %v498
        %v544 = vmul.f32 %v473, %v498
        %v545 = vmul.f32 %v474, %v498
        %v546 = vmul.f32 %v475, %v498
        %v547 = vmul.f32 %v476, %v498
        %v548 = vmul.f32 %v477, %v498
        %v549 = vmul.f32 %v478, %v498
        %v550 = vmul.f32 %v479, %v498
        %v551 = vmul.f32 %v480, %v498
        %v552 = vmul.f32 %v481, %v498
        %v553 = vmul.f32 %v482, %v498
        %v554 = vmul.f32 %v483, %v498
        %v555 = vmul.f32 %v484, %v498
        %v556 = vmul.f32 %v485, %v498
        %v557 = vmul.f32 %v486, %v498
        %v558 = vmul.f32 %v487, %v498
        %v559 = vmul.f32 %v488, %v498
        %v560 = vmul.f32 %v489, %v498
        %v561 = vmul.f32 %v490, %v498
        %v562 = vmul.f32 %v491, %v498
        %v563 = vmul.f32 %v492, %v498
        %v564 = vld [vmem:[%s1] sm:$0x1]
        %v566 = vlaneseq
        %v567 = vshrl.u32 %v566, 7
        %v568 = vsub.s32 0, %v567
        %v569 = vrot.slane %v564, %v568
        %v571 = vadd.f32 %v500, %v569
        %v572 = vadd.f32 %v501, %v569
        %v573 = vadd.f32 %v502, %v569
        %v574 = vadd.f32 %v503, %v569
        %v575 = vadd.f32 %v504, %v569
        %v576 = vadd.f32 %v505, %v569
        %v577 = vadd.f32 %v506, %v569
        %v578 = vadd.f32 %v507, %v569
        %v579 = vadd.f32 %v508, %v569
        %v580 = vadd.f32 %v509, %v569
        %v581 = vadd.f32 %v510, %v569
        %v582 = vadd.f32 %v511, %v569
        %v583 = vadd.f32 %v512, %v569
        %v584 = vadd.f32 %v513, %v569
        %v585 = vadd.f32 %v514, %v569
        %v586 = vadd.f32 %v515, %v569
        %v587 = vadd.f32 %v516, %v569
        %v588 = vadd.f32 %v517, %v569
        %v589 = vadd.f32 %v518, %v569
        %v590 = vadd.f32 %v519, %v569
        %v591 = vadd.f32 %v520, %v569
        %v592 = vadd.f32 %v521, %v569
        %v593 = vadd.f32 %v522, %v569
        %v594 = vadd.f32 %v523, %v569
        %v595 = vadd.f32 %v524, %v569
        %v596 = vadd.f32 %v525, %v569
        %v597 = vadd.f32 %v526, %v569
        %v598 = vadd.f32 %v527, %v569
        %v599 = vadd.f32 %v528, %v569
        %v600 = vadd.f32 %v529, %v569
        %v601 = vadd.f32 %v530, %v569
        %v602 = vadd.f32 %v531, %v569
        %v603 = vadd.f32 %v532, %v569
        %v604 = vadd.f32 %v533, %v569
        %v605 = vadd.f32 %v534, %v569
        %v606 = vadd.f32 %v535, %v569
        %v607 = vadd.f32 %v536, %v569
        %v608 = vadd.f32 %v537, %v569
        %v609 = vadd.f32 %v538, %v569
        %v610 = vadd.f32 %v539, %v569
        %v611 = vadd.f32 %v540, %v569
        %v612 = vadd.f32 %v541, %v569
        %v613 = vadd.f32 %v542, %v569
        %v614 = vadd.f32 %v543, %v569
        %v615 = vadd.f32 %v544, %v569
        %v616 = vadd.f32 %v545, %v569
        %v617 = vadd.f32 %v546, %v569
        %v618 = vadd.f32 %v547, %v569
        %v619 = vadd.f32 %v548, %v569
        %v620 = vadd.f32 %v549, %v569
        %v621 = vadd.f32 %v550, %v569
        %v622 = vadd.f32 %v551, %v569
        %v623 = vadd.f32 %v552, %v569
        %v624 = vadd.f32 %v553, %v569
        %v625 = vadd.f32 %v554, %v569
        %v626 = vadd.f32 %v555, %v569
        %v627 = vadd.f32 %v556, %v569
        %v628 = vadd.f32 %v557, %v569
        %v629 = vadd.f32 %v558, %v569
        %v630 = vadd.f32 %v559, %v569
        %v631 = vadd.f32 %v560, %v569
        %v632 = vadd.f32 %v561, %v569
        %v633 = vadd.f32 %v562, %v569
        %v634 = vadd.f32 %v563, %v569
        %v635 = vand.u32 2147483647, %v571
        %vm636 = vcmp.le.f32.partialorder %v635, 0.7853982
        %vm637 = vcmp.lt.s32.totalorder %v571, 0
        %v638 = vand.u32 %v571, 2139095040
        %v639 = vshrl.u32 %v638, 23
        %v640 = vsub.s32 %v639, 127
        %v641 = vand.u32 2147483647, %v571
        %v642 = vand.u32 %v641, 8388607
        %v643 = vor.u32 %v642, 8388608
        %v644 = vsub.s32 0, %v643
        %v645 = vadd.s32 %v640, 1
        %vm646 = vcmp.gt.s32.totalorder %v645, 0
        %v647 = vsel %vm646, %v645, 0
        %v648 = vshrl.u32 %v647, 5
        %v649 = vand.u32 %v647, 31
        %v650 = vsub.s32 32, %v649
        %v651 = vshrl.u32 683565275, %v650
        %v652 = vshll.u32 683565275, %v649
        %v653 = vshrl.u32 2475754826, %v650
        %v654 = vor.u32 %v652, %v653
        %v655 = vshll.u32 2475754826, %v649
        %v656 = vshrl.u32 2131351028, %v650
        %v657 = vor.u32 %v655, %v656
        %v658 = vshll.u32 2131351028, %v649
        %v659 = vshrl.u32 2102212464, %v650
        %v660 = vor.u32 %v658, %v659
        %v661 = vshll.u32 2102212464, %v649
        %v662 = vshrl.u32 920167782, %v650
        %v663 = vor.u32 %v661, %v662
        %v664 = vshll.u32 920167782, %v649
        %v665 = vshrl.u32 1326507024, %v650
        %v666 = vor.u32 %v664, %v665
        %vm667 = vcmp.lt.s32.totalorder %v648, 1
        %vm668 = vcmp.lt.s32.totalorder %v648, 2
        %vm669 = vcmp.lt.s32.totalorder %v648, 3
        %vm670 = vcmp.lt.s32.totalorder %v648, 4
        %v671 = vsel %vm667, %v651, %v654
        %v672 = vsel %vm670, %v660, 2102212464
        %v673 = vsel %vm669, %v657, %v672
        %v674 = vsel %vm668, %v671, %v673
        %v675 = vsel %vm667, %v654, %v657
        %v676 = vsel %vm670, %v663, 920167782
        %v677 = vsel %vm669, %v660, %v676
        %v678 = vsel %vm668, %v675, %v677
        %v679 = vsel %vm667, %v657, %v660
        %v680 = vsel %vm670, %v666, 1326507024
        %v681 = vsel %vm669, %v663, %v680
        %v682 = vsel %vm668, %v679, %v681
        %v683 = vshll.u32 %v643, 8
        %v684 = vmul.u32.u64.compose %v683, %v682
        %v685 = vextract.low.u32 %v684
        %v686 = vextract.high.u32 %v684
        %v687 = vmul.u32.u64.compose %v683, %v678
        %v688 = vextract.low.u32 %v687
        %v689 = vextract.high.u32 %v687
        %v690 = vmul.u32 %v683, %v674
        %v691 = vadd.s32 %v686, %v688
        %vm692 = vc.u32 %v686, %v688
        %v693 = vadd.s32 %v689, 1
        %v694 = vsel %vm692, %v693, %v689
        %v695 = vadd.s32 %v690, %v694
        %v696 = vadd.s32 %v695, 536870912
        %v697 = vshrl.u32 %v696, 30
        %v698 = vshll.u32 %v697, 30
        %v699 = vsub.s32 %v695, %v698
        %vm700 = vcmp.lt.s32.totalorder %v699, 0
        %v701 = vsub.s32 0, %v699
        %v702 = vsel %vm700, %v701, %v699
        %v703 = vclz %v702
        %v704 = vsub.s32 %v703, 2
        %vm705 = vcmp.gt.s32.totalorder 0, %v704
        %v706 = vsel %vm705, 0, %v704
        %v707 = vsub.s32 32, %v706
        %v708 = vshll.u32 %v699, %v706
        %v709 = vshrl.u32 %v691, %v707
        %v710 = vor.u32 %v708, %v709
        %v711 = vsub.s32 4294967266, %v706
        %v712 = vadd.s32 %v711, 127
        %v713 = vshll.u32 %v712, 23
        %v714 = vor.u32 4788187, %v713
        %v715 = vand.u32 2147483647, %v714
        %v717 = vcvt.s32.f32 %v710
        %v718 = vmul.f32 %v717, %v715
        %v719 = vxor.u32 %v718, 2147483648
        %v720 = vsel %vm637, %v719, %v718
        %v721 = vsub.s32 4, %v697
        %v722 = vsel %vm637, %v721, %v697
        %v723 = vsel %vm636, %v571, %v720
        %v724 = vsel %vm636, 0, %v722
        %v725 = vcosq.f32.pop %v723
        %v726 = vsinq.f32.pop %v723
        %vm727 = vweird.f32 %v571
        %v728 = vadd.s32 %v724, 3
        %v729 = vand.u32 %v728, 3
        %vm730 = vcmp.lt.s32.totalorder %v729, 2
        %vm731 = vcmp.eq.s32.totalorder %v729, 0
        %v732 = vxor.u32 %v726, 2147483648
        %v733 = vsel %vm731, %v725, %v732
        %vm734 = vcmp.eq.s32.totalorder %v729, 2
        %v735 = vxor.u32 %v725, 2147483648
        %v736 = vsel %vm734, %v735, %v726
        %v737 = vsel %vm730, %v733, %v736
        %v738 = vsel %vm727, nan, %v737
        %v739 = vand.u32 2147483647, %v572
        %vm740 = vcmp.le.f32.partialorder %v739, 0.7853982
        %vm741 = vcmp.lt.s32.totalorder %v572, 0
        %v742 = vand.u32 %v572, 2139095040
        %v743 = vshrl.u32 %v742, 23
        %v744 = vsub.s32 %v743, 127
        %v745 = vand.u32 2147483647, %v572
        %v746 = vand.u32 %v745, 8388607
        %v747 = vor.u32 %v746, 8388608
        %v748 = vsub.s32 0, %v747
        %v749 = vadd.s32 %v744, 1
        %vm750 = vcmp.gt.s32.totalorder %v749, 0
        %v751 = vsel %vm750, %v749, 0
        %v752 = vshrl.u32 %v751, 5
        %v753 = vand.u32 %v751, 31
        %v754 = vsub.s32 32, %v753
        %v755 = vshrl.u32 683565275, %v754
        %v756 = vshll.u32 683565275, %v753
        %v757 = vshrl.u32 2475754826, %v754
        %v758 = vor.u32 %v756, %v757
        %v759 = vshll.u32 2475754826, %v753
        %v760 = vshrl.u32 2131351028, %v754
        %v761 = vor.u32 %v759, %v760
        %v762 = vshll.u32 2131351028, %v753
        %v763 = vshrl.u32 2102212464, %v754
        %v764 = vor.u32 %v762, %v763
        %v765 = vshll.u32 2102212464, %v753
        %v766 = vshrl.u32 920167782, %v754
        %v767 = vor.u32 %v765, %v766
        %v768 = vshll.u32 920167782, %v753
        %v769 = vshrl.u32 1326507024, %v754
        %v770 = vor.u32 %v768, %v769
        %vm771 = vcmp.lt.s32.totalorder %v752, 1
        %vm772 = vcmp.lt.s32.totalorder %v752, 2
        %vm773 = vcmp.lt.s32.totalorder %v752, 3
        %vm774 = vcmp.lt.s32.totalorder %v752, 4
        %v775 = vsel %vm771, %v755, %v758
        %v776 = vsel %vm774, %v764, 2102212464
        %v777 = vsel %vm773, %v761, %v776
        %v778 = vsel %vm772, %v775, %v777
        %v779 = vsel %vm771, %v758, %v761
        %v780 = vsel %vm774, %v767, 920167782
        %v781 = vsel %vm773, %v764, %v780
        %v782 = vsel %vm772, %v779, %v781
        %v783 = vsel %vm771, %v761, %v764
        %v784 = vsel %vm774, %v770, 1326507024
        %v785 = vsel %vm773, %v767, %v784
        %v786 = vsel %vm772, %v783, %v785
        %v787 = vshll.u32 %v747, 8
        %v788 = vmul.u32.u64.compose %v787, %v786
        %v789 = vextract.low.u32 %v788
        %v790 = vextract.high.u32 %v788
        %v791 = vmul.u32.u64.compose %v787, %v782
        %v792 = vextract.low.u32 %v791
        %v793 = vextract.high.u32 %v791
        %v794 = vmul.u32 %v787, %v778
        %v795 = vadd.s32 %v790, %v792
        %vm796 = vc.u32 %v790, %v792
        %v797 = vadd.s32 %v793, 1
        %v798 = vsel %vm796, %v797, %v793
        %v799 = vadd.s32 %v794, %v798
        %v800 = vadd.s32 %v799, 536870912
        %v801 = vshrl.u32 %v800, 30
        %v802 = vshll.u32 %v801, 30
        %v803 = vsub.s32 %v799, %v802
        %vm804 = vcmp.lt.s32.totalorder %v803, 0
        %v805 = vsub.s32 0, %v803
        %v806 = vsel %vm804, %v805, %v803
        %v807 = vclz %v806
        %v808 = vsub.s32 %v807, 2
        %vm809 = vcmp.gt.s32.totalorder 0, %v808
        %v810 = vsel %vm809, 0, %v808
        %v811 = vsub.s32 32, %v810
        %v812 = vshll.u32 %v803, %v810
        %v813 = vshrl.u32 %v795, %v811
        %v814 = vor.u32 %v812, %v813
        %v815 = vsub.s32 4294967266, %v810
        %v816 = vadd.s32 %v815, 127
        %v817 = vshll.u32 %v816, 23
        %v818 = vor.u32 4788187, %v817
        %v819 = vand.u32 2147483647, %v818
        %v821 = vcvt.s32.f32 %v814
        %v822 = vmul.f32 %v821, %v819
        %v823 = vxor.u32 %v822, 2147483648
        %v824 = vsel %vm741, %v823, %v822
        %v825 = vsub.s32 4, %v801
        %v826 = vsel %vm741, %v825, %v801
        %v827 = vsel %vm740, %v572, %v824
        %v828 = vsel %vm740, 0, %v826
        %v829 = vcosq.f32.pop %v827
        %v830 = vsinq.f32.pop %v827
        %vm831 = vweird.f32 %v572
        %v832 = vadd.s32 %v828, 3
        %v833 = vand.u32 %v832, 3
        %vm834 = vcmp.lt.s32.totalorder %v833, 2
        %vm835 = vcmp.eq.s32.totalorder %v833, 0
        %v836 = vxor.u32 %v830, 2147483648
        %v837 = vsel %vm835, %v829, %v836
        %vm838 = vcmp.eq.s32.totalorder %v833, 2
        %v839 = vxor.u32 %v829, 2147483648
        %v840 = vsel %vm838, %v839, %v830
        %v841 = vsel %vm834, %v837, %v840
        %v842 = vsel %vm831, nan, %v841
        %v843 = vand.u32 2147483647, %v573
        %vm844 = vcmp.le.f32.partialorder %v843, 0.7853982
        %vm845 = vcmp.lt.s32.totalorder %v573, 0
        %v846 = vand.u32 %v573, 2139095040
        %v847 = vshrl.u32 %v846, 23
        %v848 = vsub.s32 %v847, 127
        %v849 = vand.u32 2147483647, %v573
        %v850 = vand.u32 %v849, 8388607
        %v851 = vor.u32 %v850, 8388608
        %v852 = vsub.s32 0, %v851
        %v853 = vadd.s32 %v848, 1
        %vm854 = vcmp.gt.s32.totalorder %v853, 0
        %v855 = vsel %vm854, %v853, 0
        %v856 = vshrl.u32 %v855, 5
        %v857 = vand.u32 %v855, 31
        %v858 = vsub.s32 32, %v857
        %v859 = vshrl.u32 683565275, %v858
        %v860 = vshll.u32 683565275, %v857
        %v861 = vshrl.u32 2475754826, %v858
        %v862 = vor.u32 %v860, %v861
        %v863 = vshll.u32 2475754826, %v857
        %v864 = vshrl.u32 2131351028, %v858
        %v865 = vor.u32 %v863, %v864
        %v866 = vshll.u32 2131351028, %v857
        %v867 = vshrl.u32 2102212464, %v858
        %v868 = vor.u32 %v866, %v867
        %v869 = vshll.u32 2102212464, %v857
        %v870 = vshrl.u32 920167782, %v858
        %v871 = vor.u32 %v869, %v870
        %v872 = vshll.u32 920167782, %v857
        %v873 = vshrl.u32 1326507024, %v858
        %v874 = vor.u32 %v872, %v873
        %vm875 = vcmp.lt.s32.totalorder %v856, 1
        %vm876 = vcmp.lt.s32.totalorder %v856, 2
        %vm877 = vcmp.lt.s32.totalorder %v856, 3
        %vm878 = vcmp.lt.s32.totalorder %v856, 4
        %v879 = vsel %vm875, %v859, %v862
        %v880 = vsel %vm878, %v868, 2102212464
        %v881 = vsel %vm877, %v865, %v880
        %v882 = vsel %vm876, %v879, %v881
        %v883 = vsel %vm875, %v862, %v865
        %v884 = vsel %vm878, %v871, 920167782
        %v885 = vsel %vm877, %v868, %v884
        %v886 = vsel %vm876, %v883, %v885
        %v887 = vsel %vm875, %v865, %v868
        %v888 = vsel %vm878, %v874, 1326507024
        %v889 = vsel %vm877, %v871, %v888
        %v890 = vsel %vm876, %v887, %v889
        %v891 = vshll.u32 %v851, 8
        %v892 = vmul.u32.u64.compose %v891, %v890
        %v893 = vextract.low.u32 %v892
        %v894 = vextract.high.u32 %v892
        %v895 = vmul.u32.u64.compose %v891, %v886
        %v896 = vextract.low.u32 %v895
        %v897 = vextract.high.u32 %v895
        %v898 = vmul.u32 %v891, %v882
        %v899 = vadd.s32 %v894, %v896
        %vm900 = vc.u32 %v894, %v896
        %v901 = vadd.s32 %v897, 1
        %v902 = vsel %vm900, %v901, %v897
        %v903 = vadd.s32 %v898, %v902
        %v904 = vadd.s32 %v903, 536870912
        %v905 = vshrl.u32 %v904, 30
        %v906 = vshll.u32 %v905, 30
        %v907 = vsub.s32 %v903, %v906
        %vm908 = vcmp.lt.s32.totalorder %v907, 0
        %v909 = vsub.s32 0, %v907
        %v910 = vsel %vm908, %v909, %v907
        %v911 = vclz %v910
        %v912 = vsub.s32 %v911, 2
        %vm913 = vcmp.gt.s32.totalorder 0, %v912
        %v914 = vsel %vm913, 0, %v912
        %v915 = vsub.s32 32, %v914
        %v916 = vshll.u32 %v907, %v914
        %v917 = vshrl.u32 %v899, %v915
        %v918 = vor.u32 %v916, %v917
        %v919 = vsub.s32 4294967266, %v914
        %v920 = vadd.s32 %v919, 127
        %v921 = vshll.u32 %v920, 23
        %v922 = vor.u32 4788187, %v921
        %v923 = vand.u32 2147483647, %v922
        %v925 = vcvt.s32.f32 %v918
        %v926 = vmul.f32 %v925, %v923
        %v927 = vxor.u32 %v926, 2147483648
        %v928 = vsel %vm845, %v927, %v926
        %v929 = vsub.s32 4, %v905
        %v930 = vsel %vm845, %v929, %v905
        %v931 = vsel %vm844, %v573, %v928
        %v932 = vsel %vm844, 0, %v930
        %v933 = vcosq.f32.pop %v931
        %v934 = vsinq.f32.pop %v931
        %vm935 = vweird.f32 %v573
        %v936 = vadd.s32 %v932, 3
        %v937 = vand.u32 %v936, 3
        %vm938 = vcmp.lt.s32.totalorder %v937, 2
        %vm939 = vcmp.eq.s32.totalorder %v937, 0
        %v940 = vxor.u32 %v934, 2147483648
        %v941 = vsel %vm939, %v933, %v940
        %vm942 = vcmp.eq.s32.totalorder %v937, 2
        %v943 = vxor.u32 %v933, 2147483648
        %v944 = vsel %vm942, %v943, %v934
        %v945 = vsel %vm938, %v941, %v944
        %v946 = vsel %vm935, nan, %v945
        %v947 = vand.u32 2147483647, %v574
        %vm948 = vcmp.le.f32.partialorder %v947, 0.7853982
        %vm949 = vcmp.lt.s32.totalorder %v574, 0
        %v950 = vand.u32 %v574, 2139095040
        %v951 = vshrl.u32 %v950, 23
        %v952 = vsub.s32 %v951, 127
        %v953 = vand.u32 2147483647, %v574
        %v954 = vand.u32 %v953, 8388607
        %v955 = vor.u32 %v954, 8388608
        %v956 = vsub.s32 0, %v955
        %v957 = vadd.s32 %v952, 1
        %vm958 = vcmp.gt.s32.totalorder %v957, 0
        %v959 = vsel %vm958, %v957, 0
        %v960 = vshrl.u32 %v959, 5
        %v961 = vand.u32 %v959, 31
        %v962 = vsub.s32 32, %v961
        %v963 = vshrl.u32 683565275, %v962
        %v964 = vshll.u32 683565275, %v961
        %v965 = vshrl.u32 2475754826, %v962
        %v966 = vor.u32 %v964, %v965
        %v967 = vshll.u32 2475754826, %v961
        %v968 = vshrl.u32 2131351028, %v962
        %v969 = vor.u32 %v967, %v968
        %v970 = vshll.u32 2131351028, %v961
        %v971 = vshrl.u32 2102212464, %v962
        %v972 = vor.u32 %v970, %v971
        %v973 = vshll.u32 2102212464, %v961
        %v974 = vshrl.u32 920167782, %v962
        %v975 = vor.u32 %v973, %v974
        %v976 = vshll.u32 920167782, %v961
        %v977 = vshrl.u32 1326507024, %v962
        %v978 = vor.u32 %v976, %v977
        %vm979 = vcmp.lt.s32.totalorder %v960, 1
        %vm980 = vcmp.lt.s32.totalorder %v960, 2
        %vm981 = vcmp.lt.s32.totalorder %v960, 3
        %vm982 = vcmp.lt.s32.totalorder %v960, 4
        %v983 = vsel %vm979, %v963, %v966
        %v984 = vsel %vm982, %v972, 2102212464
        %v985 = vsel %vm981, %v969, %v984
        %v986 = vsel %vm980, %v983, %v985
        %v987 = vsel %vm979, %v966, %v969
        %v988 = vsel %vm982, %v975, 920167782
        %v989 = vsel %vm981, %v972, %v988
        %v990 = vsel %vm980, %v987, %v989
        %v991 = vsel %vm979, %v969, %v972
        %v992 = vsel %vm982, %v978, 1326507024
        %v993 = vsel %vm981, %v975, %v992
        %v994 = vsel %vm980, %v991, %v993
        %v995 = vshll.u32 %v955, 8
        %v996 = vmul.u32.u64.compose %v995, %v994
        %v997 = vextract.low.u32 %v996
        %v998 = vextract.high.u32 %v996
        %v999 = vmul.u32.u64.compose %v995, %v990
        %v1000 = vextract.low.u32 %v999
        %v1001 = vextract.high.u32 %v999
        %v1002 = vmul.u32 %v995, %v986
        %v1003 = vadd.s32 %v998, %v1000
        %vm1004 = vc.u32 %v998, %v1000
        %v1005 = vadd.s32 %v1001, 1
        %v1006 = vsel %vm1004, %v1005, %v1001
        %v1007 = vadd.s32 %v1002, %v1006
        %v1008 = vadd.s32 %v1007, 536870912
        %v1009 = vshrl.u32 %v1008, 30
        %v1010 = vshll.u32 %v1009, 30
        %v1011 = vsub.s32 %v1007, %v1010
        %vm1012 = vcmp.lt.s32.totalorder %v1011, 0
        %v1013 = vsub.s32 0, %v1011
        %v1014 = vsel %vm1012, %v1013, %v1011
        %v1015 = vclz %v1014
        %v1016 = vsub.s32 %v1015, 2
        %vm1017 = vcmp.gt.s32.totalorder 0, %v1016
        %v1018 = vsel %vm1017, 0, %v1016
        %v1019 = vsub.s32 32, %v1018
        %v1020 = vshll.u32 %v1011, %v1018
        %v1021 = vshrl.u32 %v1003, %v1019
        %v1022 = vor.u32 %v1020, %v1021
        %v1023 = vsub.s32 4294967266, %v1018
        %v1024 = vadd.s32 %v1023, 127
        %v1025 = vshll.u32 %v1024, 23
        %v1026 = vor.u32 4788187, %v1025
        %v1027 = vand.u32 2147483647, %v1026
        %v1029 = vcvt.s32.f32 %v1022
        %v1030 = vmul.f32 %v1029, %v1027
        %v1031 = vxor.u32 %v1030, 2147483648
        %v1032 = vsel %vm949, %v1031, %v1030
        %v1033 = vsub.s32 4, %v1009
        %v1034 = vsel %vm949, %v1033, %v1009
        %v1035 = vsel %vm948, %v574, %v1032
        %v1036 = vsel %vm948, 0, %v1034
        %v1037 = vcosq.f32.pop %v1035
        %v1038 = vsinq.f32.pop %v1035
        %vm1039 = vweird.f32 %v574
        %v1040 = vadd.s32 %v1036, 3
        %v1041 = vand.u32 %v1040, 3
        %vm1042 = vcmp.lt.s32.totalorder %v1041, 2
        %vm1043 = vcmp.eq.s32.totalorder %v1041, 0
        %v1044 = vxor.u32 %v1038, 2147483648
        %v1045 = vsel %vm1043, %v1037, %v1044
        %vm1046 = vcmp.eq.s32.totalorder %v1041, 2
        %v1047 = vxor.u32 %v1037, 2147483648
        %v1048 = vsel %vm1046, %v1047, %v1038
        %v1049 = vsel %vm1042, %v1045, %v1048
        %v1050 = vsel %vm1039, nan, %v1049
        %v1051 = vand.u32 2147483647, %v575
        %vm1052 = vcmp.le.f32.partialorder %v1051, 0.7853982
        %vm1053 = vcmp.lt.s32.totalorder %v575, 0
        %v1054 = vand.u32 %v575, 2139095040
        %v1055 = vshrl.u32 %v1054, 23
        %v1056 = vsub.s32 %v1055, 127
        %v1057 = vand.u32 2147483647, %v575
        %v1058 = vand.u32 %v1057, 8388607
        %v1059 = vor.u32 %v1058, 8388608
        %v1060 = vsub.s32 0, %v1059
        %v1061 = vadd.s32 %v1056, 1
        %vm1062 = vcmp.gt.s32.totalorder %v1061, 0
        %v1063 = vsel %vm1062, %v1061, 0
        %v1064 = vshrl.u32 %v1063, 5
        %v1065 = vand.u32 %v1063, 31
        %v1066 = vsub.s32 32, %v1065
        %v1067 = vshrl.u32 683565275, %v1066
        %v1068 = vshll.u32 683565275, %v1065
        %v1069 = vshrl.u32 2475754826, %v1066
        %v1070 = vor.u32 %v1068, %v1069
        %v1071 = vshll.u32 2475754826, %v1065
        %v1072 = vshrl.u32 2131351028, %v1066
        %v1073 = vor.u32 %v1071, %v1072
        %v1074 = vshll.u32 2131351028, %v1065
        %v1075 = vshrl.u32 2102212464, %v1066
        %v1076 = vor.u32 %v1074, %v1075
        %v1077 = vshll.u32 2102212464, %v1065
        %v1078 = vshrl.u32 920167782, %v1066
        %v1079 = vor.u32 %v1077, %v1078
        %v1080 = vshll.u32 920167782, %v1065
        %v1081 = vshrl.u32 1326507024, %v1066
        %v1082 = vor.u32 %v1080, %v1081
        %vm1083 = vcmp.lt.s32.totalorder %v1064, 1
        %vm1084 = vcmp.lt.s32.totalorder %v1064, 2
        %vm1085 = vcmp.lt.s32.totalorder %v1064, 3
        %vm1086 = vcmp.lt.s32.totalorder %v1064, 4
        %v1087 = vsel %vm1083, %v1067, %v1070
        %v1088 = vsel %vm1086, %v1076, 2102212464
        %v1089 = vsel %vm1085, %v1073, %v1088
        %v1090 = vsel %vm1084, %v1087, %v1089
        %v1091 = vsel %vm1083, %v1070, %v1073
        %v1092 = vsel %vm1086, %v1079, 920167782
        %v1093 = vsel %vm1085, %v1076, %v1092
        %v1094 = vsel %vm1084, %v1091, %v1093
        %v1095 = vsel %vm1083, %v1073, %v1076
        %v1096 = vsel %vm1086, %v1082, 1326507024
        %v1097 = vsel %vm1085, %v1079, %v1096
        %v1098 = vsel %vm1084, %v1095, %v1097
        %v1099 = vshll.u32 %v1059, 8
        %v1100 = vmul.u32.u64.compose %v1099, %v1098
        %v1101 = vextract.low.u32 %v1100
        %v1102 = vextract.high.u32 %v1100
        %v1103 = vmul.u32.u64.compose %v1099, %v1094
        %v1104 = vextract.low.u32 %v1103
        %v1105 = vextract.high.u32 %v1103
        %v1106 = vmul.u32 %v1099, %v1090
        %v1107 = vadd.s32 %v1102, %v1104
        %vm1108 = vc.u32 %v1102, %v1104
        %v1109 = vadd.s32 %v1105, 1
        %v1110 = vsel %vm1108, %v1109, %v1105
        %v1111 = vadd.s32 %v1106, %v1110
        %v1112 = vadd.s32 %v1111, 536870912
        %v1113 = vshrl.u32 %v1112, 30
        %v1114 = vshll.u32 %v1113, 30
        %v1115 = vsub.s32 %v1111, %v1114
        %vm1116 = vcmp.lt.s32.totalorder %v1115, 0
        %v1117 = vsub.s32 0, %v1115
        %v1118 = vsel %vm1116, %v1117, %v1115
        %v1119 = vclz %v1118
        %v1120 = vsub.s32 %v1119, 2
        %vm1121 = vcmp.gt.s32.totalorder 0, %v1120
        %v1122 = vsel %vm1121, 0, %v1120
        %v1123 = vsub.s32 32, %v1122
        %v1124 = vshll.u32 %v1115, %v1122
        %v1125 = vshrl.u32 %v1107, %v1123
        %v1126 = vor.u32 %v1124, %v1125
        %v1127 = vsub.s32 4294967266, %v1122
        %v1128 = vadd.s32 %v1127, 127
        %v1129 = vshll.u32 %v1128, 23
        %v1130 = vor.u32 4788187, %v1129
        %v1131 = vand.u32 2147483647, %v1130
        %v1133 = vcvt.s32.f32 %v1126
        %v1134 = vmul.f32 %v1133, %v1131
        %v1135 = vxor.u32 %v1134, 2147483648
        %v1136 = vsel %vm1053, %v1135, %v1134
        %v1137 = vsub.s32 4, %v1113
        %v1138 = vsel %vm1053, %v1137, %v1113
        %v1139 = vsel %vm1052, %v575, %v1136
        %v1140 = vsel %vm1052, 0, %v1138
        %v1141 = vcosq.f32.pop %v1139
        %v1142 = vsinq.f32.pop %v1139
        %vm1143 = vweird.f32 %v575
        %v1144 = vadd.s32 %v1140, 3
        %v1145 = vand.u32 %v1144, 3
        %vm1146 = vcmp.lt.s32.totalorder %v1145, 2
        %vm1147 = vcmp.eq.s32.totalorder %v1145, 0
        %v1148 = vxor.u32 %v1142, 2147483648
        %v1149 = vsel %vm1147, %v1141, %v1148
        %vm1150 = vcmp.eq.s32.totalorder %v1145, 2
        %v1151 = vxor.u32 %v1141, 2147483648
        %v1152 = vsel %vm1150, %v1151, %v1142
        %v1153 = vsel %vm1146, %v1149, %v1152
        %v1154 = vsel %vm1143, nan, %v1153
        %v1155 = vand.u32 2147483647, %v576
        %vm1156 = vcmp.le.f32.partialorder %v1155, 0.7853982
        %vm1157 = vcmp.lt.s32.totalorder %v576, 0
        %v1158 = vand.u32 %v576, 2139095040
        %v1159 = vshrl.u32 %v1158, 23
        %v1160 = vsub.s32 %v1159, 127
        %v1161 = vand.u32 2147483647, %v576
        %v1162 = vand.u32 %v1161, 8388607
        %v1163 = vor.u32 %v1162, 8388608
        %v1164 = vsub.s32 0, %v1163
        %v1165 = vadd.s32 %v1160, 1
        %vm1166 = vcmp.gt.s32.totalorder %v1165, 0
        %v1167 = vsel %vm1166, %v1165, 0
        %v1168 = vshrl.u32 %v1167, 5
        %v1169 = vand.u32 %v1167, 31
        %v1170 = vsub.s32 32, %v1169
        %v1171 = vshrl.u32 683565275, %v1170
        %v1172 = vshll.u32 683565275, %v1169
        %v1173 = vshrl.u32 2475754826, %v1170
        %v1174 = vor.u32 %v1172, %v1173
        %v1175 = vshll.u32 2475754826, %v1169
        %v1176 = vshrl.u32 2131351028, %v1170
        %v1177 = vor.u32 %v1175, %v1176
        %v1178 = vshll.u32 2131351028, %v1169
        %v1179 = vshrl.u32 2102212464, %v1170
        %v1180 = vor.u32 %v1178, %v1179
        %v1181 = vshll.u32 2102212464, %v1169
        %v1182 = vshrl.u32 920167782, %v1170
        %v1183 = vor.u32 %v1181, %v1182
        %v1184 = vshll.u32 920167782, %v1169
        %v1185 = vshrl.u32 1326507024, %v1170
        %v1186 = vor.u32 %v1184, %v1185
        %vm1187 = vcmp.lt.s32.totalorder %v1168, 1
        %vm1188 = vcmp.lt.s32.totalorder %v1168, 2
        %vm1189 = vcmp.lt.s32.totalorder %v1168, 3
        %vm1190 = vcmp.lt.s32.totalorder %v1168, 4
        %v1191 = vsel %vm1187, %v1171, %v1174
        %v1192 = vsel %vm1190, %v1180, 2102212464
        %v1193 = vsel %vm1189, %v1177, %v1192
        %v1194 = vsel %vm1188, %v1191, %v1193
        %v1195 = vsel %vm1187, %v1174, %v1177
        %v1196 = vsel %vm1190, %v1183, 920167782
        %v1197 = vsel %vm1189, %v1180, %v1196
        %v1198 = vsel %vm1188, %v1195, %v1197
        %v1199 = vsel %vm1187, %v1177, %v1180
        %v1200 = vsel %vm1190, %v1186, 1326507024
        %v1201 = vsel %vm1189, %v1183, %v1200
        %v1202 = vsel %vm1188, %v1199, %v1201
        %v1203 = vshll.u32 %v1163, 8
        %v1204 = vmul.u32.u64.compose %v1203, %v1202
        %v1205 = vextract.low.u32 %v1204
        %v1206 = vextract.high.u32 %v1204
        %v1207 = vmul.u32.u64.compose %v1203, %v1198
        %v1208 = vextract.low.u32 %v1207
        %v1209 = vextract.high.u32 %v1207
        %v1210 = vmul.u32 %v1203, %v1194
        %v1211 = vadd.s32 %v1206, %v1208
        %vm1212 = vc.u32 %v1206, %v1208
        %v1213 = vadd.s32 %v1209, 1
        %v1214 = vsel %vm1212, %v1213, %v1209
        %v1215 = vadd.s32 %v1210, %v1214
        %v1216 = vadd.s32 %v1215, 536870912
        %v1217 = vshrl.u32 %v1216, 30
        %v1218 = vshll.u32 %v1217, 30
        %v1219 = vsub.s32 %v1215, %v1218
        %vm1220 = vcmp.lt.s32.totalorder %v1219, 0
        %v1221 = vsub.s32 0, %v1219
        %v1222 = vsel %vm1220, %v1221, %v1219
        %v1223 = vclz %v1222
        %v1224 = vsub.s32 %v1223, 2
        %vm1225 = vcmp.gt.s32.totalorder 0, %v1224
        %v1226 = vsel %vm1225, 0, %v1224
        %v1227 = vsub.s32 32, %v1226
        %v1228 = vshll.u32 %v1219, %v1226
        %v1229 = vshrl.u32 %v1211, %v1227
        %v1230 = vor.u32 %v1228, %v1229
        %v1231 = vsub.s32 4294967266, %v1226
        %v1232 = vadd.s32 %v1231, 127
        %v1233 = vshll.u32 %v1232, 23
        %v1234 = vor.u32 4788187, %v1233
        %v1235 = vand.u32 2147483647, %v1234
        %v1237 = vcvt.s32.f32 %v1230
        %v1238 = vmul.f32 %v1237, %v1235
        %v1239 = vxor.u32 %v1238, 2147483648
        %v1240 = vsel %vm1157, %v1239, %v1238
        %v1241 = vsub.s32 4, %v1217
        %v1242 = vsel %vm1157, %v1241, %v1217
        %v1243 = vsel %vm1156, %v576, %v1240
        %v1244 = vsel %vm1156, 0, %v1242
        %v1245 = vcosq.f32.pop %v1243
        %v1246 = vsinq.f32.pop %v1243
        %vm1247 = vweird.f32 %v576
        %v1248 = vadd.s32 %v1244, 3
        %v1249 = vand.u32 %v1248, 3
        %vm1250 = vcmp.lt.s32.totalorder %v1249, 2
        %vm1251 = vcmp.eq.s32.totalorder %v1249, 0
        %v1252 = vxor.u32 %v1246, 2147483648
        %v1253 = vsel %vm1251, %v1245, %v1252
        %vm1254 = vcmp.eq.s32.totalorder %v1249, 2
        %v1255 = vxor.u32 %v1245, 2147483648
        %v1256 = vsel %vm1254, %v1255, %v1246
        %v1257 = vsel %vm1250, %v1253, %v1256
        %v1258 = vsel %vm1247, nan, %v1257
        %v1259 = vand.u32 2147483647, %v577
        %vm1260 = vcmp.le.f32.partialorder %v1259, 0.7853982
        %vm1261 = vcmp.lt.s32.totalorder %v577, 0
        %v1262 = vand.u32 %v577, 2139095040
        %v1263 = vshrl.u32 %v1262, 23
        %v1264 = vsub.s32 %v1263, 127
        %v1265 = vand.u32 2147483647, %v577
        %v1266 = vand.u32 %v1265, 8388607
        %v1267 = vor.u32 %v1266, 8388608
        %v1268 = vsub.s32 0, %v1267
        %v1269 = vadd.s32 %v1264, 1
        %vm1270 = vcmp.gt.s32.totalorder %v1269, 0
        %v1271 = vsel %vm1270, %v1269, 0
        %v1272 = vshrl.u32 %v1271, 5
        %v1273 = vand.u32 %v1271, 31
        %v1274 = vsub.s32 32, %v1273
        %v1275 = vshrl.u32 683565275, %v1274
        %v1276 = vshll.u32 683565275, %v1273
        %v1277 = vshrl.u32 2475754826, %v1274
        %v1278 = vor.u32 %v1276, %v1277
        %v1279 = vshll.u32 2475754826, %v1273
        %v1280 = vshrl.u32 2131351028, %v1274
        %v1281 = vor.u32 %v1279, %v1280
        %v1282 = vshll.u32 2131351028, %v1273
        %v1283 = vshrl.u32 2102212464, %v1274
        %v1284 = vor.u32 %v1282, %v1283
        %v1285 = vshll.u32 2102212464, %v1273
        %v1286 = vshrl.u32 920167782, %v1274
        %v1287 = vor.u32 %v1285, %v1286
        %v1288 = vshll.u32 920167782, %v1273
        %v1289 = vshrl.u32 1326507024, %v1274
        %v1290 = vor.u32 %v1288, %v1289
        %vm1291 = vcmp.lt.s32.totalorder %v1272, 1
        %vm1292 = vcmp.lt.s32.totalorder %v1272, 2
        %vm1293 = vcmp.lt.s32.totalorder %v1272, 3
        %vm1294 = vcmp.lt.s32.totalorder %v1272, 4
        %v1295 = vsel %vm1291, %v1275, %v1278
        %v1296 = vsel %vm1294, %v1284, 2102212464
        %v1297 = vsel %vm1293, %v1281, %v1296
        %v1298 = vsel %vm1292, %v1295, %v1297
        %v1299 = vsel %vm1291, %v1278, %v1281
        %v1300 = vsel %vm1294, %v1287, 920167782
        %v1301 = vsel %vm1293, %v1284, %v1300
        %v1302 = vsel %vm1292, %v1299, %v1301
        %v1303 = vsel %vm1291, %v1281, %v1284
        %v1304 = vsel %vm1294, %v1290, 1326507024
        %v1305 = vsel %vm1293, %v1287, %v1304
        %v1306 = vsel %vm1292, %v1303, %v1305
        %v1307 = vshll.u32 %v1267, 8
        %v1308 = vmul.u32.u64.compose %v1307, %v1306
        %v1309 = vextract.low.u32 %v1308
        %v1310 = vextract.high.u32 %v1308
        %v1311 = vmul.u32.u64.compose %v1307, %v1302
        %v1312 = vextract.low.u32 %v1311
        %v1313 = vextract.high.u32 %v1311
        %v1314 = vmul.u32 %v1307, %v1298
        %v1315 = vadd.s32 %v1310, %v1312
        %vm1316 = vc.u32 %v1310, %v1312
        %v1317 = vadd.s32 %v1313, 1
        %v1318 = vsel %vm1316, %v1317, %v1313
        %v1319 = vadd.s32 %v1314, %v1318
        %v1320 = vadd.s32 %v1319, 536870912
        %v1321 = vshrl.u32 %v1320, 30
        %v1322 = vshll.u32 %v1321, 30
        %v1323 = vsub.s32 %v1319, %v1322
        %vm1324 = vcmp.lt.s32.totalorder %v1323, 0
        %v1325 = vsub.s32 0, %v1323
        %v1326 = vsel %vm1324, %v1325, %v1323
        %v1327 = vclz %v1326
        %v1328 = vsub.s32 %v1327, 2
        %vm1329 = vcmp.gt.s32.totalorder 0, %v1328
        %v1330 = vsel %vm1329, 0, %v1328
        %v1331 = vsub.s32 32, %v1330
        %v1332 = vshll.u32 %v1323, %v1330
        %v1333 = vshrl.u32 %v1315, %v1331
        %v1334 = vor.u32 %v1332, %v1333
        %v1335 = vsub.s32 4294967266, %v1330
        %v1336 = vadd.s32 %v1335, 127
        %v1337 = vshll.u32 %v1336, 23
        %v1338 = vor.u32 4788187, %v1337
        %v1339 = vand.u32 2147483647, %v1338
        %v1341 = vcvt.s32.f32 %v1334
        %v1342 = vmul.f32 %v1341, %v1339
        %v1343 = vxor.u32 %v1342, 2147483648
        %v1344 = vsel %vm1261, %v1343, %v1342
        %v1345 = vsub.s32 4, %v1321
        %v1346 = vsel %vm1261, %v1345, %v1321
        %v1347 = vsel %vm1260, %v577, %v1344
        %v1348 = vsel %vm1260, 0, %v1346
        %v1349 = vcosq.f32.pop %v1347
        %v1350 = vsinq.f32.pop %v1347
        %vm1351 = vweird.f32 %v577
        %v1352 = vadd.s32 %v1348, 3
        %v1353 = vand.u32 %v1352, 3
        %vm1354 = vcmp.lt.s32.totalorder %v1353, 2
        %vm1355 = vcmp.eq.s32.totalorder %v1353, 0
        %v1356 = vxor.u32 %v1350, 2147483648
        %v1357 = vsel %vm1355, %v1349, %v1356
        %vm1358 = vcmp.eq.s32.totalorder %v1353, 2
        %v1359 = vxor.u32 %v1349, 2147483648
        %v1360 = vsel %vm1358, %v1359, %v1350
        %v1361 = vsel %vm1354, %v1357, %v1360
        %v1362 = vsel %vm1351, nan, %v1361
        %v1363 = vand.u32 2147483647, %v578
        %vm1364 = vcmp.le.f32.partialorder %v1363, 0.7853982
        %vm1365 = vcmp.lt.s32.totalorder %v578, 0
        %v1366 = vand.u32 %v578, 2139095040
        %v1367 = vshrl.u32 %v1366, 23
        %v1368 = vsub.s32 %v1367, 127
        %v1369 = vand.u32 2147483647, %v578
        %v1370 = vand.u32 %v1369, 8388607
        %v1371 = vor.u32 %v1370, 8388608
        %v1372 = vsub.s32 0, %v1371
        %v1373 = vadd.s32 %v1368, 1
        %vm1374 = vcmp.gt.s32.totalorder %v1373, 0
        %v1375 = vsel %vm1374, %v1373, 0
        %v1376 = vshrl.u32 %v1375, 5
        %v1377 = vand.u32 %v1375, 31
        %v1378 = vsub.s32 32, %v1377
        %v1379 = vshrl.u32 683565275, %v1378
        %v1380 = vshll.u32 683565275, %v1377
        %v1381 = vshrl.u32 2475754826, %v1378
        %v1382 = vor.u32 %v1380, %v1381
        %v1383 = vshll.u32 2475754826, %v1377
        %v1384 = vshrl.u32 2131351028, %v1378
        %v1385 = vor.u32 %v1383, %v1384
        %v1386 = vshll.u32 2131351028, %v1377
        %v1387 = vshrl.u32 2102212464, %v1378
        %v1388 = vor.u32 %v1386, %v1387
        %v1389 = vshll.u32 2102212464, %v1377
        %v1390 = vshrl.u32 920167782, %v1378
        %v1391 = vor.u32 %v1389, %v1390
        %v1392 = vshll.u32 920167782, %v1377
        %v1393 = vshrl.u32 1326507024, %v1378
        %v1394 = vor.u32 %v1392, %v1393
        %vm1395 = vcmp.lt.s32.totalorder %v1376, 1
        %vm1396 = vcmp.lt.s32.totalorder %v1376, 2
        %vm1397 = vcmp.lt.s32.totalorder %v1376, 3
        %vm1398 = vcmp.lt.s32.totalorder %v1376, 4
        %v1399 = vsel %vm1395, %v1379, %v1382
        %v1400 = vsel %vm1398, %v1388, 2102212464
        %v1401 = vsel %vm1397, %v1385, %v1400
        %v1402 = vsel %vm1396, %v1399, %v1401
        %v1403 = vsel %vm1395, %v1382, %v1385
        %v1404 = vsel %vm1398, %v1391, 920167782
        %v1405 = vsel %vm1397, %v1388, %v1404
        %v1406 = vsel %vm1396, %v1403, %v1405
        %v1407 = vsel %vm1395, %v1385, %v1388
        %v1408 = vsel %vm1398, %v1394, 1326507024
        %v1409 = vsel %vm1397, %v1391, %v1408
        %v1410 = vsel %vm1396, %v1407, %v1409
        %v1411 = vshll.u32 %v1371, 8
        %v1412 = vmul.u32.u64.compose %v1411, %v1410
        %v1413 = vextract.low.u32 %v1412
        %v1414 = vextract.high.u32 %v1412
        %v1415 = vmul.u32.u64.compose %v1411, %v1406
        %v1416 = vextract.low.u32 %v1415
        %v1417 = vextract.high.u32 %v1415
        %v1418 = vmul.u32 %v1411, %v1402
        %v1419 = vadd.s32 %v1414, %v1416
        %vm1420 = vc.u32 %v1414, %v1416
        %v1421 = vadd.s32 %v1417, 1
        %v1422 = vsel %vm1420, %v1421, %v1417
        %v1423 = vadd.s32 %v1418, %v1422
        %v1424 = vadd.s32 %v1423, 536870912
        %v1425 = vshrl.u32 %v1424, 30
        %v1426 = vshll.u32 %v1425, 30
        %v1427 = vsub.s32 %v1423, %v1426
        %vm1428 = vcmp.lt.s32.totalorder %v1427, 0
        %v1429 = vsub.s32 0, %v1427
        %v1430 = vsel %vm1428, %v1429, %v1427
        %v1431 = vclz %v1430
        %v1432 = vsub.s32 %v1431, 2
        %vm1433 = vcmp.gt.s32.totalorder 0, %v1432
        %v1434 = vsel %vm1433, 0, %v1432
        %v1435 = vsub.s32 32, %v1434
        %v1436 = vshll.u32 %v1427, %v1434
        %v1437 = vshrl.u32 %v1419, %v1435
        %v1438 = vor.u32 %v1436, %v1437
        %v1439 = vsub.s32 4294967266, %v1434
        %v1440 = vadd.s32 %v1439, 127
        %v1441 = vshll.u32 %v1440, 23
        %v1442 = vor.u32 4788187, %v1441
        %v1443 = vand.u32 2147483647, %v1442
        %v1445 = vcvt.s32.f32 %v1438
        %v1446 = vmul.f32 %v1445, %v1443
        %v1447 = vxor.u32 %v1446, 2147483648
        %v1448 = vsel %vm1365, %v1447, %v1446
        %v1449 = vsub.s32 4, %v1425
        %v1450 = vsel %vm1365, %v1449, %v1425
        %v1451 = vsel %vm1364, %v578, %v1448
        %v1452 = vsel %vm1364, 0, %v1450
        %v1453 = vcosq.f32.pop %v1451
        %v1454 = vsinq.f32.pop %v1451
        %vm1455 = vweird.f32 %v578
        %v1456 = vadd.s32 %v1452, 3
        %v1457 = vand.u32 %v1456, 3
        %vm1458 = vcmp.lt.s32.totalorder %v1457, 2
        %vm1459 = vcmp.eq.s32.totalorder %v1457, 0
        %v1460 = vxor.u32 %v1454, 2147483648
        %v1461 = vsel %vm1459, %v1453, %v1460
        %vm1462 = vcmp.eq.s32.totalorder %v1457, 2
        %v1463 = vxor.u32 %v1453, 2147483648
        %v1464 = vsel %vm1462, %v1463, %v1454
        %v1465 = vsel %vm1458, %v1461, %v1464
        %v1466 = vsel %vm1455, nan, %v1465
        %v1467 = vand.u32 2147483647, %v579
        %vm1468 = vcmp.le.f32.partialorder %v1467, 0.7853982
        %vm1469 = vcmp.lt.s32.totalorder %v579, 0
        %v1470 = vand.u32 %v579, 2139095040
        %v1471 = vshrl.u32 %v1470, 23
        %v1472 = vsub.s32 %v1471, 127
        %v1473 = vand.u32 2147483647, %v579
        %v1474 = vand.u32 %v1473, 8388607
        %v1475 = vor.u32 %v1474, 8388608
        %v1476 = vsub.s32 0, %v1475
        %v1477 = vadd.s32 %v1472, 1
        %vm1478 = vcmp.gt.s32.totalorder %v1477, 0
        %v1479 = vsel %vm1478, %v1477, 0
        %v1480 = vshrl.u32 %v1479, 5
        %v1481 = vand.u32 %v1479, 31
        %v1482 = vsub.s32 32, %v1481
        %v1483 = vshrl.u32 683565275, %v1482
        %v1484 = vshll.u32 683565275, %v1481
        %v1485 = vshrl.u32 2475754826, %v1482
        %v1486 = vor.u32 %v1484, %v1485
        %v1487 = vshll.u32 2475754826, %v1481
        %v1488 = vshrl.u32 2131351028, %v1482
        %v1489 = vor.u32 %v1487, %v1488
        %v1490 = vshll.u32 2131351028, %v1481
        %v1491 = vshrl.u32 2102212464, %v1482
        %v1492 = vor.u32 %v1490, %v1491
        %v1493 = vshll.u32 2102212464, %v1481
        %v1494 = vshrl.u32 920167782, %v1482
        %v1495 = vor.u32 %v1493, %v1494
        %v1496 = vshll.u32 920167782, %v1481
        %v1497 = vshrl.u32 1326507024, %v1482
        %v1498 = vor.u32 %v1496, %v1497
        %vm1499 = vcmp.lt.s32.totalorder %v1480, 1
        %vm1500 = vcmp.lt.s32.totalorder %v1480, 2
        %vm1501 = vcmp.lt.s32.totalorder %v1480, 3
        %vm1502 = vcmp.lt.s32.totalorder %v1480, 4
        %v1503 = vsel %vm1499, %v1483, %v1486
        %v1504 = vsel %vm1502, %v1492, 2102212464
        %v1505 = vsel %vm1501, %v1489, %v1504
        %v1506 = vsel %vm1500, %v1503, %v1505
        %v1507 = vsel %vm1499, %v1486, %v1489
        %v1508 = vsel %vm1502, %v1495, 920167782
        %v1509 = vsel %vm1501, %v1492, %v1508
        %v1510 = vsel %vm1500, %v1507, %v1509
        %v1511 = vsel %vm1499, %v1489, %v1492
        %v1512 = vsel %vm1502, %v1498, 1326507024
        %v1513 = vsel %vm1501, %v1495, %v1512
        %v1514 = vsel %vm1500, %v1511, %v1513
        %v1515 = vshll.u32 %v1475, 8
        %v1516 = vmul.u32.u64.compose %v1515, %v1514
        %v1517 = vextract.low.u32 %v1516
        %v1518 = vextract.high.u32 %v1516
        %v1519 = vmul.u32.u64.compose %v1515, %v1510
        %v1520 = vextract.low.u32 %v1519
        %v1521 = vextract.high.u32 %v1519
        %v1522 = vmul.u32 %v1515, %v1506
        %v1523 = vadd.s32 %v1518, %v1520
        %vm1524 = vc.u32 %v1518, %v1520
        %v1525 = vadd.s32 %v1521, 1
        %v1526 = vsel %vm1524, %v1525, %v1521
        %v1527 = vadd.s32 %v1522, %v1526
        %v1528 = vadd.s32 %v1527, 536870912
        %v1529 = vshrl.u32 %v1528, 30
        %v1530 = vshll.u32 %v1529, 30
        %v1531 = vsub.s32 %v1527, %v1530
        %vm1532 = vcmp.lt.s32.totalorder %v1531, 0
        %v1533 = vsub.s32 0, %v1531
        %v1534 = vsel %vm1532, %v1533, %v1531
        %v1535 = vclz %v1534
        %v1536 = vsub.s32 %v1535, 2
        %vm1537 = vcmp.gt.s32.totalorder 0, %v1536
        %v1538 = vsel %vm1537, 0, %v1536
        %v1539 = vsub.s32 32, %v1538
        %v1540 = vshll.u32 %v1531, %v1538
        %v1541 = vshrl.u32 %v1523, %v1539
        %v1542 = vor.u32 %v1540, %v1541
        %v1543 = vsub.s32 4294967266, %v1538
        %v1544 = vadd.s32 %v1543, 127
        %v1545 = vshll.u32 %v1544, 23
        %v1546 = vor.u32 4788187, %v1545
        %v1547 = vand.u32 2147483647, %v1546
        %v1549 = vcvt.s32.f32 %v1542
        %v1550 = vmul.f32 %v1549, %v1547
        %v1551 = vxor.u32 %v1550, 2147483648
        %v1552 = vsel %vm1469, %v1551, %v1550
        %v1553 = vsub.s32 4, %v1529
        %v1554 = vsel %vm1469, %v1553, %v1529
        %v1555 = vsel %vm1468, %v579, %v1552
        %v1556 = vsel %vm1468, 0, %v1554
        %v1557 = vcosq.f32.pop %v1555
        %v1558 = vsinq.f32.pop %v1555
        %vm1559 = vweird.f32 %v579
        %v1560 = vadd.s32 %v1556, 3
        %v1561 = vand.u32 %v1560, 3
        %vm1562 = vcmp.lt.s32.totalorder %v1561, 2
        %vm1563 = vcmp.eq.s32.totalorder %v1561, 0
        %v1564 = vxor.u32 %v1558, 2147483648
        %v1565 = vsel %vm1563, %v1557, %v1564
        %vm1566 = vcmp.eq.s32.totalorder %v1561, 2
        %v1567 = vxor.u32 %v1557, 2147483648
        %v1568 = vsel %vm1566, %v1567, %v1558
        %v1569 = vsel %vm1562, %v1565, %v1568
        %v1570 = vsel %vm1559, nan, %v1569
        %v1571 = vand.u32 2147483647, %v580
        %vm1572 = vcmp.le.f32.partialorder %v1571, 0.7853982
        %vm1573 = vcmp.lt.s32.totalorder %v580, 0
        %v1574 = vand.u32 %v580, 2139095040
        %v1575 = vshrl.u32 %v1574, 23
        %v1576 = vsub.s32 %v1575, 127
        %v1577 = vand.u32 2147483647, %v580
        %v1578 = vand.u32 %v1577, 8388607
        %v1579 = vor.u32 %v1578, 8388608
        %v1580 = vsub.s32 0, %v1579
        %v1581 = vadd.s32 %v1576, 1
        %vm1582 = vcmp.gt.s32.totalorder %v1581, 0
        %v1583 = vsel %vm1582, %v1581, 0
        %v1584 = vshrl.u32 %v1583, 5
        %v1585 = vand.u32 %v1583, 31
        %v1586 = vsub.s32 32, %v1585
        %v1587 = vshrl.u32 683565275, %v1586
        %v1588 = vshll.u32 683565275, %v1585
        %v1589 = vshrl.u32 2475754826, %v1586
        %v1590 = vor.u32 %v1588, %v1589
        %v1591 = vshll.u32 2475754826, %v1585
        %v1592 = vshrl.u32 2131351028, %v1586
        %v1593 = vor.u32 %v1591, %v1592
        %v1594 = vshll.u32 2131351028, %v1585
        %v1595 = vshrl.u32 2102212464, %v1586
        %v1596 = vor.u32 %v1594, %v1595
        %v1597 = vshll.u32 2102212464, %v1585
        %v1598 = vshrl.u32 920167782, %v1586
        %v1599 = vor.u32 %v1597, %v1598
        %v1600 = vshll.u32 920167782, %v1585
        %v1601 = vshrl.u32 1326507024, %v1586
        %v1602 = vor.u32 %v1600, %v1601
        %vm1603 = vcmp.lt.s32.totalorder %v1584, 1
        %vm1604 = vcmp.lt.s32.totalorder %v1584, 2
        %vm1605 = vcmp.lt.s32.totalorder %v1584, 3
        %vm1606 = vcmp.lt.s32.totalorder %v1584, 4
        %v1607 = vsel %vm1603, %v1587, %v1590
        %v1608 = vsel %vm1606, %v1596, 2102212464
        %v1609 = vsel %vm1605, %v1593, %v1608
        %v1610 = vsel %vm1604, %v1607, %v1609
        %v1611 = vsel %vm1603, %v1590, %v1593
        %v1612 = vsel %vm1606, %v1599, 920167782
        %v1613 = vsel %vm1605, %v1596, %v1612
        %v1614 = vsel %vm1604, %v1611, %v1613
        %v1615 = vsel %vm1603, %v1593, %v1596
        %v1616 = vsel %vm1606, %v1602, 1326507024
        %v1617 = vsel %vm1605, %v1599, %v1616
        %v1618 = vsel %vm1604, %v1615, %v1617
        %v1619 = vshll.u32 %v1579, 8
        %v1620 = vmul.u32.u64.compose %v1619, %v1618
        %v1621 = vextract.low.u32 %v1620
        %v1622 = vextract.high.u32 %v1620
        %v1623 = vmul.u32.u64.compose %v1619, %v1614
        %v1624 = vextract.low.u32 %v1623
        %v1625 = vextract.high.u32 %v1623
        %v1626 = vmul.u32 %v1619, %v1610
        %v1627 = vadd.s32 %v1622, %v1624
        %vm1628 = vc.u32 %v1622, %v1624
        %v1629 = vadd.s32 %v1625, 1
        %v1630 = vsel %vm1628, %v1629, %v1625
        %v1631 = vadd.s32 %v1626, %v1630
        %v1632 = vadd.s32 %v1631, 536870912
        %v1633 = vshrl.u32 %v1632, 30
        %v1634 = vshll.u32 %v1633, 30
        %v1635 = vsub.s32 %v1631, %v1634
        %vm1636 = vcmp.lt.s32.totalorder %v1635, 0
        %v1637 = vsub.s32 0, %v1635
        %v1638 = vsel %vm1636, %v1637, %v1635
        %v1639 = vclz %v1638
        %v1640 = vsub.s32 %v1639, 2
        %vm1641 = vcmp.gt.s32.totalorder 0, %v1640
        %v1642 = vsel %vm1641, 0, %v1640
        %v1643 = vsub.s32 32, %v1642
        %v1644 = vshll.u32 %v1635, %v1642
        %v1645 = vshrl.u32 %v1627, %v1643
        %v1646 = vor.u32 %v1644, %v1645
        %v1647 = vsub.s32 4294967266, %v1642
        %v1648 = vadd.s32 %v1647, 127
        %v1649 = vshll.u32 %v1648, 23
        %v1650 = vor.u32 4788187, %v1649
        %v1651 = vand.u32 2147483647, %v1650
        %v1653 = vcvt.s32.f32 %v1646
        %v1654 = vmul.f32 %v1653, %v1651
        %v1655 = vxor.u32 %v1654, 2147483648
        %v1656 = vsel %vm1573, %v1655, %v1654
        %v1657 = vsub.s32 4, %v1633
        %v1658 = vsel %vm1573, %v1657, %v1633
        %v1659 = vsel %vm1572, %v580, %v1656
        %v1660 = vsel %vm1572, 0, %v1658
        %v1661 = vcosq.f32.pop %v1659
        %v1662 = vsinq.f32.pop %v1659
        %vm1663 = vweird.f32 %v580
        %v1664 = vadd.s32 %v1660, 3
        %v1665 = vand.u32 %v1664, 3
        %vm1666 = vcmp.lt.s32.totalorder %v1665, 2
        %vm1667 = vcmp.eq.s32.totalorder %v1665, 0
        %v1668 = vxor.u32 %v1662, 2147483648
        %v1669 = vsel %vm1667, %v1661, %v1668
        %vm1670 = vcmp.eq.s32.totalorder %v1665, 2
        %v1671 = vxor.u32 %v1661, 2147483648
        %v1672 = vsel %vm1670, %v1671, %v1662
        %v1673 = vsel %vm1666, %v1669, %v1672
        %v1674 = vsel %vm1663, nan, %v1673
        %v1675 = vand.u32 2147483647, %v581
        %vm1676 = vcmp.le.f32.partialorder %v1675, 0.7853982
        %vm1677 = vcmp.lt.s32.totalorder %v581, 0
        %v1678 = vand.u32 %v581, 2139095040
        %v1679 = vshrl.u32 %v1678, 23
        %v1680 = vsub.s32 %v1679, 127
        %v1681 = vand.u32 2147483647, %v581
        %v1682 = vand.u32 %v1681, 8388607
        %v1683 = vor.u32 %v1682, 8388608
        %v1684 = vsub.s32 0, %v1683
        %v1685 = vadd.s32 %v1680, 1
        %vm1686 = vcmp.gt.s32.totalorder %v1685, 0
        %v1687 = vsel %vm1686, %v1685, 0
        %v1688 = vshrl.u32 %v1687, 5
        %v1689 = vand.u32 %v1687, 31
        %v1690 = vsub.s32 32, %v1689
        %v1691 = vshrl.u32 683565275, %v1690
        %v1692 = vshll.u32 683565275, %v1689
        %v1693 = vshrl.u32 2475754826, %v1690
        %v1694 = vor.u32 %v1692, %v1693
        %v1695 = vshll.u32 2475754826, %v1689
        %v1696 = vshrl.u32 2131351028, %v1690
        %v1697 = vor.u32 %v1695, %v1696
        %v1698 = vshll.u32 2131351028, %v1689
        %v1699 = vshrl.u32 2102212464, %v1690
        %v1700 = vor.u32 %v1698, %v1699
        %v1701 = vshll.u32 2102212464, %v1689
        %v1702 = vshrl.u32 920167782, %v1690
        %v1703 = vor.u32 %v1701, %v1702
        %v1704 = vshll.u32 920167782, %v1689
        %v1705 = vshrl.u32 1326507024, %v1690
        %v1706 = vor.u32 %v1704, %v1705
        %vm1707 = vcmp.lt.s32.totalorder %v1688, 1
        %vm1708 = vcmp.lt.s32.totalorder %v1688, 2
        %vm1709 = vcmp.lt.s32.totalorder %v1688, 3
        %vm1710 = vcmp.lt.s32.totalorder %v1688, 4
        %v1711 = vsel %vm1707, %v1691, %v1694
        %v1712 = vsel %vm1710, %v1700, 2102212464
        %v1713 = vsel %vm1709, %v1697, %v1712
        %v1714 = vsel %vm1708, %v1711, %v1713
        %v1715 = vsel %vm1707, %v1694, %v1697
        %v1716 = vsel %vm1710, %v1703, 920167782
        %v1717 = vsel %vm1709, %v1700, %v1716
        %v1718 = vsel %vm1708, %v1715, %v1717
        %v1719 = vsel %vm1707, %v1697, %v1700
        %v1720 = vsel %vm1710, %v1706, 1326507024
        %v1721 = vsel %vm1709, %v1703, %v1720
        %v1722 = vsel %vm1708, %v1719, %v1721
        %v1723 = vshll.u32 %v1683, 8
        %v1724 = vmul.u32.u64.compose %v1723, %v1722
        %v1725 = vextract.low.u32 %v1724
        %v1726 = vextract.high.u32 %v1724
        %v1727 = vmul.u32.u64.compose %v1723, %v1718
        %v1728 = vextract.low.u32 %v1727
        %v1729 = vextract.high.u32 %v1727
        %v1730 = vmul.u32 %v1723, %v1714
        %v1731 = vadd.s32 %v1726, %v1728
        %vm1732 = vc.u32 %v1726, %v1728
        %v1733 = vadd.s32 %v1729, 1
        %v1734 = vsel %vm1732, %v1733, %v1729
        %v1735 = vadd.s32 %v1730, %v1734
        %v1736 = vadd.s32 %v1735, 536870912
        %v1737 = vshrl.u32 %v1736, 30
        %v1738 = vshll.u32 %v1737, 30
        %v1739 = vsub.s32 %v1735, %v1738
        %vm1740 = vcmp.lt.s32.totalorder %v1739, 0
        %v1741 = vsub.s32 0, %v1739
        %v1742 = vsel %vm1740, %v1741, %v1739
        %v1743 = vclz %v1742
        %v1744 = vsub.s32 %v1743, 2
        %vm1745 = vcmp.gt.s32.totalorder 0, %v1744
        %v1746 = vsel %vm1745, 0, %v1744
        %v1747 = vsub.s32 32, %v1746
        %v1748 = vshll.u32 %v1739, %v1746
        %v1749 = vshrl.u32 %v1731, %v1747
        %v1750 = vor.u32 %v1748, %v1749
        %v1751 = vsub.s32 4294967266, %v1746
        %v1752 = vadd.s32 %v1751, 127
        %v1753 = vshll.u32 %v1752, 23
        %v1754 = vor.u32 4788187, %v1753
        %v1755 = vand.u32 2147483647, %v1754
        %v1757 = vcvt.s32.f32 %v1750
        %v1758 = vmul.f32 %v1757, %v1755
        %v1759 = vxor.u32 %v1758, 2147483648
        %v1760 = vsel %vm1677, %v1759, %v1758
        %v1761 = vsub.s32 4, %v1737
        %v1762 = vsel %vm1677, %v1761, %v1737
        %v1763 = vsel %vm1676, %v581, %v1760
        %v1764 = vsel %vm1676, 0, %v1762
        %v1765 = vcosq.f32.pop %v1763
        %v1766 = vsinq.f32.pop %v1763
        %vm1767 = vweird.f32 %v581
        %v1768 = vadd.s32 %v1764, 3
        %v1769 = vand.u32 %v1768, 3
        %vm1770 = vcmp.lt.s32.totalorder %v1769, 2
        %vm1771 = vcmp.eq.s32.totalorder %v1769, 0
        %v1772 = vxor.u32 %v1766, 2147483648
        %v1773 = vsel %vm1771, %v1765, %v1772
        %vm1774 = vcmp.eq.s32.totalorder %v1769, 2
        %v1775 = vxor.u32 %v1765, 2147483648
        %v1776 = vsel %vm1774, %v1775, %v1766
        %v1777 = vsel %vm1770, %v1773, %v1776
        %v1778 = vsel %vm1767, nan, %v1777
        %v1779 = vand.u32 2147483647, %v582
        %vm1780 = vcmp.le.f32.partialorder %v1779, 0.7853982
        %vm1781 = vcmp.lt.s32.totalorder %v582, 0
        %v1782 = vand.u32 %v582, 2139095040
        %v1783 = vshrl.u32 %v1782, 23
        %v1784 = vsub.s32 %v1783, 127
        %v1785 = vand.u32 2147483647, %v582
        %v1786 = vand.u32 %v1785, 8388607
        %v1787 = vor.u32 %v1786, 8388608
        %v1788 = vsub.s32 0, %v1787
        %v1789 = vadd.s32 %v1784, 1
        %vm1790 = vcmp.gt.s32.totalorder %v1789, 0
        %v1791 = vsel %vm1790, %v1789, 0
        %v1792 = vshrl.u32 %v1791, 5
        %v1793 = vand.u32 %v1791, 31
        %v1794 = vsub.s32 32, %v1793
        %v1795 = vshrl.u32 683565275, %v1794
        %v1796 = vshll.u32 683565275, %v1793
        %v1797 = vshrl.u32 2475754826, %v1794
        %v1798 = vor.u32 %v1796, %v1797
        %v1799 = vshll.u32 2475754826, %v1793
        %v1800 = vshrl.u32 2131351028, %v1794
        %v1801 = vor.u32 %v1799, %v1800
        %v1802 = vshll.u32 2131351028, %v1793
        %v1803 = vshrl.u32 2102212464, %v1794
        %v1804 = vor.u32 %v1802, %v1803
        %v1805 = vshll.u32 2102212464, %v1793
        %v1806 = vshrl.u32 920167782, %v1794
        %v1807 = vor.u32 %v1805, %v1806
        %v1808 = vshll.u32 920167782, %v1793
        %v1809 = vshrl.u32 1326507024, %v1794
        %v1810 = vor.u32 %v1808, %v1809
        %vm1811 = vcmp.lt.s32.totalorder %v1792, 1
        %vm1812 = vcmp.lt.s32.totalorder %v1792, 2
        %vm1813 = vcmp.lt.s32.totalorder %v1792, 3
        %vm1814 = vcmp.lt.s32.totalorder %v1792, 4
        %v1815 = vsel %vm1811, %v1795, %v1798
        %v1816 = vsel %vm1814, %v1804, 2102212464
        %v1817 = vsel %vm1813, %v1801, %v1816
        %v1818 = vsel %vm1812, %v1815, %v1817
        %v1819 = vsel %vm1811, %v1798, %v1801
        %v1820 = vsel %vm1814, %v1807, 920167782
        %v1821 = vsel %vm1813, %v1804, %v1820
        %v1822 = vsel %vm1812, %v1819, %v1821
        %v1823 = vsel %vm1811, %v1801, %v1804
        %v1824 = vsel %vm1814, %v1810, 1326507024
        %v1825 = vsel %vm1813, %v1807, %v1824
        %v1826 = vsel %vm1812, %v1823, %v1825
        %v1827 = vshll.u32 %v1787, 8
        %v1828 = vmul.u32.u64.compose %v1827, %v1826
        %v1829 = vextract.low.u32 %v1828
        %v1830 = vextract.high.u32 %v1828
        %v1831 = vmul.u32.u64.compose %v1827, %v1822
        %v1832 = vextract.low.u32 %v1831
        %v1833 = vextract.high.u32 %v1831
        %v1834 = vmul.u32 %v1827, %v1818
        %v1835 = vadd.s32 %v1830, %v1832
        %vm1836 = vc.u32 %v1830, %v1832
        %v1837 = vadd.s32 %v1833, 1
        %v1838 = vsel %vm1836, %v1837, %v1833
        %v1839 = vadd.s32 %v1834, %v1838
        %v1840 = vadd.s32 %v1839, 536870912
        %v1841 = vshrl.u32 %v1840, 30
        %v1842 = vshll.u32 %v1841, 30
        %v1843 = vsub.s32 %v1839, %v1842
        %vm1844 = vcmp.lt.s32.totalorder %v1843, 0
        %v1845 = vsub.s32 0, %v1843
        %v1846 = vsel %vm1844, %v1845, %v1843
        %v1847 = vclz %v1846
        %v1848 = vsub.s32 %v1847, 2
        %vm1849 = vcmp.gt.s32.totalorder 0, %v1848
        %v1850 = vsel %vm1849, 0, %v1848
        %v1851 = vsub.s32 32, %v1850
        %v1852 = vshll.u32 %v1843, %v1850
        %v1853 = vshrl.u32 %v1835, %v1851
        %v1854 = vor.u32 %v1852, %v1853
        %v1855 = vsub.s32 4294967266, %v1850
        %v1856 = vadd.s32 %v1855, 127
        %v1857 = vshll.u32 %v1856, 23
        %v1858 = vor.u32 4788187, %v1857
        %v1859 = vand.u32 2147483647, %v1858
        %v1861 = vcvt.s32.f32 %v1854
        %v1862 = vmul.f32 %v1861, %v1859
        %v1863 = vxor.u32 %v1862, 2147483648
        %v1864 = vsel %vm1781, %v1863, %v1862
        %v1865 = vsub.s32 4, %v1841
        %v1866 = vsel %vm1781, %v1865, %v1841
        %v1867 = vsel %vm1780, %v582, %v1864
        %v1868 = vsel %vm1780, 0, %v1866
        %v1869 = vcosq.f32.pop %v1867
        %v1870 = vsinq.f32.pop %v1867
        %vm1871 = vweird.f32 %v582
        %v1872 = vadd.s32 %v1868, 3
        %v1873 = vand.u32 %v1872, 3
        %vm1874 = vcmp.lt.s32.totalorder %v1873, 2
        %vm1875 = vcmp.eq.s32.totalorder %v1873, 0
        %v1876 = vxor.u32 %v1870, 2147483648
        %v1877 = vsel %vm1875, %v1869, %v1876
        %vm1878 = vcmp.eq.s32.totalorder %v1873, 2
        %v1879 = vxor.u32 %v1869, 2147483648
        %v1880 = vsel %vm1878, %v1879, %v1870
        %v1881 = vsel %vm1874, %v1877, %v1880
        %v1882 = vsel %vm1871, nan, %v1881
        %v1883 = vand.u32 2147483647, %v583
        %vm1884 = vcmp.le.f32.partialorder %v1883, 0.7853982
        %vm1885 = vcmp.lt.s32.totalorder %v583, 0
        %v1886 = vand.u32 %v583, 2139095040
        %v1887 = vshrl.u32 %v1886, 23
        %v1888 = vsub.s32 %v1887, 127
        %v1889 = vand.u32 2147483647, %v583
        %v1890 = vand.u32 %v1889, 8388607
        %v1891 = vor.u32 %v1890, 8388608
        %v1892 = vsub.s32 0, %v1891
        %v1893 = vadd.s32 %v1888, 1
        %vm1894 = vcmp.gt.s32.totalorder %v1893, 0
        %v1895 = vsel %vm1894, %v1893, 0
        %v1896 = vshrl.u32 %v1895, 5
        %v1897 = vand.u32 %v1895, 31
        %v1898 = vsub.s32 32, %v1897
        %v1899 = vshrl.u32 683565275, %v1898
        %v1900 = vshll.u32 683565275, %v1897
        %v1901 = vshrl.u32 2475754826, %v1898
        %v1902 = vor.u32 %v1900, %v1901
        %v1903 = vshll.u32 2475754826, %v1897
        %v1904 = vshrl.u32 2131351028, %v1898
        %v1905 = vor.u32 %v1903, %v1904
        %v1906 = vshll.u32 2131351028, %v1897
        %v1907 = vshrl.u32 2102212464, %v1898
        %v1908 = vor.u32 %v1906, %v1907
        %v1909 = vshll.u32 2102212464, %v1897
        %v1910 = vshrl.u32 920167782, %v1898
        %v1911 = vor.u32 %v1909, %v1910
        %v1912 = vshll.u32 920167782, %v1897
        %v1913 = vshrl.u32 1326507024, %v1898
        %v1914 = vor.u32 %v1912, %v1913
        %vm1915 = vcmp.lt.s32.totalorder %v1896, 1
        %vm1916 = vcmp.lt.s32.totalorder %v1896, 2
        %vm1917 = vcmp.lt.s32.totalorder %v1896, 3
        %vm1918 = vcmp.lt.s32.totalorder %v1896, 4
        %v1919 = vsel %vm1915, %v1899, %v1902
        %v1920 = vsel %vm1918, %v1908, 2102212464
        %v1921 = vsel %vm1917, %v1905, %v1920
        %v1922 = vsel %vm1916, %v1919, %v1921
        %v1923 = vsel %vm1915, %v1902, %v1905
        %v1924 = vsel %vm1918, %v1911, 920167782
        %v1925 = vsel %vm1917, %v1908, %v1924
        %v1926 = vsel %vm1916, %v1923, %v1925
        %v1927 = vsel %vm1915, %v1905, %v1908
        %v1928 = vsel %vm1918, %v1914, 1326507024
        %v1929 = vsel %vm1917, %v1911, %v1928
        %v1930 = vsel %vm1916, %v1927, %v1929
        %v1931 = vshll.u32 %v1891, 8
        %v1932 = vmul.u32.u64.compose %v1931, %v1930
        %v1933 = vextract.low.u32 %v1932
        %v1934 = vextract.high.u32 %v1932
        %v1935 = vmul.u32.u64.compose %v1931, %v1926
        %v1936 = vextract.low.u32 %v1935
        %v1937 = vextract.high.u32 %v1935
        %v1938 = vmul.u32 %v1931, %v1922
        %v1939 = vadd.s32 %v1934, %v1936
        %vm1940 = vc.u32 %v1934, %v1936
        %v1941 = vadd.s32 %v1937, 1
        %v1942 = vsel %vm1940, %v1941, %v1937
        %v1943 = vadd.s32 %v1938, %v1942
        %v1944 = vadd.s32 %v1943, 536870912
        %v1945 = vshrl.u32 %v1944, 30
        %v1946 = vshll.u32 %v1945, 30
        %v1947 = vsub.s32 %v1943, %v1946
        %vm1948 = vcmp.lt.s32.totalorder %v1947, 0
        %v1949 = vsub.s32 0, %v1947
        %v1950 = vsel %vm1948, %v1949, %v1947
        %v1951 = vclz %v1950
        %v1952 = vsub.s32 %v1951, 2
        %vm1953 = vcmp.gt.s32.totalorder 0, %v1952
        %v1954 = vsel %vm1953, 0, %v1952
        %v1955 = vsub.s32 32, %v1954
        %v1956 = vshll.u32 %v1947, %v1954
        %v1957 = vshrl.u32 %v1939, %v1955
        %v1958 = vor.u32 %v1956, %v1957
        %v1959 = vsub.s32 4294967266, %v1954
        %v1960 = vadd.s32 %v1959, 127
        %v1961 = vshll.u32 %v1960, 23
        %v1962 = vor.u32 4788187, %v1961
        %v1963 = vand.u32 2147483647, %v1962
        %v1965 = vcvt.s32.f32 %v1958
        %v1966 = vmul.f32 %v1965, %v1963
        %v1967 = vxor.u32 %v1966, 2147483648
        %v1968 = vsel %vm1885, %v1967, %v1966
        %v1969 = vsub.s32 4, %v1945
        %v1970 = vsel %vm1885, %v1969, %v1945
        %v1971 = vsel %vm1884, %v583, %v1968
        %v1972 = vsel %vm1884, 0, %v1970
        %v1973 = vcosq.f32.pop %v1971
        %v1974 = vsinq.f32.pop %v1971
        %vm1975 = vweird.f32 %v583
        %v1976 = vadd.s32 %v1972, 3
        %v1977 = vand.u32 %v1976, 3
        %vm1978 = vcmp.lt.s32.totalorder %v1977, 2
        %vm1979 = vcmp.eq.s32.totalorder %v1977, 0
        %v1980 = vxor.u32 %v1974, 2147483648
        %v1981 = vsel %vm1979, %v1973, %v1980
        %vm1982 = vcmp.eq.s32.totalorder %v1977, 2
        %v1983 = vxor.u32 %v1973, 2147483648
        %v1984 = vsel %vm1982, %v1983, %v1974
        %v1985 = vsel %vm1978, %v1981, %v1984
        %v1986 = vsel %vm1975, nan, %v1985
        %v1987 = vand.u32 2147483647, %v584
        %vm1988 = vcmp.le.f32.partialorder %v1987, 0.7853982
        %vm1989 = vcmp.lt.s32.totalorder %v584, 0
        %v1990 = vand.u32 %v584, 2139095040
        %v1991 = vshrl.u32 %v1990, 23
        %v1992 = vsub.s32 %v1991, 127
        %v1993 = vand.u32 2147483647, %v584
        %v1994 = vand.u32 %v1993, 8388607
        %v1995 = vor.u32 %v1994, 8388608
        %v1996 = vsub.s32 0, %v1995
        %v1997 = vadd.s32 %v1992, 1
        %vm1998 = vcmp.gt.s32.totalorder %v1997, 0
        %v1999 = vsel %vm1998, %v1997, 0
        %v2000 = vshrl.u32 %v1999, 5
        %v2001 = vand.u32 %v1999, 31
        %v2002 = vsub.s32 32, %v2001
        %v2003 = vshrl.u32 683565275, %v2002
        %v2004 = vshll.u32 683565275, %v2001
        %v2005 = vshrl.u32 2475754826, %v2002
        %v2006 = vor.u32 %v2004, %v2005
        %v2007 = vshll.u32 2475754826, %v2001
        %v2008 = vshrl.u32 2131351028, %v2002
        %v2009 = vor.u32 %v2007, %v2008
        %v2010 = vshll.u32 2131351028, %v2001
        %v2011 = vshrl.u32 2102212464, %v2002
        %v2012 = vor.u32 %v2010, %v2011
        %v2013 = vshll.u32 2102212464, %v2001
        %v2014 = vshrl.u32 920167782, %v2002
        %v2015 = vor.u32 %v2013, %v2014
        %v2016 = vshll.u32 920167782, %v2001
        %v2017 = vshrl.u32 1326507024, %v2002
        %v2018 = vor.u32 %v2016, %v2017
        %vm2019 = vcmp.lt.s32.totalorder %v2000, 1
        %vm2020 = vcmp.lt.s32.totalorder %v2000, 2
        %vm2021 = vcmp.lt.s32.totalorder %v2000, 3
        %vm2022 = vcmp.lt.s32.totalorder %v2000, 4
        %v2023 = vsel %vm2019, %v2003, %v2006
        %v2024 = vsel %vm2022, %v2012, 2102212464
        %v2025 = vsel %vm2021, %v2009, %v2024
        %v2026 = vsel %vm2020, %v2023, %v2025
        %v2027 = vsel %vm2019, %v2006, %v2009
        %v2028 = vsel %vm2022, %v2015, 920167782
        %v2029 = vsel %vm2021, %v2012, %v2028
        %v2030 = vsel %vm2020, %v2027, %v2029
        %v2031 = vsel %vm2019, %v2009, %v2012
        %v2032 = vsel %vm2022, %v2018, 1326507024
        %v2033 = vsel %vm2021, %v2015, %v2032
        %v2034 = vsel %vm2020, %v2031, %v2033
        %v2035 = vshll.u32 %v1995, 8
        %v2036 = vmul.u32.u64.compose %v2035, %v2034
        %v2037 = vextract.low.u32 %v2036
        %v2038 = vextract.high.u32 %v2036
        %v2039 = vmul.u32.u64.compose %v2035, %v2030
        %v2040 = vextract.low.u32 %v2039
        %v2041 = vextract.high.u32 %v2039
        %v2042 = vmul.u32 %v2035, %v2026
        %v2043 = vadd.s32 %v2038, %v2040
        %vm2044 = vc.u32 %v2038, %v2040
        %v2045 = vadd.s32 %v2041, 1
        %v2046 = vsel %vm2044, %v2045, %v2041
        %v2047 = vadd.s32 %v2042, %v2046
        %v2048 = vadd.s32 %v2047, 536870912
        %v2049 = vshrl.u32 %v2048, 30
        %v2050 = vshll.u32 %v2049, 30
        %v2051 = vsub.s32 %v2047, %v2050
        %vm2052 = vcmp.lt.s32.totalorder %v2051, 0
        %v2053 = vsub.s32 0, %v2051
        %v2054 = vsel %vm2052, %v2053, %v2051
        %v2055 = vclz %v2054
        %v2056 = vsub.s32 %v2055, 2
        %vm2057 = vcmp.gt.s32.totalorder 0, %v2056
        %v2058 = vsel %vm2057, 0, %v2056
        %v2059 = vsub.s32 32, %v2058
        %v2060 = vshll.u32 %v2051, %v2058
        %v2061 = vshrl.u32 %v2043, %v2059
        %v2062 = vor.u32 %v2060, %v2061
        %v2063 = vsub.s32 4294967266, %v2058
        %v2064 = vadd.s32 %v2063, 127
        %v2065 = vshll.u32 %v2064, 23
        %v2066 = vor.u32 4788187, %v2065
        %v2067 = vand.u32 2147483647, %v2066
        %v2069 = vcvt.s32.f32 %v2062
        %v2070 = vmul.f32 %v2069, %v2067
        %v2071 = vxor.u32 %v2070, 2147483648
        %v2072 = vsel %vm1989, %v2071, %v2070
        %v2073 = vsub.s32 4, %v2049
        %v2074 = vsel %vm1989, %v2073, %v2049
        %v2075 = vsel %vm1988, %v584, %v2072
        %v2076 = vsel %vm1988, 0, %v2074
        %v2077 = vcosq.f32.pop %v2075
        %v2078 = vsinq.f32.pop %v2075
        %vm2079 = vweird.f32 %v584
        %v2080 = vadd.s32 %v2076, 3
        %v2081 = vand.u32 %v2080, 3
        %vm2082 = vcmp.lt.s32.totalorder %v2081, 2
        %vm2083 = vcmp.eq.s32.totalorder %v2081, 0
        %v2084 = vxor.u32 %v2078, 2147483648
        %v2085 = vsel %vm2083, %v2077, %v2084
        %vm2086 = vcmp.eq.s32.totalorder %v2081, 2
        %v2087 = vxor.u32 %v2077, 2147483648
        %v2088 = vsel %vm2086, %v2087, %v2078
        %v2089 = vsel %vm2082, %v2085, %v2088
        %v2090 = vsel %vm2079, nan, %v2089
        %v2091 = vand.u32 2147483647, %v585
        %vm2092 = vcmp.le.f32.partialorder %v2091, 0.7853982
        %vm2093 = vcmp.lt.s32.totalorder %v585, 0
        %v2094 = vand.u32 %v585, 2139095040
        %v2095 = vshrl.u32 %v2094, 23
        %v2096 = vsub.s32 %v2095, 127
        %v2097 = vand.u32 2147483647, %v585
        %v2098 = vand.u32 %v2097, 8388607
        %v2099 = vor.u32 %v2098, 8388608
        %v2100 = vsub.s32 0, %v2099
        %v2101 = vadd.s32 %v2096, 1
        %vm2102 = vcmp.gt.s32.totalorder %v2101, 0
        %v2103 = vsel %vm2102, %v2101, 0
        %v2104 = vshrl.u32 %v2103, 5
        %v2105 = vand.u32 %v2103, 31
        %v2106 = vsub.s32 32, %v2105
        %v2107 = vshrl.u32 683565275, %v2106
        %v2108 = vshll.u32 683565275, %v2105
        %v2109 = vshrl.u32 2475754826, %v2106
        %v2110 = vor.u32 %v2108, %v2109
        %v2111 = vshll.u32 2475754826, %v2105
        %v2112 = vshrl.u32 2131351028, %v2106
        %v2113 = vor.u32 %v2111, %v2112
        %v2114 = vshll.u32 2131351028, %v2105
        %v2115 = vshrl.u32 2102212464, %v2106
        %v2116 = vor.u32 %v2114, %v2115
        %v2117 = vshll.u32 2102212464, %v2105
        %v2118 = vshrl.u32 920167782, %v2106
        %v2119 = vor.u32 %v2117, %v2118
        %v2120 = vshll.u32 920167782, %v2105
        %v2121 = vshrl.u32 1326507024, %v2106
        %v2122 = vor.u32 %v2120, %v2121
        %vm2123 = vcmp.lt.s32.totalorder %v2104, 1
        %vm2124 = vcmp.lt.s32.totalorder %v2104, 2
        %vm2125 = vcmp.lt.s32.totalorder %v2104, 3
        %vm2126 = vcmp.lt.s32.totalorder %v2104, 4
        %v2127 = vsel %vm2123, %v2107, %v2110
        %v2128 = vsel %vm2126, %v2116, 2102212464
        %v2129 = vsel %vm2125, %v2113, %v2128
        %v2130 = vsel %vm2124, %v2127, %v2129
        %v2131 = vsel %vm2123, %v2110, %v2113
        %v2132 = vsel %vm2126, %v2119, 920167782
        %v2133 = vsel %vm2125, %v2116, %v2132
        %v2134 = vsel %vm2124, %v2131, %v2133
        %v2135 = vsel %vm2123, %v2113, %v2116
        %v2136 = vsel %vm2126, %v2122, 1326507024
        %v2137 = vsel %vm2125, %v2119, %v2136
        %v2138 = vsel %vm2124, %v2135, %v2137
        %v2139 = vshll.u32 %v2099, 8
        %v2140 = vmul.u32.u64.compose %v2139, %v2138
        %v2141 = vextract.low.u32 %v2140
        %v2142 = vextract.high.u32 %v2140
        %v2143 = vmul.u32.u64.compose %v2139, %v2134
        %v2144 = vextract.low.u32 %v2143
        %v2145 = vextract.high.u32 %v2143
        %v2146 = vmul.u32 %v2139, %v2130
        %v2147 = vadd.s32 %v2142, %v2144
        %vm2148 = vc.u32 %v2142, %v2144
        %v2149 = vadd.s32 %v2145, 1
        %v2150 = vsel %vm2148, %v2149, %v2145
        %v2151 = vadd.s32 %v2146, %v2150
        %v2152 = vadd.s32 %v2151, 536870912
        %v2153 = vshrl.u32 %v2152, 30
        %v2154 = vshll.u32 %v2153, 30
        %v2155 = vsub.s32 %v2151, %v2154
        %vm2156 = vcmp.lt.s32.totalorder %v2155, 0
        %v2157 = vsub.s32 0, %v2155
        %v2158 = vsel %vm2156, %v2157, %v2155
        %v2159 = vclz %v2158
        %v2160 = vsub.s32 %v2159, 2
        %vm2161 = vcmp.gt.s32.totalorder 0, %v2160
        %v2162 = vsel %vm2161, 0, %v2160
        %v2163 = vsub.s32 32, %v2162
        %v2164 = vshll.u32 %v2155, %v2162
        %v2165 = vshrl.u32 %v2147, %v2163
        %v2166 = vor.u32 %v2164, %v2165
        %v2167 = vsub.s32 4294967266, %v2162
        %v2168 = vadd.s32 %v2167, 127
        %v2169 = vshll.u32 %v2168, 23
        %v2170 = vor.u32 4788187, %v2169
        %v2171 = vand.u32 2147483647, %v2170
        %v2173 = vcvt.s32.f32 %v2166
        %v2174 = vmul.f32 %v2173, %v2171
        %v2175 = vxor.u32 %v2174, 2147483648
        %v2176 = vsel %vm2093, %v2175, %v2174
        %v2177 = vsub.s32 4, %v2153
        %v2178 = vsel %vm2093, %v2177, %v2153
        %v2179 = vsel %vm2092, %v585, %v2176
        %v2180 = vsel %vm2092, 0, %v2178
        %v2181 = vcosq.f32.pop %v2179
        %v2182 = vsinq.f32.pop %v2179
        %vm2183 = vweird.f32 %v585
        %v2184 = vadd.s32 %v2180, 3
        %v2185 = vand.u32 %v2184, 3
        %vm2186 = vcmp.lt.s32.totalorder %v2185, 2
        %vm2187 = vcmp.eq.s32.totalorder %v2185, 0
        %v2188 = vxor.u32 %v2182, 2147483648
        %v2189 = vsel %vm2187, %v2181, %v2188
        %vm2190 = vcmp.eq.s32.totalorder %v2185, 2
        %v2191 = vxor.u32 %v2181, 2147483648
        %v2192 = vsel %vm2190, %v2191, %v2182
        %v2193 = vsel %vm2186, %v2189, %v2192
        %v2194 = vsel %vm2183, nan, %v2193
        %v2195 = vand.u32 2147483647, %v586
        %vm2196 = vcmp.le.f32.partialorder %v2195, 0.7853982
        %vm2197 = vcmp.lt.s32.totalorder %v586, 0
        %v2198 = vand.u32 %v586, 2139095040
        %v2199 = vshrl.u32 %v2198, 23
        %v2200 = vsub.s32 %v2199, 127
        %v2201 = vand.u32 2147483647, %v586
        %v2202 = vand.u32 %v2201, 8388607
        %v2203 = vor.u32 %v2202, 8388608
        %v2204 = vsub.s32 0, %v2203
        %v2205 = vadd.s32 %v2200, 1
        %vm2206 = vcmp.gt.s32.totalorder %v2205, 0
        %v2207 = vsel %vm2206, %v2205, 0
        %v2208 = vshrl.u32 %v2207, 5
        %v2209 = vand.u32 %v2207, 31
        %v2210 = vsub.s32 32, %v2209
        %v2211 = vshrl.u32 683565275, %v2210
        %v2212 = vshll.u32 683565275, %v2209
        %v2213 = vshrl.u32 2475754826, %v2210
        %v2214 = vor.u32 %v2212, %v2213
        %v2215 = vshll.u32 2475754826, %v2209
        %v2216 = vshrl.u32 2131351028, %v2210
        %v2217 = vor.u32 %v2215, %v2216
        %v2218 = vshll.u32 2131351028, %v2209
        %v2219 = vshrl.u32 2102212464, %v2210
        %v2220 = vor.u32 %v2218, %v2219
        %v2221 = vshll.u32 2102212464, %v2209
        %v2222 = vshrl.u32 920167782, %v2210
        %v2223 = vor.u32 %v2221, %v2222
        %v2224 = vshll.u32 920167782, %v2209
        %v2225 = vshrl.u32 1326507024, %v2210
        %v2226 = vor.u32 %v2224, %v2225
        %vm2227 = vcmp.lt.s32.totalorder %v2208, 1
        %vm2228 = vcmp.lt.s32.totalorder %v2208, 2
        %vm2229 = vcmp.lt.s32.totalorder %v2208, 3
        %vm2230 = vcmp.lt.s32.totalorder %v2208, 4
        %v2231 = vsel %vm2227, %v2211, %v2214
        %v2232 = vsel %vm2230, %v2220, 2102212464
        %v2233 = vsel %vm2229, %v2217, %v2232
        %v2234 = vsel %vm2228, %v2231, %v2233
        %v2235 = vsel %vm2227, %v2214, %v2217
        %v2236 = vsel %vm2230, %v2223, 920167782
        %v2237 = vsel %vm2229, %v2220, %v2236
        %v2238 = vsel %vm2228, %v2235, %v2237
        %v2239 = vsel %vm2227, %v2217, %v2220
        %v2240 = vsel %vm2230, %v2226, 1326507024
        %v2241 = vsel %vm2229, %v2223, %v2240
        %v2242 = vsel %vm2228, %v2239, %v2241
        %v2243 = vshll.u32 %v2203, 8
        %v2244 = vmul.u32.u64.compose %v2243, %v2242
        %v2245 = vextract.low.u32 %v2244
        %v2246 = vextract.high.u32 %v2244
        %v2247 = vmul.u32.u64.compose %v2243, %v2238
        %v2248 = vextract.low.u32 %v2247
        %v2249 = vextract.high.u32 %v2247
        %v2250 = vmul.u32 %v2243, %v2234
        %v2251 = vadd.s32 %v2246, %v2248
        %vm2252 = vc.u32 %v2246, %v2248
        %v2253 = vadd.s32 %v2249, 1
        %v2254 = vsel %vm2252, %v2253, %v2249
        %v2255 = vadd.s32 %v2250, %v2254
        %v2256 = vadd.s32 %v2255, 536870912
        %v2257 = vshrl.u32 %v2256, 30
        %v2258 = vshll.u32 %v2257, 30
        %v2259 = vsub.s32 %v2255, %v2258
        %vm2260 = vcmp.lt.s32.totalorder %v2259, 0
        %v2261 = vsub.s32 0, %v2259
        %v2262 = vsel %vm2260, %v2261, %v2259
        %v2263 = vclz %v2262
        %v2264 = vsub.s32 %v2263, 2
        %vm2265 = vcmp.gt.s32.totalorder 0, %v2264
        %v2266 = vsel %vm2265, 0, %v2264
        %v2267 = vsub.s32 32, %v2266
        %v2268 = vshll.u32 %v2259, %v2266
        %v2269 = vshrl.u32 %v2251, %v2267
        %v2270 = vor.u32 %v2268, %v2269
        %v2271 = vsub.s32 4294967266, %v2266
        %v2272 = vadd.s32 %v2271, 127
        %v2273 = vshll.u32 %v2272, 23
        %v2274 = vor.u32 4788187, %v2273
        %v2275 = vand.u32 2147483647, %v2274
        %v2277 = vcvt.s32.f32 %v2270
        %v2278 = vmul.f32 %v2277, %v2275
        %v2279 = vxor.u32 %v2278, 2147483648
        %v2280 = vsel %vm2197, %v2279, %v2278
        %v2281 = vsub.s32 4, %v2257
        %v2282 = vsel %vm2197, %v2281, %v2257
        %v2283 = vsel %vm2196, %v586, %v2280
        %v2284 = vsel %vm2196, 0, %v2282
        %v2285 = vcosq.f32.pop %v2283
        %v2286 = vsinq.f32.pop %v2283
        %vm2287 = vweird.f32 %v586
        %v2288 = vadd.s32 %v2284, 3
        %v2289 = vand.u32 %v2288, 3
        %vm2290 = vcmp.lt.s32.totalorder %v2289, 2
        %vm2291 = vcmp.eq.s32.totalorder %v2289, 0
        %v2292 = vxor.u32 %v2286, 2147483648
        %v2293 = vsel %vm2291, %v2285, %v2292
        %vm2294 = vcmp.eq.s32.totalorder %v2289, 2
        %v2295 = vxor.u32 %v2285, 2147483648
        %v2296 = vsel %vm2294, %v2295, %v2286
        %v2297 = vsel %vm2290, %v2293, %v2296
        %v2298 = vsel %vm2287, nan, %v2297
        %v2299 = vand.u32 2147483647, %v587
        %vm2300 = vcmp.le.f32.partialorder %v2299, 0.7853982
        %vm2301 = vcmp.lt.s32.totalorder %v587, 0
        %v2302 = vand.u32 %v587, 2139095040
        %v2303 = vshrl.u32 %v2302, 23
        %v2304 = vsub.s32 %v2303, 127
        %v2305 = vand.u32 2147483647, %v587
        %v2306 = vand.u32 %v2305, 8388607
        %v2307 = vor.u32 %v2306, 8388608
        %v2308 = vsub.s32 0, %v2307
        %v2309 = vadd.s32 %v2304, 1
        %vm2310 = vcmp.gt.s32.totalorder %v2309, 0
        %v2311 = vsel %vm2310, %v2309, 0
        %v2312 = vshrl.u32 %v2311, 5
        %v2313 = vand.u32 %v2311, 31
        %v2314 = vsub.s32 32, %v2313
        %v2315 = vshrl.u32 683565275, %v2314
        %v2316 = vshll.u32 683565275, %v2313
        %v2317 = vshrl.u32 2475754826, %v2314
        %v2318 = vor.u32 %v2316, %v2317
        %v2319 = vshll.u32 2475754826, %v2313
        %v2320 = vshrl.u32 2131351028, %v2314
        %v2321 = vor.u32 %v2319, %v2320
        %v2322 = vshll.u32 2131351028, %v2313
        %v2323 = vshrl.u32 2102212464, %v2314
        %v2324 = vor.u32 %v2322, %v2323
        %v2325 = vshll.u32 2102212464, %v2313
        %v2326 = vshrl.u32 920167782, %v2314
        %v2327 = vor.u32 %v2325, %v2326
        %v2328 = vshll.u32 920167782, %v2313
        %v2329 = vshrl.u32 1326507024, %v2314
        %v2330 = vor.u32 %v2328, %v2329
        %vm2331 = vcmp.lt.s32.totalorder %v2312, 1
        %vm2332 = vcmp.lt.s32.totalorder %v2312, 2
        %vm2333 = vcmp.lt.s32.totalorder %v2312, 3
        %vm2334 = vcmp.lt.s32.totalorder %v2312, 4
        %v2335 = vsel %vm2331, %v2315, %v2318
        %v2336 = vsel %vm2334, %v2324, 2102212464
        %v2337 = vsel %vm2333, %v2321, %v2336
        %v2338 = vsel %vm2332, %v2335, %v2337
        %v2339 = vsel %vm2331, %v2318, %v2321
        %v2340 = vsel %vm2334, %v2327, 920167782
        %v2341 = vsel %vm2333, %v2324, %v2340
        %v2342 = vsel %vm2332, %v2339, %v2341
        %v2343 = vsel %vm2331, %v2321, %v2324
        %v2344 = vsel %vm2334, %v2330, 1326507024
        %v2345 = vsel %vm2333, %v2327, %v2344
        %v2346 = vsel %vm2332, %v2343, %v2345
        %v2347 = vshll.u32 %v2307, 8
        %v2348 = vmul.u32.u64.compose %v2347, %v2346
        %v2349 = vextract.low.u32 %v2348
        %v2350 = vextract.high.u32 %v2348
        %v2351 = vmul.u32.u64.compose %v2347, %v2342
        %v2352 = vextract.low.u32 %v2351
        %v2353 = vextract.high.u32 %v2351
        %v2354 = vmul.u32 %v2347, %v2338
        %v2355 = vadd.s32 %v2350, %v2352
        %vm2356 = vc.u32 %v2350, %v2352
        %v2357 = vadd.s32 %v2353, 1
        %v2358 = vsel %vm2356, %v2357, %v2353
        %v2359 = vadd.s32 %v2354, %v2358
        %v2360 = vadd.s32 %v2359, 536870912
        %v2361 = vshrl.u32 %v2360, 30
        %v2362 = vshll.u32 %v2361, 30
        %v2363 = vsub.s32 %v2359, %v2362
        %vm2364 = vcmp.lt.s32.totalorder %v2363, 0
        %v2365 = vsub.s32 0, %v2363
        %v2366 = vsel %vm2364, %v2365, %v2363
        %v2367 = vclz %v2366
        %v2368 = vsub.s32 %v2367, 2
        %vm2369 = vcmp.gt.s32.totalorder 0, %v2368
        %v2370 = vsel %vm2369, 0, %v2368
        %v2371 = vsub.s32 32, %v2370
        %v2372 = vshll.u32 %v2363, %v2370
        %v2373 = vshrl.u32 %v2355, %v2371
        %v2374 = vor.u32 %v2372, %v2373
        %v2375 = vsub.s32 4294967266, %v2370
        %v2376 = vadd.s32 %v2375, 127
        %v2377 = vshll.u32 %v2376, 23
        %v2378 = vor.u32 4788187, %v2377
        %v2379 = vand.u32 2147483647, %v2378
        %v2381 = vcvt.s32.f32 %v2374
        %v2382 = vmul.f32 %v2381, %v2379
        %v2383 = vxor.u32 %v2382, 2147483648
        %v2384 = vsel %vm2301, %v2383, %v2382
        %v2385 = vsub.s32 4, %v2361
        %v2386 = vsel %vm2301, %v2385, %v2361
        %v2387 = vsel %vm2300, %v587, %v2384
        %v2388 = vsel %vm2300, 0, %v2386
        %v2389 = vcosq.f32.pop %v2387
        %v2390 = vsinq.f32.pop %v2387
        %vm2391 = vweird.f32 %v587
        %v2392 = vadd.s32 %v2388, 3
        %v2393 = vand.u32 %v2392, 3
        %vm2394 = vcmp.lt.s32.totalorder %v2393, 2
        %vm2395 = vcmp.eq.s32.totalorder %v2393, 0
        %v2396 = vxor.u32 %v2390, 2147483648
        %v2397 = vsel %vm2395, %v2389, %v2396
        %vm2398 = vcmp.eq.s32.totalorder %v2393, 2
        %v2399 = vxor.u32 %v2389, 2147483648
        %v2400 = vsel %vm2398, %v2399, %v2390
        %v2401 = vsel %vm2394, %v2397, %v2400
        %v2402 = vsel %vm2391, nan, %v2401
        %v2403 = vand.u32 2147483647, %v588
        %vm2404 = vcmp.le.f32.partialorder %v2403, 0.7853982
        %vm2405 = vcmp.lt.s32.totalorder %v588, 0
        %v2406 = vand.u32 %v588, 2139095040
        %v2407 = vshrl.u32 %v2406, 23
        %v2408 = vsub.s32 %v2407, 127
        %v2409 = vand.u32 2147483647, %v588
        %v2410 = vand.u32 %v2409, 8388607
        %v2411 = vor.u32 %v2410, 8388608
        %v2412 = vsub.s32 0, %v2411
        %v2413 = vadd.s32 %v2408, 1
        %vm2414 = vcmp.gt.s32.totalorder %v2413, 0
        %v2415 = vsel %vm2414, %v2413, 0
        %v2416 = vshrl.u32 %v2415, 5
        %v2417 = vand.u32 %v2415, 31
        %v2418 = vsub.s32 32, %v2417
        %v2419 = vshrl.u32 683565275, %v2418
        %v2420 = vshll.u32 683565275, %v2417
        %v2421 = vshrl.u32 2475754826, %v2418
        %v2422 = vor.u32 %v2420, %v2421
        %v2423 = vshll.u32 2475754826, %v2417
        %v2424 = vshrl.u32 2131351028, %v2418
        %v2425 = vor.u32 %v2423, %v2424
        %v2426 = vshll.u32 2131351028, %v2417
        %v2427 = vshrl.u32 2102212464, %v2418
        %v2428 = vor.u32 %v2426, %v2427
        %v2429 = vshll.u32 2102212464, %v2417
        %v2430 = vshrl.u32 920167782, %v2418
        %v2431 = vor.u32 %v2429, %v2430
        %v2432 = vshll.u32 920167782, %v2417
        %v2433 = vshrl.u32 1326507024, %v2418
        %v2434 = vor.u32 %v2432, %v2433
        %vm2435 = vcmp.lt.s32.totalorder %v2416, 1
        %vm2436 = vcmp.lt.s32.totalorder %v2416, 2
        %vm2437 = vcmp.lt.s32.totalorder %v2416, 3
        %vm2438 = vcmp.lt.s32.totalorder %v2416, 4
        %v2439 = vsel %vm2435, %v2419, %v2422
        %v2440 = vsel %vm2438, %v2428, 2102212464
        %v2441 = vsel %vm2437, %v2425, %v2440
        %v2442 = vsel %vm2436, %v2439, %v2441
        %v2443 = vsel %vm2435, %v2422, %v2425
        %v2444 = vsel %vm2438, %v2431, 920167782
        %v2445 = vsel %vm2437, %v2428, %v2444
        %v2446 = vsel %vm2436, %v2443, %v2445
        %v2447 = vsel %vm2435, %v2425, %v2428
        %v2448 = vsel %vm2438, %v2434, 1326507024
        %v2449 = vsel %vm2437, %v2431, %v2448
        %v2450 = vsel %vm2436, %v2447, %v2449
        %v2451 = vshll.u32 %v2411, 8
        %v2452 = vmul.u32.u64.compose %v2451, %v2450
        %v2453 = vextract.low.u32 %v2452
        %v2454 = vextract.high.u32 %v2452
        %v2455 = vmul.u32.u64.compose %v2451, %v2446
        %v2456 = vextract.low.u32 %v2455
        %v2457 = vextract.high.u32 %v2455
        %v2458 = vmul.u32 %v2451, %v2442
        %v2459 = vadd.s32 %v2454, %v2456
        %vm2460 = vc.u32 %v2454, %v2456
        %v2461 = vadd.s32 %v2457, 1
        %v2462 = vsel %vm2460, %v2461, %v2457
        %v2463 = vadd.s32 %v2458, %v2462
        %v2464 = vadd.s32 %v2463, 536870912
        %v2465 = vshrl.u32 %v2464, 30
        %v2466 = vshll.u32 %v2465, 30
        %v2467 = vsub.s32 %v2463, %v2466
        %vm2468 = vcmp.lt.s32.totalorder %v2467, 0
        %v2469 = vsub.s32 0, %v2467
        %v2470 = vsel %vm2468, %v2469, %v2467
        %v2471 = vclz %v2470
        %v2472 = vsub.s32 %v2471, 2
        %vm2473 = vcmp.gt.s32.totalorder 0, %v2472
        %v2474 = vsel %vm2473, 0, %v2472
        %v2475 = vsub.s32 32, %v2474
        %v2476 = vshll.u32 %v2467, %v2474
        %v2477 = vshrl.u32 %v2459, %v2475
        %v2478 = vor.u32 %v2476, %v2477
        %v2479 = vsub.s32 4294967266, %v2474
        %v2480 = vadd.s32 %v2479, 127
        %v2481 = vshll.u32 %v2480, 23
        %v2482 = vor.u32 4788187, %v2481
        %v2483 = vand.u32 2147483647, %v2482
        %v2485 = vcvt.s32.f32 %v2478
        %v2486 = vmul.f32 %v2485, %v2483
        %v2487 = vxor.u32 %v2486, 2147483648
        %v2488 = vsel %vm2405, %v2487, %v2486
        %v2489 = vsub.s32 4, %v2465
        %v2490 = vsel %vm2405, %v2489, %v2465
        %v2491 = vsel %vm2404, %v588, %v2488
        %v2492 = vsel %vm2404, 0, %v2490
        %v2493 = vcosq.f32.pop %v2491
        %v2494 = vsinq.f32.pop %v2491
        %vm2495 = vweird.f32 %v588
        %v2496 = vadd.s32 %v2492, 3
        %v2497 = vand.u32 %v2496, 3
        %vm2498 = vcmp.lt.s32.totalorder %v2497, 2
        %vm2499 = vcmp.eq.s32.totalorder %v2497, 0
        %v2500 = vxor.u32 %v2494, 2147483648
        %v2501 = vsel %vm2499, %v2493, %v2500
        %vm2502 = vcmp.eq.s32.totalorder %v2497, 2
        %v2503 = vxor.u32 %v2493, 2147483648
        %v2504 = vsel %vm2502, %v2503, %v2494
        %v2505 = vsel %vm2498, %v2501, %v2504
        %v2506 = vsel %vm2495, nan, %v2505
        %v2507 = vand.u32 2147483647, %v589
        %vm2508 = vcmp.le.f32.partialorder %v2507, 0.7853982
        %vm2509 = vcmp.lt.s32.totalorder %v589, 0
        %v2510 = vand.u32 %v589, 2139095040
        %v2511 = vshrl.u32 %v2510, 23
        %v2512 = vsub.s32 %v2511, 127
        %v2513 = vand.u32 2147483647, %v589
        %v2514 = vand.u32 %v2513, 8388607
        %v2515 = vor.u32 %v2514, 8388608
        %v2516 = vsub.s32 0, %v2515
        %v2517 = vadd.s32 %v2512, 1
        %vm2518 = vcmp.gt.s32.totalorder %v2517, 0
        %v2519 = vsel %vm2518, %v2517, 0
        %v2520 = vshrl.u32 %v2519, 5
        %v2521 = vand.u32 %v2519, 31
        %v2522 = vsub.s32 32, %v2521
        %v2523 = vshrl.u32 683565275, %v2522
        %v2524 = vshll.u32 683565275, %v2521
        %v2525 = vshrl.u32 2475754826, %v2522
        %v2526 = vor.u32 %v2524, %v2525
        %v2527 = vshll.u32 2475754826, %v2521
        %v2528 = vshrl.u32 2131351028, %v2522
        %v2529 = vor.u32 %v2527, %v2528
        %v2530 = vshll.u32 2131351028, %v2521
        %v2531 = vshrl.u32 2102212464, %v2522
        %v2532 = vor.u32 %v2530, %v2531
        %v2533 = vshll.u32 2102212464, %v2521
        %v2534 = vshrl.u32 920167782, %v2522
        %v2535 = vor.u32 %v2533, %v2534
        %v2536 = vshll.u32 920167782, %v2521
        %v2537 = vshrl.u32 1326507024, %v2522
        %v2538 = vor.u32 %v2536, %v2537
        %vm2539 = vcmp.lt.s32.totalorder %v2520, 1
        %vm2540 = vcmp.lt.s32.totalorder %v2520, 2
        %vm2541 = vcmp.lt.s32.totalorder %v2520, 3
        %vm2542 = vcmp.lt.s32.totalorder %v2520, 4
        %v2543 = vsel %vm2539, %v2523, %v2526
        %v2544 = vsel %vm2542, %v2532, 2102212464
        %v2545 = vsel %vm2541, %v2529, %v2544
        %v2546 = vsel %vm2540, %v2543, %v2545
        %v2547 = vsel %vm2539, %v2526, %v2529
        %v2548 = vsel %vm2542, %v2535, 920167782
        %v2549 = vsel %vm2541, %v2532, %v2548
        %v2550 = vsel %vm2540, %v2547, %v2549
        %v2551 = vsel %vm2539, %v2529, %v2532
        %v2552 = vsel %vm2542, %v2538, 1326507024
        %v2553 = vsel %vm2541, %v2535, %v2552
        %v2554 = vsel %vm2540, %v2551, %v2553
        %v2555 = vshll.u32 %v2515, 8
        %v2556 = vmul.u32.u64.compose %v2555, %v2554
        %v2557 = vextract.low.u32 %v2556
        %v2558 = vextract.high.u32 %v2556
        %v2559 = vmul.u32.u64.compose %v2555, %v2550
        %v2560 = vextract.low.u32 %v2559
        %v2561 = vextract.high.u32 %v2559
        %v2562 = vmul.u32 %v2555, %v2546
        %v2563 = vadd.s32 %v2558, %v2560
        %vm2564 = vc.u32 %v2558, %v2560
        %v2565 = vadd.s32 %v2561, 1
        %v2566 = vsel %vm2564, %v2565, %v2561
        %v2567 = vadd.s32 %v2562, %v2566
        %v2568 = vadd.s32 %v2567, 536870912
        %v2569 = vshrl.u32 %v2568, 30
        %v2570 = vshll.u32 %v2569, 30
        %v2571 = vsub.s32 %v2567, %v2570
        %vm2572 = vcmp.lt.s32.totalorder %v2571, 0
        %v2573 = vsub.s32 0, %v2571
        %v2574 = vsel %vm2572, %v2573, %v2571
        %v2575 = vclz %v2574
        %v2576 = vsub.s32 %v2575, 2
        %vm2577 = vcmp.gt.s32.totalorder 0, %v2576
        %v2578 = vsel %vm2577, 0, %v2576
        %v2579 = vsub.s32 32, %v2578
        %v2580 = vshll.u32 %v2571, %v2578
        %v2581 = vshrl.u32 %v2563, %v2579
        %v2582 = vor.u32 %v2580, %v2581
        %v2583 = vsub.s32 4294967266, %v2578
        %v2584 = vadd.s32 %v2583, 127
        %v2585 = vshll.u32 %v2584, 23
        %v2586 = vor.u32 4788187, %v2585
        %v2587 = vand.u32 2147483647, %v2586
        %v2589 = vcvt.s32.f32 %v2582
        %v2590 = vmul.f32 %v2589, %v2587
        %v2591 = vxor.u32 %v2590, 2147483648
        %v2592 = vsel %vm2509, %v2591, %v2590
        %v2593 = vsub.s32 4, %v2569
        %v2594 = vsel %vm2509, %v2593, %v2569
        %v2595 = vsel %vm2508, %v589, %v2592
        %v2596 = vsel %vm2508, 0, %v2594
        %v2597 = vcosq.f32.pop %v2595
        %v2598 = vsinq.f32.pop %v2595
        %vm2599 = vweird.f32 %v589
        %v2600 = vadd.s32 %v2596, 3
        %v2601 = vand.u32 %v2600, 3
        %vm2602 = vcmp.lt.s32.totalorder %v2601, 2
        %vm2603 = vcmp.eq.s32.totalorder %v2601, 0
        %v2604 = vxor.u32 %v2598, 2147483648
        %v2605 = vsel %vm2603, %v2597, %v2604
        %vm2606 = vcmp.eq.s32.totalorder %v2601, 2
        %v2607 = vxor.u32 %v2597, 2147483648
        %v2608 = vsel %vm2606, %v2607, %v2598
        %v2609 = vsel %vm2602, %v2605, %v2608
        %v2610 = vsel %vm2599, nan, %v2609
        %v2611 = vand.u32 2147483647, %v590
        %vm2612 = vcmp.le.f32.partialorder %v2611, 0.7853982
        %vm2613 = vcmp.lt.s32.totalorder %v590, 0
        %v2614 = vand.u32 %v590, 2139095040
        %v2615 = vshrl.u32 %v2614, 23
        %v2616 = vsub.s32 %v2615, 127
        %v2617 = vand.u32 2147483647, %v590
        %v2618 = vand.u32 %v2617, 8388607
        %v2619 = vor.u32 %v2618, 8388608
        %v2620 = vsub.s32 0, %v2619
        %v2621 = vadd.s32 %v2616, 1
        %vm2622 = vcmp.gt.s32.totalorder %v2621, 0
        %v2623 = vsel %vm2622, %v2621, 0
        %v2624 = vshrl.u32 %v2623, 5
        %v2625 = vand.u32 %v2623, 31
        %v2626 = vsub.s32 32, %v2625
        %v2627 = vshrl.u32 683565275, %v2626
        %v2628 = vshll.u32 683565275, %v2625
        %v2629 = vshrl.u32 2475754826, %v2626
        %v2630 = vor.u32 %v2628, %v2629
        %v2631 = vshll.u32 2475754826, %v2625
        %v2632 = vshrl.u32 2131351028, %v2626
        %v2633 = vor.u32 %v2631, %v2632
        %v2634 = vshll.u32 2131351028, %v2625
        %v2635 = vshrl.u32 2102212464, %v2626
        %v2636 = vor.u32 %v2634, %v2635
        %v2637 = vshll.u32 2102212464, %v2625
        %v2638 = vshrl.u32 920167782, %v2626
        %v2639 = vor.u32 %v2637, %v2638
        %v2640 = vshll.u32 920167782, %v2625
        %v2641 = vshrl.u32 1326507024, %v2626
        %v2642 = vor.u32 %v2640, %v2641
        %vm2643 = vcmp.lt.s32.totalorder %v2624, 1
        %vm2644 = vcmp.lt.s32.totalorder %v2624, 2
        %vm2645 = vcmp.lt.s32.totalorder %v2624, 3
        %vm2646 = vcmp.lt.s32.totalorder %v2624, 4
        %v2647 = vsel %vm2643, %v2627, %v2630
        %v2648 = vsel %vm2646, %v2636, 2102212464
        %v2649 = vsel %vm2645, %v2633, %v2648
        %v2650 = vsel %vm2644, %v2647, %v2649
        %v2651 = vsel %vm2643, %v2630, %v2633
        %v2652 = vsel %vm2646, %v2639, 920167782
        %v2653 = vsel %vm2645, %v2636, %v2652
        %v2654 = vsel %vm2644, %v2651, %v2653
        %v2655 = vsel %vm2643, %v2633, %v2636
        %v2656 = vsel %vm2646, %v2642, 1326507024
        %v2657 = vsel %vm2645, %v2639, %v2656
        %v2658 = vsel %vm2644, %v2655, %v2657
        %v2659 = vshll.u32 %v2619, 8
        %v2660 = vmul.u32.u64.compose %v2659, %v2658
        %v2661 = vextract.low.u32 %v2660
        %v2662 = vextract.high.u32 %v2660
        %v2663 = vmul.u32.u64.compose %v2659, %v2654
        %v2664 = vextract.low.u32 %v2663
        %v2665 = vextract.high.u32 %v2663
        %v2666 = vmul.u32 %v2659, %v2650
        %v2667 = vadd.s32 %v2662, %v2664
        %vm2668 = vc.u32 %v2662, %v2664
        %v2669 = vadd.s32 %v2665, 1
        %v2670 = vsel %vm2668, %v2669, %v2665
        %v2671 = vadd.s32 %v2666, %v2670
        %v2672 = vadd.s32 %v2671, 536870912
        %v2673 = vshrl.u32 %v2672, 30
        %v2674 = vshll.u32 %v2673, 30
        %v2675 = vsub.s32 %v2671, %v2674
        %vm2676 = vcmp.lt.s32.totalorder %v2675, 0
        %v2677 = vsub.s32 0, %v2675
        %v2678 = vsel %vm2676, %v2677, %v2675
        %v2679 = vclz %v2678
        %v2680 = vsub.s32 %v2679, 2
        %vm2681 = vcmp.gt.s32.totalorder 0, %v2680
        %v2682 = vsel %vm2681, 0, %v2680
        %v2683 = vsub.s32 32, %v2682
        %v2684 = vshll.u32 %v2675, %v2682
        %v2685 = vshrl.u32 %v2667, %v2683
        %v2686 = vor.u32 %v2684, %v2685
        %v2687 = vsub.s32 4294967266, %v2682
        %v2688 = vadd.s32 %v2687, 127
        %v2689 = vshll.u32 %v2688, 23
        %v2690 = vor.u32 4788187, %v2689
        %v2691 = vand.u32 2147483647, %v2690
        %v2693 = vcvt.s32.f32 %v2686
        %v2694 = vmul.f32 %v2693, %v2691
        %v2695 = vxor.u32 %v2694, 2147483648
        %v2696 = vsel %vm2613, %v2695, %v2694
        %v2697 = vsub.s32 4, %v2673
        %v2698 = vsel %vm2613, %v2697, %v2673
        %v2699 = vsel %vm2612, %v590, %v2696
        %v2700 = vsel %vm2612, 0, %v2698
        %v2701 = vcosq.f32.pop %v2699
        %v2702 = vsinq.f32.pop %v2699
        %vm2703 = vweird.f32 %v590
        %v2704 = vadd.s32 %v2700, 3
        %v2705 = vand.u32 %v2704, 3
        %vm2706 = vcmp.lt.s32.totalorder %v2705, 2
        %vm2707 = vcmp.eq.s32.totalorder %v2705, 0
        %v2708 = vxor.u32 %v2702, 2147483648
        %v2709 = vsel %vm2707, %v2701, %v2708
        %vm2710 = vcmp.eq.s32.totalorder %v2705, 2
        %v2711 = vxor.u32 %v2701, 2147483648
        %v2712 = vsel %vm2710, %v2711, %v2702
        %v2713 = vsel %vm2706, %v2709, %v2712
        %v2714 = vsel %vm2703, nan, %v2713
        %v2715 = vand.u32 2147483647, %v591
        %vm2716 = vcmp.le.f32.partialorder %v2715, 0.7853982
        %vm2717 = vcmp.lt.s32.totalorder %v591, 0
        %v2718 = vand.u32 %v591, 2139095040
        %v2719 = vshrl.u32 %v2718, 23
        %v2720 = vsub.s32 %v2719, 127
        %v2721 = vand.u32 2147483647, %v591
        %v2722 = vand.u32 %v2721, 8388607
        %v2723 = vor.u32 %v2722, 8388608
        %v2724 = vsub.s32 0, %v2723
        %v2725 = vadd.s32 %v2720, 1
        %vm2726 = vcmp.gt.s32.totalorder %v2725, 0
        %v2727 = vsel %vm2726, %v2725, 0
        %v2728 = vshrl.u32 %v2727, 5
        %v2729 = vand.u32 %v2727, 31
        %v2730 = vsub.s32 32, %v2729
        %v2731 = vshrl.u32 683565275, %v2730
        %v2732 = vshll.u32 683565275, %v2729
        %v2733 = vshrl.u32 2475754826, %v2730
        %v2734 = vor.u32 %v2732, %v2733
        %v2735 = vshll.u32 2475754826, %v2729
        %v2736 = vshrl.u32 2131351028, %v2730
        %v2737 = vor.u32 %v2735, %v2736
        %v2738 = vshll.u32 2131351028, %v2729
        %v2739 = vshrl.u32 2102212464, %v2730
        %v2740 = vor.u32 %v2738, %v2739
        %v2741 = vshll.u32 2102212464, %v2729
        %v2742 = vshrl.u32 920167782, %v2730
        %v2743 = vor.u32 %v2741, %v2742
        %v2744 = vshll.u32 920167782, %v2729
        %v2745 = vshrl.u32 1326507024, %v2730
        %v2746 = vor.u32 %v2744, %v2745
        %vm2747 = vcmp.lt.s32.totalorder %v2728, 1
        %vm2748 = vcmp.lt.s32.totalorder %v2728, 2
        %vm2749 = vcmp.lt.s32.totalorder %v2728, 3
        %vm2750 = vcmp.lt.s32.totalorder %v2728, 4
        %v2751 = vsel %vm2747, %v2731, %v2734
        %v2752 = vsel %vm2750, %v2740, 2102212464
        %v2753 = vsel %vm2749, %v2737, %v2752
        %v2754 = vsel %vm2748, %v2751, %v2753
        %v2755 = vsel %vm2747, %v2734, %v2737
        %v2756 = vsel %vm2750, %v2743, 920167782
        %v2757 = vsel %vm2749, %v2740, %v2756
        %v2758 = vsel %vm2748, %v2755, %v2757
        %v2759 = vsel %vm2747, %v2737, %v2740
        %v2760 = vsel %vm2750, %v2746, 1326507024
        %v2761 = vsel %vm2749, %v2743, %v2760
        %v2762 = vsel %vm2748, %v2759, %v2761
        %v2763 = vshll.u32 %v2723, 8
        %v2764 = vmul.u32.u64.compose %v2763, %v2762
        %v2765 = vextract.low.u32 %v2764
        %v2766 = vextract.high.u32 %v2764
        %v2767 = vmul.u32.u64.compose %v2763, %v2758
        %v2768 = vextract.low.u32 %v2767
        %v2769 = vextract.high.u32 %v2767
        %v2770 = vmul.u32 %v2763, %v2754
        %v2771 = vadd.s32 %v2766, %v2768
        %vm2772 = vc.u32 %v2766, %v2768
        %v2773 = vadd.s32 %v2769, 1
        %v2774 = vsel %vm2772, %v2773, %v2769
        %v2775 = vadd.s32 %v2770, %v2774
        %v2776 = vadd.s32 %v2775, 536870912
        %v2777 = vshrl.u32 %v2776, 30
        %v2778 = vshll.u32 %v2777, 30
        %v2779 = vsub.s32 %v2775, %v2778
        %vm2780 = vcmp.lt.s32.totalorder %v2779, 0
        %v2781 = vsub.s32 0, %v2779
        %v2782 = vsel %vm2780, %v2781, %v2779
        %v2783 = vclz %v2782
        %v2784 = vsub.s32 %v2783, 2
        %vm2785 = vcmp.gt.s32.totalorder 0, %v2784
        %v2786 = vsel %vm2785, 0, %v2784
        %v2787 = vsub.s32 32, %v2786
        %v2788 = vshll.u32 %v2779, %v2786
        %v2789 = vshrl.u32 %v2771, %v2787
        %v2790 = vor.u32 %v2788, %v2789
        %v2791 = vsub.s32 4294967266, %v2786
        %v2792 = vadd.s32 %v2791, 127
        %v2793 = vshll.u32 %v2792, 23
        %v2794 = vor.u32 4788187, %v2793
        %v2795 = vand.u32 2147483647, %v2794
        %v2797 = vcvt.s32.f32 %v2790
        %v2798 = vmul.f32 %v2797, %v2795
        %v2799 = vxor.u32 %v2798, 2147483648
        %v2800 = vsel %vm2717, %v2799, %v2798
        %v2801 = vsub.s32 4, %v2777
        %v2802 = vsel %vm2717, %v2801, %v2777
        %v2803 = vsel %vm2716, %v591, %v2800
        %v2804 = vsel %vm2716, 0, %v2802
        %v2805 = vcosq.f32.pop %v2803
        %v2806 = vsinq.f32.pop %v2803
        %vm2807 = vweird.f32 %v591
        %v2808 = vadd.s32 %v2804, 3
        %v2809 = vand.u32 %v2808, 3
        %vm2810 = vcmp.lt.s32.totalorder %v2809, 2
        %vm2811 = vcmp.eq.s32.totalorder %v2809, 0
        %v2812 = vxor.u32 %v2806, 2147483648
        %v2813 = vsel %vm2811, %v2805, %v2812
        %vm2814 = vcmp.eq.s32.totalorder %v2809, 2
        %v2815 = vxor.u32 %v2805, 2147483648
        %v2816 = vsel %vm2814, %v2815, %v2806
        %v2817 = vsel %vm2810, %v2813, %v2816
        %v2818 = vsel %vm2807, nan, %v2817
        %v2819 = vand.u32 2147483647, %v592
        %vm2820 = vcmp.le.f32.partialorder %v2819, 0.7853982
        %vm2821 = vcmp.lt.s32.totalorder %v592, 0
        %v2822 = vand.u32 %v592, 2139095040
        %v2823 = vshrl.u32 %v2822, 23
        %v2824 = vsub.s32 %v2823, 127
        %v2825 = vand.u32 2147483647, %v592
        %v2826 = vand.u32 %v2825, 8388607
        %v2827 = vor.u32 %v2826, 8388608
        %v2828 = vsub.s32 0, %v2827
        %v2829 = vadd.s32 %v2824, 1
        %vm2830 = vcmp.gt.s32.totalorder %v2829, 0
        %v2831 = vsel %vm2830, %v2829, 0
        %v2832 = vshrl.u32 %v2831, 5
        %v2833 = vand.u32 %v2831, 31
        %v2834 = vsub.s32 32, %v2833
        %v2835 = vshrl.u32 683565275, %v2834
        %v2836 = vshll.u32 683565275, %v2833
        %v2837 = vshrl.u32 2475754826, %v2834
        %v2838 = vor.u32 %v2836, %v2837
        %v2839 = vshll.u32 2475754826, %v2833
        %v2840 = vshrl.u32 2131351028, %v2834
        %v2841 = vor.u32 %v2839, %v2840
        %v2842 = vshll.u32 2131351028, %v2833
        %v2843 = vshrl.u32 2102212464, %v2834
        %v2844 = vor.u32 %v2842, %v2843
        %v2845 = vshll.u32 2102212464, %v2833
        %v2846 = vshrl.u32 920167782, %v2834
        %v2847 = vor.u32 %v2845, %v2846
        %v2848 = vshll.u32 920167782, %v2833
        %v2849 = vshrl.u32 1326507024, %v2834
        %v2850 = vor.u32 %v2848, %v2849
        %vm2851 = vcmp.lt.s32.totalorder %v2832, 1
        %vm2852 = vcmp.lt.s32.totalorder %v2832, 2
        %vm2853 = vcmp.lt.s32.totalorder %v2832, 3
        %vm2854 = vcmp.lt.s32.totalorder %v2832, 4
        %v2855 = vsel %vm2851, %v2835, %v2838
        %v2856 = vsel %vm2854, %v2844, 2102212464
        %v2857 = vsel %vm2853, %v2841, %v2856
        %v2858 = vsel %vm2852, %v2855, %v2857
        %v2859 = vsel %vm2851, %v2838, %v2841
        %v2860 = vsel %vm2854, %v2847, 920167782
        %v2861 = vsel %vm2853, %v2844, %v2860
        %v2862 = vsel %vm2852, %v2859, %v2861
        %v2863 = vsel %vm2851, %v2841, %v2844
        %v2864 = vsel %vm2854, %v2850, 1326507024
        %v2865 = vsel %vm2853, %v2847, %v2864
        %v2866 = vsel %vm2852, %v2863, %v2865
        %v2867 = vshll.u32 %v2827, 8
        %v2868 = vmul.u32.u64.compose %v2867, %v2866
        %v2869 = vextract.low.u32 %v2868
        %v2870 = vextract.high.u32 %v2868
        %v2871 = vmul.u32.u64.compose %v2867, %v2862
        %v2872 = vextract.low.u32 %v2871
        %v2873 = vextract.high.u32 %v2871
        %v2874 = vmul.u32 %v2867, %v2858
        %v2875 = vadd.s32 %v2870, %v2872
        %vm2876 = vc.u32 %v2870, %v2872
        %v2877 = vadd.s32 %v2873, 1
        %v2878 = vsel %vm2876, %v2877, %v2873
        %v2879 = vadd.s32 %v2874, %v2878
        %v2880 = vadd.s32 %v2879, 536870912
        %v2881 = vshrl.u32 %v2880, 30
        %v2882 = vshll.u32 %v2881, 30
        %v2883 = vsub.s32 %v2879, %v2882
        %vm2884 = vcmp.lt.s32.totalorder %v2883, 0
        %v2885 = vsub.s32 0, %v2883
        %v2886 = vsel %vm2884, %v2885, %v2883
        %v2887 = vclz %v2886
        %v2888 = vsub.s32 %v2887, 2
        %vm2889 = vcmp.gt.s32.totalorder 0, %v2888
        %v2890 = vsel %vm2889, 0, %v2888
        %v2891 = vsub.s32 32, %v2890
        %v2892 = vshll.u32 %v2883, %v2890
        %v2893 = vshrl.u32 %v2875, %v2891
        %v2894 = vor.u32 %v2892, %v2893
        %v2895 = vsub.s32 4294967266, %v2890
        %v2896 = vadd.s32 %v2895, 127
        %v2897 = vshll.u32 %v2896, 23
        %v2898 = vor.u32 4788187, %v2897
        %v2899 = vand.u32 2147483647, %v2898
        %v2901 = vcvt.s32.f32 %v2894
        %v2902 = vmul.f32 %v2901, %v2899
        %v2903 = vxor.u32 %v2902, 2147483648
        %v2904 = vsel %vm2821, %v2903, %v2902
        %v2905 = vsub.s32 4, %v2881
        %v2906 = vsel %vm2821, %v2905, %v2881
        %v2907 = vsel %vm2820, %v592, %v2904
        %v2908 = vsel %vm2820, 0, %v2906
        %v2909 = vcosq.f32.pop %v2907
        %v2910 = vsinq.f32.pop %v2907
        %vm2911 = vweird.f32 %v592
        %v2912 = vadd.s32 %v2908, 3
        %v2913 = vand.u32 %v2912, 3
        %vm2914 = vcmp.lt.s32.totalorder %v2913, 2
        %vm2915 = vcmp.eq.s32.totalorder %v2913, 0
        %v2916 = vxor.u32 %v2910, 2147483648
        %v2917 = vsel %vm2915, %v2909, %v2916
        %vm2918 = vcmp.eq.s32.totalorder %v2913, 2
        %v2919 = vxor.u32 %v2909, 2147483648
        %v2920 = vsel %vm2918, %v2919, %v2910
        %v2921 = vsel %vm2914, %v2917, %v2920
        %v2922 = vsel %vm2911, nan, %v2921
        %v2923 = vand.u32 2147483647, %v593
        %vm2924 = vcmp.le.f32.partialorder %v2923, 0.7853982
        %vm2925 = vcmp.lt.s32.totalorder %v593, 0
        %v2926 = vand.u32 %v593, 2139095040
        %v2927 = vshrl.u32 %v2926, 23
        %v2928 = vsub.s32 %v2927, 127
        %v2929 = vand.u32 2147483647, %v593
        %v2930 = vand.u32 %v2929, 8388607
        %v2931 = vor.u32 %v2930, 8388608
        %v2932 = vsub.s32 0, %v2931
        %v2933 = vadd.s32 %v2928, 1
        %vm2934 = vcmp.gt.s32.totalorder %v2933, 0
        %v2935 = vsel %vm2934, %v2933, 0
        %v2936 = vshrl.u32 %v2935, 5
        %v2937 = vand.u32 %v2935, 31
        %v2938 = vsub.s32 32, %v2937
        %v2939 = vshrl.u32 683565275, %v2938
        %v2940 = vshll.u32 683565275, %v2937
        %v2941 = vshrl.u32 2475754826, %v2938
        %v2942 = vor.u32 %v2940, %v2941
        %v2943 = vshll.u32 2475754826, %v2937
        %v2944 = vshrl.u32 2131351028, %v2938
        %v2945 = vor.u32 %v2943, %v2944
        %v2946 = vshll.u32 2131351028, %v2937
        %v2947 = vshrl.u32 2102212464, %v2938
        %v2948 = vor.u32 %v2946, %v2947
        %v2949 = vshll.u32 2102212464, %v2937
        %v2950 = vshrl.u32 920167782, %v2938
        %v2951 = vor.u32 %v2949, %v2950
        %v2952 = vshll.u32 920167782, %v2937
        %v2953 = vshrl.u32 1326507024, %v2938
        %v2954 = vor.u32 %v2952, %v2953
        %vm2955 = vcmp.lt.s32.totalorder %v2936, 1
        %vm2956 = vcmp.lt.s32.totalorder %v2936, 2
        %vm2957 = vcmp.lt.s32.totalorder %v2936, 3
        %vm2958 = vcmp.lt.s32.totalorder %v2936, 4
        %v2959 = vsel %vm2955, %v2939, %v2942
        %v2960 = vsel %vm2958, %v2948, 2102212464
        %v2961 = vsel %vm2957, %v2945, %v2960
        %v2962 = vsel %vm2956, %v2959, %v2961
        %v2963 = vsel %vm2955, %v2942, %v2945
        %v2964 = vsel %vm2958, %v2951, 920167782
        %v2965 = vsel %vm2957, %v2948, %v2964
        %v2966 = vsel %vm2956, %v2963, %v2965
        %v2967 = vsel %vm2955, %v2945, %v2948
        %v2968 = vsel %vm2958, %v2954, 1326507024
        %v2969 = vsel %vm2957, %v2951, %v2968
        %v2970 = vsel %vm2956, %v2967, %v2969
        %v2971 = vshll.u32 %v2931, 8
        %v2972 = vmul.u32.u64.compose %v2971, %v2970
        %v2973 = vextract.low.u32 %v2972
        %v2974 = vextract.high.u32 %v2972
        %v2975 = vmul.u32.u64.compose %v2971, %v2966
        %v2976 = vextract.low.u32 %v2975
        %v2977 = vextract.high.u32 %v2975
        %v2978 = vmul.u32 %v2971, %v2962
        %v2979 = vadd.s32 %v2974, %v2976
        %vm2980 = vc.u32 %v2974, %v2976
        %v2981 = vadd.s32 %v2977, 1
        %v2982 = vsel %vm2980, %v2981, %v2977
        %v2983 = vadd.s32 %v2978, %v2982
        %v2984 = vadd.s32 %v2983, 536870912
        %v2985 = vshrl.u32 %v2984, 30
        %v2986 = vshll.u32 %v2985, 30
        %v2987 = vsub.s32 %v2983, %v2986
        %vm2988 = vcmp.lt.s32.totalorder %v2987, 0
        %v2989 = vsub.s32 0, %v2987
        %v2990 = vsel %vm2988, %v2989, %v2987
        %v2991 = vclz %v2990
        %v2992 = vsub.s32 %v2991, 2
        %vm2993 = vcmp.gt.s32.totalorder 0, %v2992
        %v2994 = vsel %vm2993, 0, %v2992
        %v2995 = vsub.s32 32, %v2994
        %v2996 = vshll.u32 %v2987, %v2994
        %v2997 = vshrl.u32 %v2979, %v2995
        %v2998 = vor.u32 %v2996, %v2997
        %v2999 = vsub.s32 4294967266, %v2994
        %v3000 = vadd.s32 %v2999, 127
        %v3001 = vshll.u32 %v3000, 23
        %v3002 = vor.u32 4788187, %v3001
        %v3003 = vand.u32 2147483647, %v3002
        %v3005 = vcvt.s32.f32 %v2998
        %v3006 = vmul.f32 %v3005, %v3003
        %v3007 = vxor.u32 %v3006, 2147483648
        %v3008 = vsel %vm2925, %v3007, %v3006
        %v3009 = vsub.s32 4, %v2985
        %v3010 = vsel %vm2925, %v3009, %v2985
        %v3011 = vsel %vm2924, %v593, %v3008
        %v3012 = vsel %vm2924, 0, %v3010
        %v3013 = vcosq.f32.pop %v3011
        %v3014 = vsinq.f32.pop %v3011
        %vm3015 = vweird.f32 %v593
        %v3016 = vadd.s32 %v3012, 3
        %v3017 = vand.u32 %v3016, 3
        %vm3018 = vcmp.lt.s32.totalorder %v3017, 2
        %vm3019 = vcmp.eq.s32.totalorder %v3017, 0
        %v3020 = vxor.u32 %v3014, 2147483648
        %v3021 = vsel %vm3019, %v3013, %v3020
        %vm3022 = vcmp.eq.s32.totalorder %v3017, 2
        %v3023 = vxor.u32 %v3013, 2147483648
        %v3024 = vsel %vm3022, %v3023, %v3014
        %v3025 = vsel %vm3018, %v3021, %v3024
        %v3026 = vsel %vm3015, nan, %v3025
        %v3027 = vand.u32 2147483647, %v594
        %vm3028 = vcmp.le.f32.partialorder %v3027, 0.7853982
        %vm3029 = vcmp.lt.s32.totalorder %v594, 0
        %v3030 = vand.u32 %v594, 2139095040
        %v3031 = vshrl.u32 %v3030, 23
        %v3032 = vsub.s32 %v3031, 127
        %v3033 = vand.u32 2147483647, %v594
        %v3034 = vand.u32 %v3033, 8388607
        %v3035 = vor.u32 %v3034, 8388608
        %v3036 = vsub.s32 0, %v3035
        %v3037 = vadd.s32 %v3032, 1
        %vm3038 = vcmp.gt.s32.totalorder %v3037, 0
        %v3039 = vsel %vm3038, %v3037, 0
        %v3040 = vshrl.u32 %v3039, 5
        %v3041 = vand.u32 %v3039, 31
        %v3042 = vsub.s32 32, %v3041
        %v3043 = vshrl.u32 683565275, %v3042
        %v3044 = vshll.u32 683565275, %v3041
        %v3045 = vshrl.u32 2475754826, %v3042
        %v3046 = vor.u32 %v3044, %v3045
        %v3047 = vshll.u32 2475754826, %v3041
        %v3048 = vshrl.u32 2131351028, %v3042
        %v3049 = vor.u32 %v3047, %v3048
        %v3050 = vshll.u32 2131351028, %v3041
        %v3051 = vshrl.u32 2102212464, %v3042
        %v3052 = vor.u32 %v3050, %v3051
        %v3053 = vshll.u32 2102212464, %v3041
        %v3054 = vshrl.u32 920167782, %v3042
        %v3055 = vor.u32 %v3053, %v3054
        %v3056 = vshll.u32 920167782, %v3041
        %v3057 = vshrl.u32 1326507024, %v3042
        %v3058 = vor.u32 %v3056, %v3057
        %vm3059 = vcmp.lt.s32.totalorder %v3040, 1
        %vm3060 = vcmp.lt.s32.totalorder %v3040, 2
        %vm3061 = vcmp.lt.s32.totalorder %v3040, 3
        %vm3062 = vcmp.lt.s32.totalorder %v3040, 4
        %v3063 = vsel %vm3059, %v3043, %v3046
        %v3064 = vsel %vm3062, %v3052, 2102212464
        %v3065 = vsel %vm3061, %v3049, %v3064
        %v3066 = vsel %vm3060, %v3063, %v3065
        %v3067 = vsel %vm3059, %v3046, %v3049
        %v3068 = vsel %vm3062, %v3055, 920167782
        %v3069 = vsel %vm3061, %v3052, %v3068
        %v3070 = vsel %vm3060, %v3067, %v3069
        %v3071 = vsel %vm3059, %v3049, %v3052
        %v3072 = vsel %vm3062, %v3058, 1326507024
        %v3073 = vsel %vm3061, %v3055, %v3072
        %v3074 = vsel %vm3060, %v3071, %v3073
        %v3075 = vshll.u32 %v3035, 8
        %v3076 = vmul.u32.u64.compose %v3075, %v3074
        %v3077 = vextract.low.u32 %v3076
        %v3078 = vextract.high.u32 %v3076
        %v3079 = vmul.u32.u64.compose %v3075, %v3070
        %v3080 = vextract.low.u32 %v3079
        %v3081 = vextract.high.u32 %v3079
        %v3082 = vmul.u32 %v3075, %v3066
        %v3083 = vadd.s32 %v3078, %v3080
        %vm3084 = vc.u32 %v3078, %v3080
        %v3085 = vadd.s32 %v3081, 1
        %v3086 = vsel %vm3084, %v3085, %v3081
        %v3087 = vadd.s32 %v3082, %v3086
        %v3088 = vadd.s32 %v3087, 536870912
        %v3089 = vshrl.u32 %v3088, 30
        %v3090 = vshll.u32 %v3089, 30
        %v3091 = vsub.s32 %v3087, %v3090
        %vm3092 = vcmp.lt.s32.totalorder %v3091, 0
        %v3093 = vsub.s32 0, %v3091
        %v3094 = vsel %vm3092, %v3093, %v3091
        %v3095 = vclz %v3094
        %v3096 = vsub.s32 %v3095, 2
        %vm3097 = vcmp.gt.s32.totalorder 0, %v3096
        %v3098 = vsel %vm3097, 0, %v3096
        %v3099 = vsub.s32 32, %v3098
        %v3100 = vshll.u32 %v3091, %v3098
        %v3101 = vshrl.u32 %v3083, %v3099
        %v3102 = vor.u32 %v3100, %v3101
        %v3103 = vsub.s32 4294967266, %v3098
        %v3104 = vadd.s32 %v3103, 127
        %v3105 = vshll.u32 %v3104, 23
        %v3106 = vor.u32 4788187, %v3105
        %v3107 = vand.u32 2147483647, %v3106
        %v3109 = vcvt.s32.f32 %v3102
        %v3110 = vmul.f32 %v3109, %v3107
        %v3111 = vxor.u32 %v3110, 2147483648
        %v3112 = vsel %vm3029, %v3111, %v3110
        %v3113 = vsub.s32 4, %v3089
        %v3114 = vsel %vm3029, %v3113, %v3089
        %v3115 = vsel %vm3028, %v594, %v3112
        %v3116 = vsel %vm3028, 0, %v3114
        %v3117 = vcosq.f32.pop %v3115
        %v3118 = vsinq.f32.pop %v3115
        %vm3119 = vweird.f32 %v594
        %v3120 = vadd.s32 %v3116, 3
        %v3121 = vand.u32 %v3120, 3
        %vm3122 = vcmp.lt.s32.totalorder %v3121, 2
        %vm3123 = vcmp.eq.s32.totalorder %v3121, 0
        %v3124 = vxor.u32 %v3118, 2147483648
        %v3125 = vsel %vm3123, %v3117, %v3124
        %vm3126 = vcmp.eq.s32.totalorder %v3121, 2
        %v3127 = vxor.u32 %v3117, 2147483648
        %v3128 = vsel %vm3126, %v3127, %v3118
        %v3129 = vsel %vm3122, %v3125, %v3128
        %v3130 = vsel %vm3119, nan, %v3129
        %v3131 = vand.u32 2147483647, %v595
        %vm3132 = vcmp.le.f32.partialorder %v3131, 0.7853982
        %vm3133 = vcmp.lt.s32.totalorder %v595, 0
        %v3134 = vand.u32 %v595, 2139095040
        %v3135 = vshrl.u32 %v3134, 23
        %v3136 = vsub.s32 %v3135, 127
        %v3137 = vand.u32 2147483647, %v595
        %v3138 = vand.u32 %v3137, 8388607
        %v3139 = vor.u32 %v3138, 8388608
        %v3140 = vsub.s32 0, %v3139
        %v3141 = vadd.s32 %v3136, 1
        %vm3142 = vcmp.gt.s32.totalorder %v3141, 0
        %v3143 = vsel %vm3142, %v3141, 0
        %v3144 = vshrl.u32 %v3143, 5
        %v3145 = vand.u32 %v3143, 31
        %v3146 = vsub.s32 32, %v3145
        %v3147 = vshrl.u32 683565275, %v3146
        %v3148 = vshll.u32 683565275, %v3145
        %v3149 = vshrl.u32 2475754826, %v3146
        %v3150 = vor.u32 %v3148, %v3149
        %v3151 = vshll.u32 2475754826, %v3145
        %v3152 = vshrl.u32 2131351028, %v3146
        %v3153 = vor.u32 %v3151, %v3152
        %v3154 = vshll.u32 2131351028, %v3145
        %v3155 = vshrl.u32 2102212464, %v3146
        %v3156 = vor.u32 %v3154, %v3155
        %v3157 = vshll.u32 2102212464, %v3145
        %v3158 = vshrl.u32 920167782, %v3146
        %v3159 = vor.u32 %v3157, %v3158
        %v3160 = vshll.u32 920167782, %v3145
        %v3161 = vshrl.u32 1326507024, %v3146
        %v3162 = vor.u32 %v3160, %v3161
        %vm3163 = vcmp.lt.s32.totalorder %v3144, 1
        %vm3164 = vcmp.lt.s32.totalorder %v3144, 2
        %vm3165 = vcmp.lt.s32.totalorder %v3144, 3
        %vm3166 = vcmp.lt.s32.totalorder %v3144, 4
        %v3167 = vsel %vm3163, %v3147, %v3150
        %v3168 = vsel %vm3166, %v3156, 2102212464
        %v3169 = vsel %vm3165, %v3153, %v3168
        %v3170 = vsel %vm3164, %v3167, %v3169
        %v3171 = vsel %vm3163, %v3150, %v3153
        %v3172 = vsel %vm3166, %v3159, 920167782
        %v3173 = vsel %vm3165, %v3156, %v3172
        %v3174 = vsel %vm3164, %v3171, %v3173
        %v3175 = vsel %vm3163, %v3153, %v3156
        %v3176 = vsel %vm3166, %v3162, 1326507024
        %v3177 = vsel %vm3165, %v3159, %v3176
        %v3178 = vsel %vm3164, %v3175, %v3177
        %v3179 = vshll.u32 %v3139, 8
        %v3180 = vmul.u32.u64.compose %v3179, %v3178
        %v3181 = vextract.low.u32 %v3180
        %v3182 = vextract.high.u32 %v3180
        %v3183 = vmul.u32.u64.compose %v3179, %v3174
        %v3184 = vextract.low.u32 %v3183
        %v3185 = vextract.high.u32 %v3183
        %v3186 = vmul.u32 %v3179, %v3170
        %v3187 = vadd.s32 %v3182, %v3184
        %vm3188 = vc.u32 %v3182, %v3184
        %v3189 = vadd.s32 %v3185, 1
        %v3190 = vsel %vm3188, %v3189, %v3185
        %v3191 = vadd.s32 %v3186, %v3190
        %v3192 = vadd.s32 %v3191, 536870912
        %v3193 = vshrl.u32 %v3192, 30
        %v3194 = vshll.u32 %v3193, 30
        %v3195 = vsub.s32 %v3191, %v3194
        %vm3196 = vcmp.lt.s32.totalorder %v3195, 0
        %v3197 = vsub.s32 0, %v3195
        %v3198 = vsel %vm3196, %v3197, %v3195
        %v3199 = vclz %v3198
        %v3200 = vsub.s32 %v3199, 2
        %vm3201 = vcmp.gt.s32.totalorder 0, %v3200
        %v3202 = vsel %vm3201, 0, %v3200
        %v3203 = vsub.s32 32, %v3202
        %v3204 = vshll.u32 %v3195, %v3202
        %v3205 = vshrl.u32 %v3187, %v3203
        %v3206 = vor.u32 %v3204, %v3205
        %v3207 = vsub.s32 4294967266, %v3202
        %v3208 = vadd.s32 %v3207, 127
        %v3209 = vshll.u32 %v3208, 23
        %v3210 = vor.u32 4788187, %v3209
        %v3211 = vand.u32 2147483647, %v3210
        %v3213 = vcvt.s32.f32 %v3206
        %v3214 = vmul.f32 %v3213, %v3211
        %v3215 = vxor.u32 %v3214, 2147483648
        %v3216 = vsel %vm3133, %v3215, %v3214
        %v3217 = vsub.s32 4, %v3193
        %v3218 = vsel %vm3133, %v3217, %v3193
        %v3219 = vsel %vm3132, %v595, %v3216
        %v3220 = vsel %vm3132, 0, %v3218
        %v3221 = vcosq.f32.pop %v3219
        %v3222 = vsinq.f32.pop %v3219
        %vm3223 = vweird.f32 %v595
        %v3224 = vadd.s32 %v3220, 3
        %v3225 = vand.u32 %v3224, 3
        %vm3226 = vcmp.lt.s32.totalorder %v3225, 2
        %vm3227 = vcmp.eq.s32.totalorder %v3225, 0
        %v3228 = vxor.u32 %v3222, 2147483648
        %v3229 = vsel %vm3227, %v3221, %v3228
        %vm3230 = vcmp.eq.s32.totalorder %v3225, 2
        %v3231 = vxor.u32 %v3221, 2147483648
        %v3232 = vsel %vm3230, %v3231, %v3222
        %v3233 = vsel %vm3226, %v3229, %v3232
        %v3234 = vsel %vm3223, nan, %v3233
        %v3235 = vand.u32 2147483647, %v596
        %vm3236 = vcmp.le.f32.partialorder %v3235, 0.7853982
        %vm3237 = vcmp.lt.s32.totalorder %v596, 0
        %v3238 = vand.u32 %v596, 2139095040
        %v3239 = vshrl.u32 %v3238, 23
        %v3240 = vsub.s32 %v3239, 127
        %v3241 = vand.u32 2147483647, %v596
        %v3242 = vand.u32 %v3241, 8388607
        %v3243 = vor.u32 %v3242, 8388608
        %v3244 = vsub.s32 0, %v3243
        %v3245 = vadd.s32 %v3240, 1
        %vm3246 = vcmp.gt.s32.totalorder %v3245, 0
        %v3247 = vsel %vm3246, %v3245, 0
        %v3248 = vshrl.u32 %v3247, 5
        %v3249 = vand.u32 %v3247, 31
        %v3250 = vsub.s32 32, %v3249
        %v3251 = vshrl.u32 683565275, %v3250
        %v3252 = vshll.u32 683565275, %v3249
        %v3253 = vshrl.u32 2475754826, %v3250
        %v3254 = vor.u32 %v3252, %v3253
        %v3255 = vshll.u32 2475754826, %v3249
        %v3256 = vshrl.u32 2131351028, %v3250
        %v3257 = vor.u32 %v3255, %v3256
        %v3258 = vshll.u32 2131351028, %v3249
        %v3259 = vshrl.u32 2102212464, %v3250
        %v3260 = vor.u32 %v3258, %v3259
        %v3261 = vshll.u32 2102212464, %v3249
        %v3262 = vshrl.u32 920167782, %v3250
        %v3263 = vor.u32 %v3261, %v3262
        %v3264 = vshll.u32 920167782, %v3249
        %v3265 = vshrl.u32 1326507024, %v3250
        %v3266 = vor.u32 %v3264, %v3265
        %vm3267 = vcmp.lt.s32.totalorder %v3248, 1
        %vm3268 = vcmp.lt.s32.totalorder %v3248, 2
        %vm3269 = vcmp.lt.s32.totalorder %v3248, 3
        %vm3270 = vcmp.lt.s32.totalorder %v3248, 4
        %v3271 = vsel %vm3267, %v3251, %v3254
        %v3272 = vsel %vm3270, %v3260, 2102212464
        %v3273 = vsel %vm3269, %v3257, %v3272
        %v3274 = vsel %vm3268, %v3271, %v3273
        %v3275 = vsel %vm3267, %v3254, %v3257
        %v3276 = vsel %vm3270, %v3263, 920167782
        %v3277 = vsel %vm3269, %v3260, %v3276
        %v3278 = vsel %vm3268, %v3275, %v3277
        %v3279 = vsel %vm3267, %v3257, %v3260
        %v3280 = vsel %vm3270, %v3266, 1326507024
        %v3281 = vsel %vm3269, %v3263, %v3280
        %v3282 = vsel %vm3268, %v3279, %v3281
        %v3283 = vshll.u32 %v3243, 8
        %v3284 = vmul.u32.u64.compose %v3283, %v3282
        %v3285 = vextract.low.u32 %v3284
        %v3286 = vextract.high.u32 %v3284
        %v3287 = vmul.u32.u64.compose %v3283, %v3278
        %v3288 = vextract.low.u32 %v3287
        %v3289 = vextract.high.u32 %v3287
        %v3290 = vmul.u32 %v3283, %v3274
        %v3291 = vadd.s32 %v3286, %v3288
        %vm3292 = vc.u32 %v3286, %v3288
        %v3293 = vadd.s32 %v3289, 1
        %v3294 = vsel %vm3292, %v3293, %v3289
        %v3295 = vadd.s32 %v3290, %v3294
        %v3296 = vadd.s32 %v3295, 536870912
        %v3297 = vshrl.u32 %v3296, 30
        %v3298 = vshll.u32 %v3297, 30
        %v3299 = vsub.s32 %v3295, %v3298
        %vm3300 = vcmp.lt.s32.totalorder %v3299, 0
        %v3301 = vsub.s32 0, %v3299
        %v3302 = vsel %vm3300, %v3301, %v3299
        %v3303 = vclz %v3302
        %v3304 = vsub.s32 %v3303, 2
        %vm3305 = vcmp.gt.s32.totalorder 0, %v3304
        %v3306 = vsel %vm3305, 0, %v3304
        %v3307 = vsub.s32 32, %v3306
        %v3308 = vshll.u32 %v3299, %v3306
        %v3309 = vshrl.u32 %v3291, %v3307
        %v3310 = vor.u32 %v3308, %v3309
        %v3311 = vsub.s32 4294967266, %v3306
        %v3312 = vadd.s32 %v3311, 127
        %v3313 = vshll.u32 %v3312, 23
        %v3314 = vor.u32 4788187, %v3313
        %v3315 = vand.u32 2147483647, %v3314
        %v3317 = vcvt.s32.f32 %v3310
        %v3318 = vmul.f32 %v3317, %v3315
        %v3319 = vxor.u32 %v3318, 2147483648
        %v3320 = vsel %vm3237, %v3319, %v3318
        %v3321 = vsub.s32 4, %v3297
        %v3322 = vsel %vm3237, %v3321, %v3297
        %v3323 = vsel %vm3236, %v596, %v3320
        %v3324 = vsel %vm3236, 0, %v3322
        %v3325 = vcosq.f32.pop %v3323
        %v3326 = vsinq.f32.pop %v3323
        %vm3327 = vweird.f32 %v596
        %v3328 = vadd.s32 %v3324, 3
        %v3329 = vand.u32 %v3328, 3
        %vm3330 = vcmp.lt.s32.totalorder %v3329, 2
        %vm3331 = vcmp.eq.s32.totalorder %v3329, 0
        %v3332 = vxor.u32 %v3326, 2147483648
        %v3333 = vsel %vm3331, %v3325, %v3332
        %vm3334 = vcmp.eq.s32.totalorder %v3329, 2
        %v3335 = vxor.u32 %v3325, 2147483648
        %v3336 = vsel %vm3334, %v3335, %v3326
        %v3337 = vsel %vm3330, %v3333, %v3336
        %v3338 = vsel %vm3327, nan, %v3337
        %v3339 = vand.u32 2147483647, %v597
        %vm3340 = vcmp.le.f32.partialorder %v3339, 0.7853982
        %vm3341 = vcmp.lt.s32.totalorder %v597, 0
        %v3342 = vand.u32 %v597, 2139095040
        %v3343 = vshrl.u32 %v3342, 23
        %v3344 = vsub.s32 %v3343, 127
        %v3345 = vand.u32 2147483647, %v597
        %v3346 = vand.u32 %v3345, 8388607
        %v3347 = vor.u32 %v3346, 8388608
        %v3348 = vsub.s32 0, %v3347
        %v3349 = vadd.s32 %v3344, 1
        %vm3350 = vcmp.gt.s32.totalorder %v3349, 0
        %v3351 = vsel %vm3350, %v3349, 0
        %v3352 = vshrl.u32 %v3351, 5
        %v3353 = vand.u32 %v3351, 31
        %v3354 = vsub.s32 32, %v3353
        %v3355 = vshrl.u32 683565275, %v3354
        %v3356 = vshll.u32 683565275, %v3353
        %v3357 = vshrl.u32 2475754826, %v3354
        %v3358 = vor.u32 %v3356, %v3357
        %v3359 = vshll.u32 2475754826, %v3353
        %v3360 = vshrl.u32 2131351028, %v3354
        %v3361 = vor.u32 %v3359, %v3360
        %v3362 = vshll.u32 2131351028, %v3353
        %v3363 = vshrl.u32 2102212464, %v3354
        %v3364 = vor.u32 %v3362, %v3363
        %v3365 = vshll.u32 2102212464, %v3353
        %v3366 = vshrl.u32 920167782, %v3354
        %v3367 = vor.u32 %v3365, %v3366
        %v3368 = vshll.u32 920167782, %v3353
        %v3369 = vshrl.u32 1326507024, %v3354
        %v3370 = vor.u32 %v3368, %v3369
        %vm3371 = vcmp.lt.s32.totalorder %v3352, 1
        %vm3372 = vcmp.lt.s32.totalorder %v3352, 2
        %vm3373 = vcmp.lt.s32.totalorder %v3352, 3
        %vm3374 = vcmp.lt.s32.totalorder %v3352, 4
        %v3375 = vsel %vm3371, %v3355, %v3358
        %v3376 = vsel %vm3374, %v3364, 2102212464
        %v3377 = vsel %vm3373, %v3361, %v3376
        %v3378 = vsel %vm3372, %v3375, %v3377
        %v3379 = vsel %vm3371, %v3358, %v3361
        %v3380 = vsel %vm3374, %v3367, 920167782
        %v3381 = vsel %vm3373, %v3364, %v3380
        %v3382 = vsel %vm3372, %v3379, %v3381
        %v3383 = vsel %vm3371, %v3361, %v3364
        %v3384 = vsel %vm3374, %v3370, 1326507024
        %v3385 = vsel %vm3373, %v3367, %v3384
        %v3386 = vsel %vm3372, %v3383, %v3385
        %v3387 = vshll.u32 %v3347, 8
        %v3388 = vmul.u32.u64.compose %v3387, %v3386
        %v3389 = vextract.low.u32 %v3388
        %v3390 = vextract.high.u32 %v3388
        %v3391 = vmul.u32.u64.compose %v3387, %v3382
        %v3392 = vextract.low.u32 %v3391
        %v3393 = vextract.high.u32 %v3391
        %v3394 = vmul.u32 %v3387, %v3378
        %v3395 = vadd.s32 %v3390, %v3392
        %vm3396 = vc.u32 %v3390, %v3392
        %v3397 = vadd.s32 %v3393, 1
        %v3398 = vsel %vm3396, %v3397, %v3393
        %v3399 = vadd.s32 %v3394, %v3398
        %v3400 = vadd.s32 %v3399, 536870912
        %v3401 = vshrl.u32 %v3400, 30
        %v3402 = vshll.u32 %v3401, 30
        %v3403 = vsub.s32 %v3399, %v3402
        %vm3404 = vcmp.lt.s32.totalorder %v3403, 0
        %v3405 = vsub.s32 0, %v3403
        %v3406 = vsel %vm3404, %v3405, %v3403
        %v3407 = vclz %v3406
        %v3408 = vsub.s32 %v3407, 2
        %vm3409 = vcmp.gt.s32.totalorder 0, %v3408
        %v3410 = vsel %vm3409, 0, %v3408
        %v3411 = vsub.s32 32, %v3410
        %v3412 = vshll.u32 %v3403, %v3410
        %v3413 = vshrl.u32 %v3395, %v3411
        %v3414 = vor.u32 %v3412, %v3413
        %v3415 = vsub.s32 4294967266, %v3410
        %v3416 = vadd.s32 %v3415, 127
        %v3417 = vshll.u32 %v3416, 23
        %v3418 = vor.u32 4788187, %v3417
        %v3419 = vand.u32 2147483647, %v3418
        %v3421 = vcvt.s32.f32 %v3414
        %v3422 = vmul.f32 %v3421, %v3419
        %v3423 = vxor.u32 %v3422, 2147483648
        %v3424 = vsel %vm3341, %v3423, %v3422
        %v3425 = vsub.s32 4, %v3401
        %v3426 = vsel %vm3341, %v3425, %v3401
        %v3427 = vsel %vm3340, %v597, %v3424
        %v3428 = vsel %vm3340, 0, %v3426
        %v3429 = vcosq.f32.pop %v3427
        %v3430 = vsinq.f32.pop %v3427
        %vm3431 = vweird.f32 %v597
        %v3432 = vadd.s32 %v3428, 3
        %v3433 = vand.u32 %v3432, 3
        %vm3434 = vcmp.lt.s32.totalorder %v3433, 2
        %vm3435 = vcmp.eq.s32.totalorder %v3433, 0
        %v3436 = vxor.u32 %v3430, 2147483648
        %v3437 = vsel %vm3435, %v3429, %v3436
        %vm3438 = vcmp.eq.s32.totalorder %v3433, 2
        %v3439 = vxor.u32 %v3429, 2147483648
        %v3440 = vsel %vm3438, %v3439, %v3430
        %v3441 = vsel %vm3434, %v3437, %v3440
        %v3442 = vsel %vm3431, nan, %v3441
        %v3443 = vand.u32 2147483647, %v598
        %vm3444 = vcmp.le.f32.partialorder %v3443, 0.7853982
        %vm3445 = vcmp.lt.s32.totalorder %v598, 0
        %v3446 = vand.u32 %v598, 2139095040
        %v3447 = vshrl.u32 %v3446, 23
        %v3448 = vsub.s32 %v3447, 127
        %v3449 = vand.u32 2147483647, %v598
        %v3450 = vand.u32 %v3449, 8388607
        %v3451 = vor.u32 %v3450, 8388608
        %v3452 = vsub.s32 0, %v3451
        %v3453 = vadd.s32 %v3448, 1
        %vm3454 = vcmp.gt.s32.totalorder %v3453, 0
        %v3455 = vsel %vm3454, %v3453, 0
        %v3456 = vshrl.u32 %v3455, 5
        %v3457 = vand.u32 %v3455, 31
        %v3458 = vsub.s32 32, %v3457
        %v3459 = vshrl.u32 683565275, %v3458
        %v3460 = vshll.u32 683565275, %v3457
        %v3461 = vshrl.u32 2475754826, %v3458
        %v3462 = vor.u32 %v3460, %v3461
        %v3463 = vshll.u32 2475754826, %v3457
        %v3464 = vshrl.u32 2131351028, %v3458
        %v3465 = vor.u32 %v3463, %v3464
        %v3466 = vshll.u32 2131351028, %v3457
        %v3467 = vshrl.u32 2102212464, %v3458
        %v3468 = vor.u32 %v3466, %v3467
        %v3469 = vshll.u32 2102212464, %v3457
        %v3470 = vshrl.u32 920167782, %v3458
        %v3471 = vor.u32 %v3469, %v3470
        %v3472 = vshll.u32 920167782, %v3457
        %v3473 = vshrl.u32 1326507024, %v3458
        %v3474 = vor.u32 %v3472, %v3473
        %vm3475 = vcmp.lt.s32.totalorder %v3456, 1
        %vm3476 = vcmp.lt.s32.totalorder %v3456, 2
        %vm3477 = vcmp.lt.s32.totalorder %v3456, 3
        %vm3478 = vcmp.lt.s32.totalorder %v3456, 4
        %v3479 = vsel %vm3475, %v3459, %v3462
        %v3480 = vsel %vm3478, %v3468, 2102212464
        %v3481 = vsel %vm3477, %v3465, %v3480
        %v3482 = vsel %vm3476, %v3479, %v3481
        %v3483 = vsel %vm3475, %v3462, %v3465
        %v3484 = vsel %vm3478, %v3471, 920167782
        %v3485 = vsel %vm3477, %v3468, %v3484
        %v3486 = vsel %vm3476, %v3483, %v3485
        %v3487 = vsel %vm3475, %v3465, %v3468
        %v3488 = vsel %vm3478, %v3474, 1326507024
        %v3489 = vsel %vm3477, %v3471, %v3488
        %v3490 = vsel %vm3476, %v3487, %v3489
        %v3491 = vshll.u32 %v3451, 8
        %v3492 = vmul.u32.u64.compose %v3491, %v3490
        %v3493 = vextract.low.u32 %v3492
        %v3494 = vextract.high.u32 %v3492
        %v3495 = vmul.u32.u64.compose %v3491, %v3486
        %v3496 = vextract.low.u32 %v3495
        %v3497 = vextract.high.u32 %v3495
        %v3498 = vmul.u32 %v3491, %v3482
        %v3499 = vadd.s32 %v3494, %v3496
        %vm3500 = vc.u32 %v3494, %v3496
        %v3501 = vadd.s32 %v3497, 1
        %v3502 = vsel %vm3500, %v3501, %v3497
        %v3503 = vadd.s32 %v3498, %v3502
        %v3504 = vadd.s32 %v3503, 536870912
        %v3505 = vshrl.u32 %v3504, 30
        %v3506 = vshll.u32 %v3505, 30
        %v3507 = vsub.s32 %v3503, %v3506
        %vm3508 = vcmp.lt.s32.totalorder %v3507, 0
        %v3509 = vsub.s32 0, %v3507
        %v3510 = vsel %vm3508, %v3509, %v3507
        %v3511 = vclz %v3510
        %v3512 = vsub.s32 %v3511, 2
        %vm3513 = vcmp.gt.s32.totalorder 0, %v3512
        %v3514 = vsel %vm3513, 0, %v3512
        %v3515 = vsub.s32 32, %v3514
        %v3516 = vshll.u32 %v3507, %v3514
        %v3517 = vshrl.u32 %v3499, %v3515
        %v3518 = vor.u32 %v3516, %v3517
        %v3519 = vsub.s32 4294967266, %v3514
        %v3520 = vadd.s32 %v3519, 127
        %v3521 = vshll.u32 %v3520, 23
        %v3522 = vor.u32 4788187, %v3521
        %v3523 = vand.u32 2147483647, %v3522
        %v3525 = vcvt.s32.f32 %v3518
        %v3526 = vmul.f32 %v3525, %v3523
        %v3527 = vxor.u32 %v3526, 2147483648
        %v3528 = vsel %vm3445, %v3527, %v3526
        %v3529 = vsub.s32 4, %v3505
        %v3530 = vsel %vm3445, %v3529, %v3505
        %v3531 = vsel %vm3444, %v598, %v3528
        %v3532 = vsel %vm3444, 0, %v3530
        %v3533 = vcosq.f32.pop %v3531
        %v3534 = vsinq.f32.pop %v3531
        %vm3535 = vweird.f32 %v598
        %v3536 = vadd.s32 %v3532, 3
        %v3537 = vand.u32 %v3536, 3
        %vm3538 = vcmp.lt.s32.totalorder %v3537, 2
        %vm3539 = vcmp.eq.s32.totalorder %v3537, 0
        %v3540 = vxor.u32 %v3534, 2147483648
        %v3541 = vsel %vm3539, %v3533, %v3540
        %vm3542 = vcmp.eq.s32.totalorder %v3537, 2
        %v3543 = vxor.u32 %v3533, 2147483648
        %v3544 = vsel %vm3542, %v3543, %v3534
        %v3545 = vsel %vm3538, %v3541, %v3544
        %v3546 = vsel %vm3535, nan, %v3545
        %v3547 = vand.u32 2147483647, %v599
        %vm3548 = vcmp.le.f32.partialorder %v3547, 0.7853982
        %vm3549 = vcmp.lt.s32.totalorder %v599, 0
        %v3550 = vand.u32 %v599, 2139095040
        %v3551 = vshrl.u32 %v3550, 23
        %v3552 = vsub.s32 %v3551, 127
        %v3553 = vand.u32 2147483647, %v599
        %v3554 = vand.u32 %v3553, 8388607
        %v3555 = vor.u32 %v3554, 8388608
        %v3556 = vsub.s32 0, %v3555
        %v3557 = vadd.s32 %v3552, 1
        %vm3558 = vcmp.gt.s32.totalorder %v3557, 0
        %v3559 = vsel %vm3558, %v3557, 0
        %v3560 = vshrl.u32 %v3559, 5
        %v3561 = vand.u32 %v3559, 31
        %v3562 = vsub.s32 32, %v3561
        %v3563 = vshrl.u32 683565275, %v3562
        %v3564 = vshll.u32 683565275, %v3561
        %v3565 = vshrl.u32 2475754826, %v3562
        %v3566 = vor.u32 %v3564, %v3565
        %v3567 = vshll.u32 2475754826, %v3561
        %v3568 = vshrl.u32 2131351028, %v3562
        %v3569 = vor.u32 %v3567, %v3568
        %v3570 = vshll.u32 2131351028, %v3561
        %v3571 = vshrl.u32 2102212464, %v3562
        %v3572 = vor.u32 %v3570, %v3571
        %v3573 = vshll.u32 2102212464, %v3561
        %v3574 = vshrl.u32 920167782, %v3562
        %v3575 = vor.u32 %v3573, %v3574
        %v3576 = vshll.u32 920167782, %v3561
        %v3577 = vshrl.u32 1326507024, %v3562
        %v3578 = vor.u32 %v3576, %v3577
        %vm3579 = vcmp.lt.s32.totalorder %v3560, 1
        %vm3580 = vcmp.lt.s32.totalorder %v3560, 2
        %vm3581 = vcmp.lt.s32.totalorder %v3560, 3
        %vm3582 = vcmp.lt.s32.totalorder %v3560, 4
        %v3583 = vsel %vm3579, %v3563, %v3566
        %v3584 = vsel %vm3582, %v3572, 2102212464
        %v3585 = vsel %vm3581, %v3569, %v3584
        %v3586 = vsel %vm3580, %v3583, %v3585
        %v3587 = vsel %vm3579, %v3566, %v3569
        %v3588 = vsel %vm3582, %v3575, 920167782
        %v3589 = vsel %vm3581, %v3572, %v3588
        %v3590 = vsel %vm3580, %v3587, %v3589
        %v3591 = vsel %vm3579, %v3569, %v3572
        %v3592 = vsel %vm3582, %v3578, 1326507024
        %v3593 = vsel %vm3581, %v3575, %v3592
        %v3594 = vsel %vm3580, %v3591, %v3593
        %v3595 = vshll.u32 %v3555, 8
        %v3596 = vmul.u32.u64.compose %v3595, %v3594
        %v3597 = vextract.low.u32 %v3596
        %v3598 = vextract.high.u32 %v3596
        %v3599 = vmul.u32.u64.compose %v3595, %v3590
        %v3600 = vextract.low.u32 %v3599
        %v3601 = vextract.high.u32 %v3599
        %v3602 = vmul.u32 %v3595, %v3586
        %v3603 = vadd.s32 %v3598, %v3600
        %vm3604 = vc.u32 %v3598, %v3600
        %v3605 = vadd.s32 %v3601, 1
        %v3606 = vsel %vm3604, %v3605, %v3601
        %v3607 = vadd.s32 %v3602, %v3606
        %v3608 = vadd.s32 %v3607, 536870912
        %v3609 = vshrl.u32 %v3608, 30
        %v3610 = vshll.u32 %v3609, 30
        %v3611 = vsub.s32 %v3607, %v3610
        %vm3612 = vcmp.lt.s32.totalorder %v3611, 0
        %v3613 = vsub.s32 0, %v3611
        %v3614 = vsel %vm3612, %v3613, %v3611
        %v3615 = vclz %v3614
        %v3616 = vsub.s32 %v3615, 2
        %vm3617 = vcmp.gt.s32.totalorder 0, %v3616
        %v3618 = vsel %vm3617, 0, %v3616
        %v3619 = vsub.s32 32, %v3618
        %v3620 = vshll.u32 %v3611, %v3618
        %v3621 = vshrl.u32 %v3603, %v3619
        %v3622 = vor.u32 %v3620, %v3621
        %v3623 = vsub.s32 4294967266, %v3618
        %v3624 = vadd.s32 %v3623, 127
        %v3625 = vshll.u32 %v3624, 23
        %v3626 = vor.u32 4788187, %v3625
        %v3627 = vand.u32 2147483647, %v3626
        %v3629 = vcvt.s32.f32 %v3622
        %v3630 = vmul.f32 %v3629, %v3627
        %v3631 = vxor.u32 %v3630, 2147483648
        %v3632 = vsel %vm3549, %v3631, %v3630
        %v3633 = vsub.s32 4, %v3609
        %v3634 = vsel %vm3549, %v3633, %v3609
        %v3635 = vsel %vm3548, %v599, %v3632
        %v3636 = vsel %vm3548, 0, %v3634
        %v3637 = vcosq.f32.pop %v3635
        %v3638 = vsinq.f32.pop %v3635
        %vm3639 = vweird.f32 %v599
        %v3640 = vadd.s32 %v3636, 3
        %v3641 = vand.u32 %v3640, 3
        %vm3642 = vcmp.lt.s32.totalorder %v3641, 2
        %vm3643 = vcmp.eq.s32.totalorder %v3641, 0
        %v3644 = vxor.u32 %v3638, 2147483648
        %v3645 = vsel %vm3643, %v3637, %v3644
        %vm3646 = vcmp.eq.s32.totalorder %v3641, 2
        %v3647 = vxor.u32 %v3637, 2147483648
        %v3648 = vsel %vm3646, %v3647, %v3638
        %v3649 = vsel %vm3642, %v3645, %v3648
        %v3650 = vsel %vm3639, nan, %v3649
        %v3651 = vand.u32 2147483647, %v600
        %vm3652 = vcmp.le.f32.partialorder %v3651, 0.7853982
        %vm3653 = vcmp.lt.s32.totalorder %v600, 0
        %v3654 = vand.u32 %v600, 2139095040
        %v3655 = vshrl.u32 %v3654, 23
        %v3656 = vsub.s32 %v3655, 127
        %v3657 = vand.u32 2147483647, %v600
        %v3658 = vand.u32 %v3657, 8388607
        %v3659 = vor.u32 %v3658, 8388608
        %v3660 = vsub.s32 0, %v3659
        %v3661 = vadd.s32 %v3656, 1
        %vm3662 = vcmp.gt.s32.totalorder %v3661, 0
        %v3663 = vsel %vm3662, %v3661, 0
        %v3664 = vshrl.u32 %v3663, 5
        %v3665 = vand.u32 %v3663, 31
        %v3666 = vsub.s32 32, %v3665
        %v3667 = vshrl.u32 683565275, %v3666
        %v3668 = vshll.u32 683565275, %v3665
        %v3669 = vshrl.u32 2475754826, %v3666
        %v3670 = vor.u32 %v3668, %v3669
        %v3671 = vshll.u32 2475754826, %v3665
        %v3672 = vshrl.u32 2131351028, %v3666
        %v3673 = vor.u32 %v3671, %v3672
        %v3674 = vshll.u32 2131351028, %v3665
        %v3675 = vshrl.u32 2102212464, %v3666
        %v3676 = vor.u32 %v3674, %v3675
        %v3677 = vshll.u32 2102212464, %v3665
        %v3678 = vshrl.u32 920167782, %v3666
        %v3679 = vor.u32 %v3677, %v3678
        %v3680 = vshll.u32 920167782, %v3665
        %v3681 = vshrl.u32 1326507024, %v3666
        %v3682 = vor.u32 %v3680, %v3681
        %vm3683 = vcmp.lt.s32.totalorder %v3664, 1
        %vm3684 = vcmp.lt.s32.totalorder %v3664, 2
        %vm3685 = vcmp.lt.s32.totalorder %v3664, 3
        %vm3686 = vcmp.lt.s32.totalorder %v3664, 4
        %v3687 = vsel %vm3683, %v3667, %v3670
        %v3688 = vsel %vm3686, %v3676, 2102212464
        %v3689 = vsel %vm3685, %v3673, %v3688
        %v3690 = vsel %vm3684, %v3687, %v3689
        %v3691 = vsel %vm3683, %v3670, %v3673
        %v3692 = vsel %vm3686, %v3679, 920167782
        %v3693 = vsel %vm3685, %v3676, %v3692
        %v3694 = vsel %vm3684, %v3691, %v3693
        %v3695 = vsel %vm3683, %v3673, %v3676
        %v3696 = vsel %vm3686, %v3682, 1326507024
        %v3697 = vsel %vm3685, %v3679, %v3696
        %v3698 = vsel %vm3684, %v3695, %v3697
        %v3699 = vshll.u32 %v3659, 8
        %v3700 = vmul.u32.u64.compose %v3699, %v3698
        %v3701 = vextract.low.u32 %v3700
        %v3702 = vextract.high.u32 %v3700
        %v3703 = vmul.u32.u64.compose %v3699, %v3694
        %v3704 = vextract.low.u32 %v3703
        %v3705 = vextract.high.u32 %v3703
        %v3706 = vmul.u32 %v3699, %v3690
        %v3707 = vadd.s32 %v3702, %v3704
        %vm3708 = vc.u32 %v3702, %v3704
        %v3709 = vadd.s32 %v3705, 1
        %v3710 = vsel %vm3708, %v3709, %v3705
        %v3711 = vadd.s32 %v3706, %v3710
        %v3712 = vadd.s32 %v3711, 536870912
        %v3713 = vshrl.u32 %v3712, 30
        %v3714 = vshll.u32 %v3713, 30
        %v3715 = vsub.s32 %v3711, %v3714
        %vm3716 = vcmp.lt.s32.totalorder %v3715, 0
        %v3717 = vsub.s32 0, %v3715
        %v3718 = vsel %vm3716, %v3717, %v3715
        %v3719 = vclz %v3718
        %v3720 = vsub.s32 %v3719, 2
        %vm3721 = vcmp.gt.s32.totalorder 0, %v3720
        %v3722 = vsel %vm3721, 0, %v3720
        %v3723 = vsub.s32 32, %v3722
        %v3724 = vshll.u32 %v3715, %v3722
        %v3725 = vshrl.u32 %v3707, %v3723
        %v3726 = vor.u32 %v3724, %v3725
        %v3727 = vsub.s32 4294967266, %v3722
        %v3728 = vadd.s32 %v3727, 127
        %v3729 = vshll.u32 %v3728, 23
        %v3730 = vor.u32 4788187, %v3729
        %v3731 = vand.u32 2147483647, %v3730
        %v3733 = vcvt.s32.f32 %v3726
        %v3734 = vmul.f32 %v3733, %v3731
        %v3735 = vxor.u32 %v3734, 2147483648
        %v3736 = vsel %vm3653, %v3735, %v3734
        %v3737 = vsub.s32 4, %v3713
        %v3738 = vsel %vm3653, %v3737, %v3713
        %v3739 = vsel %vm3652, %v600, %v3736
        %v3740 = vsel %vm3652, 0, %v3738
        %v3741 = vcosq.f32.pop %v3739
        %v3742 = vsinq.f32.pop %v3739
        %vm3743 = vweird.f32 %v600
        %v3744 = vadd.s32 %v3740, 3
        %v3745 = vand.u32 %v3744, 3
        %vm3746 = vcmp.lt.s32.totalorder %v3745, 2
        %vm3747 = vcmp.eq.s32.totalorder %v3745, 0
        %v3748 = vxor.u32 %v3742, 2147483648
        %v3749 = vsel %vm3747, %v3741, %v3748
        %vm3750 = vcmp.eq.s32.totalorder %v3745, 2
        %v3751 = vxor.u32 %v3741, 2147483648
        %v3752 = vsel %vm3750, %v3751, %v3742
        %v3753 = vsel %vm3746, %v3749, %v3752
        %v3754 = vsel %vm3743, nan, %v3753
        %v3755 = vand.u32 2147483647, %v601
        %vm3756 = vcmp.le.f32.partialorder %v3755, 0.7853982
        %vm3757 = vcmp.lt.s32.totalorder %v601, 0
        %v3758 = vand.u32 %v601, 2139095040
        %v3759 = vshrl.u32 %v3758, 23
        %v3760 = vsub.s32 %v3759, 127
        %v3761 = vand.u32 2147483647, %v601
        %v3762 = vand.u32 %v3761, 8388607
        %v3763 = vor.u32 %v3762, 8388608
        %v3764 = vsub.s32 0, %v3763
        %v3765 = vadd.s32 %v3760, 1
        %vm3766 = vcmp.gt.s32.totalorder %v3765, 0
        %v3767 = vsel %vm3766, %v3765, 0
        %v3768 = vshrl.u32 %v3767, 5
        %v3769 = vand.u32 %v3767, 31
        %v3770 = vsub.s32 32, %v3769
        %v3771 = vshrl.u32 683565275, %v3770
        %v3772 = vshll.u32 683565275, %v3769
        %v3773 = vshrl.u32 2475754826, %v3770
        %v3774 = vor.u32 %v3772, %v3773
        %v3775 = vshll.u32 2475754826, %v3769
        %v3776 = vshrl.u32 2131351028, %v3770
        %v3777 = vor.u32 %v3775, %v3776
        %v3778 = vshll.u32 2131351028, %v3769
        %v3779 = vshrl.u32 2102212464, %v3770
        %v3780 = vor.u32 %v3778, %v3779
        %v3781 = vshll.u32 2102212464, %v3769
        %v3782 = vshrl.u32 920167782, %v3770
        %v3783 = vor.u32 %v3781, %v3782
        %v3784 = vshll.u32 920167782, %v3769
        %v3785 = vshrl.u32 1326507024, %v3770
        %v3786 = vor.u32 %v3784, %v3785
        %vm3787 = vcmp.lt.s32.totalorder %v3768, 1
        %vm3788 = vcmp.lt.s32.totalorder %v3768, 2
        %vm3789 = vcmp.lt.s32.totalorder %v3768, 3
        %vm3790 = vcmp.lt.s32.totalorder %v3768, 4
        %v3791 = vsel %vm3787, %v3771, %v3774
        %v3792 = vsel %vm3790, %v3780, 2102212464
        %v3793 = vsel %vm3789, %v3777, %v3792
        %v3794 = vsel %vm3788, %v3791, %v3793
        %v3795 = vsel %vm3787, %v3774, %v3777
        %v3796 = vsel %vm3790, %v3783, 920167782
        %v3797 = vsel %vm3789, %v3780, %v3796
        %v3798 = vsel %vm3788, %v3795, %v3797
        %v3799 = vsel %vm3787, %v3777, %v3780
        %v3800 = vsel %vm3790, %v3786, 1326507024
        %v3801 = vsel %vm3789, %v3783, %v3800
        %v3802 = vsel %vm3788, %v3799, %v3801
        %v3803 = vshll.u32 %v3763, 8
        %v3804 = vmul.u32.u64.compose %v3803, %v3802
        %v3805 = vextract.low.u32 %v3804
        %v3806 = vextract.high.u32 %v3804
        %v3807 = vmul.u32.u64.compose %v3803, %v3798
        %v3808 = vextract.low.u32 %v3807
        %v3809 = vextract.high.u32 %v3807
        %v3810 = vmul.u32 %v3803, %v3794
        %v3811 = vadd.s32 %v3806, %v3808
        %vm3812 = vc.u32 %v3806, %v3808
        %v3813 = vadd.s32 %v3809, 1
        %v3814 = vsel %vm3812, %v3813, %v3809
        %v3815 = vadd.s32 %v3810, %v3814
        %v3816 = vadd.s32 %v3815, 536870912
        %v3817 = vshrl.u32 %v3816, 30
        %v3818 = vshll.u32 %v3817, 30
        %v3819 = vsub.s32 %v3815, %v3818
        %vm3820 = vcmp.lt.s32.totalorder %v3819, 0
        %v3821 = vsub.s32 0, %v3819
        %v3822 = vsel %vm3820, %v3821, %v3819
        %v3823 = vclz %v3822
        %v3824 = vsub.s32 %v3823, 2
        %vm3825 = vcmp.gt.s32.totalorder 0, %v3824
        %v3826 = vsel %vm3825, 0, %v3824
        %v3827 = vsub.s32 32, %v3826
        %v3828 = vshll.u32 %v3819, %v3826
        %v3829 = vshrl.u32 %v3811, %v3827
        %v3830 = vor.u32 %v3828, %v3829
        %v3831 = vsub.s32 4294967266, %v3826
        %v3832 = vadd.s32 %v3831, 127
        %v3833 = vshll.u32 %v3832, 23
        %v3834 = vor.u32 4788187, %v3833
        %v3835 = vand.u32 2147483647, %v3834
        %v3837 = vcvt.s32.f32 %v3830
        %v3838 = vmul.f32 %v3837, %v3835
        %v3839 = vxor.u32 %v3838, 2147483648
        %v3840 = vsel %vm3757, %v3839, %v3838
        %v3841 = vsub.s32 4, %v3817
        %v3842 = vsel %vm3757, %v3841, %v3817
        %v3843 = vsel %vm3756, %v601, %v3840
        %v3844 = vsel %vm3756, 0, %v3842
        %v3845 = vcosq.f32.pop %v3843
        %v3846 = vsinq.f32.pop %v3843
        %vm3847 = vweird.f32 %v601
        %v3848 = vadd.s32 %v3844, 3
        %v3849 = vand.u32 %v3848, 3
        %vm3850 = vcmp.lt.s32.totalorder %v3849, 2
        %vm3851 = vcmp.eq.s32.totalorder %v3849, 0
        %v3852 = vxor.u32 %v3846, 2147483648
        %v3853 = vsel %vm3851, %v3845, %v3852
        %vm3854 = vcmp.eq.s32.totalorder %v3849, 2
        %v3855 = vxor.u32 %v3845, 2147483648
        %v3856 = vsel %vm3854, %v3855, %v3846
        %v3857 = vsel %vm3850, %v3853, %v3856
        %v3858 = vsel %vm3847, nan, %v3857
        %v3859 = vand.u32 2147483647, %v602
        %vm3860 = vcmp.le.f32.partialorder %v3859, 0.7853982
        %vm3861 = vcmp.lt.s32.totalorder %v602, 0
        %v3862 = vand.u32 %v602, 2139095040
        %v3863 = vshrl.u32 %v3862, 23
        %v3864 = vsub.s32 %v3863, 127
        %v3865 = vand.u32 2147483647, %v602
        %v3866 = vand.u32 %v3865, 8388607
        %v3867 = vor.u32 %v3866, 8388608
        %v3868 = vsub.s32 0, %v3867
        %v3869 = vadd.s32 %v3864, 1
        %vm3870 = vcmp.gt.s32.totalorder %v3869, 0
        %v3871 = vsel %vm3870, %v3869, 0
        %v3872 = vshrl.u32 %v3871, 5
        %v3873 = vand.u32 %v3871, 31
        %v3874 = vsub.s32 32, %v3873
        %v3875 = vshrl.u32 683565275, %v3874
        %v3876 = vshll.u32 683565275, %v3873
        %v3877 = vshrl.u32 2475754826, %v3874
        %v3878 = vor.u32 %v3876, %v3877
        %v3879 = vshll.u32 2475754826, %v3873
        %v3880 = vshrl.u32 2131351028, %v3874
        %v3881 = vor.u32 %v3879, %v3880
        %v3882 = vshll.u32 2131351028, %v3873
        %v3883 = vshrl.u32 2102212464, %v3874
        %v3884 = vor.u32 %v3882, %v3883
        %v3885 = vshll.u32 2102212464, %v3873
        %v3886 = vshrl.u32 920167782, %v3874
        %v3887 = vor.u32 %v3885, %v3886
        %v3888 = vshll.u32 920167782, %v3873
        %v3889 = vshrl.u32 1326507024, %v3874
        %v3890 = vor.u32 %v3888, %v3889
        %vm3891 = vcmp.lt.s32.totalorder %v3872, 1
        %vm3892 = vcmp.lt.s32.totalorder %v3872, 2
        %vm3893 = vcmp.lt.s32.totalorder %v3872, 3
        %vm3894 = vcmp.lt.s32.totalorder %v3872, 4
        %v3895 = vsel %vm3891, %v3875, %v3878
        %v3896 = vsel %vm3894, %v3884, 2102212464
        %v3897 = vsel %vm3893, %v3881, %v3896
        %v3898 = vsel %vm3892, %v3895, %v3897
        %v3899 = vsel %vm3891, %v3878, %v3881
        %v3900 = vsel %vm3894, %v3887, 920167782
        %v3901 = vsel %vm3893, %v3884, %v3900
        %v3902 = vsel %vm3892, %v3899, %v3901
        %v3903 = vsel %vm3891, %v3881, %v3884
        %v3904 = vsel %vm3894, %v3890, 1326507024
        %v3905 = vsel %vm3893, %v3887, %v3904
        %v3906 = vsel %vm3892, %v3903, %v3905
        %v3907 = vshll.u32 %v3867, 8
        %v3908 = vmul.u32.u64.compose %v3907, %v3906
        %v3909 = vextract.low.u32 %v3908
        %v3910 = vextract.high.u32 %v3908
        %v3911 = vmul.u32.u64.compose %v3907, %v3902
        %v3912 = vextract.low.u32 %v3911
        %v3913 = vextract.high.u32 %v3911
        %v3914 = vmul.u32 %v3907, %v3898
        %v3915 = vadd.s32 %v3910, %v3912
        %vm3916 = vc.u32 %v3910, %v3912
        %v3917 = vadd.s32 %v3913, 1
        %v3918 = vsel %vm3916, %v3917, %v3913
        %v3919 = vadd.s32 %v3914, %v3918
        %v3920 = vadd.s32 %v3919, 536870912
        %v3921 = vshrl.u32 %v3920, 30
        %v3922 = vshll.u32 %v3921, 30
        %v3923 = vsub.s32 %v3919, %v3922
        %vm3924 = vcmp.lt.s32.totalorder %v3923, 0
        %v3925 = vsub.s32 0, %v3923
        %v3926 = vsel %vm3924, %v3925, %v3923
        %v3927 = vclz %v3926
        %v3928 = vsub.s32 %v3927, 2
        %vm3929 = vcmp.gt.s32.totalorder 0, %v3928
        %v3930 = vsel %vm3929, 0, %v3928
        %v3931 = vsub.s32 32, %v3930
        %v3932 = vshll.u32 %v3923, %v3930
        %v3933 = vshrl.u32 %v3915, %v3931
        %v3934 = vor.u32 %v3932, %v3933
        %v3935 = vsub.s32 4294967266, %v3930
        %v3936 = vadd.s32 %v3935, 127
        %v3937 = vshll.u32 %v3936, 23
        %v3938 = vor.u32 4788187, %v3937
        %v3939 = vand.u32 2147483647, %v3938
        %v3941 = vcvt.s32.f32 %v3934
        %v3942 = vmul.f32 %v3941, %v3939
        %v3943 = vxor.u32 %v3942, 2147483648
        %v3944 = vsel %vm3861, %v3943, %v3942
        %v3945 = vsub.s32 4, %v3921
        %v3946 = vsel %vm3861, %v3945, %v3921
        %v3947 = vsel %vm3860, %v602, %v3944
        %v3948 = vsel %vm3860, 0, %v3946
        %v3949 = vcosq.f32.pop %v3947
        %v3950 = vsinq.f32.pop %v3947
        %vm3951 = vweird.f32 %v602
        %v3952 = vadd.s32 %v3948, 3
        %v3953 = vand.u32 %v3952, 3
        %vm3954 = vcmp.lt.s32.totalorder %v3953, 2
        %vm3955 = vcmp.eq.s32.totalorder %v3953, 0
        %v3956 = vxor.u32 %v3950, 2147483648
        %v3957 = vsel %vm3955, %v3949, %v3956
        %vm3958 = vcmp.eq.s32.totalorder %v3953, 2
        %v3959 = vxor.u32 %v3949, 2147483648
        %v3960 = vsel %vm3958, %v3959, %v3950
        %v3961 = vsel %vm3954, %v3957, %v3960
        %v3962 = vsel %vm3951, nan, %v3961
        %v3963 = vand.u32 2147483647, %v603
        %vm3964 = vcmp.le.f32.partialorder %v3963, 0.7853982
        %vm3965 = vcmp.lt.s32.totalorder %v603, 0
        %v3966 = vand.u32 %v603, 2139095040
        %v3967 = vshrl.u32 %v3966, 23
        %v3968 = vsub.s32 %v3967, 127
        %v3969 = vand.u32 2147483647, %v603
        %v3970 = vand.u32 %v3969, 8388607
        %v3971 = vor.u32 %v3970, 8388608
        %v3972 = vsub.s32 0, %v3971
        %v3973 = vadd.s32 %v3968, 1
        %vm3974 = vcmp.gt.s32.totalorder %v3973, 0
        %v3975 = vsel %vm3974, %v3973, 0
        %v3976 = vshrl.u32 %v3975, 5
        %v3977 = vand.u32 %v3975, 31
        %v3978 = vsub.s32 32, %v3977
        %v3979 = vshrl.u32 683565275, %v3978
        %v3980 = vshll.u32 683565275, %v3977
        %v3981 = vshrl.u32 2475754826, %v3978
        %v3982 = vor.u32 %v3980, %v3981
        %v3983 = vshll.u32 2475754826, %v3977
        %v3984 = vshrl.u32 2131351028, %v3978
        %v3985 = vor.u32 %v3983, %v3984
        %v3986 = vshll.u32 2131351028, %v3977
        %v3987 = vshrl.u32 2102212464, %v3978
        %v3988 = vor.u32 %v3986, %v3987
        %v3989 = vshll.u32 2102212464, %v3977
        %v3990 = vshrl.u32 920167782, %v3978
        %v3991 = vor.u32 %v3989, %v3990
        %v3992 = vshll.u32 920167782, %v3977
        %v3993 = vshrl.u32 1326507024, %v3978
        %v3994 = vor.u32 %v3992, %v3993
        %vm3995 = vcmp.lt.s32.totalorder %v3976, 1
        %vm3996 = vcmp.lt.s32.totalorder %v3976, 2
        %vm3997 = vcmp.lt.s32.totalorder %v3976, 3
        %vm3998 = vcmp.lt.s32.totalorder %v3976, 4
        %v3999 = vsel %vm3995, %v3979, %v3982
        %v4000 = vsel %vm3998, %v3988, 2102212464
        %v4001 = vsel %vm3997, %v3985, %v4000
        %v4002 = vsel %vm3996, %v3999, %v4001
        %v4003 = vsel %vm3995, %v3982, %v3985
        %v4004 = vsel %vm3998, %v3991, 920167782
        %v4005 = vsel %vm3997, %v3988, %v4004
        %v4006 = vsel %vm3996, %v4003, %v4005
        %v4007 = vsel %vm3995, %v3985, %v3988
        %v4008 = vsel %vm3998, %v3994, 1326507024
        %v4009 = vsel %vm3997, %v3991, %v4008
        %v4010 = vsel %vm3996, %v4007, %v4009
        %v4011 = vshll.u32 %v3971, 8
        %v4012 = vmul.u32.u64.compose %v4011, %v4010
        %v4013 = vextract.low.u32 %v4012
        %v4014 = vextract.high.u32 %v4012
        %v4015 = vmul.u32.u64.compose %v4011, %v4006
        %v4016 = vextract.low.u32 %v4015
        %v4017 = vextract.high.u32 %v4015
        %v4018 = vmul.u32 %v4011, %v4002
        %v4019 = vadd.s32 %v4014, %v4016
        %vm4020 = vc.u32 %v4014, %v4016
        %v4021 = vadd.s32 %v4017, 1
        %v4022 = vsel %vm4020, %v4021, %v4017
        %v4023 = vadd.s32 %v4018, %v4022
        %v4024 = vadd.s32 %v4023, 536870912
        %v4025 = vshrl.u32 %v4024, 30
        %v4026 = vshll.u32 %v4025, 30
        %v4027 = vsub.s32 %v4023, %v4026
        %vm4028 = vcmp.lt.s32.totalorder %v4027, 0
        %v4029 = vsub.s32 0, %v4027
        %v4030 = vsel %vm4028, %v4029, %v4027
        %v4031 = vclz %v4030
        %v4032 = vsub.s32 %v4031, 2
        %vm4033 = vcmp.gt.s32.totalorder 0, %v4032
        %v4034 = vsel %vm4033, 0, %v4032
        %v4035 = vsub.s32 32, %v4034
        %v4036 = vshll.u32 %v4027, %v4034
        %v4037 = vshrl.u32 %v4019, %v4035
        %v4038 = vor.u32 %v4036, %v4037
        %v4039 = vsub.s32 4294967266, %v4034
        %v4040 = vadd.s32 %v4039, 127
        %v4041 = vshll.u32 %v4040, 23
        %v4042 = vor.u32 4788187, %v4041
        %v4043 = vand.u32 2147483647, %v4042
        %v4045 = vcvt.s32.f32 %v4038
        %v4046 = vmul.f32 %v4045, %v4043
        %v4047 = vxor.u32 %v4046, 2147483648
        %v4048 = vsel %vm3965, %v4047, %v4046
        %v4049 = vsub.s32 4, %v4025
        %v4050 = vsel %vm3965, %v4049, %v4025
        %v4051 = vsel %vm3964, %v603, %v4048
        %v4052 = vsel %vm3964, 0, %v4050
        %v4053 = vcosq.f32.pop %v4051
        %v4054 = vsinq.f32.pop %v4051
        %vm4055 = vweird.f32 %v603
        %v4056 = vadd.s32 %v4052, 3
        %v4057 = vand.u32 %v4056, 3
        %vm4058 = vcmp.lt.s32.totalorder %v4057, 2
        %vm4059 = vcmp.eq.s32.totalorder %v4057, 0
        %v4060 = vxor.u32 %v4054, 2147483648
        %v4061 = vsel %vm4059, %v4053, %v4060
        %vm4062 = vcmp.eq.s32.totalorder %v4057, 2
        %v4063 = vxor.u32 %v4053, 2147483648
        %v4064 = vsel %vm4062, %v4063, %v4054
        %v4065 = vsel %vm4058, %v4061, %v4064
        %v4066 = vsel %vm4055, nan, %v4065
        %v4067 = vand.u32 2147483647, %v604
        %vm4068 = vcmp.le.f32.partialorder %v4067, 0.7853982
        %vm4069 = vcmp.lt.s32.totalorder %v604, 0
        %v4070 = vand.u32 %v604, 2139095040
        %v4071 = vshrl.u32 %v4070, 23
        %v4072 = vsub.s32 %v4071, 127
        %v4073 = vand.u32 2147483647, %v604
        %v4074 = vand.u32 %v4073, 8388607
        %v4075 = vor.u32 %v4074, 8388608
        %v4076 = vsub.s32 0, %v4075
        %v4077 = vadd.s32 %v4072, 1
        %vm4078 = vcmp.gt.s32.totalorder %v4077, 0
        %v4079 = vsel %vm4078, %v4077, 0
        %v4080 = vshrl.u32 %v4079, 5
        %v4081 = vand.u32 %v4079, 31
        %v4082 = vsub.s32 32, %v4081
        %v4083 = vshrl.u32 683565275, %v4082
        %v4084 = vshll.u32 683565275, %v4081
        %v4085 = vshrl.u32 2475754826, %v4082
        %v4086 = vor.u32 %v4084, %v4085
        %v4087 = vshll.u32 2475754826, %v4081
        %v4088 = vshrl.u32 2131351028, %v4082
        %v4089 = vor.u32 %v4087, %v4088
        %v4090 = vshll.u32 2131351028, %v4081
        %v4091 = vshrl.u32 2102212464, %v4082
        %v4092 = vor.u32 %v4090, %v4091
        %v4093 = vshll.u32 2102212464, %v4081
        %v4094 = vshrl.u32 920167782, %v4082
        %v4095 = vor.u32 %v4093, %v4094
        %v4096 = vshll.u32 920167782, %v4081
        %v4097 = vshrl.u32 1326507024, %v4082
        %v4098 = vor.u32 %v4096, %v4097
        %vm4099 = vcmp.lt.s32.totalorder %v4080, 1
        %vm4100 = vcmp.lt.s32.totalorder %v4080, 2
        %vm4101 = vcmp.lt.s32.totalorder %v4080, 3
        %vm4102 = vcmp.lt.s32.totalorder %v4080, 4
        %v4103 = vsel %vm4099, %v4083, %v4086
        %v4104 = vsel %vm4102, %v4092, 2102212464
        %v4105 = vsel %vm4101, %v4089, %v4104
        %v4106 = vsel %vm4100, %v4103, %v4105
        %v4107 = vsel %vm4099, %v4086, %v4089
        %v4108 = vsel %vm4102, %v4095, 920167782
        %v4109 = vsel %vm4101, %v4092, %v4108
        %v4110 = vsel %vm4100, %v4107, %v4109
        %v4111 = vsel %vm4099, %v4089, %v4092
        %v4112 = vsel %vm4102, %v4098, 1326507024
        %v4113 = vsel %vm4101, %v4095, %v4112
        %v4114 = vsel %vm4100, %v4111, %v4113
        %v4115 = vshll.u32 %v4075, 8
        %v4116 = vmul.u32.u64.compose %v4115, %v4114
        %v4117 = vextract.low.u32 %v4116
        %v4118 = vextract.high.u32 %v4116
        %v4119 = vmul.u32.u64.compose %v4115, %v4110
        %v4120 = vextract.low.u32 %v4119
        %v4121 = vextract.high.u32 %v4119
        %v4122 = vmul.u32 %v4115, %v4106
        %v4123 = vadd.s32 %v4118, %v4120
        %vm4124 = vc.u32 %v4118, %v4120
        %v4125 = vadd.s32 %v4121, 1
        %v4126 = vsel %vm4124, %v4125, %v4121
        %v4127 = vadd.s32 %v4122, %v4126
        %v4128 = vadd.s32 %v4127, 536870912
        %v4129 = vshrl.u32 %v4128, 30
        %v4130 = vshll.u32 %v4129, 30
        %v4131 = vsub.s32 %v4127, %v4130
        %vm4132 = vcmp.lt.s32.totalorder %v4131, 0
        %v4133 = vsub.s32 0, %v4131
        %v4134 = vsel %vm4132, %v4133, %v4131
        %v4135 = vclz %v4134
        %v4136 = vsub.s32 %v4135, 2
        %vm4137 = vcmp.gt.s32.totalorder 0, %v4136
        %v4138 = vsel %vm4137, 0, %v4136
        %v4139 = vsub.s32 32, %v4138
        %v4140 = vshll.u32 %v4131, %v4138
        %v4141 = vshrl.u32 %v4123, %v4139
        %v4142 = vor.u32 %v4140, %v4141
        %v4143 = vsub.s32 4294967266, %v4138
        %v4144 = vadd.s32 %v4143, 127
        %v4145 = vshll.u32 %v4144, 23
        %v4146 = vor.u32 4788187, %v4145
        %v4147 = vand.u32 2147483647, %v4146
        %v4149 = vcvt.s32.f32 %v4142
        %v4150 = vmul.f32 %v4149, %v4147
        %v4151 = vxor.u32 %v4150, 2147483648
        %v4152 = vsel %vm4069, %v4151, %v4150
        %v4153 = vsub.s32 4, %v4129
        %v4154 = vsel %vm4069, %v4153, %v4129
        %v4155 = vsel %vm4068, %v604, %v4152
        %v4156 = vsel %vm4068, 0, %v4154
        %v4157 = vcosq.f32.pop %v4155
        %v4158 = vsinq.f32.pop %v4155
        %vm4159 = vweird.f32 %v604
        %v4160 = vadd.s32 %v4156, 3
        %v4161 = vand.u32 %v4160, 3
        %vm4162 = vcmp.lt.s32.totalorder %v4161, 2
        %vm4163 = vcmp.eq.s32.totalorder %v4161, 0
        %v4164 = vxor.u32 %v4158, 2147483648
        %v4165 = vsel %vm4163, %v4157, %v4164
        %vm4166 = vcmp.eq.s32.totalorder %v4161, 2
        %v4167 = vxor.u32 %v4157, 2147483648
        %v4168 = vsel %vm4166, %v4167, %v4158
        %v4169 = vsel %vm4162, %v4165, %v4168
        %v4170 = vsel %vm4159, nan, %v4169
        %v4171 = vand.u32 2147483647, %v605
        %vm4172 = vcmp.le.f32.partialorder %v4171, 0.7853982
        %vm4173 = vcmp.lt.s32.totalorder %v605, 0
        %v4174 = vand.u32 %v605, 2139095040
        %v4175 = vshrl.u32 %v4174, 23
        %v4176 = vsub.s32 %v4175, 127
        %v4177 = vand.u32 2147483647, %v605
        %v4178 = vand.u32 %v4177, 8388607
        %v4179 = vor.u32 %v4178, 8388608
        %v4180 = vsub.s32 0, %v4179
        %v4181 = vadd.s32 %v4176, 1
        %vm4182 = vcmp.gt.s32.totalorder %v4181, 0
        %v4183 = vsel %vm4182, %v4181, 0
        %v4184 = vshrl.u32 %v4183, 5
        %v4185 = vand.u32 %v4183, 31
        %v4186 = vsub.s32 32, %v4185
        %v4187 = vshrl.u32 683565275, %v4186
        %v4188 = vshll.u32 683565275, %v4185
        %v4189 = vshrl.u32 2475754826, %v4186
        %v4190 = vor.u32 %v4188, %v4189
        %v4191 = vshll.u32 2475754826, %v4185
        %v4192 = vshrl.u32 2131351028, %v4186
        %v4193 = vor.u32 %v4191, %v4192
        %v4194 = vshll.u32 2131351028, %v4185
        %v4195 = vshrl.u32 2102212464, %v4186
        %v4196 = vor.u32 %v4194, %v4195
        %v4197 = vshll.u32 2102212464, %v4185
        %v4198 = vshrl.u32 920167782, %v4186
        %v4199 = vor.u32 %v4197, %v4198
        %v4200 = vshll.u32 920167782, %v4185
        %v4201 = vshrl.u32 1326507024, %v4186
        %v4202 = vor.u32 %v4200, %v4201
        %vm4203 = vcmp.lt.s32.totalorder %v4184, 1
        %vm4204 = vcmp.lt.s32.totalorder %v4184, 2
        %vm4205 = vcmp.lt.s32.totalorder %v4184, 3
        %vm4206 = vcmp.lt.s32.totalorder %v4184, 4
        %v4207 = vsel %vm4203, %v4187, %v4190
        %v4208 = vsel %vm4206, %v4196, 2102212464
        %v4209 = vsel %vm4205, %v4193, %v4208
        %v4210 = vsel %vm4204, %v4207, %v4209
        %v4211 = vsel %vm4203, %v4190, %v4193
        %v4212 = vsel %vm4206, %v4199, 920167782
        %v4213 = vsel %vm4205, %v4196, %v4212
        %v4214 = vsel %vm4204, %v4211, %v4213
        %v4215 = vsel %vm4203, %v4193, %v4196
        %v4216 = vsel %vm4206, %v4202, 1326507024
        %v4217 = vsel %vm4205, %v4199, %v4216
        %v4218 = vsel %vm4204, %v4215, %v4217
        %v4219 = vshll.u32 %v4179, 8
        %v4220 = vmul.u32.u64.compose %v4219, %v4218
        %v4221 = vextract.low.u32 %v4220
        %v4222 = vextract.high.u32 %v4220
        %v4223 = vmul.u32.u64.compose %v4219, %v4214
        %v4224 = vextract.low.u32 %v4223
        %v4225 = vextract.high.u32 %v4223
        %v4226 = vmul.u32 %v4219, %v4210
        %v4227 = vadd.s32 %v4222, %v4224
        %vm4228 = vc.u32 %v4222, %v4224
        %v4229 = vadd.s32 %v4225, 1
        %v4230 = vsel %vm4228, %v4229, %v4225
        %v4231 = vadd.s32 %v4226, %v4230
        %v4232 = vadd.s32 %v4231, 536870912
        %v4233 = vshrl.u32 %v4232, 30
        %v4234 = vshll.u32 %v4233, 30
        %v4235 = vsub.s32 %v4231, %v4234
        %vm4236 = vcmp.lt.s32.totalorder %v4235, 0
        %v4237 = vsub.s32 0, %v4235
        %v4238 = vsel %vm4236, %v4237, %v4235
        %v4239 = vclz %v4238
        %v4240 = vsub.s32 %v4239, 2
        %vm4241 = vcmp.gt.s32.totalorder 0, %v4240
        %v4242 = vsel %vm4241, 0, %v4240
        %v4243 = vsub.s32 32, %v4242
        %v4244 = vshll.u32 %v4235, %v4242
        %v4245 = vshrl.u32 %v4227, %v4243
        %v4246 = vor.u32 %v4244, %v4245
        %v4247 = vsub.s32 4294967266, %v4242
        %v4248 = vadd.s32 %v4247, 127
        %v4249 = vshll.u32 %v4248, 23
        %v4250 = vor.u32 4788187, %v4249
        %v4251 = vand.u32 2147483647, %v4250
        %v4253 = vcvt.s32.f32 %v4246
        %v4254 = vmul.f32 %v4253, %v4251
        %v4255 = vxor.u32 %v4254, 2147483648
        %v4256 = vsel %vm4173, %v4255, %v4254
        %v4257 = vsub.s32 4, %v4233
        %v4258 = vsel %vm4173, %v4257, %v4233
        %v4259 = vsel %vm4172, %v605, %v4256
        %v4260 = vsel %vm4172, 0, %v4258
        %v4261 = vcosq.f32.pop %v4259
        %v4262 = vsinq.f32.pop %v4259
        %vm4263 = vweird.f32 %v605
        %v4264 = vadd.s32 %v4260, 3
        %v4265 = vand.u32 %v4264, 3
        %vm4266 = vcmp.lt.s32.totalorder %v4265, 2
        %vm4267 = vcmp.eq.s32.totalorder %v4265, 0
        %v4268 = vxor.u32 %v4262, 2147483648
        %v4269 = vsel %vm4267, %v4261, %v4268
        %vm4270 = vcmp.eq.s32.totalorder %v4265, 2
        %v4271 = vxor.u32 %v4261, 2147483648
        %v4272 = vsel %vm4270, %v4271, %v4262
        %v4273 = vsel %vm4266, %v4269, %v4272
        %v4274 = vsel %vm4263, nan, %v4273
        %v4275 = vand.u32 2147483647, %v606
        %vm4276 = vcmp.le.f32.partialorder %v4275, 0.7853982
        %vm4277 = vcmp.lt.s32.totalorder %v606, 0
        %v4278 = vand.u32 %v606, 2139095040
        %v4279 = vshrl.u32 %v4278, 23
        %v4280 = vsub.s32 %v4279, 127
        %v4281 = vand.u32 2147483647, %v606
        %v4282 = vand.u32 %v4281, 8388607
        %v4283 = vor.u32 %v4282, 8388608
        %v4284 = vsub.s32 0, %v4283
        %v4285 = vadd.s32 %v4280, 1
        %vm4286 = vcmp.gt.s32.totalorder %v4285, 0
        %v4287 = vsel %vm4286, %v4285, 0
        %v4288 = vshrl.u32 %v4287, 5
        %v4289 = vand.u32 %v4287, 31
        %v4290 = vsub.s32 32, %v4289
        %v4291 = vshrl.u32 683565275, %v4290
        %v4292 = vshll.u32 683565275, %v4289
        %v4293 = vshrl.u32 2475754826, %v4290
        %v4294 = vor.u32 %v4292, %v4293
        %v4295 = vshll.u32 2475754826, %v4289
        %v4296 = vshrl.u32 2131351028, %v4290
        %v4297 = vor.u32 %v4295, %v4296
        %v4298 = vshll.u32 2131351028, %v4289
        %v4299 = vshrl.u32 2102212464, %v4290
        %v4300 = vor.u32 %v4298, %v4299
        %v4301 = vshll.u32 2102212464, %v4289
        %v4302 = vshrl.u32 920167782, %v4290
        %v4303 = vor.u32 %v4301, %v4302
        %v4304 = vshll.u32 920167782, %v4289
        %v4305 = vshrl.u32 1326507024, %v4290
        %v4306 = vor.u32 %v4304, %v4305
        %vm4307 = vcmp.lt.s32.totalorder %v4288, 1
        %vm4308 = vcmp.lt.s32.totalorder %v4288, 2
        %vm4309 = vcmp.lt.s32.totalorder %v4288, 3
        %vm4310 = vcmp.lt.s32.totalorder %v4288, 4
        %v4311 = vsel %vm4307, %v4291, %v4294
        %v4312 = vsel %vm4310, %v4300, 2102212464
        %v4313 = vsel %vm4309, %v4297, %v4312
        %v4314 = vsel %vm4308, %v4311, %v4313
        %v4315 = vsel %vm4307, %v4294, %v4297
        %v4316 = vsel %vm4310, %v4303, 920167782
        %v4317 = vsel %vm4309, %v4300, %v4316
        %v4318 = vsel %vm4308, %v4315, %v4317
        %v4319 = vsel %vm4307, %v4297, %v4300
        %v4320 = vsel %vm4310, %v4306, 1326507024
        %v4321 = vsel %vm4309, %v4303, %v4320
        %v4322 = vsel %vm4308, %v4319, %v4321
        %v4323 = vshll.u32 %v4283, 8
        %v4324 = vmul.u32.u64.compose %v4323, %v4322
        %v4325 = vextract.low.u32 %v4324
        %v4326 = vextract.high.u32 %v4324
        %v4327 = vmul.u32.u64.compose %v4323, %v4318
        %v4328 = vextract.low.u32 %v4327
        %v4329 = vextract.high.u32 %v4327
        %v4330 = vmul.u32 %v4323, %v4314
        %v4331 = vadd.s32 %v4326, %v4328
        %vm4332 = vc.u32 %v4326, %v4328
        %v4333 = vadd.s32 %v4329, 1
        %v4334 = vsel %vm4332, %v4333, %v4329
        %v4335 = vadd.s32 %v4330, %v4334
        %v4336 = vadd.s32 %v4335, 536870912
        %v4337 = vshrl.u32 %v4336, 30
        %v4338 = vshll.u32 %v4337, 30
        %v4339 = vsub.s32 %v4335, %v4338
        %vm4340 = vcmp.lt.s32.totalorder %v4339, 0
        %v4341 = vsub.s32 0, %v4339
        %v4342 = vsel %vm4340, %v4341, %v4339
        %v4343 = vclz %v4342
        %v4344 = vsub.s32 %v4343, 2
        %vm4345 = vcmp.gt.s32.totalorder 0, %v4344
        %v4346 = vsel %vm4345, 0, %v4344
        %v4347 = vsub.s32 32, %v4346
        %v4348 = vshll.u32 %v4339, %v4346
        %v4349 = vshrl.u32 %v4331, %v4347
        %v4350 = vor.u32 %v4348, %v4349
        %v4351 = vsub.s32 4294967266, %v4346
        %v4352 = vadd.s32 %v4351, 127
        %v4353 = vshll.u32 %v4352, 23
        %v4354 = vor.u32 4788187, %v4353
        %v4355 = vand.u32 2147483647, %v4354
        %v4357 = vcvt.s32.f32 %v4350
        %v4358 = vmul.f32 %v4357, %v4355
        %v4359 = vxor.u32 %v4358, 2147483648
        %v4360 = vsel %vm4277, %v4359, %v4358
        %v4361 = vsub.s32 4, %v4337
        %v4362 = vsel %vm4277, %v4361, %v4337
        %v4363 = vsel %vm4276, %v606, %v4360
        %v4364 = vsel %vm4276, 0, %v4362
        %v4365 = vcosq.f32.pop %v4363
        %v4366 = vsinq.f32.pop %v4363
        %vm4367 = vweird.f32 %v606
        %v4368 = vadd.s32 %v4364, 3
        %v4369 = vand.u32 %v4368, 3
        %vm4370 = vcmp.lt.s32.totalorder %v4369, 2
        %vm4371 = vcmp.eq.s32.totalorder %v4369, 0
        %v4372 = vxor.u32 %v4366, 2147483648
        %v4373 = vsel %vm4371, %v4365, %v4372
        %vm4374 = vcmp.eq.s32.totalorder %v4369, 2
        %v4375 = vxor.u32 %v4365, 2147483648
        %v4376 = vsel %vm4374, %v4375, %v4366
        %v4377 = vsel %vm4370, %v4373, %v4376
        %v4378 = vsel %vm4367, nan, %v4377
        %v4379 = vand.u32 2147483647, %v607
        %vm4380 = vcmp.le.f32.partialorder %v4379, 0.7853982
        %vm4381 = vcmp.lt.s32.totalorder %v607, 0
        %v4382 = vand.u32 %v607, 2139095040
        %v4383 = vshrl.u32 %v4382, 23
        %v4384 = vsub.s32 %v4383, 127
        %v4385 = vand.u32 2147483647, %v607
        %v4386 = vand.u32 %v4385, 8388607
        %v4387 = vor.u32 %v4386, 8388608
        %v4388 = vsub.s32 0, %v4387
        %v4389 = vadd.s32 %v4384, 1
        %vm4390 = vcmp.gt.s32.totalorder %v4389, 0
        %v4391 = vsel %vm4390, %v4389, 0
        %v4392 = vshrl.u32 %v4391, 5
        %v4393 = vand.u32 %v4391, 31
        %v4394 = vsub.s32 32, %v4393
        %v4395 = vshrl.u32 683565275, %v4394
        %v4396 = vshll.u32 683565275, %v4393
        %v4397 = vshrl.u32 2475754826, %v4394
        %v4398 = vor.u32 %v4396, %v4397
        %v4399 = vshll.u32 2475754826, %v4393
        %v4400 = vshrl.u32 2131351028, %v4394
        %v4401 = vor.u32 %v4399, %v4400
        %v4402 = vshll.u32 2131351028, %v4393
        %v4403 = vshrl.u32 2102212464, %v4394
        %v4404 = vor.u32 %v4402, %v4403
        %v4405 = vshll.u32 2102212464, %v4393
        %v4406 = vshrl.u32 920167782, %v4394
        %v4407 = vor.u32 %v4405, %v4406
        %v4408 = vshll.u32 920167782, %v4393
        %v4409 = vshrl.u32 1326507024, %v4394
        %v4410 = vor.u32 %v4408, %v4409
        %vm4411 = vcmp.lt.s32.totalorder %v4392, 1
        %vm4412 = vcmp.lt.s32.totalorder %v4392, 2
        %vm4413 = vcmp.lt.s32.totalorder %v4392, 3
        %vm4414 = vcmp.lt.s32.totalorder %v4392, 4
        %v4415 = vsel %vm4411, %v4395, %v4398
        %v4416 = vsel %vm4414, %v4404, 2102212464
        %v4417 = vsel %vm4413, %v4401, %v4416
        %v4418 = vsel %vm4412, %v4415, %v4417
        %v4419 = vsel %vm4411, %v4398, %v4401
        %v4420 = vsel %vm4414, %v4407, 920167782
        %v4421 = vsel %vm4413, %v4404, %v4420
        %v4422 = vsel %vm4412, %v4419, %v4421
        %v4423 = vsel %vm4411, %v4401, %v4404
        %v4424 = vsel %vm4414, %v4410, 1326507024
        %v4425 = vsel %vm4413, %v4407, %v4424
        %v4426 = vsel %vm4412, %v4423, %v4425
        %v4427 = vshll.u32 %v4387, 8
        %v4428 = vmul.u32.u64.compose %v4427, %v4426
        %v4429 = vextract.low.u32 %v4428
        %v4430 = vextract.high.u32 %v4428
        %v4431 = vmul.u32.u64.compose %v4427, %v4422
        %v4432 = vextract.low.u32 %v4431
        %v4433 = vextract.high.u32 %v4431
        %v4434 = vmul.u32 %v4427, %v4418
        %v4435 = vadd.s32 %v4430, %v4432
        %vm4436 = vc.u32 %v4430, %v4432
        %v4437 = vadd.s32 %v4433, 1
        %v4438 = vsel %vm4436, %v4437, %v4433
        %v4439 = vadd.s32 %v4434, %v4438
        %v4440 = vadd.s32 %v4439, 536870912
        %v4441 = vshrl.u32 %v4440, 30
        %v4442 = vshll.u32 %v4441, 30
        %v4443 = vsub.s32 %v4439, %v4442
        %vm4444 = vcmp.lt.s32.totalorder %v4443, 0
        %v4445 = vsub.s32 0, %v4443
        %v4446 = vsel %vm4444, %v4445, %v4443
        %v4447 = vclz %v4446
        %v4448 = vsub.s32 %v4447, 2
        %vm4449 = vcmp.gt.s32.totalorder 0, %v4448
        %v4450 = vsel %vm4449, 0, %v4448
        %v4451 = vsub.s32 32, %v4450
        %v4452 = vshll.u32 %v4443, %v4450
        %v4453 = vshrl.u32 %v4435, %v4451
        %v4454 = vor.u32 %v4452, %v4453
        %v4455 = vsub.s32 4294967266, %v4450
        %v4456 = vadd.s32 %v4455, 127
        %v4457 = vshll.u32 %v4456, 23
        %v4458 = vor.u32 4788187, %v4457
        %v4459 = vand.u32 2147483647, %v4458
        %v4461 = vcvt.s32.f32 %v4454
        %v4462 = vmul.f32 %v4461, %v4459
        %v4463 = vxor.u32 %v4462, 2147483648
        %v4464 = vsel %vm4381, %v4463, %v4462
        %v4465 = vsub.s32 4, %v4441
        %v4466 = vsel %vm4381, %v4465, %v4441
        %v4467 = vsel %vm4380, %v607, %v4464
        %v4468 = vsel %vm4380, 0, %v4466
        %v4469 = vcosq.f32.pop %v4467
        %v4470 = vsinq.f32.pop %v4467
        %vm4471 = vweird.f32 %v607
        %v4472 = vadd.s32 %v4468, 3
        %v4473 = vand.u32 %v4472, 3
        %vm4474 = vcmp.lt.s32.totalorder %v4473, 2
        %vm4475 = vcmp.eq.s32.totalorder %v4473, 0
        %v4476 = vxor.u32 %v4470, 2147483648
        %v4477 = vsel %vm4475, %v4469, %v4476
        %vm4478 = vcmp.eq.s32.totalorder %v4473, 2
        %v4479 = vxor.u32 %v4469, 2147483648
        %v4480 = vsel %vm4478, %v4479, %v4470
        %v4481 = vsel %vm4474, %v4477, %v4480
        %v4482 = vsel %vm4471, nan, %v4481
        %v4483 = vand.u32 2147483647, %v608
        %vm4484 = vcmp.le.f32.partialorder %v4483, 0.7853982
        %vm4485 = vcmp.lt.s32.totalorder %v608, 0
        %v4486 = vand.u32 %v608, 2139095040
        %v4487 = vshrl.u32 %v4486, 23
        %v4488 = vsub.s32 %v4487, 127
        %v4489 = vand.u32 2147483647, %v608
        %v4490 = vand.u32 %v4489, 8388607
        %v4491 = vor.u32 %v4490, 8388608
        %v4492 = vsub.s32 0, %v4491
        %v4493 = vadd.s32 %v4488, 1
        %vm4494 = vcmp.gt.s32.totalorder %v4493, 0
        %v4495 = vsel %vm4494, %v4493, 0
        %v4496 = vshrl.u32 %v4495, 5
        %v4497 = vand.u32 %v4495, 31
        %v4498 = vsub.s32 32, %v4497
        %v4499 = vshrl.u32 683565275, %v4498
        %v4500 = vshll.u32 683565275, %v4497
        %v4501 = vshrl.u32 2475754826, %v4498
        %v4502 = vor.u32 %v4500, %v4501
        %v4503 = vshll.u32 2475754826, %v4497
        %v4504 = vshrl.u32 2131351028, %v4498
        %v4505 = vor.u32 %v4503, %v4504
        %v4506 = vshll.u32 2131351028, %v4497
        %v4507 = vshrl.u32 2102212464, %v4498
        %v4508 = vor.u32 %v4506, %v4507
        %v4509 = vshll.u32 2102212464, %v4497
        %v4510 = vshrl.u32 920167782, %v4498
        %v4511 = vor.u32 %v4509, %v4510
        %v4512 = vshll.u32 920167782, %v4497
        %v4513 = vshrl.u32 1326507024, %v4498
        %v4514 = vor.u32 %v4512, %v4513
        %vm4515 = vcmp.lt.s32.totalorder %v4496, 1
        %vm4516 = vcmp.lt.s32.totalorder %v4496, 2
        %vm4517 = vcmp.lt.s32.totalorder %v4496, 3
        %vm4518 = vcmp.lt.s32.totalorder %v4496, 4
        %v4519 = vsel %vm4515, %v4499, %v4502
        %v4520 = vsel %vm4518, %v4508, 2102212464
        %v4521 = vsel %vm4517, %v4505, %v4520
        %v4522 = vsel %vm4516, %v4519, %v4521
        %v4523 = vsel %vm4515, %v4502, %v4505
        %v4524 = vsel %vm4518, %v4511, 920167782
        %v4525 = vsel %vm4517, %v4508, %v4524
        %v4526 = vsel %vm4516, %v4523, %v4525
        %v4527 = vsel %vm4515, %v4505, %v4508
        %v4528 = vsel %vm4518, %v4514, 1326507024
        %v4529 = vsel %vm4517, %v4511, %v4528
        %v4530 = vsel %vm4516, %v4527, %v4529
        %v4531 = vshll.u32 %v4491, 8
        %v4532 = vmul.u32.u64.compose %v4531, %v4530
        %v4533 = vextract.low.u32 %v4532
        %v4534 = vextract.high.u32 %v4532
        %v4535 = vmul.u32.u64.compose %v4531, %v4526
        %v4536 = vextract.low.u32 %v4535
        %v4537 = vextract.high.u32 %v4535
        %v4538 = vmul.u32 %v4531, %v4522
        %v4539 = vadd.s32 %v4534, %v4536
        %vm4540 = vc.u32 %v4534, %v4536
        %v4541 = vadd.s32 %v4537, 1
        %v4542 = vsel %vm4540, %v4541, %v4537
        %v4543 = vadd.s32 %v4538, %v4542
        %v4544 = vadd.s32 %v4543, 536870912
        %v4545 = vshrl.u32 %v4544, 30
        %v4546 = vshll.u32 %v4545, 30
        %v4547 = vsub.s32 %v4543, %v4546
        %vm4548 = vcmp.lt.s32.totalorder %v4547, 0
        %v4549 = vsub.s32 0, %v4547
        %v4550 = vsel %vm4548, %v4549, %v4547
        %v4551 = vclz %v4550
        %v4552 = vsub.s32 %v4551, 2
        %vm4553 = vcmp.gt.s32.totalorder 0, %v4552
        %v4554 = vsel %vm4553, 0, %v4552
        %v4555 = vsub.s32 32, %v4554
        %v4556 = vshll.u32 %v4547, %v4554
        %v4557 = vshrl.u32 %v4539, %v4555
        %v4558 = vor.u32 %v4556, %v4557
        %v4559 = vsub.s32 4294967266, %v4554
        %v4560 = vadd.s32 %v4559, 127
        %v4561 = vshll.u32 %v4560, 23
        %v4562 = vor.u32 4788187, %v4561
        %v4563 = vand.u32 2147483647, %v4562
        %v4565 = vcvt.s32.f32 %v4558
        %v4566 = vmul.f32 %v4565, %v4563
        %v4567 = vxor.u32 %v4566, 2147483648
        %v4568 = vsel %vm4485, %v4567, %v4566
        %v4569 = vsub.s32 4, %v4545
        %v4570 = vsel %vm4485, %v4569, %v4545
        %v4571 = vsel %vm4484, %v608, %v4568
        %v4572 = vsel %vm4484, 0, %v4570
        %v4573 = vcosq.f32.pop %v4571
        %v4574 = vsinq.f32.pop %v4571
        %vm4575 = vweird.f32 %v608
        %v4576 = vadd.s32 %v4572, 3
        %v4577 = vand.u32 %v4576, 3
        %vm4578 = vcmp.lt.s32.totalorder %v4577, 2
        %vm4579 = vcmp.eq.s32.totalorder %v4577, 0
        %v4580 = vxor.u32 %v4574, 2147483648
        %v4581 = vsel %vm4579, %v4573, %v4580
        %vm4582 = vcmp.eq.s32.totalorder %v4577, 2
        %v4583 = vxor.u32 %v4573, 2147483648
        %v4584 = vsel %vm4582, %v4583, %v4574
        %v4585 = vsel %vm4578, %v4581, %v4584
        %v4586 = vsel %vm4575, nan, %v4585
        %v4587 = vand.u32 2147483647, %v609
        %vm4588 = vcmp.le.f32.partialorder %v4587, 0.7853982
        %vm4589 = vcmp.lt.s32.totalorder %v609, 0
        %v4590 = vand.u32 %v609, 2139095040
        %v4591 = vshrl.u32 %v4590, 23
        %v4592 = vsub.s32 %v4591, 127
        %v4593 = vand.u32 2147483647, %v609
        %v4594 = vand.u32 %v4593, 8388607
        %v4595 = vor.u32 %v4594, 8388608
        %v4596 = vsub.s32 0, %v4595
        %v4597 = vadd.s32 %v4592, 1
        %vm4598 = vcmp.gt.s32.totalorder %v4597, 0
        %v4599 = vsel %vm4598, %v4597, 0
        %v4600 = vshrl.u32 %v4599, 5
        %v4601 = vand.u32 %v4599, 31
        %v4602 = vsub.s32 32, %v4601
        %v4603 = vshrl.u32 683565275, %v4602
        %v4604 = vshll.u32 683565275, %v4601
        %v4605 = vshrl.u32 2475754826, %v4602
        %v4606 = vor.u32 %v4604, %v4605
        %v4607 = vshll.u32 2475754826, %v4601
        %v4608 = vshrl.u32 2131351028, %v4602
        %v4609 = vor.u32 %v4607, %v4608
        %v4610 = vshll.u32 2131351028, %v4601
        %v4611 = vshrl.u32 2102212464, %v4602
        %v4612 = vor.u32 %v4610, %v4611
        %v4613 = vshll.u32 2102212464, %v4601
        %v4614 = vshrl.u32 920167782, %v4602
        %v4615 = vor.u32 %v4613, %v4614
        %v4616 = vshll.u32 920167782, %v4601
        %v4617 = vshrl.u32 1326507024, %v4602
        %v4618 = vor.u32 %v4616, %v4617
        %vm4619 = vcmp.lt.s32.totalorder %v4600, 1
        %vm4620 = vcmp.lt.s32.totalorder %v4600, 2
        %vm4621 = vcmp.lt.s32.totalorder %v4600, 3
        %vm4622 = vcmp.lt.s32.totalorder %v4600, 4
        %v4623 = vsel %vm4619, %v4603, %v4606
        %v4624 = vsel %vm4622, %v4612, 2102212464
        %v4625 = vsel %vm4621, %v4609, %v4624
        %v4626 = vsel %vm4620, %v4623, %v4625
        %v4627 = vsel %vm4619, %v4606, %v4609
        %v4628 = vsel %vm4622, %v4615, 920167782
        %v4629 = vsel %vm4621, %v4612, %v4628
        %v4630 = vsel %vm4620, %v4627, %v4629
        %v4631 = vsel %vm4619, %v4609, %v4612
        %v4632 = vsel %vm4622, %v4618, 1326507024
        %v4633 = vsel %vm4621, %v4615, %v4632
        %v4634 = vsel %vm4620, %v4631, %v4633
        %v4635 = vshll.u32 %v4595, 8
        %v4636 = vmul.u32.u64.compose %v4635, %v4634
        %v4637 = vextract.low.u32 %v4636
        %v4638 = vextract.high.u32 %v4636
        %v4639 = vmul.u32.u64.compose %v4635, %v4630
        %v4640 = vextract.low.u32 %v4639
        %v4641 = vextract.high.u32 %v4639
        %v4642 = vmul.u32 %v4635, %v4626
        %v4643 = vadd.s32 %v4638, %v4640
        %vm4644 = vc.u32 %v4638, %v4640
        %v4645 = vadd.s32 %v4641, 1
        %v4646 = vsel %vm4644, %v4645, %v4641
        %v4647 = vadd.s32 %v4642, %v4646
        %v4648 = vadd.s32 %v4647, 536870912
        %v4649 = vshrl.u32 %v4648, 30
        %v4650 = vshll.u32 %v4649, 30
        %v4651 = vsub.s32 %v4647, %v4650
        %vm4652 = vcmp.lt.s32.totalorder %v4651, 0
        %v4653 = vsub.s32 0, %v4651
        %v4654 = vsel %vm4652, %v4653, %v4651
        %v4655 = vclz %v4654
        %v4656 = vsub.s32 %v4655, 2
        %vm4657 = vcmp.gt.s32.totalorder 0, %v4656
        %v4658 = vsel %vm4657, 0, %v4656
        %v4659 = vsub.s32 32, %v4658
        %v4660 = vshll.u32 %v4651, %v4658
        %v4661 = vshrl.u32 %v4643, %v4659
        %v4662 = vor.u32 %v4660, %v4661
        %v4663 = vsub.s32 4294967266, %v4658
        %v4664 = vadd.s32 %v4663, 127
        %v4665 = vshll.u32 %v4664, 23
        %v4666 = vor.u32 4788187, %v4665
        %v4667 = vand.u32 2147483647, %v4666
        %v4669 = vcvt.s32.f32 %v4662
        %v4670 = vmul.f32 %v4669, %v4667
        %v4671 = vxor.u32 %v4670, 2147483648
        %v4672 = vsel %vm4589, %v4671, %v4670
        %v4673 = vsub.s32 4, %v4649
        %v4674 = vsel %vm4589, %v4673, %v4649
        %v4675 = vsel %vm4588, %v609, %v4672
        %v4676 = vsel %vm4588, 0, %v4674
        %v4677 = vcosq.f32.pop %v4675
        %v4678 = vsinq.f32.pop %v4675
        %vm4679 = vweird.f32 %v609
        %v4680 = vadd.s32 %v4676, 3
        %v4681 = vand.u32 %v4680, 3
        %vm4682 = vcmp.lt.s32.totalorder %v4681, 2
        %vm4683 = vcmp.eq.s32.totalorder %v4681, 0
        %v4684 = vxor.u32 %v4678, 2147483648
        %v4685 = vsel %vm4683, %v4677, %v4684
        %vm4686 = vcmp.eq.s32.totalorder %v4681, 2
        %v4687 = vxor.u32 %v4677, 2147483648
        %v4688 = vsel %vm4686, %v4687, %v4678
        %v4689 = vsel %vm4682, %v4685, %v4688
        %v4690 = vsel %vm4679, nan, %v4689
        %v4691 = vand.u32 2147483647, %v610
        %vm4692 = vcmp.le.f32.partialorder %v4691, 0.7853982
        %vm4693 = vcmp.lt.s32.totalorder %v610, 0
        %v4694 = vand.u32 %v610, 2139095040
        %v4695 = vshrl.u32 %v4694, 23
        %v4696 = vsub.s32 %v4695, 127
        %v4697 = vand.u32 2147483647, %v610
        %v4698 = vand.u32 %v4697, 8388607
        %v4699 = vor.u32 %v4698, 8388608
        %v4700 = vsub.s32 0, %v4699
        %v4701 = vadd.s32 %v4696, 1
        %vm4702 = vcmp.gt.s32.totalorder %v4701, 0
        %v4703 = vsel %vm4702, %v4701, 0
        %v4704 = vshrl.u32 %v4703, 5
        %v4705 = vand.u32 %v4703, 31
        %v4706 = vsub.s32 32, %v4705
        %v4707 = vshrl.u32 683565275, %v4706
        %v4708 = vshll.u32 683565275, %v4705
        %v4709 = vshrl.u32 2475754826, %v4706
        %v4710 = vor.u32 %v4708, %v4709
        %v4711 = vshll.u32 2475754826, %v4705
        %v4712 = vshrl.u32 2131351028, %v4706
        %v4713 = vor.u32 %v4711, %v4712
        %v4714 = vshll.u32 2131351028, %v4705
        %v4715 = vshrl.u32 2102212464, %v4706
        %v4716 = vor.u32 %v4714, %v4715
        %v4717 = vshll.u32 2102212464, %v4705
        %v4718 = vshrl.u32 920167782, %v4706
        %v4719 = vor.u32 %v4717, %v4718
        %v4720 = vshll.u32 920167782, %v4705
        %v4721 = vshrl.u32 1326507024, %v4706
        %v4722 = vor.u32 %v4720, %v4721
        %vm4723 = vcmp.lt.s32.totalorder %v4704, 1
        %vm4724 = vcmp.lt.s32.totalorder %v4704, 2
        %vm4725 = vcmp.lt.s32.totalorder %v4704, 3
        %vm4726 = vcmp.lt.s32.totalorder %v4704, 4
        %v4727 = vsel %vm4723, %v4707, %v4710
        %v4728 = vsel %vm4726, %v4716, 2102212464
        %v4729 = vsel %vm4725, %v4713, %v4728
        %v4730 = vsel %vm4724, %v4727, %v4729
        %v4731 = vsel %vm4723, %v4710, %v4713
        %v4732 = vsel %vm4726, %v4719, 920167782
        %v4733 = vsel %vm4725, %v4716, %v4732
        %v4734 = vsel %vm4724, %v4731, %v4733
        %v4735 = vsel %vm4723, %v4713, %v4716
        %v4736 = vsel %vm4726, %v4722, 1326507024
        %v4737 = vsel %vm4725, %v4719, %v4736
        %v4738 = vsel %vm4724, %v4735, %v4737
        %v4739 = vshll.u32 %v4699, 8
        %v4740 = vmul.u32.u64.compose %v4739, %v4738
        %v4741 = vextract.low.u32 %v4740
        %v4742 = vextract.high.u32 %v4740
        %v4743 = vmul.u32.u64.compose %v4739, %v4734
        %v4744 = vextract.low.u32 %v4743
        %v4745 = vextract.high.u32 %v4743
        %v4746 = vmul.u32 %v4739, %v4730
        %v4747 = vadd.s32 %v4742, %v4744
        %vm4748 = vc.u32 %v4742, %v4744
        %v4749 = vadd.s32 %v4745, 1
        %v4750 = vsel %vm4748, %v4749, %v4745
        %v4751 = vadd.s32 %v4746, %v4750
        %v4752 = vadd.s32 %v4751, 536870912
        %v4753 = vshrl.u32 %v4752, 30
        %v4754 = vshll.u32 %v4753, 30
        %v4755 = vsub.s32 %v4751, %v4754
        %vm4756 = vcmp.lt.s32.totalorder %v4755, 0
        %v4757 = vsub.s32 0, %v4755
        %v4758 = vsel %vm4756, %v4757, %v4755
        %v4759 = vclz %v4758
        %v4760 = vsub.s32 %v4759, 2
        %vm4761 = vcmp.gt.s32.totalorder 0, %v4760
        %v4762 = vsel %vm4761, 0, %v4760
        %v4763 = vsub.s32 32, %v4762
        %v4764 = vshll.u32 %v4755, %v4762
        %v4765 = vshrl.u32 %v4747, %v4763
        %v4766 = vor.u32 %v4764, %v4765
        %v4767 = vsub.s32 4294967266, %v4762
        %v4768 = vadd.s32 %v4767, 127
        %v4769 = vshll.u32 %v4768, 23
        %v4770 = vor.u32 4788187, %v4769
        %v4771 = vand.u32 2147483647, %v4770
        %v4773 = vcvt.s32.f32 %v4766
        %v4774 = vmul.f32 %v4773, %v4771
        %v4775 = vxor.u32 %v4774, 2147483648
        %v4776 = vsel %vm4693, %v4775, %v4774
        %v4777 = vsub.s32 4, %v4753
        %v4778 = vsel %vm4693, %v4777, %v4753
        %v4779 = vsel %vm4692, %v610, %v4776
        %v4780 = vsel %vm4692, 0, %v4778
        %v4781 = vcosq.f32.pop %v4779
        %v4782 = vsinq.f32.pop %v4779
        %vm4783 = vweird.f32 %v610
        %v4784 = vadd.s32 %v4780, 3
        %v4785 = vand.u32 %v4784, 3
        %vm4786 = vcmp.lt.s32.totalorder %v4785, 2
        %vm4787 = vcmp.eq.s32.totalorder %v4785, 0
        %v4788 = vxor.u32 %v4782, 2147483648
        %v4789 = vsel %vm4787, %v4781, %v4788
        %vm4790 = vcmp.eq.s32.totalorder %v4785, 2
        %v4791 = vxor.u32 %v4781, 2147483648
        %v4792 = vsel %vm4790, %v4791, %v4782
        %v4793 = vsel %vm4786, %v4789, %v4792
        %v4794 = vsel %vm4783, nan, %v4793
        %v4795 = vand.u32 2147483647, %v611
        %vm4796 = vcmp.le.f32.partialorder %v4795, 0.7853982
        %vm4797 = vcmp.lt.s32.totalorder %v611, 0
        %v4798 = vand.u32 %v611, 2139095040
        %v4799 = vshrl.u32 %v4798, 23
        %v4800 = vsub.s32 %v4799, 127
        %v4801 = vand.u32 2147483647, %v611
        %v4802 = vand.u32 %v4801, 8388607
        %v4803 = vor.u32 %v4802, 8388608
        %v4804 = vsub.s32 0, %v4803
        %v4805 = vadd.s32 %v4800, 1
        %vm4806 = vcmp.gt.s32.totalorder %v4805, 0
        %v4807 = vsel %vm4806, %v4805, 0
        %v4808 = vshrl.u32 %v4807, 5
        %v4809 = vand.u32 %v4807, 31
        %v4810 = vsub.s32 32, %v4809
        %v4811 = vshrl.u32 683565275, %v4810
        %v4812 = vshll.u32 683565275, %v4809
        %v4813 = vshrl.u32 2475754826, %v4810
        %v4814 = vor.u32 %v4812, %v4813
        %v4815 = vshll.u32 2475754826, %v4809
        %v4816 = vshrl.u32 2131351028, %v4810
        %v4817 = vor.u32 %v4815, %v4816
        %v4818 = vshll.u32 2131351028, %v4809
        %v4819 = vshrl.u32 2102212464, %v4810
        %v4820 = vor.u32 %v4818, %v4819
        %v4821 = vshll.u32 2102212464, %v4809
        %v4822 = vshrl.u32 920167782, %v4810
        %v4823 = vor.u32 %v4821, %v4822
        %v4824 = vshll.u32 920167782, %v4809
        %v4825 = vshrl.u32 1326507024, %v4810
        %v4826 = vor.u32 %v4824, %v4825
        %vm4827 = vcmp.lt.s32.totalorder %v4808, 1
        %vm4828 = vcmp.lt.s32.totalorder %v4808, 2
        %vm4829 = vcmp.lt.s32.totalorder %v4808, 3
        %vm4830 = vcmp.lt.s32.totalorder %v4808, 4
        %v4831 = vsel %vm4827, %v4811, %v4814
        %v4832 = vsel %vm4830, %v4820, 2102212464
        %v4833 = vsel %vm4829, %v4817, %v4832
        %v4834 = vsel %vm4828, %v4831, %v4833
        %v4835 = vsel %vm4827, %v4814, %v4817
        %v4836 = vsel %vm4830, %v4823, 920167782
        %v4837 = vsel %vm4829, %v4820, %v4836
        %v4838 = vsel %vm4828, %v4835, %v4837
        %v4839 = vsel %vm4827, %v4817, %v4820
        %v4840 = vsel %vm4830, %v4826, 1326507024
        %v4841 = vsel %vm4829, %v4823, %v4840
        %v4842 = vsel %vm4828, %v4839, %v4841
        %v4843 = vshll.u32 %v4803, 8
        %v4844 = vmul.u32.u64.compose %v4843, %v4842
        %v4845 = vextract.low.u32 %v4844
        %v4846 = vextract.high.u32 %v4844
        %v4847 = vmul.u32.u64.compose %v4843, %v4838
        %v4848 = vextract.low.u32 %v4847
        %v4849 = vextract.high.u32 %v4847
        %v4850 = vmul.u32 %v4843, %v4834
        %v4851 = vadd.s32 %v4846, %v4848
        %vm4852 = vc.u32 %v4846, %v4848
        %v4853 = vadd.s32 %v4849, 1
        %v4854 = vsel %vm4852, %v4853, %v4849
        %v4855 = vadd.s32 %v4850, %v4854
        %v4856 = vadd.s32 %v4855, 536870912
        %v4857 = vshrl.u32 %v4856, 30
        %v4858 = vshll.u32 %v4857, 30
        %v4859 = vsub.s32 %v4855, %v4858
        %vm4860 = vcmp.lt.s32.totalorder %v4859, 0
        %v4861 = vsub.s32 0, %v4859
        %v4862 = vsel %vm4860, %v4861, %v4859
        %v4863 = vclz %v4862
        %v4864 = vsub.s32 %v4863, 2
        %vm4865 = vcmp.gt.s32.totalorder 0, %v4864
        %v4866 = vsel %vm4865, 0, %v4864
        %v4867 = vsub.s32 32, %v4866
        %v4868 = vshll.u32 %v4859, %v4866
        %v4869 = vshrl.u32 %v4851, %v4867
        %v4870 = vor.u32 %v4868, %v4869
        %v4871 = vsub.s32 4294967266, %v4866
        %v4872 = vadd.s32 %v4871, 127
        %v4873 = vshll.u32 %v4872, 23
        %v4874 = vor.u32 4788187, %v4873
        %v4875 = vand.u32 2147483647, %v4874
        %v4877 = vcvt.s32.f32 %v4870
        %v4878 = vmul.f32 %v4877, %v4875
        %v4879 = vxor.u32 %v4878, 2147483648
        %v4880 = vsel %vm4797, %v4879, %v4878
        %v4881 = vsub.s32 4, %v4857
        %v4882 = vsel %vm4797, %v4881, %v4857
        %v4883 = vsel %vm4796, %v611, %v4880
        %v4884 = vsel %vm4796, 0, %v4882
        %v4885 = vcosq.f32.pop %v4883
        %v4886 = vsinq.f32.pop %v4883
        %vm4887 = vweird.f32 %v611
        %v4888 = vadd.s32 %v4884, 3
        %v4889 = vand.u32 %v4888, 3
        %vm4890 = vcmp.lt.s32.totalorder %v4889, 2
        %vm4891 = vcmp.eq.s32.totalorder %v4889, 0
        %v4892 = vxor.u32 %v4886, 2147483648
        %v4893 = vsel %vm4891, %v4885, %v4892
        %vm4894 = vcmp.eq.s32.totalorder %v4889, 2
        %v4895 = vxor.u32 %v4885, 2147483648
        %v4896 = vsel %vm4894, %v4895, %v4886
        %v4897 = vsel %vm4890, %v4893, %v4896
        %v4898 = vsel %vm4887, nan, %v4897
        %v4899 = vand.u32 2147483647, %v612
        %vm4900 = vcmp.le.f32.partialorder %v4899, 0.7853982
        %vm4901 = vcmp.lt.s32.totalorder %v612, 0
        %v4902 = vand.u32 %v612, 2139095040
        %v4903 = vshrl.u32 %v4902, 23
        %v4904 = vsub.s32 %v4903, 127
        %v4905 = vand.u32 2147483647, %v612
        %v4906 = vand.u32 %v4905, 8388607
        %v4907 = vor.u32 %v4906, 8388608
        %v4908 = vsub.s32 0, %v4907
        %v4909 = vadd.s32 %v4904, 1
        %vm4910 = vcmp.gt.s32.totalorder %v4909, 0
        %v4911 = vsel %vm4910, %v4909, 0
        %v4912 = vshrl.u32 %v4911, 5
        %v4913 = vand.u32 %v4911, 31
        %v4914 = vsub.s32 32, %v4913
        %v4915 = vshrl.u32 683565275, %v4914
        %v4916 = vshll.u32 683565275, %v4913
        %v4917 = vshrl.u32 2475754826, %v4914
        %v4918 = vor.u32 %v4916, %v4917
        %v4919 = vshll.u32 2475754826, %v4913
        %v4920 = vshrl.u32 2131351028, %v4914
        %v4921 = vor.u32 %v4919, %v4920
        %v4922 = vshll.u32 2131351028, %v4913
        %v4923 = vshrl.u32 2102212464, %v4914
        %v4924 = vor.u32 %v4922, %v4923
        %v4925 = vshll.u32 2102212464, %v4913
        %v4926 = vshrl.u32 920167782, %v4914
        %v4927 = vor.u32 %v4925, %v4926
        %v4928 = vshll.u32 920167782, %v4913
        %v4929 = vshrl.u32 1326507024, %v4914
        %v4930 = vor.u32 %v4928, %v4929
        %vm4931 = vcmp.lt.s32.totalorder %v4912, 1
        %vm4932 = vcmp.lt.s32.totalorder %v4912, 2
        %vm4933 = vcmp.lt.s32.totalorder %v4912, 3
        %vm4934 = vcmp.lt.s32.totalorder %v4912, 4
        %v4935 = vsel %vm4931, %v4915, %v4918
        %v4936 = vsel %vm4934, %v4924, 2102212464
        %v4937 = vsel %vm4933, %v4921, %v4936
        %v4938 = vsel %vm4932, %v4935, %v4937
        %v4939 = vsel %vm4931, %v4918, %v4921
        %v4940 = vsel %vm4934, %v4927, 920167782
        %v4941 = vsel %vm4933, %v4924, %v4940
        %v4942 = vsel %vm4932, %v4939, %v4941
        %v4943 = vsel %vm4931, %v4921, %v4924
        %v4944 = vsel %vm4934, %v4930, 1326507024
        %v4945 = vsel %vm4933, %v4927, %v4944
        %v4946 = vsel %vm4932, %v4943, %v4945
        %v4947 = vshll.u32 %v4907, 8
        %v4948 = vmul.u32.u64.compose %v4947, %v4946
        %v4949 = vextract.low.u32 %v4948
        %v4950 = vextract.high.u32 %v4948
        %v4951 = vmul.u32.u64.compose %v4947, %v4942
        %v4952 = vextract.low.u32 %v4951
        %v4953 = vextract.high.u32 %v4951
        %v4954 = vmul.u32 %v4947, %v4938
        %v4955 = vadd.s32 %v4950, %v4952
        %vm4956 = vc.u32 %v4950, %v4952
        %v4957 = vadd.s32 %v4953, 1
        %v4958 = vsel %vm4956, %v4957, %v4953
        %v4959 = vadd.s32 %v4954, %v4958
        %v4960 = vadd.s32 %v4959, 536870912
        %v4961 = vshrl.u32 %v4960, 30
        %v4962 = vshll.u32 %v4961, 30
        %v4963 = vsub.s32 %v4959, %v4962
        %vm4964 = vcmp.lt.s32.totalorder %v4963, 0
        %v4965 = vsub.s32 0, %v4963
        %v4966 = vsel %vm4964, %v4965, %v4963
        %v4967 = vclz %v4966
        %v4968 = vsub.s32 %v4967, 2
        %vm4969 = vcmp.gt.s32.totalorder 0, %v4968
        %v4970 = vsel %vm4969, 0, %v4968
        %v4971 = vsub.s32 32, %v4970
        %v4972 = vshll.u32 %v4963, %v4970
        %v4973 = vshrl.u32 %v4955, %v4971
        %v4974 = vor.u32 %v4972, %v4973
        %v4975 = vsub.s32 4294967266, %v4970
        %v4976 = vadd.s32 %v4975, 127
        %v4977 = vshll.u32 %v4976, 23
        %v4978 = vor.u32 4788187, %v4977
        %v4979 = vand.u32 2147483647, %v4978
        %v4981 = vcvt.s32.f32 %v4974
        %v4982 = vmul.f32 %v4981, %v4979
        %v4983 = vxor.u32 %v4982, 2147483648
        %v4984 = vsel %vm4901, %v4983, %v4982
        %v4985 = vsub.s32 4, %v4961
        %v4986 = vsel %vm4901, %v4985, %v4961
        %v4987 = vsel %vm4900, %v612, %v4984
        %v4988 = vsel %vm4900, 0, %v4986
        %v4989 = vcosq.f32.pop %v4987
        %v4990 = vsinq.f32.pop %v4987
        %vm4991 = vweird.f32 %v612
        %v4992 = vadd.s32 %v4988, 3
        %v4993 = vand.u32 %v4992, 3
        %vm4994 = vcmp.lt.s32.totalorder %v4993, 2
        %vm4995 = vcmp.eq.s32.totalorder %v4993, 0
        %v4996 = vxor.u32 %v4990, 2147483648
        %v4997 = vsel %vm4995, %v4989, %v4996
        %vm4998 = vcmp.eq.s32.totalorder %v4993, 2
        %v4999 = vxor.u32 %v4989, 2147483648
        %v5000 = vsel %vm4998, %v4999, %v4990
        %v5001 = vsel %vm4994, %v4997, %v5000
        %v5002 = vsel %vm4991, nan, %v5001
        %v5003 = vand.u32 2147483647, %v613
        %vm5004 = vcmp.le.f32.partialorder %v5003, 0.7853982
        %vm5005 = vcmp.lt.s32.totalorder %v613, 0
        %v5006 = vand.u32 %v613, 2139095040
        %v5007 = vshrl.u32 %v5006, 23
        %v5008 = vsub.s32 %v5007, 127
        %v5009 = vand.u32 2147483647, %v613
        %v5010 = vand.u32 %v5009, 8388607
        %v5011 = vor.u32 %v5010, 8388608
        %v5012 = vsub.s32 0, %v5011
        %v5013 = vadd.s32 %v5008, 1
        %vm5014 = vcmp.gt.s32.totalorder %v5013, 0
        %v5015 = vsel %vm5014, %v5013, 0
        %v5016 = vshrl.u32 %v5015, 5
        %v5017 = vand.u32 %v5015, 31
        %v5018 = vsub.s32 32, %v5017
        %v5019 = vshrl.u32 683565275, %v5018
        %v5020 = vshll.u32 683565275, %v5017
        %v5021 = vshrl.u32 2475754826, %v5018
        %v5022 = vor.u32 %v5020, %v5021
        %v5023 = vshll.u32 2475754826, %v5017
        %v5024 = vshrl.u32 2131351028, %v5018
        %v5025 = vor.u32 %v5023, %v5024
        %v5026 = vshll.u32 2131351028, %v5017
        %v5027 = vshrl.u32 2102212464, %v5018
        %v5028 = vor.u32 %v5026, %v5027
        %v5029 = vshll.u32 2102212464, %v5017
        %v5030 = vshrl.u32 920167782, %v5018
        %v5031 = vor.u32 %v5029, %v5030
        %v5032 = vshll.u32 920167782, %v5017
        %v5033 = vshrl.u32 1326507024, %v5018
        %v5034 = vor.u32 %v5032, %v5033
        %vm5035 = vcmp.lt.s32.totalorder %v5016, 1
        %vm5036 = vcmp.lt.s32.totalorder %v5016, 2
        %vm5037 = vcmp.lt.s32.totalorder %v5016, 3
        %vm5038 = vcmp.lt.s32.totalorder %v5016, 4
        %v5039 = vsel %vm5035, %v5019, %v5022
        %v5040 = vsel %vm5038, %v5028, 2102212464
        %v5041 = vsel %vm5037, %v5025, %v5040
        %v5042 = vsel %vm5036, %v5039, %v5041
        %v5043 = vsel %vm5035, %v5022, %v5025
        %v5044 = vsel %vm5038, %v5031, 920167782
        %v5045 = vsel %vm5037, %v5028, %v5044
        %v5046 = vsel %vm5036, %v5043, %v5045
        %v5047 = vsel %vm5035, %v5025, %v5028
        %v5048 = vsel %vm5038, %v5034, 1326507024
        %v5049 = vsel %vm5037, %v5031, %v5048
        %v5050 = vsel %vm5036, %v5047, %v5049
        %v5051 = vshll.u32 %v5011, 8
        %v5052 = vmul.u32.u64.compose %v5051, %v5050
        %v5053 = vextract.low.u32 %v5052
        %v5054 = vextract.high.u32 %v5052
        %v5055 = vmul.u32.u64.compose %v5051, %v5046
        %v5056 = vextract.low.u32 %v5055
        %v5057 = vextract.high.u32 %v5055
        %v5058 = vmul.u32 %v5051, %v5042
        %v5059 = vadd.s32 %v5054, %v5056
        %vm5060 = vc.u32 %v5054, %v5056
        %v5061 = vadd.s32 %v5057, 1
        %v5062 = vsel %vm5060, %v5061, %v5057
        %v5063 = vadd.s32 %v5058, %v5062
        %v5064 = vadd.s32 %v5063, 536870912
        %v5065 = vshrl.u32 %v5064, 30
        %v5066 = vshll.u32 %v5065, 30
        %v5067 = vsub.s32 %v5063, %v5066
        %vm5068 = vcmp.lt.s32.totalorder %v5067, 0
        %v5069 = vsub.s32 0, %v5067
        %v5070 = vsel %vm5068, %v5069, %v5067
        %v5071 = vclz %v5070
        %v5072 = vsub.s32 %v5071, 2
        %vm5073 = vcmp.gt.s32.totalorder 0, %v5072
        %v5074 = vsel %vm5073, 0, %v5072
        %v5075 = vsub.s32 32, %v5074
        %v5076 = vshll.u32 %v5067, %v5074
        %v5077 = vshrl.u32 %v5059, %v5075
        %v5078 = vor.u32 %v5076, %v5077
        %v5079 = vsub.s32 4294967266, %v5074
        %v5080 = vadd.s32 %v5079, 127
        %v5081 = vshll.u32 %v5080, 23
        %v5082 = vor.u32 4788187, %v5081
        %v5083 = vand.u32 2147483647, %v5082
        %v5085 = vcvt.s32.f32 %v5078
        %v5086 = vmul.f32 %v5085, %v5083
        %v5087 = vxor.u32 %v5086, 2147483648
        %v5088 = vsel %vm5005, %v5087, %v5086
        %v5089 = vsub.s32 4, %v5065
        %v5090 = vsel %vm5005, %v5089, %v5065
        %v5091 = vsel %vm5004, %v613, %v5088
        %v5092 = vsel %vm5004, 0, %v5090
        %v5093 = vcosq.f32.pop %v5091
        %v5094 = vsinq.f32.pop %v5091
        %vm5095 = vweird.f32 %v613
        %v5096 = vadd.s32 %v5092, 3
        %v5097 = vand.u32 %v5096, 3
        %vm5098 = vcmp.lt.s32.totalorder %v5097, 2
        %vm5099 = vcmp.eq.s32.totalorder %v5097, 0
        %v5100 = vxor.u32 %v5094, 2147483648
        %v5101 = vsel %vm5099, %v5093, %v5100
        %vm5102 = vcmp.eq.s32.totalorder %v5097, 2
        %v5103 = vxor.u32 %v5093, 2147483648
        %v5104 = vsel %vm5102, %v5103, %v5094
        %v5105 = vsel %vm5098, %v5101, %v5104
        %v5106 = vsel %vm5095, nan, %v5105
        %v5107 = vand.u32 2147483647, %v614
        %vm5108 = vcmp.le.f32.partialorder %v5107, 0.7853982
        %vm5109 = vcmp.lt.s32.totalorder %v614, 0
        %v5110 = vand.u32 %v614, 2139095040
        %v5111 = vshrl.u32 %v5110, 23
        %v5112 = vsub.s32 %v5111, 127
        %v5113 = vand.u32 2147483647, %v614
        %v5114 = vand.u32 %v5113, 8388607
        %v5115 = vor.u32 %v5114, 8388608
        %v5116 = vsub.s32 0, %v5115
        %v5117 = vadd.s32 %v5112, 1
        %vm5118 = vcmp.gt.s32.totalorder %v5117, 0
        %v5119 = vsel %vm5118, %v5117, 0
        %v5120 = vshrl.u32 %v5119, 5
        %v5121 = vand.u32 %v5119, 31
        %v5122 = vsub.s32 32, %v5121
        %v5123 = vshrl.u32 683565275, %v5122
        %v5124 = vshll.u32 683565275, %v5121
        %v5125 = vshrl.u32 2475754826, %v5122
        %v5126 = vor.u32 %v5124, %v5125
        %v5127 = vshll.u32 2475754826, %v5121
        %v5128 = vshrl.u32 2131351028, %v5122
        %v5129 = vor.u32 %v5127, %v5128
        %v5130 = vshll.u32 2131351028, %v5121
        %v5131 = vshrl.u32 2102212464, %v5122
        %v5132 = vor.u32 %v5130, %v5131
        %v5133 = vshll.u32 2102212464, %v5121
        %v5134 = vshrl.u32 920167782, %v5122
        %v5135 = vor.u32 %v5133, %v5134
        %v5136 = vshll.u32 920167782, %v5121
        %v5137 = vshrl.u32 1326507024, %v5122
        %v5138 = vor.u32 %v5136, %v5137
        %vm5139 = vcmp.lt.s32.totalorder %v5120, 1
        %vm5140 = vcmp.lt.s32.totalorder %v5120, 2
        %vm5141 = vcmp.lt.s32.totalorder %v5120, 3
        %vm5142 = vcmp.lt.s32.totalorder %v5120, 4
        %v5143 = vsel %vm5139, %v5123, %v5126
        %v5144 = vsel %vm5142, %v5132, 2102212464
        %v5145 = vsel %vm5141, %v5129, %v5144
        %v5146 = vsel %vm5140, %v5143, %v5145
        %v5147 = vsel %vm5139, %v5126, %v5129
        %v5148 = vsel %vm5142, %v5135, 920167782
        %v5149 = vsel %vm5141, %v5132, %v5148
        %v5150 = vsel %vm5140, %v5147, %v5149
        %v5151 = vsel %vm5139, %v5129, %v5132
        %v5152 = vsel %vm5142, %v5138, 1326507024
        %v5153 = vsel %vm5141, %v5135, %v5152
        %v5154 = vsel %vm5140, %v5151, %v5153
        %v5155 = vshll.u32 %v5115, 8
        %v5156 = vmul.u32.u64.compose %v5155, %v5154
        %v5157 = vextract.low.u32 %v5156
        %v5158 = vextract.high.u32 %v5156
        %v5159 = vmul.u32.u64.compose %v5155, %v5150
        %v5160 = vextract.low.u32 %v5159
        %v5161 = vextract.high.u32 %v5159
        %v5162 = vmul.u32 %v5155, %v5146
        %v5163 = vadd.s32 %v5158, %v5160
        %vm5164 = vc.u32 %v5158, %v5160
        %v5165 = vadd.s32 %v5161, 1
        %v5166 = vsel %vm5164, %v5165, %v5161
        %v5167 = vadd.s32 %v5162, %v5166
        %v5168 = vadd.s32 %v5167, 536870912
        %v5169 = vshrl.u32 %v5168, 30
        %v5170 = vshll.u32 %v5169, 30
        %v5171 = vsub.s32 %v5167, %v5170
        %vm5172 = vcmp.lt.s32.totalorder %v5171, 0
        %v5173 = vsub.s32 0, %v5171
        %v5174 = vsel %vm5172, %v5173, %v5171
        %v5175 = vclz %v5174
        %v5176 = vsub.s32 %v5175, 2
        %vm5177 = vcmp.gt.s32.totalorder 0, %v5176
        %v5178 = vsel %vm5177, 0, %v5176
        %v5179 = vsub.s32 32, %v5178
        %v5180 = vshll.u32 %v5171, %v5178
        %v5181 = vshrl.u32 %v5163, %v5179
        %v5182 = vor.u32 %v5180, %v5181
        %v5183 = vsub.s32 4294967266, %v5178
        %v5184 = vadd.s32 %v5183, 127
        %v5185 = vshll.u32 %v5184, 23
        %v5186 = vor.u32 4788187, %v5185
        %v5187 = vand.u32 2147483647, %v5186
        %v5189 = vcvt.s32.f32 %v5182
        %v5190 = vmul.f32 %v5189, %v5187
        %v5191 = vxor.u32 %v5190, 2147483648
        %v5192 = vsel %vm5109, %v5191, %v5190
        %v5193 = vsub.s32 4, %v5169
        %v5194 = vsel %vm5109, %v5193, %v5169
        %v5195 = vsel %vm5108, %v614, %v5192
        %v5196 = vsel %vm5108, 0, %v5194
        %v5197 = vcosq.f32.pop %v5195
        %v5198 = vsinq.f32.pop %v5195
        %vm5199 = vweird.f32 %v614
        %v5200 = vadd.s32 %v5196, 3
        %v5201 = vand.u32 %v5200, 3
        %vm5202 = vcmp.lt.s32.totalorder %v5201, 2
        %vm5203 = vcmp.eq.s32.totalorder %v5201, 0
        %v5204 = vxor.u32 %v5198, 2147483648
        %v5205 = vsel %vm5203, %v5197, %v5204
        %vm5206 = vcmp.eq.s32.totalorder %v5201, 2
        %v5207 = vxor.u32 %v5197, 2147483648
        %v5208 = vsel %vm5206, %v5207, %v5198
        %v5209 = vsel %vm5202, %v5205, %v5208
        %v5210 = vsel %vm5199, nan, %v5209
        %v5211 = vand.u32 2147483647, %v615
        %vm5212 = vcmp.le.f32.partialorder %v5211, 0.7853982
        %vm5213 = vcmp.lt.s32.totalorder %v615, 0
        %v5214 = vand.u32 %v615, 2139095040
        %v5215 = vshrl.u32 %v5214, 23
        %v5216 = vsub.s32 %v5215, 127
        %v5217 = vand.u32 2147483647, %v615
        %v5218 = vand.u32 %v5217, 8388607
        %v5219 = vor.u32 %v5218, 8388608
        %v5220 = vsub.s32 0, %v5219
        %v5221 = vadd.s32 %v5216, 1
        %vm5222 = vcmp.gt.s32.totalorder %v5221, 0
        %v5223 = vsel %vm5222, %v5221, 0
        %v5224 = vshrl.u32 %v5223, 5
        %v5225 = vand.u32 %v5223, 31
        %v5226 = vsub.s32 32, %v5225
        %v5227 = vshrl.u32 683565275, %v5226
        %v5228 = vshll.u32 683565275, %v5225
        %v5229 = vshrl.u32 2475754826, %v5226
        %v5230 = vor.u32 %v5228, %v5229
        %v5231 = vshll.u32 2475754826, %v5225
        %v5232 = vshrl.u32 2131351028, %v5226
        %v5233 = vor.u32 %v5231, %v5232
        %v5234 = vshll.u32 2131351028, %v5225
        %v5235 = vshrl.u32 2102212464, %v5226
        %v5236 = vor.u32 %v5234, %v5235
        %v5237 = vshll.u32 2102212464, %v5225
        %v5238 = vshrl.u32 920167782, %v5226
        %v5239 = vor.u32 %v5237, %v5238
        %v5240 = vshll.u32 920167782, %v5225
        %v5241 = vshrl.u32 1326507024, %v5226
        %v5242 = vor.u32 %v5240, %v5241
        %vm5243 = vcmp.lt.s32.totalorder %v5224, 1
        %vm5244 = vcmp.lt.s32.totalorder %v5224, 2
        %vm5245 = vcmp.lt.s32.totalorder %v5224, 3
        %vm5246 = vcmp.lt.s32.totalorder %v5224, 4
        %v5247 = vsel %vm5243, %v5227, %v5230
        %v5248 = vsel %vm5246, %v5236, 2102212464
        %v5249 = vsel %vm5245, %v5233, %v5248
        %v5250 = vsel %vm5244, %v5247, %v5249
        %v5251 = vsel %vm5243, %v5230, %v5233
        %v5252 = vsel %vm5246, %v5239, 920167782
        %v5253 = vsel %vm5245, %v5236, %v5252
        %v5254 = vsel %vm5244, %v5251, %v5253
        %v5255 = vsel %vm5243, %v5233, %v5236
        %v5256 = vsel %vm5246, %v5242, 1326507024
        %v5257 = vsel %vm5245, %v5239, %v5256
        %v5258 = vsel %vm5244, %v5255, %v5257
        %v5259 = vshll.u32 %v5219, 8
        %v5260 = vmul.u32.u64.compose %v5259, %v5258
        %v5261 = vextract.low.u32 %v5260
        %v5262 = vextract.high.u32 %v5260
        %v5263 = vmul.u32.u64.compose %v5259, %v5254
        %v5264 = vextract.low.u32 %v5263
        %v5265 = vextract.high.u32 %v5263
        %v5266 = vmul.u32 %v5259, %v5250
        %v5267 = vadd.s32 %v5262, %v5264
        %vm5268 = vc.u32 %v5262, %v5264
        %v5269 = vadd.s32 %v5265, 1
        %v5270 = vsel %vm5268, %v5269, %v5265
        %v5271 = vadd.s32 %v5266, %v5270
        %v5272 = vadd.s32 %v5271, 536870912
        %v5273 = vshrl.u32 %v5272, 30
        %v5274 = vshll.u32 %v5273, 30
        %v5275 = vsub.s32 %v5271, %v5274
        %vm5276 = vcmp.lt.s32.totalorder %v5275, 0
        %v5277 = vsub.s32 0, %v5275
        %v5278 = vsel %vm5276, %v5277, %v5275
        %v5279 = vclz %v5278
        %v5280 = vsub.s32 %v5279, 2
        %vm5281 = vcmp.gt.s32.totalorder 0, %v5280
        %v5282 = vsel %vm5281, 0, %v5280
        %v5283 = vsub.s32 32, %v5282
        %v5284 = vshll.u32 %v5275, %v5282
        %v5285 = vshrl.u32 %v5267, %v5283
        %v5286 = vor.u32 %v5284, %v5285
        %v5287 = vsub.s32 4294967266, %v5282
        %v5288 = vadd.s32 %v5287, 127
        %v5289 = vshll.u32 %v5288, 23
        %v5290 = vor.u32 4788187, %v5289
        %v5291 = vand.u32 2147483647, %v5290
        %v5293 = vcvt.s32.f32 %v5286
        %v5294 = vmul.f32 %v5293, %v5291
        %v5295 = vxor.u32 %v5294, 2147483648
        %v5296 = vsel %vm5213, %v5295, %v5294
        %v5297 = vsub.s32 4, %v5273
        %v5298 = vsel %vm5213, %v5297, %v5273
        %v5299 = vsel %vm5212, %v615, %v5296
        %v5300 = vsel %vm5212, 0, %v5298
        %v5301 = vcosq.f32.pop %v5299
        %v5302 = vsinq.f32.pop %v5299
        %vm5303 = vweird.f32 %v615
        %v5304 = vadd.s32 %v5300, 3
        %v5305 = vand.u32 %v5304, 3
        %vm5306 = vcmp.lt.s32.totalorder %v5305, 2
        %vm5307 = vcmp.eq.s32.totalorder %v5305, 0
        %v5308 = vxor.u32 %v5302, 2147483648
        %v5309 = vsel %vm5307, %v5301, %v5308
        %vm5310 = vcmp.eq.s32.totalorder %v5305, 2
        %v5311 = vxor.u32 %v5301, 2147483648
        %v5312 = vsel %vm5310, %v5311, %v5302
        %v5313 = vsel %vm5306, %v5309, %v5312
        %v5314 = vsel %vm5303, nan, %v5313
        %v5315 = vand.u32 2147483647, %v616
        %vm5316 = vcmp.le.f32.partialorder %v5315, 0.7853982
        %vm5317 = vcmp.lt.s32.totalorder %v616, 0
        %v5318 = vand.u32 %v616, 2139095040
        %v5319 = vshrl.u32 %v5318, 23
        %v5320 = vsub.s32 %v5319, 127
        %v5321 = vand.u32 2147483647, %v616
        %v5322 = vand.u32 %v5321, 8388607
        %v5323 = vor.u32 %v5322, 8388608
        %v5324 = vsub.s32 0, %v5323
        %v5325 = vadd.s32 %v5320, 1
        %vm5326 = vcmp.gt.s32.totalorder %v5325, 0
        %v5327 = vsel %vm5326, %v5325, 0
        %v5328 = vshrl.u32 %v5327, 5
        %v5329 = vand.u32 %v5327, 31
        %v5330 = vsub.s32 32, %v5329
        %v5331 = vshrl.u32 683565275, %v5330
        %v5332 = vshll.u32 683565275, %v5329
        %v5333 = vshrl.u32 2475754826, %v5330
        %v5334 = vor.u32 %v5332, %v5333
        %v5335 = vshll.u32 2475754826, %v5329
        %v5336 = vshrl.u32 2131351028, %v5330
        %v5337 = vor.u32 %v5335, %v5336
        %v5338 = vshll.u32 2131351028, %v5329
        %v5339 = vshrl.u32 2102212464, %v5330
        %v5340 = vor.u32 %v5338, %v5339
        %v5341 = vshll.u32 2102212464, %v5329
        %v5342 = vshrl.u32 920167782, %v5330
        %v5343 = vor.u32 %v5341, %v5342
        %v5344 = vshll.u32 920167782, %v5329
        %v5345 = vshrl.u32 1326507024, %v5330
        %v5346 = vor.u32 %v5344, %v5345
        %vm5347 = vcmp.lt.s32.totalorder %v5328, 1
        %vm5348 = vcmp.lt.s32.totalorder %v5328, 2
        %vm5349 = vcmp.lt.s32.totalorder %v5328, 3
        %vm5350 = vcmp.lt.s32.totalorder %v5328, 4
        %v5351 = vsel %vm5347, %v5331, %v5334
        %v5352 = vsel %vm5350, %v5340, 2102212464
        %v5353 = vsel %vm5349, %v5337, %v5352
        %v5354 = vsel %vm5348, %v5351, %v5353
        %v5355 = vsel %vm5347, %v5334, %v5337
        %v5356 = vsel %vm5350, %v5343, 920167782
        %v5357 = vsel %vm5349, %v5340, %v5356
        %v5358 = vsel %vm5348, %v5355, %v5357
        %v5359 = vsel %vm5347, %v5337, %v5340
        %v5360 = vsel %vm5350, %v5346, 1326507024
        %v5361 = vsel %vm5349, %v5343, %v5360
        %v5362 = vsel %vm5348, %v5359, %v5361
        %v5363 = vshll.u32 %v5323, 8
        %v5364 = vmul.u32.u64.compose %v5363, %v5362
        %v5365 = vextract.low.u32 %v5364
        %v5366 = vextract.high.u32 %v5364
        %v5367 = vmul.u32.u64.compose %v5363, %v5358
        %v5368 = vextract.low.u32 %v5367
        %v5369 = vextract.high.u32 %v5367
        %v5370 = vmul.u32 %v5363, %v5354
        %v5371 = vadd.s32 %v5366, %v5368
        %vm5372 = vc.u32 %v5366, %v5368
        %v5373 = vadd.s32 %v5369, 1
        %v5374 = vsel %vm5372, %v5373, %v5369
        %v5375 = vadd.s32 %v5370, %v5374
        %v5376 = vadd.s32 %v5375, 536870912
        %v5377 = vshrl.u32 %v5376, 30
        %v5378 = vshll.u32 %v5377, 30
        %v5379 = vsub.s32 %v5375, %v5378
        %vm5380 = vcmp.lt.s32.totalorder %v5379, 0
        %v5381 = vsub.s32 0, %v5379
        %v5382 = vsel %vm5380, %v5381, %v5379
        %v5383 = vclz %v5382
        %v5384 = vsub.s32 %v5383, 2
        %vm5385 = vcmp.gt.s32.totalorder 0, %v5384
        %v5386 = vsel %vm5385, 0, %v5384
        %v5387 = vsub.s32 32, %v5386
        %v5388 = vshll.u32 %v5379, %v5386
        %v5389 = vshrl.u32 %v5371, %v5387
        %v5390 = vor.u32 %v5388, %v5389
        %v5391 = vsub.s32 4294967266, %v5386
        %v5392 = vadd.s32 %v5391, 127
        %v5393 = vshll.u32 %v5392, 23
        %v5394 = vor.u32 4788187, %v5393
        %v5395 = vand.u32 2147483647, %v5394
        %v5397 = vcvt.s32.f32 %v5390
        %v5398 = vmul.f32 %v5397, %v5395
        %v5399 = vxor.u32 %v5398, 2147483648
        %v5400 = vsel %vm5317, %v5399, %v5398
        %v5401 = vsub.s32 4, %v5377
        %v5402 = vsel %vm5317, %v5401, %v5377
        %v5403 = vsel %vm5316, %v616, %v5400
        %v5404 = vsel %vm5316, 0, %v5402
        %v5405 = vcosq.f32.pop %v5403
        %v5406 = vsinq.f32.pop %v5403
        %vm5407 = vweird.f32 %v616
        %v5408 = vadd.s32 %v5404, 3
        %v5409 = vand.u32 %v5408, 3
        %vm5410 = vcmp.lt.s32.totalorder %v5409, 2
        %vm5411 = vcmp.eq.s32.totalorder %v5409, 0
        %v5412 = vxor.u32 %v5406, 2147483648
        %v5413 = vsel %vm5411, %v5405, %v5412
        %vm5414 = vcmp.eq.s32.totalorder %v5409, 2
        %v5415 = vxor.u32 %v5405, 2147483648
        %v5416 = vsel %vm5414, %v5415, %v5406
        %v5417 = vsel %vm5410, %v5413, %v5416
        %v5418 = vsel %vm5407, nan, %v5417
        %v5419 = vand.u32 2147483647, %v617
        %vm5420 = vcmp.le.f32.partialorder %v5419, 0.7853982
        %vm5421 = vcmp.lt.s32.totalorder %v617, 0
        %v5422 = vand.u32 %v617, 2139095040
        %v5423 = vshrl.u32 %v5422, 23
        %v5424 = vsub.s32 %v5423, 127
        %v5425 = vand.u32 2147483647, %v617
        %v5426 = vand.u32 %v5425, 8388607
        %v5427 = vor.u32 %v5426, 8388608
        %v5428 = vsub.s32 0, %v5427
        %v5429 = vadd.s32 %v5424, 1
        %vm5430 = vcmp.gt.s32.totalorder %v5429, 0
        %v5431 = vsel %vm5430, %v5429, 0
        %v5432 = vshrl.u32 %v5431, 5
        %v5433 = vand.u32 %v5431, 31
        %v5434 = vsub.s32 32, %v5433
        %v5435 = vshrl.u32 683565275, %v5434
        %v5436 = vshll.u32 683565275, %v5433
        %v5437 = vshrl.u32 2475754826, %v5434
        %v5438 = vor.u32 %v5436, %v5437
        %v5439 = vshll.u32 2475754826, %v5433
        %v5440 = vshrl.u32 2131351028, %v5434
        %v5441 = vor.u32 %v5439, %v5440
        %v5442 = vshll.u32 2131351028, %v5433
        %v5443 = vshrl.u32 2102212464, %v5434
        %v5444 = vor.u32 %v5442, %v5443
        %v5445 = vshll.u32 2102212464, %v5433
        %v5446 = vshrl.u32 920167782, %v5434
        %v5447 = vor.u32 %v5445, %v5446
        %v5448 = vshll.u32 920167782, %v5433
        %v5449 = vshrl.u32 1326507024, %v5434
        %v5450 = vor.u32 %v5448, %v5449
        %vm5451 = vcmp.lt.s32.totalorder %v5432, 1
        %vm5452 = vcmp.lt.s32.totalorder %v5432, 2
        %vm5453 = vcmp.lt.s32.totalorder %v5432, 3
        %vm5454 = vcmp.lt.s32.totalorder %v5432, 4
        %v5455 = vsel %vm5451, %v5435, %v5438
        %v5456 = vsel %vm5454, %v5444, 2102212464
        %v5457 = vsel %vm5453, %v5441, %v5456
        %v5458 = vsel %vm5452, %v5455, %v5457
        %v5459 = vsel %vm5451, %v5438, %v5441
        %v5460 = vsel %vm5454, %v5447, 920167782
        %v5461 = vsel %vm5453, %v5444, %v5460
        %v5462 = vsel %vm5452, %v5459, %v5461
        %v5463 = vsel %vm5451, %v5441, %v5444
        %v5464 = vsel %vm5454, %v5450, 1326507024
        %v5465 = vsel %vm5453, %v5447, %v5464
        %v5466 = vsel %vm5452, %v5463, %v5465
        %v5467 = vshll.u32 %v5427, 8
        %v5468 = vmul.u32.u64.compose %v5467, %v5466
        %v5469 = vextract.low.u32 %v5468
        %v5470 = vextract.high.u32 %v5468
        %v5471 = vmul.u32.u64.compose %v5467, %v5462
        %v5472 = vextract.low.u32 %v5471
        %v5473 = vextract.high.u32 %v5471
        %v5474 = vmul.u32 %v5467, %v5458
        %v5475 = vadd.s32 %v5470, %v5472
        %vm5476 = vc.u32 %v5470, %v5472
        %v5477 = vadd.s32 %v5473, 1
        %v5478 = vsel %vm5476, %v5477, %v5473
        %v5479 = vadd.s32 %v5474, %v5478
        %v5480 = vadd.s32 %v5479, 536870912
        %v5481 = vshrl.u32 %v5480, 30
        %v5482 = vshll.u32 %v5481, 30
        %v5483 = vsub.s32 %v5479, %v5482
        %vm5484 = vcmp.lt.s32.totalorder %v5483, 0
        %v5485 = vsub.s32 0, %v5483
        %v5486 = vsel %vm5484, %v5485, %v5483
        %v5487 = vclz %v5486
        %v5488 = vsub.s32 %v5487, 2
        %vm5489 = vcmp.gt.s32.totalorder 0, %v5488
        %v5490 = vsel %vm5489, 0, %v5488
        %v5491 = vsub.s32 32, %v5490
        %v5492 = vshll.u32 %v5483, %v5490
        %v5493 = vshrl.u32 %v5475, %v5491
        %v5494 = vor.u32 %v5492, %v5493
        %v5495 = vsub.s32 4294967266, %v5490
        %v5496 = vadd.s32 %v5495, 127
        %v5497 = vshll.u32 %v5496, 23
        %v5498 = vor.u32 4788187, %v5497
        %v5499 = vand.u32 2147483647, %v5498
        %v5501 = vcvt.s32.f32 %v5494
        %v5502 = vmul.f32 %v5501, %v5499
        %v5503 = vxor.u32 %v5502, 2147483648
        %v5504 = vsel %vm5421, %v5503, %v5502
        %v5505 = vsub.s32 4, %v5481
        %v5506 = vsel %vm5421, %v5505, %v5481
        %v5507 = vsel %vm5420, %v617, %v5504
        %v5508 = vsel %vm5420, 0, %v5506
        %v5509 = vcosq.f32.pop %v5507
        %v5510 = vsinq.f32.pop %v5507
        %vm5511 = vweird.f32 %v617
        %v5512 = vadd.s32 %v5508, 3
        %v5513 = vand.u32 %v5512, 3
        %vm5514 = vcmp.lt.s32.totalorder %v5513, 2
        %vm5515 = vcmp.eq.s32.totalorder %v5513, 0
        %v5516 = vxor.u32 %v5510, 2147483648
        %v5517 = vsel %vm5515, %v5509, %v5516
        %vm5518 = vcmp.eq.s32.totalorder %v5513, 2
        %v5519 = vxor.u32 %v5509, 2147483648
        %v5520 = vsel %vm5518, %v5519, %v5510
        %v5521 = vsel %vm5514, %v5517, %v5520
        %v5522 = vsel %vm5511, nan, %v5521
        %v5523 = vand.u32 2147483647, %v618
        %vm5524 = vcmp.le.f32.partialorder %v5523, 0.7853982
        %vm5525 = vcmp.lt.s32.totalorder %v618, 0
        %v5526 = vand.u32 %v618, 2139095040
        %v5527 = vshrl.u32 %v5526, 23
        %v5528 = vsub.s32 %v5527, 127
        %v5529 = vand.u32 2147483647, %v618
        %v5530 = vand.u32 %v5529, 8388607
        %v5531 = vor.u32 %v5530, 8388608
        %v5532 = vsub.s32 0, %v5531
        %v5533 = vadd.s32 %v5528, 1
        %vm5534 = vcmp.gt.s32.totalorder %v5533, 0
        %v5535 = vsel %vm5534, %v5533, 0
        %v5536 = vshrl.u32 %v5535, 5
        %v5537 = vand.u32 %v5535, 31
        %v5538 = vsub.s32 32, %v5537
        %v5539 = vshrl.u32 683565275, %v5538
        %v5540 = vshll.u32 683565275, %v5537
        %v5541 = vshrl.u32 2475754826, %v5538
        %v5542 = vor.u32 %v5540, %v5541
        %v5543 = vshll.u32 2475754826, %v5537
        %v5544 = vshrl.u32 2131351028, %v5538
        %v5545 = vor.u32 %v5543, %v5544
        %v5546 = vshll.u32 2131351028, %v5537
        %v5547 = vshrl.u32 2102212464, %v5538
        %v5548 = vor.u32 %v5546, %v5547
        %v5549 = vshll.u32 2102212464, %v5537
        %v5550 = vshrl.u32 920167782, %v5538
        %v5551 = vor.u32 %v5549, %v5550
        %v5552 = vshll.u32 920167782, %v5537
        %v5553 = vshrl.u32 1326507024, %v5538
        %v5554 = vor.u32 %v5552, %v5553
        %vm5555 = vcmp.lt.s32.totalorder %v5536, 1
        %vm5556 = vcmp.lt.s32.totalorder %v5536, 2
        %vm5557 = vcmp.lt.s32.totalorder %v5536, 3
        %vm5558 = vcmp.lt.s32.totalorder %v5536, 4
        %v5559 = vsel %vm5555, %v5539, %v5542
        %v5560 = vsel %vm5558, %v5548, 2102212464
        %v5561 = vsel %vm5557, %v5545, %v5560
        %v5562 = vsel %vm5556, %v5559, %v5561
        %v5563 = vsel %vm5555, %v5542, %v5545
        %v5564 = vsel %vm5558, %v5551, 920167782
        %v5565 = vsel %vm5557, %v5548, %v5564
        %v5566 = vsel %vm5556, %v5563, %v5565
        %v5567 = vsel %vm5555, %v5545, %v5548
        %v5568 = vsel %vm5558, %v5554, 1326507024
        %v5569 = vsel %vm5557, %v5551, %v5568
        %v5570 = vsel %vm5556, %v5567, %v5569
        %v5571 = vshll.u32 %v5531, 8
        %v5572 = vmul.u32.u64.compose %v5571, %v5570
        %v5573 = vextract.low.u32 %v5572
        %v5574 = vextract.high.u32 %v5572
        %v5575 = vmul.u32.u64.compose %v5571, %v5566
        %v5576 = vextract.low.u32 %v5575
        %v5577 = vextract.high.u32 %v5575
        %v5578 = vmul.u32 %v5571, %v5562
        %v5579 = vadd.s32 %v5574, %v5576
        %vm5580 = vc.u32 %v5574, %v5576
        %v5581 = vadd.s32 %v5577, 1
        %v5582 = vsel %vm5580, %v5581, %v5577
        %v5583 = vadd.s32 %v5578, %v5582
        %v5584 = vadd.s32 %v5583, 536870912
        %v5585 = vshrl.u32 %v5584, 30
        %v5586 = vshll.u32 %v5585, 30
        %v5587 = vsub.s32 %v5583, %v5586
        %vm5588 = vcmp.lt.s32.totalorder %v5587, 0
        %v5589 = vsub.s32 0, %v5587
        %v5590 = vsel %vm5588, %v5589, %v5587
        %v5591 = vclz %v5590
        %v5592 = vsub.s32 %v5591, 2
        %vm5593 = vcmp.gt.s32.totalorder 0, %v5592
        %v5594 = vsel %vm5593, 0, %v5592
        %v5595 = vsub.s32 32, %v5594
        %v5596 = vshll.u32 %v5587, %v5594
        %v5597 = vshrl.u32 %v5579, %v5595
        %v5598 = vor.u32 %v5596, %v5597
        %v5599 = vsub.s32 4294967266, %v5594
        %v5600 = vadd.s32 %v5599, 127
        %v5601 = vshll.u32 %v5600, 23
        %v5602 = vor.u32 4788187, %v5601
        %v5603 = vand.u32 2147483647, %v5602
        %v5605 = vcvt.s32.f32 %v5598
        %v5606 = vmul.f32 %v5605, %v5603
        %v5607 = vxor.u32 %v5606, 2147483648
        %v5608 = vsel %vm5525, %v5607, %v5606
        %v5609 = vsub.s32 4, %v5585
        %v5610 = vsel %vm5525, %v5609, %v5585
        %v5611 = vsel %vm5524, %v618, %v5608
        %v5612 = vsel %vm5524, 0, %v5610
        %v5613 = vcosq.f32.pop %v5611
        %v5614 = vsinq.f32.pop %v5611
        %vm5615 = vweird.f32 %v618
        %v5616 = vadd.s32 %v5612, 3
        %v5617 = vand.u32 %v5616, 3
        %vm5618 = vcmp.lt.s32.totalorder %v5617, 2
        %vm5619 = vcmp.eq.s32.totalorder %v5617, 0
        %v5620 = vxor.u32 %v5614, 2147483648
        %v5621 = vsel %vm5619, %v5613, %v5620
        %vm5622 = vcmp.eq.s32.totalorder %v5617, 2
        %v5623 = vxor.u32 %v5613, 2147483648
        %v5624 = vsel %vm5622, %v5623, %v5614
        %v5625 = vsel %vm5618, %v5621, %v5624
        %v5626 = vsel %vm5615, nan, %v5625
        %v5627 = vand.u32 2147483647, %v619
        %vm5628 = vcmp.le.f32.partialorder %v5627, 0.7853982
        %vm5629 = vcmp.lt.s32.totalorder %v619, 0
        %v5630 = vand.u32 %v619, 2139095040
        %v5631 = vshrl.u32 %v5630, 23
        %v5632 = vsub.s32 %v5631, 127
        %v5633 = vand.u32 2147483647, %v619
        %v5634 = vand.u32 %v5633, 8388607
        %v5635 = vor.u32 %v5634, 8388608
        %v5636 = vsub.s32 0, %v5635
        %v5637 = vadd.s32 %v5632, 1
        %vm5638 = vcmp.gt.s32.totalorder %v5637, 0
        %v5639 = vsel %vm5638, %v5637, 0
        %v5640 = vshrl.u32 %v5639, 5
        %v5641 = vand.u32 %v5639, 31
        %v5642 = vsub.s32 32, %v5641
        %v5643 = vshrl.u32 683565275, %v5642
        %v5644 = vshll.u32 683565275, %v5641
        %v5645 = vshrl.u32 2475754826, %v5642
        %v5646 = vor.u32 %v5644, %v5645
        %v5647 = vshll.u32 2475754826, %v5641
        %v5648 = vshrl.u32 2131351028, %v5642
        %v5649 = vor.u32 %v5647, %v5648
        %v5650 = vshll.u32 2131351028, %v5641
        %v5651 = vshrl.u32 2102212464, %v5642
        %v5652 = vor.u32 %v5650, %v5651
        %v5653 = vshll.u32 2102212464, %v5641
        %v5654 = vshrl.u32 920167782, %v5642
        %v5655 = vor.u32 %v5653, %v5654
        %v5656 = vshll.u32 920167782, %v5641
        %v5657 = vshrl.u32 1326507024, %v5642
        %v5658 = vor.u32 %v5656, %v5657
        %vm5659 = vcmp.lt.s32.totalorder %v5640, 1
        %vm5660 = vcmp.lt.s32.totalorder %v5640, 2
        %vm5661 = vcmp.lt.s32.totalorder %v5640, 3
        %vm5662 = vcmp.lt.s32.totalorder %v5640, 4
        %v5663 = vsel %vm5659, %v5643, %v5646
        %v5664 = vsel %vm5662, %v5652, 2102212464
        %v5665 = vsel %vm5661, %v5649, %v5664
        %v5666 = vsel %vm5660, %v5663, %v5665
        %v5667 = vsel %vm5659, %v5646, %v5649
        %v5668 = vsel %vm5662, %v5655, 920167782
        %v5669 = vsel %vm5661, %v5652, %v5668
        %v5670 = vsel %vm5660, %v5667, %v5669
        %v5671 = vsel %vm5659, %v5649, %v5652
        %v5672 = vsel %vm5662, %v5658, 1326507024
        %v5673 = vsel %vm5661, %v5655, %v5672
        %v5674 = vsel %vm5660, %v5671, %v5673
        %v5675 = vshll.u32 %v5635, 8
        %v5676 = vmul.u32.u64.compose %v5675, %v5674
        %v5677 = vextract.low.u32 %v5676
        %v5678 = vextract.high.u32 %v5676
        %v5679 = vmul.u32.u64.compose %v5675, %v5670
        %v5680 = vextract.low.u32 %v5679
        %v5681 = vextract.high.u32 %v5679
        %v5682 = vmul.u32 %v5675, %v5666
        %v5683 = vadd.s32 %v5678, %v5680
        %vm5684 = vc.u32 %v5678, %v5680
        %v5685 = vadd.s32 %v5681, 1
        %v5686 = vsel %vm5684, %v5685, %v5681
        %v5687 = vadd.s32 %v5682, %v5686
        %v5688 = vadd.s32 %v5687, 536870912
        %v5689 = vshrl.u32 %v5688, 30
        %v5690 = vshll.u32 %v5689, 30
        %v5691 = vsub.s32 %v5687, %v5690
        %vm5692 = vcmp.lt.s32.totalorder %v5691, 0
        %v5693 = vsub.s32 0, %v5691
        %v5694 = vsel %vm5692, %v5693, %v5691
        %v5695 = vclz %v5694
        %v5696 = vsub.s32 %v5695, 2
        %vm5697 = vcmp.gt.s32.totalorder 0, %v5696
        %v5698 = vsel %vm5697, 0, %v5696
        %v5699 = vsub.s32 32, %v5698
        %v5700 = vshll.u32 %v5691, %v5698
        %v5701 = vshrl.u32 %v5683, %v5699
        %v5702 = vor.u32 %v5700, %v5701
        %v5703 = vsub.s32 4294967266, %v5698
        %v5704 = vadd.s32 %v5703, 127
        %v5705 = vshll.u32 %v5704, 23
        %v5706 = vor.u32 4788187, %v5705
        %v5707 = vand.u32 2147483647, %v5706
        %v5709 = vcvt.s32.f32 %v5702
        %v5710 = vmul.f32 %v5709, %v5707
        %v5711 = vxor.u32 %v5710, 2147483648
        %v5712 = vsel %vm5629, %v5711, %v5710
        %v5713 = vsub.s32 4, %v5689
        %v5714 = vsel %vm5629, %v5713, %v5689
        %v5715 = vsel %vm5628, %v619, %v5712
        %v5716 = vsel %vm5628, 0, %v5714
        %v5717 = vcosq.f32.pop %v5715
        %v5718 = vsinq.f32.pop %v5715
        %vm5719 = vweird.f32 %v619
        %v5720 = vadd.s32 %v5716, 3
        %v5721 = vand.u32 %v5720, 3
        %vm5722 = vcmp.lt.s32.totalorder %v5721, 2
        %vm5723 = vcmp.eq.s32.totalorder %v5721, 0
        %v5724 = vxor.u32 %v5718, 2147483648
        %v5725 = vsel %vm5723, %v5717, %v5724
        %vm5726 = vcmp.eq.s32.totalorder %v5721, 2
        %v5727 = vxor.u32 %v5717, 2147483648
        %v5728 = vsel %vm5726, %v5727, %v5718
        %v5729 = vsel %vm5722, %v5725, %v5728
        %v5730 = vsel %vm5719, nan, %v5729
        %v5731 = vand.u32 2147483647, %v620
        %vm5732 = vcmp.le.f32.partialorder %v5731, 0.7853982
        %vm5733 = vcmp.lt.s32.totalorder %v620, 0
        %v5734 = vand.u32 %v620, 2139095040
        %v5735 = vshrl.u32 %v5734, 23
        %v5736 = vsub.s32 %v5735, 127
        %v5737 = vand.u32 2147483647, %v620
        %v5738 = vand.u32 %v5737, 8388607
        %v5739 = vor.u32 %v5738, 8388608
        %v5740 = vsub.s32 0, %v5739
        %v5741 = vadd.s32 %v5736, 1
        %vm5742 = vcmp.gt.s32.totalorder %v5741, 0
        %v5743 = vsel %vm5742, %v5741, 0
        %v5744 = vshrl.u32 %v5743, 5
        %v5745 = vand.u32 %v5743, 31
        %v5746 = vsub.s32 32, %v5745
        %v5747 = vshrl.u32 683565275, %v5746
        %v5748 = vshll.u32 683565275, %v5745
        %v5749 = vshrl.u32 2475754826, %v5746
        %v5750 = vor.u32 %v5748, %v5749
        %v5751 = vshll.u32 2475754826, %v5745
        %v5752 = vshrl.u32 2131351028, %v5746
        %v5753 = vor.u32 %v5751, %v5752
        %v5754 = vshll.u32 2131351028, %v5745
        %v5755 = vshrl.u32 2102212464, %v5746
        %v5756 = vor.u32 %v5754, %v5755
        %v5757 = vshll.u32 2102212464, %v5745
        %v5758 = vshrl.u32 920167782, %v5746
        %v5759 = vor.u32 %v5757, %v5758
        %v5760 = vshll.u32 920167782, %v5745
        %v5761 = vshrl.u32 1326507024, %v5746
        %v5762 = vor.u32 %v5760, %v5761
        %vm5763 = vcmp.lt.s32.totalorder %v5744, 1
        %vm5764 = vcmp.lt.s32.totalorder %v5744, 2
        %vm5765 = vcmp.lt.s32.totalorder %v5744, 3
        %vm5766 = vcmp.lt.s32.totalorder %v5744, 4
        %v5767 = vsel %vm5763, %v5747, %v5750
        %v5768 = vsel %vm5766, %v5756, 2102212464
        %v5769 = vsel %vm5765, %v5753, %v5768
        %v5770 = vsel %vm5764, %v5767, %v5769
        %v5771 = vsel %vm5763, %v5750, %v5753
        %v5772 = vsel %vm5766, %v5759, 920167782
        %v5773 = vsel %vm5765, %v5756, %v5772
        %v5774 = vsel %vm5764, %v5771, %v5773
        %v5775 = vsel %vm5763, %v5753, %v5756
        %v5776 = vsel %vm5766, %v5762, 1326507024
        %v5777 = vsel %vm5765, %v5759, %v5776
        %v5778 = vsel %vm5764, %v5775, %v5777
        %v5779 = vshll.u32 %v5739, 8
        %v5780 = vmul.u32.u64.compose %v5779, %v5778
        %v5781 = vextract.low.u32 %v5780
        %v5782 = vextract.high.u32 %v5780
        %v5783 = vmul.u32.u64.compose %v5779, %v5774
        %v5784 = vextract.low.u32 %v5783
        %v5785 = vextract.high.u32 %v5783
        %v5786 = vmul.u32 %v5779, %v5770
        %v5787 = vadd.s32 %v5782, %v5784
        %vm5788 = vc.u32 %v5782, %v5784
        %v5789 = vadd.s32 %v5785, 1
        %v5790 = vsel %vm5788, %v5789, %v5785
        %v5791 = vadd.s32 %v5786, %v5790
        %v5792 = vadd.s32 %v5791, 536870912
        %v5793 = vshrl.u32 %v5792, 30
        %v5794 = vshll.u32 %v5793, 30
        %v5795 = vsub.s32 %v5791, %v5794
        %vm5796 = vcmp.lt.s32.totalorder %v5795, 0
        %v5797 = vsub.s32 0, %v5795
        %v5798 = vsel %vm5796, %v5797, %v5795
        %v5799 = vclz %v5798
        %v5800 = vsub.s32 %v5799, 2
        %vm5801 = vcmp.gt.s32.totalorder 0, %v5800
        %v5802 = vsel %vm5801, 0, %v5800
        %v5803 = vsub.s32 32, %v5802
        %v5804 = vshll.u32 %v5795, %v5802
        %v5805 = vshrl.u32 %v5787, %v5803
        %v5806 = vor.u32 %v5804, %v5805
        %v5807 = vsub.s32 4294967266, %v5802
        %v5808 = vadd.s32 %v5807, 127
        %v5809 = vshll.u32 %v5808, 23
        %v5810 = vor.u32 4788187, %v5809
        %v5811 = vand.u32 2147483647, %v5810
        %v5813 = vcvt.s32.f32 %v5806
        %v5814 = vmul.f32 %v5813, %v5811
        %v5815 = vxor.u32 %v5814, 2147483648
        %v5816 = vsel %vm5733, %v5815, %v5814
        %v5817 = vsub.s32 4, %v5793
        %v5818 = vsel %vm5733, %v5817, %v5793
        %v5819 = vsel %vm5732, %v620, %v5816
        %v5820 = vsel %vm5732, 0, %v5818
        %v5821 = vcosq.f32.pop %v5819
        %v5822 = vsinq.f32.pop %v5819
        %vm5823 = vweird.f32 %v620
        %v5824 = vadd.s32 %v5820, 3
        %v5825 = vand.u32 %v5824, 3
        %vm5826 = vcmp.lt.s32.totalorder %v5825, 2
        %vm5827 = vcmp.eq.s32.totalorder %v5825, 0
        %v5828 = vxor.u32 %v5822, 2147483648
        %v5829 = vsel %vm5827, %v5821, %v5828
        %vm5830 = vcmp.eq.s32.totalorder %v5825, 2
        %v5831 = vxor.u32 %v5821, 2147483648
        %v5832 = vsel %vm5830, %v5831, %v5822
        %v5833 = vsel %vm5826, %v5829, %v5832
        %v5834 = vsel %vm5823, nan, %v5833
        %v5835 = vand.u32 2147483647, %v621
        %vm5836 = vcmp.le.f32.partialorder %v5835, 0.7853982
        %vm5837 = vcmp.lt.s32.totalorder %v621, 0
        %v5838 = vand.u32 %v621, 2139095040
        %v5839 = vshrl.u32 %v5838, 23
        %v5840 = vsub.s32 %v5839, 127
        %v5841 = vand.u32 2147483647, %v621
        %v5842 = vand.u32 %v5841, 8388607
        %v5843 = vor.u32 %v5842, 8388608
        %v5844 = vsub.s32 0, %v5843
        %v5845 = vadd.s32 %v5840, 1
        %vm5846 = vcmp.gt.s32.totalorder %v5845, 0
        %v5847 = vsel %vm5846, %v5845, 0
        %v5848 = vshrl.u32 %v5847, 5
        %v5849 = vand.u32 %v5847, 31
        %v5850 = vsub.s32 32, %v5849
        %v5851 = vshrl.u32 683565275, %v5850
        %v5852 = vshll.u32 683565275, %v5849
        %v5853 = vshrl.u32 2475754826, %v5850
        %v5854 = vor.u32 %v5852, %v5853
        %v5855 = vshll.u32 2475754826, %v5849
        %v5856 = vshrl.u32 2131351028, %v5850
        %v5857 = vor.u32 %v5855, %v5856
        %v5858 = vshll.u32 2131351028, %v5849
        %v5859 = vshrl.u32 2102212464, %v5850
        %v5860 = vor.u32 %v5858, %v5859
        %v5861 = vshll.u32 2102212464, %v5849
        %v5862 = vshrl.u32 920167782, %v5850
        %v5863 = vor.u32 %v5861, %v5862
        %v5864 = vshll.u32 920167782, %v5849
        %v5865 = vshrl.u32 1326507024, %v5850
        %v5866 = vor.u32 %v5864, %v5865
        %vm5867 = vcmp.lt.s32.totalorder %v5848, 1
        %vm5868 = vcmp.lt.s32.totalorder %v5848, 2
        %vm5869 = vcmp.lt.s32.totalorder %v5848, 3
        %vm5870 = vcmp.lt.s32.totalorder %v5848, 4
        %v5871 = vsel %vm5867, %v5851, %v5854
        %v5872 = vsel %vm5870, %v5860, 2102212464
        %v5873 = vsel %vm5869, %v5857, %v5872
        %v5874 = vsel %vm5868, %v5871, %v5873
        %v5875 = vsel %vm5867, %v5854, %v5857
        %v5876 = vsel %vm5870, %v5863, 920167782
        %v5877 = vsel %vm5869, %v5860, %v5876
        %v5878 = vsel %vm5868, %v5875, %v5877
        %v5879 = vsel %vm5867, %v5857, %v5860
        %v5880 = vsel %vm5870, %v5866, 1326507024
        %v5881 = vsel %vm5869, %v5863, %v5880
        %v5882 = vsel %vm5868, %v5879, %v5881
        %v5883 = vshll.u32 %v5843, 8
        %v5884 = vmul.u32.u64.compose %v5883, %v5882
        %v5885 = vextract.low.u32 %v5884
        %v5886 = vextract.high.u32 %v5884
        %v5887 = vmul.u32.u64.compose %v5883, %v5878
        %v5888 = vextract.low.u32 %v5887
        %v5889 = vextract.high.u32 %v5887
        %v5890 = vmul.u32 %v5883, %v5874
        %v5891 = vadd.s32 %v5886, %v5888
        %vm5892 = vc.u32 %v5886, %v5888
        %v5893 = vadd.s32 %v5889, 1
        %v5894 = vsel %vm5892, %v5893, %v5889
        %v5895 = vadd.s32 %v5890, %v5894
        %v5896 = vadd.s32 %v5895, 536870912
        %v5897 = vshrl.u32 %v5896, 30
        %v5898 = vshll.u32 %v5897, 30
        %v5899 = vsub.s32 %v5895, %v5898
        %vm5900 = vcmp.lt.s32.totalorder %v5899, 0
        %v5901 = vsub.s32 0, %v5899
        %v5902 = vsel %vm5900, %v5901, %v5899
        %v5903 = vclz %v5902
        %v5904 = vsub.s32 %v5903, 2
        %vm5905 = vcmp.gt.s32.totalorder 0, %v5904
        %v5906 = vsel %vm5905, 0, %v5904
        %v5907 = vsub.s32 32, %v5906
        %v5908 = vshll.u32 %v5899, %v5906
        %v5909 = vshrl.u32 %v5891, %v5907
        %v5910 = vor.u32 %v5908, %v5909
        %v5911 = vsub.s32 4294967266, %v5906
        %v5912 = vadd.s32 %v5911, 127
        %v5913 = vshll.u32 %v5912, 23
        %v5914 = vor.u32 4788187, %v5913
        %v5915 = vand.u32 2147483647, %v5914
        %v5917 = vcvt.s32.f32 %v5910
        %v5918 = vmul.f32 %v5917, %v5915
        %v5919 = vxor.u32 %v5918, 2147483648
        %v5920 = vsel %vm5837, %v5919, %v5918
        %v5921 = vsub.s32 4, %v5897
        %v5922 = vsel %vm5837, %v5921, %v5897
        %v5923 = vsel %vm5836, %v621, %v5920
        %v5924 = vsel %vm5836, 0, %v5922
        %v5925 = vcosq.f32.pop %v5923
        %v5926 = vsinq.f32.pop %v5923
        %vm5927 = vweird.f32 %v621
        %v5928 = vadd.s32 %v5924, 3
        %v5929 = vand.u32 %v5928, 3
        %vm5930 = vcmp.lt.s32.totalorder %v5929, 2
        %vm5931 = vcmp.eq.s32.totalorder %v5929, 0
        %v5932 = vxor.u32 %v5926, 2147483648
        %v5933 = vsel %vm5931, %v5925, %v5932
        %vm5934 = vcmp.eq.s32.totalorder %v5929, 2
        %v5935 = vxor.u32 %v5925, 2147483648
        %v5936 = vsel %vm5934, %v5935, %v5926
        %v5937 = vsel %vm5930, %v5933, %v5936
        %v5938 = vsel %vm5927, nan, %v5937
        %v5939 = vand.u32 2147483647, %v622
        %vm5940 = vcmp.le.f32.partialorder %v5939, 0.7853982
        %vm5941 = vcmp.lt.s32.totalorder %v622, 0
        %v5942 = vand.u32 %v622, 2139095040
        %v5943 = vshrl.u32 %v5942, 23
        %v5944 = vsub.s32 %v5943, 127
        %v5945 = vand.u32 2147483647, %v622
        %v5946 = vand.u32 %v5945, 8388607
        %v5947 = vor.u32 %v5946, 8388608
        %v5948 = vsub.s32 0, %v5947
        %v5949 = vadd.s32 %v5944, 1
        %vm5950 = vcmp.gt.s32.totalorder %v5949, 0
        %v5951 = vsel %vm5950, %v5949, 0
        %v5952 = vshrl.u32 %v5951, 5
        %v5953 = vand.u32 %v5951, 31
        %v5954 = vsub.s32 32, %v5953
        %v5955 = vshrl.u32 683565275, %v5954
        %v5956 = vshll.u32 683565275, %v5953
        %v5957 = vshrl.u32 2475754826, %v5954
        %v5958 = vor.u32 %v5956, %v5957
        %v5959 = vshll.u32 2475754826, %v5953
        %v5960 = vshrl.u32 2131351028, %v5954
        %v5961 = vor.u32 %v5959, %v5960
        %v5962 = vshll.u32 2131351028, %v5953
        %v5963 = vshrl.u32 2102212464, %v5954
        %v5964 = vor.u32 %v5962, %v5963
        %v5965 = vshll.u32 2102212464, %v5953
        %v5966 = vshrl.u32 920167782, %v5954
        %v5967 = vor.u32 %v5965, %v5966
        %v5968 = vshll.u32 920167782, %v5953
        %v5969 = vshrl.u32 1326507024, %v5954
        %v5970 = vor.u32 %v5968, %v5969
        %vm5971 = vcmp.lt.s32.totalorder %v5952, 1
        %vm5972 = vcmp.lt.s32.totalorder %v5952, 2
        %vm5973 = vcmp.lt.s32.totalorder %v5952, 3
        %vm5974 = vcmp.lt.s32.totalorder %v5952, 4
        %v5975 = vsel %vm5971, %v5955, %v5958
        %v5976 = vsel %vm5974, %v5964, 2102212464
        %v5977 = vsel %vm5973, %v5961, %v5976
        %v5978 = vsel %vm5972, %v5975, %v5977
        %v5979 = vsel %vm5971, %v5958, %v5961
        %v5980 = vsel %vm5974, %v5967, 920167782
        %v5981 = vsel %vm5973, %v5964, %v5980
        %v5982 = vsel %vm5972, %v5979, %v5981
        %v5983 = vsel %vm5971, %v5961, %v5964
        %v5984 = vsel %vm5974, %v5970, 1326507024
        %v5985 = vsel %vm5973, %v5967, %v5984
        %v5986 = vsel %vm5972, %v5983, %v5985
        %v5987 = vshll.u32 %v5947, 8
        %v5988 = vmul.u32.u64.compose %v5987, %v5986
        %v5989 = vextract.low.u32 %v5988
        %v5990 = vextract.high.u32 %v5988
        %v5991 = vmul.u32.u64.compose %v5987, %v5982
        %v5992 = vextract.low.u32 %v5991
        %v5993 = vextract.high.u32 %v5991
        %v5994 = vmul.u32 %v5987, %v5978
        %v5995 = vadd.s32 %v5990, %v5992
        %vm5996 = vc.u32 %v5990, %v5992
        %v5997 = vadd.s32 %v5993, 1
        %v5998 = vsel %vm5996, %v5997, %v5993
        %v5999 = vadd.s32 %v5994, %v5998
        %v6000 = vadd.s32 %v5999, 536870912
        %v6001 = vshrl.u32 %v6000, 30
        %v6002 = vshll.u32 %v6001, 30
        %v6003 = vsub.s32 %v5999, %v6002
        %vm6004 = vcmp.lt.s32.totalorder %v6003, 0
        %v6005 = vsub.s32 0, %v6003
        %v6006 = vsel %vm6004, %v6005, %v6003
        %v6007 = vclz %v6006
        %v6008 = vsub.s32 %v6007, 2
        %vm6009 = vcmp.gt.s32.totalorder 0, %v6008
        %v6010 = vsel %vm6009, 0, %v6008
        %v6011 = vsub.s32 32, %v6010
        %v6012 = vshll.u32 %v6003, %v6010
        %v6013 = vshrl.u32 %v5995, %v6011
        %v6014 = vor.u32 %v6012, %v6013
        %v6015 = vsub.s32 4294967266, %v6010
        %v6016 = vadd.s32 %v6015, 127
        %v6017 = vshll.u32 %v6016, 23
        %v6018 = vor.u32 4788187, %v6017
        %v6019 = vand.u32 2147483647, %v6018
        %v6021 = vcvt.s32.f32 %v6014
        %v6022 = vmul.f32 %v6021, %v6019
        %v6023 = vxor.u32 %v6022, 2147483648
        %v6024 = vsel %vm5941, %v6023, %v6022
        %v6025 = vsub.s32 4, %v6001
        %v6026 = vsel %vm5941, %v6025, %v6001
        %v6027 = vsel %vm5940, %v622, %v6024
        %v6028 = vsel %vm5940, 0, %v6026
        %v6029 = vcosq.f32.pop %v6027
        %v6030 = vsinq.f32.pop %v6027
        %vm6031 = vweird.f32 %v622
        %v6032 = vadd.s32 %v6028, 3
        %v6033 = vand.u32 %v6032, 3
        %vm6034 = vcmp.lt.s32.totalorder %v6033, 2
        %vm6035 = vcmp.eq.s32.totalorder %v6033, 0
        %v6036 = vxor.u32 %v6030, 2147483648
        %v6037 = vsel %vm6035, %v6029, %v6036
        %vm6038 = vcmp.eq.s32.totalorder %v6033, 2
        %v6039 = vxor.u32 %v6029, 2147483648
        %v6040 = vsel %vm6038, %v6039, %v6030
        %v6041 = vsel %vm6034, %v6037, %v6040
        %v6042 = vsel %vm6031, nan, %v6041
        %v6043 = vand.u32 2147483647, %v623
        %vm6044 = vcmp.le.f32.partialorder %v6043, 0.7853982
        %vm6045 = vcmp.lt.s32.totalorder %v623, 0
        %v6046 = vand.u32 %v623, 2139095040
        %v6047 = vshrl.u32 %v6046, 23
        %v6048 = vsub.s32 %v6047, 127
        %v6049 = vand.u32 2147483647, %v623
        %v6050 = vand.u32 %v6049, 8388607
        %v6051 = vor.u32 %v6050, 8388608
        %v6052 = vsub.s32 0, %v6051
        %v6053 = vadd.s32 %v6048, 1
        %vm6054 = vcmp.gt.s32.totalorder %v6053, 0
        %v6055 = vsel %vm6054, %v6053, 0
        %v6056 = vshrl.u32 %v6055, 5
        %v6057 = vand.u32 %v6055, 31
        %v6058 = vsub.s32 32, %v6057
        %v6059 = vshrl.u32 683565275, %v6058
        %v6060 = vshll.u32 683565275, %v6057
        %v6061 = vshrl.u32 2475754826, %v6058
        %v6062 = vor.u32 %v6060, %v6061
        %v6063 = vshll.u32 2475754826, %v6057
        %v6064 = vshrl.u32 2131351028, %v6058
        %v6065 = vor.u32 %v6063, %v6064
        %v6066 = vshll.u32 2131351028, %v6057
        %v6067 = vshrl.u32 2102212464, %v6058
        %v6068 = vor.u32 %v6066, %v6067
        %v6069 = vshll.u32 2102212464, %v6057
        %v6070 = vshrl.u32 920167782, %v6058
        %v6071 = vor.u32 %v6069, %v6070
        %v6072 = vshll.u32 920167782, %v6057
        %v6073 = vshrl.u32 1326507024, %v6058
        %v6074 = vor.u32 %v6072, %v6073
        %vm6075 = vcmp.lt.s32.totalorder %v6056, 1
        %vm6076 = vcmp.lt.s32.totalorder %v6056, 2
        %vm6077 = vcmp.lt.s32.totalorder %v6056, 3
        %vm6078 = vcmp.lt.s32.totalorder %v6056, 4
        %v6079 = vsel %vm6075, %v6059, %v6062
        %v6080 = vsel %vm6078, %v6068, 2102212464
        %v6081 = vsel %vm6077, %v6065, %v6080
        %v6082 = vsel %vm6076, %v6079, %v6081
        %v6083 = vsel %vm6075, %v6062, %v6065
        %v6084 = vsel %vm6078, %v6071, 920167782
        %v6085 = vsel %vm6077, %v6068, %v6084
        %v6086 = vsel %vm6076, %v6083, %v6085
        %v6087 = vsel %vm6075, %v6065, %v6068
        %v6088 = vsel %vm6078, %v6074, 1326507024
        %v6089 = vsel %vm6077, %v6071, %v6088
        %v6090 = vsel %vm6076, %v6087, %v6089
        %v6091 = vshll.u32 %v6051, 8
        %v6092 = vmul.u32.u64.compose %v6091, %v6090
        %v6093 = vextract.low.u32 %v6092
        %v6094 = vextract.high.u32 %v6092
        %v6095 = vmul.u32.u64.compose %v6091, %v6086
        %v6096 = vextract.low.u32 %v6095
        %v6097 = vextract.high.u32 %v6095
        %v6098 = vmul.u32 %v6091, %v6082
        %v6099 = vadd.s32 %v6094, %v6096
        %vm6100 = vc.u32 %v6094, %v6096
        %v6101 = vadd.s32 %v6097, 1
        %v6102 = vsel %vm6100, %v6101, %v6097
        %v6103 = vadd.s32 %v6098, %v6102
        %v6104 = vadd.s32 %v6103, 536870912
        %v6105 = vshrl.u32 %v6104, 30
        %v6106 = vshll.u32 %v6105, 30
        %v6107 = vsub.s32 %v6103, %v6106
        %vm6108 = vcmp.lt.s32.totalorder %v6107, 0
        %v6109 = vsub.s32 0, %v6107
        %v6110 = vsel %vm6108, %v6109, %v6107
        %v6111 = vclz %v6110
        %v6112 = vsub.s32 %v6111, 2
        %vm6113 = vcmp.gt.s32.totalorder 0, %v6112
        %v6114 = vsel %vm6113, 0, %v6112
        %v6115 = vsub.s32 32, %v6114
        %v6116 = vshll.u32 %v6107, %v6114
        %v6117 = vshrl.u32 %v6099, %v6115
        %v6118 = vor.u32 %v6116, %v6117
        %v6119 = vsub.s32 4294967266, %v6114
        %v6120 = vadd.s32 %v6119, 127
        %v6121 = vshll.u32 %v6120, 23
        %v6122 = vor.u32 4788187, %v6121
        %v6123 = vand.u32 2147483647, %v6122
        %v6125 = vcvt.s32.f32 %v6118
        %v6126 = vmul.f32 %v6125, %v6123
        %v6127 = vxor.u32 %v6126, 2147483648
        %v6128 = vsel %vm6045, %v6127, %v6126
        %v6129 = vsub.s32 4, %v6105
        %v6130 = vsel %vm6045, %v6129, %v6105
        %v6131 = vsel %vm6044, %v623, %v6128
        %v6132 = vsel %vm6044, 0, %v6130
        %v6133 = vcosq.f32.pop %v6131
        %v6134 = vsinq.f32.pop %v6131
        %vm6135 = vweird.f32 %v623
        %v6136 = vadd.s32 %v6132, 3
        %v6137 = vand.u32 %v6136, 3
        %vm6138 = vcmp.lt.s32.totalorder %v6137, 2
        %vm6139 = vcmp.eq.s32.totalorder %v6137, 0
        %v6140 = vxor.u32 %v6134, 2147483648
        %v6141 = vsel %vm6139, %v6133, %v6140
        %vm6142 = vcmp.eq.s32.totalorder %v6137, 2
        %v6143 = vxor.u32 %v6133, 2147483648
        %v6144 = vsel %vm6142, %v6143, %v6134
        %v6145 = vsel %vm6138, %v6141, %v6144
        %v6146 = vsel %vm6135, nan, %v6145
        %v6147 = vand.u32 2147483647, %v624
        %vm6148 = vcmp.le.f32.partialorder %v6147, 0.7853982
        %vm6149 = vcmp.lt.s32.totalorder %v624, 0
        %v6150 = vand.u32 %v624, 2139095040
        %v6151 = vshrl.u32 %v6150, 23
        %v6152 = vsub.s32 %v6151, 127
        %v6153 = vand.u32 2147483647, %v624
        %v6154 = vand.u32 %v6153, 8388607
        %v6155 = vor.u32 %v6154, 8388608
        %v6156 = vsub.s32 0, %v6155
        %v6157 = vadd.s32 %v6152, 1
        %vm6158 = vcmp.gt.s32.totalorder %v6157, 0
        %v6159 = vsel %vm6158, %v6157, 0
        %v6160 = vshrl.u32 %v6159, 5
        %v6161 = vand.u32 %v6159, 31
        %v6162 = vsub.s32 32, %v6161
        %v6163 = vshrl.u32 683565275, %v6162
        %v6164 = vshll.u32 683565275, %v6161
        %v6165 = vshrl.u32 2475754826, %v6162
        %v6166 = vor.u32 %v6164, %v6165
        %v6167 = vshll.u32 2475754826, %v6161
        %v6168 = vshrl.u32 2131351028, %v6162
        %v6169 = vor.u32 %v6167, %v6168
        %v6170 = vshll.u32 2131351028, %v6161
        %v6171 = vshrl.u32 2102212464, %v6162
        %v6172 = vor.u32 %v6170, %v6171
        %v6173 = vshll.u32 2102212464, %v6161
        %v6174 = vshrl.u32 920167782, %v6162
        %v6175 = vor.u32 %v6173, %v6174
        %v6176 = vshll.u32 920167782, %v6161
        %v6177 = vshrl.u32 1326507024, %v6162
        %v6178 = vor.u32 %v6176, %v6177
        %vm6179 = vcmp.lt.s32.totalorder %v6160, 1
        %vm6180 = vcmp.lt.s32.totalorder %v6160, 2
        %vm6181 = vcmp.lt.s32.totalorder %v6160, 3
        %vm6182 = vcmp.lt.s32.totalorder %v6160, 4
        %v6183 = vsel %vm6179, %v6163, %v6166
        %v6184 = vsel %vm6182, %v6172, 2102212464
        %v6185 = vsel %vm6181, %v6169, %v6184
        %v6186 = vsel %vm6180, %v6183, %v6185
        %v6187 = vsel %vm6179, %v6166, %v6169
        %v6188 = vsel %vm6182, %v6175, 920167782
        %v6189 = vsel %vm6181, %v6172, %v6188
        %v6190 = vsel %vm6180, %v6187, %v6189
        %v6191 = vsel %vm6179, %v6169, %v6172
        %v6192 = vsel %vm6182, %v6178, 1326507024
        %v6193 = vsel %vm6181, %v6175, %v6192
        %v6194 = vsel %vm6180, %v6191, %v6193
        %v6195 = vshll.u32 %v6155, 8
        %v6196 = vmul.u32.u64.compose %v6195, %v6194
        %v6197 = vextract.low.u32 %v6196
        %v6198 = vextract.high.u32 %v6196
        %v6199 = vmul.u32.u64.compose %v6195, %v6190
        %v6200 = vextract.low.u32 %v6199
        %v6201 = vextract.high.u32 %v6199
        %v6202 = vmul.u32 %v6195, %v6186
        %v6203 = vadd.s32 %v6198, %v6200
        %vm6204 = vc.u32 %v6198, %v6200
        %v6205 = vadd.s32 %v6201, 1
        %v6206 = vsel %vm6204, %v6205, %v6201
        %v6207 = vadd.s32 %v6202, %v6206
        %v6208 = vadd.s32 %v6207, 536870912
        %v6209 = vshrl.u32 %v6208, 30
        %v6210 = vshll.u32 %v6209, 30
        %v6211 = vsub.s32 %v6207, %v6210
        %vm6212 = vcmp.lt.s32.totalorder %v6211, 0
        %v6213 = vsub.s32 0, %v6211
        %v6214 = vsel %vm6212, %v6213, %v6211
        %v6215 = vclz %v6214
        %v6216 = vsub.s32 %v6215, 2
        %vm6217 = vcmp.gt.s32.totalorder 0, %v6216
        %v6218 = vsel %vm6217, 0, %v6216
        %v6219 = vsub.s32 32, %v6218
        %v6220 = vshll.u32 %v6211, %v6218
        %v6221 = vshrl.u32 %v6203, %v6219
        %v6222 = vor.u32 %v6220, %v6221
        %v6223 = vsub.s32 4294967266, %v6218
        %v6224 = vadd.s32 %v6223, 127
        %v6225 = vshll.u32 %v6224, 23
        %v6226 = vor.u32 4788187, %v6225
        %v6227 = vand.u32 2147483647, %v6226
        %v6229 = vcvt.s32.f32 %v6222
        %v6230 = vmul.f32 %v6229, %v6227
        %v6231 = vxor.u32 %v6230, 2147483648
        %v6232 = vsel %vm6149, %v6231, %v6230
        %v6233 = vsub.s32 4, %v6209
        %v6234 = vsel %vm6149, %v6233, %v6209
        %v6235 = vsel %vm6148, %v624, %v6232
        %v6236 = vsel %vm6148, 0, %v6234
        %v6237 = vcosq.f32.pop %v6235
        %v6238 = vsinq.f32.pop %v6235
        %vm6239 = vweird.f32 %v624
        %v6240 = vadd.s32 %v6236, 3
        %v6241 = vand.u32 %v6240, 3
        %vm6242 = vcmp.lt.s32.totalorder %v6241, 2
        %vm6243 = vcmp.eq.s32.totalorder %v6241, 0
        %v6244 = vxor.u32 %v6238, 2147483648
        %v6245 = vsel %vm6243, %v6237, %v6244
        %vm6246 = vcmp.eq.s32.totalorder %v6241, 2
        %v6247 = vxor.u32 %v6237, 2147483648
        %v6248 = vsel %vm6246, %v6247, %v6238
        %v6249 = vsel %vm6242, %v6245, %v6248
        %v6250 = vsel %vm6239, nan, %v6249
        %v6251 = vand.u32 2147483647, %v625
        %vm6252 = vcmp.le.f32.partialorder %v6251, 0.7853982
        %vm6253 = vcmp.lt.s32.totalorder %v625, 0
        %v6254 = vand.u32 %v625, 2139095040
        %v6255 = vshrl.u32 %v6254, 23
        %v6256 = vsub.s32 %v6255, 127
        %v6257 = vand.u32 2147483647, %v625
        %v6258 = vand.u32 %v6257, 8388607
        %v6259 = vor.u32 %v6258, 8388608
        %v6260 = vsub.s32 0, %v6259
        %v6261 = vadd.s32 %v6256, 1
        %vm6262 = vcmp.gt.s32.totalorder %v6261, 0
        %v6263 = vsel %vm6262, %v6261, 0
        %v6264 = vshrl.u32 %v6263, 5
        %v6265 = vand.u32 %v6263, 31
        %v6266 = vsub.s32 32, %v6265
        %v6267 = vshrl.u32 683565275, %v6266
        %v6268 = vshll.u32 683565275, %v6265
        %v6269 = vshrl.u32 2475754826, %v6266
        %v6270 = vor.u32 %v6268, %v6269
        %v6271 = vshll.u32 2475754826, %v6265
        %v6272 = vshrl.u32 2131351028, %v6266
        %v6273 = vor.u32 %v6271, %v6272
        %v6274 = vshll.u32 2131351028, %v6265
        %v6275 = vshrl.u32 2102212464, %v6266
        %v6276 = vor.u32 %v6274, %v6275
        %v6277 = vshll.u32 2102212464, %v6265
        %v6278 = vshrl.u32 920167782, %v6266
        %v6279 = vor.u32 %v6277, %v6278
        %v6280 = vshll.u32 920167782, %v6265
        %v6281 = vshrl.u32 1326507024, %v6266
        %v6282 = vor.u32 %v6280, %v6281
        %vm6283 = vcmp.lt.s32.totalorder %v6264, 1
        %vm6284 = vcmp.lt.s32.totalorder %v6264, 2
        %vm6285 = vcmp.lt.s32.totalorder %v6264, 3
        %vm6286 = vcmp.lt.s32.totalorder %v6264, 4
        %v6287 = vsel %vm6283, %v6267, %v6270
        %v6288 = vsel %vm6286, %v6276, 2102212464
        %v6289 = vsel %vm6285, %v6273, %v6288
        %v6290 = vsel %vm6284, %v6287, %v6289
        %v6291 = vsel %vm6283, %v6270, %v6273
        %v6292 = vsel %vm6286, %v6279, 920167782
        %v6293 = vsel %vm6285, %v6276, %v6292
        %v6294 = vsel %vm6284, %v6291, %v6293
        %v6295 = vsel %vm6283, %v6273, %v6276
        %v6296 = vsel %vm6286, %v6282, 1326507024
        %v6297 = vsel %vm6285, %v6279, %v6296
        %v6298 = vsel %vm6284, %v6295, %v6297
        %v6299 = vshll.u32 %v6259, 8
        %v6300 = vmul.u32.u64.compose %v6299, %v6298
        %v6301 = vextract.low.u32 %v6300
        %v6302 = vextract.high.u32 %v6300
        %v6303 = vmul.u32.u64.compose %v6299, %v6294
        %v6304 = vextract.low.u32 %v6303
        %v6305 = vextract.high.u32 %v6303
        %v6306 = vmul.u32 %v6299, %v6290
        %v6307 = vadd.s32 %v6302, %v6304
        %vm6308 = vc.u32 %v6302, %v6304
        %v6309 = vadd.s32 %v6305, 1
        %v6310 = vsel %vm6308, %v6309, %v6305
        %v6311 = vadd.s32 %v6306, %v6310
        %v6312 = vadd.s32 %v6311, 536870912
        %v6313 = vshrl.u32 %v6312, 30
        %v6314 = vshll.u32 %v6313, 30
        %v6315 = vsub.s32 %v6311, %v6314
        %vm6316 = vcmp.lt.s32.totalorder %v6315, 0
        %v6317 = vsub.s32 0, %v6315
        %v6318 = vsel %vm6316, %v6317, %v6315
        %v6319 = vclz %v6318
        %v6320 = vsub.s32 %v6319, 2
        %vm6321 = vcmp.gt.s32.totalorder 0, %v6320
        %v6322 = vsel %vm6321, 0, %v6320
        %v6323 = vsub.s32 32, %v6322
        %v6324 = vshll.u32 %v6315, %v6322
        %v6325 = vshrl.u32 %v6307, %v6323
        %v6326 = vor.u32 %v6324, %v6325
        %v6327 = vsub.s32 4294967266, %v6322
        %v6328 = vadd.s32 %v6327, 127
        %v6329 = vshll.u32 %v6328, 23
        %v6330 = vor.u32 4788187, %v6329
        %v6331 = vand.u32 2147483647, %v6330
        %v6333 = vcvt.s32.f32 %v6326
        %v6334 = vmul.f32 %v6333, %v6331
        %v6335 = vxor.u32 %v6334, 2147483648
        %v6336 = vsel %vm6253, %v6335, %v6334
        %v6337 = vsub.s32 4, %v6313
        %v6338 = vsel %vm6253, %v6337, %v6313
        %v6339 = vsel %vm6252, %v625, %v6336
        %v6340 = vsel %vm6252, 0, %v6338
        %v6341 = vcosq.f32.pop %v6339
        %v6342 = vsinq.f32.pop %v6339
        %vm6343 = vweird.f32 %v625
        %v6344 = vadd.s32 %v6340, 3
        %v6345 = vand.u32 %v6344, 3
        %vm6346 = vcmp.lt.s32.totalorder %v6345, 2
        %vm6347 = vcmp.eq.s32.totalorder %v6345, 0
        %v6348 = vxor.u32 %v6342, 2147483648
        %v6349 = vsel %vm6347, %v6341, %v6348
        %vm6350 = vcmp.eq.s32.totalorder %v6345, 2
        %v6351 = vxor.u32 %v6341, 2147483648
        %v6352 = vsel %vm6350, %v6351, %v6342
        %v6353 = vsel %vm6346, %v6349, %v6352
        %v6354 = vsel %vm6343, nan, %v6353
        %v6355 = vand.u32 2147483647, %v626
        %vm6356 = vcmp.le.f32.partialorder %v6355, 0.7853982
        %vm6357 = vcmp.lt.s32.totalorder %v626, 0
        %v6358 = vand.u32 %v626, 2139095040
        %v6359 = vshrl.u32 %v6358, 23
        %v6360 = vsub.s32 %v6359, 127
        %v6361 = vand.u32 2147483647, %v626
        %v6362 = vand.u32 %v6361, 8388607
        %v6363 = vor.u32 %v6362, 8388608
        %v6364 = vsub.s32 0, %v6363
        %v6365 = vadd.s32 %v6360, 1
        %vm6366 = vcmp.gt.s32.totalorder %v6365, 0
        %v6367 = vsel %vm6366, %v6365, 0
        %v6368 = vshrl.u32 %v6367, 5
        %v6369 = vand.u32 %v6367, 31
        %v6370 = vsub.s32 32, %v6369
        %v6371 = vshrl.u32 683565275, %v6370
        %v6372 = vshll.u32 683565275, %v6369
        %v6373 = vshrl.u32 2475754826, %v6370
        %v6374 = vor.u32 %v6372, %v6373
        %v6375 = vshll.u32 2475754826, %v6369
        %v6376 = vshrl.u32 2131351028, %v6370
        %v6377 = vor.u32 %v6375, %v6376
        %v6378 = vshll.u32 2131351028, %v6369
        %v6379 = vshrl.u32 2102212464, %v6370
        %v6380 = vor.u32 %v6378, %v6379
        %v6381 = vshll.u32 2102212464, %v6369
        %v6382 = vshrl.u32 920167782, %v6370
        %v6383 = vor.u32 %v6381, %v6382
        %v6384 = vshll.u32 920167782, %v6369
        %v6385 = vshrl.u32 1326507024, %v6370
        %v6386 = vor.u32 %v6384, %v6385
        %vm6387 = vcmp.lt.s32.totalorder %v6368, 1
        %vm6388 = vcmp.lt.s32.totalorder %v6368, 2
        %vm6389 = vcmp.lt.s32.totalorder %v6368, 3
        %vm6390 = vcmp.lt.s32.totalorder %v6368, 4
        %v6391 = vsel %vm6387, %v6371, %v6374
        %v6392 = vsel %vm6390, %v6380, 2102212464
        %v6393 = vsel %vm6389, %v6377, %v6392
        %v6394 = vsel %vm6388, %v6391, %v6393
        %v6395 = vsel %vm6387, %v6374, %v6377
        %v6396 = vsel %vm6390, %v6383, 920167782
        %v6397 = vsel %vm6389, %v6380, %v6396
        %v6398 = vsel %vm6388, %v6395, %v6397
        %v6399 = vsel %vm6387, %v6377, %v6380
        %v6400 = vsel %vm6390, %v6386, 1326507024
        %v6401 = vsel %vm6389, %v6383, %v6400
        %v6402 = vsel %vm6388, %v6399, %v6401
        %v6403 = vshll.u32 %v6363, 8
        %v6404 = vmul.u32.u64.compose %v6403, %v6402
        %v6405 = vextract.low.u32 %v6404
        %v6406 = vextract.high.u32 %v6404
        %v6407 = vmul.u32.u64.compose %v6403, %v6398
        %v6408 = vextract.low.u32 %v6407
        %v6409 = vextract.high.u32 %v6407
        %v6410 = vmul.u32 %v6403, %v6394
        %v6411 = vadd.s32 %v6406, %v6408
        %vm6412 = vc.u32 %v6406, %v6408
        %v6413 = vadd.s32 %v6409, 1
        %v6414 = vsel %vm6412, %v6413, %v6409
        %v6415 = vadd.s32 %v6410, %v6414
        %v6416 = vadd.s32 %v6415, 536870912
        %v6417 = vshrl.u32 %v6416, 30
        %v6418 = vshll.u32 %v6417, 30
        %v6419 = vsub.s32 %v6415, %v6418
        %vm6420 = vcmp.lt.s32.totalorder %v6419, 0
        %v6421 = vsub.s32 0, %v6419
        %v6422 = vsel %vm6420, %v6421, %v6419
        %v6423 = vclz %v6422
        %v6424 = vsub.s32 %v6423, 2
        %vm6425 = vcmp.gt.s32.totalorder 0, %v6424
        %v6426 = vsel %vm6425, 0, %v6424
        %v6427 = vsub.s32 32, %v6426
        %v6428 = vshll.u32 %v6419, %v6426
        %v6429 = vshrl.u32 %v6411, %v6427
        %v6430 = vor.u32 %v6428, %v6429
        %v6431 = vsub.s32 4294967266, %v6426
        %v6432 = vadd.s32 %v6431, 127
        %v6433 = vshll.u32 %v6432, 23
        %v6434 = vor.u32 4788187, %v6433
        %v6435 = vand.u32 2147483647, %v6434
        %v6437 = vcvt.s32.f32 %v6430
        %v6438 = vmul.f32 %v6437, %v6435
        %v6439 = vxor.u32 %v6438, 2147483648
        %v6440 = vsel %vm6357, %v6439, %v6438
        %v6441 = vsub.s32 4, %v6417
        %v6442 = vsel %vm6357, %v6441, %v6417
        %v6443 = vsel %vm6356, %v626, %v6440
        %v6444 = vsel %vm6356, 0, %v6442
        %v6445 = vcosq.f32.pop %v6443
        %v6446 = vsinq.f32.pop %v6443
        %vm6447 = vweird.f32 %v626
        %v6448 = vadd.s32 %v6444, 3
        %v6449 = vand.u32 %v6448, 3
        %vm6450 = vcmp.lt.s32.totalorder %v6449, 2
        %vm6451 = vcmp.eq.s32.totalorder %v6449, 0
        %v6452 = vxor.u32 %v6446, 2147483648
        %v6453 = vsel %vm6451, %v6445, %v6452
        %vm6454 = vcmp.eq.s32.totalorder %v6449, 2
        %v6455 = vxor.u32 %v6445, 2147483648
        %v6456 = vsel %vm6454, %v6455, %v6446
        %v6457 = vsel %vm6450, %v6453, %v6456
        %v6458 = vsel %vm6447, nan, %v6457
        %v6459 = vand.u32 2147483647, %v627
        %vm6460 = vcmp.le.f32.partialorder %v6459, 0.7853982
        %vm6461 = vcmp.lt.s32.totalorder %v627, 0
        %v6462 = vand.u32 %v627, 2139095040
        %v6463 = vshrl.u32 %v6462, 23
        %v6464 = vsub.s32 %v6463, 127
        %v6465 = vand.u32 2147483647, %v627
        %v6466 = vand.u32 %v6465, 8388607
        %v6467 = vor.u32 %v6466, 8388608
        %v6468 = vsub.s32 0, %v6467
        %v6469 = vadd.s32 %v6464, 1
        %vm6470 = vcmp.gt.s32.totalorder %v6469, 0
        %v6471 = vsel %vm6470, %v6469, 0
        %v6472 = vshrl.u32 %v6471, 5
        %v6473 = vand.u32 %v6471, 31
        %v6474 = vsub.s32 32, %v6473
        %v6475 = vshrl.u32 683565275, %v6474
        %v6476 = vshll.u32 683565275, %v6473
        %v6477 = vshrl.u32 2475754826, %v6474
        %v6478 = vor.u32 %v6476, %v6477
        %v6479 = vshll.u32 2475754826, %v6473
        %v6480 = vshrl.u32 2131351028, %v6474
        %v6481 = vor.u32 %v6479, %v6480
        %v6482 = vshll.u32 2131351028, %v6473
        %v6483 = vshrl.u32 2102212464, %v6474
        %v6484 = vor.u32 %v6482, %v6483
        %v6485 = vshll.u32 2102212464, %v6473
        %v6486 = vshrl.u32 920167782, %v6474
        %v6487 = vor.u32 %v6485, %v6486
        %v6488 = vshll.u32 920167782, %v6473
        %v6489 = vshrl.u32 1326507024, %v6474
        %v6490 = vor.u32 %v6488, %v6489
        %vm6491 = vcmp.lt.s32.totalorder %v6472, 1
        %vm6492 = vcmp.lt.s32.totalorder %v6472, 2
        %vm6493 = vcmp.lt.s32.totalorder %v6472, 3
        %vm6494 = vcmp.lt.s32.totalorder %v6472, 4
        %v6495 = vsel %vm6491, %v6475, %v6478
        %v6496 = vsel %vm6494, %v6484, 2102212464
        %v6497 = vsel %vm6493, %v6481, %v6496
        %v6498 = vsel %vm6492, %v6495, %v6497
        %v6499 = vsel %vm6491, %v6478, %v6481
        %v6500 = vsel %vm6494, %v6487, 920167782
        %v6501 = vsel %vm6493, %v6484, %v6500
        %v6502 = vsel %vm6492, %v6499, %v6501
        %v6503 = vsel %vm6491, %v6481, %v6484
        %v6504 = vsel %vm6494, %v6490, 1326507024
        %v6505 = vsel %vm6493, %v6487, %v6504
        %v6506 = vsel %vm6492, %v6503, %v6505
        %v6507 = vshll.u32 %v6467, 8
        %v6508 = vmul.u32.u64.compose %v6507, %v6506
        %v6509 = vextract.low.u32 %v6508
        %v6510 = vextract.high.u32 %v6508
        %v6511 = vmul.u32.u64.compose %v6507, %v6502
        %v6512 = vextract.low.u32 %v6511
        %v6513 = vextract.high.u32 %v6511
        %v6514 = vmul.u32 %v6507, %v6498
        %v6515 = vadd.s32 %v6510, %v6512
        %vm6516 = vc.u32 %v6510, %v6512
        %v6517 = vadd.s32 %v6513, 1
        %v6518 = vsel %vm6516, %v6517, %v6513
        %v6519 = vadd.s32 %v6514, %v6518
        %v6520 = vadd.s32 %v6519, 536870912
        %v6521 = vshrl.u32 %v6520, 30
        %v6522 = vshll.u32 %v6521, 30
        %v6523 = vsub.s32 %v6519, %v6522
        %vm6524 = vcmp.lt.s32.totalorder %v6523, 0
        %v6525 = vsub.s32 0, %v6523
        %v6526 = vsel %vm6524, %v6525, %v6523
        %v6527 = vclz %v6526
        %v6528 = vsub.s32 %v6527, 2
        %vm6529 = vcmp.gt.s32.totalorder 0, %v6528
        %v6530 = vsel %vm6529, 0, %v6528
        %v6531 = vsub.s32 32, %v6530
        %v6532 = vshll.u32 %v6523, %v6530
        %v6533 = vshrl.u32 %v6515, %v6531
        %v6534 = vor.u32 %v6532, %v6533
        %v6535 = vsub.s32 4294967266, %v6530
        %v6536 = vadd.s32 %v6535, 127
        %v6537 = vshll.u32 %v6536, 23
        %v6538 = vor.u32 4788187, %v6537
        %v6539 = vand.u32 2147483647, %v6538
        %v6541 = vcvt.s32.f32 %v6534
        %v6542 = vmul.f32 %v6541, %v6539
        %v6543 = vxor.u32 %v6542, 2147483648
        %v6544 = vsel %vm6461, %v6543, %v6542
        %v6545 = vsub.s32 4, %v6521
        %v6546 = vsel %vm6461, %v6545, %v6521
        %v6547 = vsel %vm6460, %v627, %v6544
        %v6548 = vsel %vm6460, 0, %v6546
        %v6549 = vcosq.f32.pop %v6547
        %v6550 = vsinq.f32.pop %v6547
        %vm6551 = vweird.f32 %v627
        %v6552 = vadd.s32 %v6548, 3
        %v6553 = vand.u32 %v6552, 3
        %vm6554 = vcmp.lt.s32.totalorder %v6553, 2
        %vm6555 = vcmp.eq.s32.totalorder %v6553, 0
        %v6556 = vxor.u32 %v6550, 2147483648
        %v6557 = vsel %vm6555, %v6549, %v6556
        %vm6558 = vcmp.eq.s32.totalorder %v6553, 2
        %v6559 = vxor.u32 %v6549, 2147483648
        %v6560 = vsel %vm6558, %v6559, %v6550
        %v6561 = vsel %vm6554, %v6557, %v6560
        %v6562 = vsel %vm6551, nan, %v6561
        %v6563 = vand.u32 2147483647, %v628
        %vm6564 = vcmp.le.f32.partialorder %v6563, 0.7853982
        %vm6565 = vcmp.lt.s32.totalorder %v628, 0
        %v6566 = vand.u32 %v628, 2139095040
        %v6567 = vshrl.u32 %v6566, 23
        %v6568 = vsub.s32 %v6567, 127
        %v6569 = vand.u32 2147483647, %v628
        %v6570 = vand.u32 %v6569, 8388607
        %v6571 = vor.u32 %v6570, 8388608
        %v6572 = vsub.s32 0, %v6571
        %v6573 = vadd.s32 %v6568, 1
        %vm6574 = vcmp.gt.s32.totalorder %v6573, 0
        %v6575 = vsel %vm6574, %v6573, 0
        %v6576 = vshrl.u32 %v6575, 5
        %v6577 = vand.u32 %v6575, 31
        %v6578 = vsub.s32 32, %v6577
        %v6579 = vshrl.u32 683565275, %v6578
        %v6580 = vshll.u32 683565275, %v6577
        %v6581 = vshrl.u32 2475754826, %v6578
        %v6582 = vor.u32 %v6580, %v6581
        %v6583 = vshll.u32 2475754826, %v6577
        %v6584 = vshrl.u32 2131351028, %v6578
        %v6585 = vor.u32 %v6583, %v6584
        %v6586 = vshll.u32 2131351028, %v6577
        %v6587 = vshrl.u32 2102212464, %v6578
        %v6588 = vor.u32 %v6586, %v6587
        %v6589 = vshll.u32 2102212464, %v6577
        %v6590 = vshrl.u32 920167782, %v6578
        %v6591 = vor.u32 %v6589, %v6590
        %v6592 = vshll.u32 920167782, %v6577
        %v6593 = vshrl.u32 1326507024, %v6578
        %v6594 = vor.u32 %v6592, %v6593
        %vm6595 = vcmp.lt.s32.totalorder %v6576, 1
        %vm6596 = vcmp.lt.s32.totalorder %v6576, 2
        %vm6597 = vcmp.lt.s32.totalorder %v6576, 3
        %vm6598 = vcmp.lt.s32.totalorder %v6576, 4
        %v6599 = vsel %vm6595, %v6579, %v6582
        %v6600 = vsel %vm6598, %v6588, 2102212464
        %v6601 = vsel %vm6597, %v6585, %v6600
        %v6602 = vsel %vm6596, %v6599, %v6601
        %v6603 = vsel %vm6595, %v6582, %v6585
        %v6604 = vsel %vm6598, %v6591, 920167782
        %v6605 = vsel %vm6597, %v6588, %v6604
        %v6606 = vsel %vm6596, %v6603, %v6605
        %v6607 = vsel %vm6595, %v6585, %v6588
        %v6608 = vsel %vm6598, %v6594, 1326507024
        %v6609 = vsel %vm6597, %v6591, %v6608
        %v6610 = vsel %vm6596, %v6607, %v6609
        %v6611 = vshll.u32 %v6571, 8
        %v6612 = vmul.u32.u64.compose %v6611, %v6610
        %v6613 = vextract.low.u32 %v6612
        %v6614 = vextract.high.u32 %v6612
        %v6615 = vmul.u32.u64.compose %v6611, %v6606
        %v6616 = vextract.low.u32 %v6615
        %v6617 = vextract.high.u32 %v6615
        %v6618 = vmul.u32 %v6611, %v6602
        %v6619 = vadd.s32 %v6614, %v6616
        %vm6620 = vc.u32 %v6614, %v6616
        %v6621 = vadd.s32 %v6617, 1
        %v6622 = vsel %vm6620, %v6621, %v6617
        %v6623 = vadd.s32 %v6618, %v6622
        %v6624 = vadd.s32 %v6623, 536870912
        %v6625 = vshrl.u32 %v6624, 30
        %v6626 = vshll.u32 %v6625, 30
        %v6627 = vsub.s32 %v6623, %v6626
        %vm6628 = vcmp.lt.s32.totalorder %v6627, 0
        %v6629 = vsub.s32 0, %v6627
        %v6630 = vsel %vm6628, %v6629, %v6627
        %v6631 = vclz %v6630
        %v6632 = vsub.s32 %v6631, 2
        %vm6633 = vcmp.gt.s32.totalorder 0, %v6632
        %v6634 = vsel %vm6633, 0, %v6632
        %v6635 = vsub.s32 32, %v6634
        %v6636 = vshll.u32 %v6627, %v6634
        %v6637 = vshrl.u32 %v6619, %v6635
        %v6638 = vor.u32 %v6636, %v6637
        %v6639 = vsub.s32 4294967266, %v6634
        %v6640 = vadd.s32 %v6639, 127
        %v6641 = vshll.u32 %v6640, 23
        %v6642 = vor.u32 4788187, %v6641
        %v6643 = vand.u32 2147483647, %v6642
        %v6645 = vcvt.s32.f32 %v6638
        %v6646 = vmul.f32 %v6645, %v6643
        %v6647 = vxor.u32 %v6646, 2147483648
        %v6648 = vsel %vm6565, %v6647, %v6646
        %v6649 = vsub.s32 4, %v6625
        %v6650 = vsel %vm6565, %v6649, %v6625
        %v6651 = vsel %vm6564, %v628, %v6648
        %v6652 = vsel %vm6564, 0, %v6650
        %v6653 = vcosq.f32.pop %v6651
        %v6654 = vsinq.f32.pop %v6651
        %vm6655 = vweird.f32 %v628
        %v6656 = vadd.s32 %v6652, 3
        %v6657 = vand.u32 %v6656, 3
        %vm6658 = vcmp.lt.s32.totalorder %v6657, 2
        %vm6659 = vcmp.eq.s32.totalorder %v6657, 0
        %v6660 = vxor.u32 %v6654, 2147483648
        %v6661 = vsel %vm6659, %v6653, %v6660
        %vm6662 = vcmp.eq.s32.totalorder %v6657, 2
        %v6663 = vxor.u32 %v6653, 2147483648
        %v6664 = vsel %vm6662, %v6663, %v6654
        %v6665 = vsel %vm6658, %v6661, %v6664
        %v6666 = vsel %vm6655, nan, %v6665
        %v6667 = vand.u32 2147483647, %v629
        %vm6668 = vcmp.le.f32.partialorder %v6667, 0.7853982
        %vm6669 = vcmp.lt.s32.totalorder %v629, 0
        %v6670 = vand.u32 %v629, 2139095040
        %v6671 = vshrl.u32 %v6670, 23
        %v6672 = vsub.s32 %v6671, 127
        %v6673 = vand.u32 2147483647, %v629
        %v6674 = vand.u32 %v6673, 8388607
        %v6675 = vor.u32 %v6674, 8388608
        %v6676 = vsub.s32 0, %v6675
        %v6677 = vadd.s32 %v6672, 1
        %vm6678 = vcmp.gt.s32.totalorder %v6677, 0
        %v6679 = vsel %vm6678, %v6677, 0
        %v6680 = vshrl.u32 %v6679, 5
        %v6681 = vand.u32 %v6679, 31
        %v6682 = vsub.s32 32, %v6681
        %v6683 = vshrl.u32 683565275, %v6682
        %v6684 = vshll.u32 683565275, %v6681
        %v6685 = vshrl.u32 2475754826, %v6682
        %v6686 = vor.u32 %v6684, %v6685
        %v6687 = vshll.u32 2475754826, %v6681
        %v6688 = vshrl.u32 2131351028, %v6682
        %v6689 = vor.u32 %v6687, %v6688
        %v6690 = vshll.u32 2131351028, %v6681
        %v6691 = vshrl.u32 2102212464, %v6682
        %v6692 = vor.u32 %v6690, %v6691
        %v6693 = vshll.u32 2102212464, %v6681
        %v6694 = vshrl.u32 920167782, %v6682
        %v6695 = vor.u32 %v6693, %v6694
        %v6696 = vshll.u32 920167782, %v6681
        %v6697 = vshrl.u32 1326507024, %v6682
        %v6698 = vor.u32 %v6696, %v6697
        %vm6699 = vcmp.lt.s32.totalorder %v6680, 1
        %vm6700 = vcmp.lt.s32.totalorder %v6680, 2
        %vm6701 = vcmp.lt.s32.totalorder %v6680, 3
        %vm6702 = vcmp.lt.s32.totalorder %v6680, 4
        %v6703 = vsel %vm6699, %v6683, %v6686
        %v6704 = vsel %vm6702, %v6692, 2102212464
        %v6705 = vsel %vm6701, %v6689, %v6704
        %v6706 = vsel %vm6700, %v6703, %v6705
        %v6707 = vsel %vm6699, %v6686, %v6689
        %v6708 = vsel %vm6702, %v6695, 920167782
        %v6709 = vsel %vm6701, %v6692, %v6708
        %v6710 = vsel %vm6700, %v6707, %v6709
        %v6711 = vsel %vm6699, %v6689, %v6692
        %v6712 = vsel %vm6702, %v6698, 1326507024
        %v6713 = vsel %vm6701, %v6695, %v6712
        %v6714 = vsel %vm6700, %v6711, %v6713
        %v6715 = vshll.u32 %v6675, 8
        %v6716 = vmul.u32.u64.compose %v6715, %v6714
        %v6717 = vextract.low.u32 %v6716
        %v6718 = vextract.high.u32 %v6716
        %v6719 = vmul.u32.u64.compose %v6715, %v6710
        %v6720 = vextract.low.u32 %v6719
        %v6721 = vextract.high.u32 %v6719
        %v6722 = vmul.u32 %v6715, %v6706
        %v6723 = vadd.s32 %v6718, %v6720
        %vm6724 = vc.u32 %v6718, %v6720
        %v6725 = vadd.s32 %v6721, 1
        %v6726 = vsel %vm6724, %v6725, %v6721
        %v6727 = vadd.s32 %v6722, %v6726
        %v6728 = vadd.s32 %v6727, 536870912
        %v6729 = vshrl.u32 %v6728, 30
        %v6730 = vshll.u32 %v6729, 30
        %v6731 = vsub.s32 %v6727, %v6730
        %vm6732 = vcmp.lt.s32.totalorder %v6731, 0
        %v6733 = vsub.s32 0, %v6731
        %v6734 = vsel %vm6732, %v6733, %v6731
        %v6735 = vclz %v6734
        %v6736 = vsub.s32 %v6735, 2
        %vm6737 = vcmp.gt.s32.totalorder 0, %v6736
        %v6738 = vsel %vm6737, 0, %v6736
        %v6739 = vsub.s32 32, %v6738
        %v6740 = vshll.u32 %v6731, %v6738
        %v6741 = vshrl.u32 %v6723, %v6739
        %v6742 = vor.u32 %v6740, %v6741
        %v6743 = vsub.s32 4294967266, %v6738
        %v6744 = vadd.s32 %v6743, 127
        %v6745 = vshll.u32 %v6744, 23
        %v6746 = vor.u32 4788187, %v6745
        %v6747 = vand.u32 2147483647, %v6746
        %v6749 = vcvt.s32.f32 %v6742
        %v6750 = vmul.f32 %v6749, %v6747
        %v6751 = vxor.u32 %v6750, 2147483648
        %v6752 = vsel %vm6669, %v6751, %v6750
        %v6753 = vsub.s32 4, %v6729
        %v6754 = vsel %vm6669, %v6753, %v6729
        %v6755 = vsel %vm6668, %v629, %v6752
        %v6756 = vsel %vm6668, 0, %v6754
        %v6757 = vcosq.f32.pop %v6755
        %v6758 = vsinq.f32.pop %v6755
        %vm6759 = vweird.f32 %v629
        %v6760 = vadd.s32 %v6756, 3
        %v6761 = vand.u32 %v6760, 3
        %vm6762 = vcmp.lt.s32.totalorder %v6761, 2
        %vm6763 = vcmp.eq.s32.totalorder %v6761, 0
        %v6764 = vxor.u32 %v6758, 2147483648
        %v6765 = vsel %vm6763, %v6757, %v6764
        %vm6766 = vcmp.eq.s32.totalorder %v6761, 2
        %v6767 = vxor.u32 %v6757, 2147483648
        %v6768 = vsel %vm6766, %v6767, %v6758
        %v6769 = vsel %vm6762, %v6765, %v6768
        %v6770 = vsel %vm6759, nan, %v6769
        %v6771 = vand.u32 2147483647, %v630
        %vm6772 = vcmp.le.f32.partialorder %v6771, 0.7853982
        %vm6773 = vcmp.lt.s32.totalorder %v630, 0
        %v6774 = vand.u32 %v630, 2139095040
        %v6775 = vshrl.u32 %v6774, 23
        %v6776 = vsub.s32 %v6775, 127
        %v6777 = vand.u32 2147483647, %v630
        %v6778 = vand.u32 %v6777, 8388607
        %v6779 = vor.u32 %v6778, 8388608
        %v6780 = vsub.s32 0, %v6779
        %v6781 = vadd.s32 %v6776, 1
        %vm6782 = vcmp.gt.s32.totalorder %v6781, 0
        %v6783 = vsel %vm6782, %v6781, 0
        %v6784 = vshrl.u32 %v6783, 5
        %v6785 = vand.u32 %v6783, 31
        %v6786 = vsub.s32 32, %v6785
        %v6787 = vshrl.u32 683565275, %v6786
        %v6788 = vshll.u32 683565275, %v6785
        %v6789 = vshrl.u32 2475754826, %v6786
        %v6790 = vor.u32 %v6788, %v6789
        %v6791 = vshll.u32 2475754826, %v6785
        %v6792 = vshrl.u32 2131351028, %v6786
        %v6793 = vor.u32 %v6791, %v6792
        %v6794 = vshll.u32 2131351028, %v6785
        %v6795 = vshrl.u32 2102212464, %v6786
        %v6796 = vor.u32 %v6794, %v6795
        %v6797 = vshll.u32 2102212464, %v6785
        %v6798 = vshrl.u32 920167782, %v6786
        %v6799 = vor.u32 %v6797, %v6798
        %v6800 = vshll.u32 920167782, %v6785
        %v6801 = vshrl.u32 1326507024, %v6786
        %v6802 = vor.u32 %v6800, %v6801
        %vm6803 = vcmp.lt.s32.totalorder %v6784, 1
        %vm6804 = vcmp.lt.s32.totalorder %v6784, 2
        %vm6805 = vcmp.lt.s32.totalorder %v6784, 3
        %vm6806 = vcmp.lt.s32.totalorder %v6784, 4
        %v6807 = vsel %vm6803, %v6787, %v6790
        %v6808 = vsel %vm6806, %v6796, 2102212464
        %v6809 = vsel %vm6805, %v6793, %v6808
        %v6810 = vsel %vm6804, %v6807, %v6809
        %v6811 = vsel %vm6803, %v6790, %v6793
        %v6812 = vsel %vm6806, %v6799, 920167782
        %v6813 = vsel %vm6805, %v6796, %v6812
        %v6814 = vsel %vm6804, %v6811, %v6813
        %v6815 = vsel %vm6803, %v6793, %v6796
        %v6816 = vsel %vm6806, %v6802, 1326507024
        %v6817 = vsel %vm6805, %v6799, %v6816
        %v6818 = vsel %vm6804, %v6815, %v6817
        %v6819 = vshll.u32 %v6779, 8
        %v6820 = vmul.u32.u64.compose %v6819, %v6818
        %v6821 = vextract.low.u32 %v6820
        %v6822 = vextract.high.u32 %v6820
        %v6823 = vmul.u32.u64.compose %v6819, %v6814
        %v6824 = vextract.low.u32 %v6823
        %v6825 = vextract.high.u32 %v6823
        %v6826 = vmul.u32 %v6819, %v6810
        %v6827 = vadd.s32 %v6822, %v6824
        %vm6828 = vc.u32 %v6822, %v6824
        %v6829 = vadd.s32 %v6825, 1
        %v6830 = vsel %vm6828, %v6829, %v6825
        %v6831 = vadd.s32 %v6826, %v6830
        %v6832 = vadd.s32 %v6831, 536870912
        %v6833 = vshrl.u32 %v6832, 30
        %v6834 = vshll.u32 %v6833, 30
        %v6835 = vsub.s32 %v6831, %v6834
        %vm6836 = vcmp.lt.s32.totalorder %v6835, 0
        %v6837 = vsub.s32 0, %v6835
        %v6838 = vsel %vm6836, %v6837, %v6835
        %v6839 = vclz %v6838
        %v6840 = vsub.s32 %v6839, 2
        %vm6841 = vcmp.gt.s32.totalorder 0, %v6840
        %v6842 = vsel %vm6841, 0, %v6840
        %v6843 = vsub.s32 32, %v6842
        %v6844 = vshll.u32 %v6835, %v6842
        %v6845 = vshrl.u32 %v6827, %v6843
        %v6846 = vor.u32 %v6844, %v6845
        %v6847 = vsub.s32 4294967266, %v6842
        %v6848 = vadd.s32 %v6847, 127
        %v6849 = vshll.u32 %v6848, 23
        %v6850 = vor.u32 4788187, %v6849
        %v6851 = vand.u32 2147483647, %v6850
        %v6853 = vcvt.s32.f32 %v6846
        %v6854 = vmul.f32 %v6853, %v6851
        %v6855 = vxor.u32 %v6854, 2147483648
        %v6856 = vsel %vm6773, %v6855, %v6854
        %v6857 = vsub.s32 4, %v6833
        %v6858 = vsel %vm6773, %v6857, %v6833
        %v6859 = vsel %vm6772, %v630, %v6856
        %v6860 = vsel %vm6772, 0, %v6858
        %v6861 = vcosq.f32.pop %v6859
        %v6862 = vsinq.f32.pop %v6859
        %vm6863 = vweird.f32 %v630
        %v6864 = vadd.s32 %v6860, 3
        %v6865 = vand.u32 %v6864, 3
        %vm6866 = vcmp.lt.s32.totalorder %v6865, 2
        %vm6867 = vcmp.eq.s32.totalorder %v6865, 0
        %v6868 = vxor.u32 %v6862, 2147483648
        %v6869 = vsel %vm6867, %v6861, %v6868
        %vm6870 = vcmp.eq.s32.totalorder %v6865, 2
        %v6871 = vxor.u32 %v6861, 2147483648
        %v6872 = vsel %vm6870, %v6871, %v6862
        %v6873 = vsel %vm6866, %v6869, %v6872
        %v6874 = vsel %vm6863, nan, %v6873
        %v6875 = vand.u32 2147483647, %v631
        %vm6876 = vcmp.le.f32.partialorder %v6875, 0.7853982
        %vm6877 = vcmp.lt.s32.totalorder %v631, 0
        %v6878 = vand.u32 %v631, 2139095040
        %v6879 = vshrl.u32 %v6878, 23
        %v6880 = vsub.s32 %v6879, 127
        %v6881 = vand.u32 2147483647, %v631
        %v6882 = vand.u32 %v6881, 8388607
        %v6883 = vor.u32 %v6882, 8388608
        %v6884 = vsub.s32 0, %v6883
        %v6885 = vadd.s32 %v6880, 1
        %vm6886 = vcmp.gt.s32.totalorder %v6885, 0
        %v6887 = vsel %vm6886, %v6885, 0
        %v6888 = vshrl.u32 %v6887, 5
        %v6889 = vand.u32 %v6887, 31
        %v6890 = vsub.s32 32, %v6889
        %v6891 = vshrl.u32 683565275, %v6890
        %v6892 = vshll.u32 683565275, %v6889
        %v6893 = vshrl.u32 2475754826, %v6890
        %v6894 = vor.u32 %v6892, %v6893
        %v6895 = vshll.u32 2475754826, %v6889
        %v6896 = vshrl.u32 2131351028, %v6890
        %v6897 = vor.u32 %v6895, %v6896
        %v6898 = vshll.u32 2131351028, %v6889
        %v6899 = vshrl.u32 2102212464, %v6890
        %v6900 = vor.u32 %v6898, %v6899
        %v6901 = vshll.u32 2102212464, %v6889
        %v6902 = vshrl.u32 920167782, %v6890
        %v6903 = vor.u32 %v6901, %v6902
        %v6904 = vshll.u32 920167782, %v6889
        %v6905 = vshrl.u32 1326507024, %v6890
        %v6906 = vor.u32 %v6904, %v6905
        %vm6907 = vcmp.lt.s32.totalorder %v6888, 1
        %vm6908 = vcmp.lt.s32.totalorder %v6888, 2
        %vm6909 = vcmp.lt.s32.totalorder %v6888, 3
        %vm6910 = vcmp.lt.s32.totalorder %v6888, 4
        %v6911 = vsel %vm6907, %v6891, %v6894
        %v6912 = vsel %vm6910, %v6900, 2102212464
        %v6913 = vsel %vm6909, %v6897, %v6912
        %v6914 = vsel %vm6908, %v6911, %v6913
        %v6915 = vsel %vm6907, %v6894, %v6897
        %v6916 = vsel %vm6910, %v6903, 920167782
        %v6917 = vsel %vm6909, %v6900, %v6916
        %v6918 = vsel %vm6908, %v6915, %v6917
        %v6919 = vsel %vm6907, %v6897, %v6900
        %v6920 = vsel %vm6910, %v6906, 1326507024
        %v6921 = vsel %vm6909, %v6903, %v6920
        %v6922 = vsel %vm6908, %v6919, %v6921
        %v6923 = vshll.u32 %v6883, 8
        %v6924 = vmul.u32.u64.compose %v6923, %v6922
        %v6925 = vextract.low.u32 %v6924
        %v6926 = vextract.high.u32 %v6924
        %v6927 = vmul.u32.u64.compose %v6923, %v6918
        %v6928 = vextract.low.u32 %v6927
        %v6929 = vextract.high.u32 %v6927
        %v6930 = vmul.u32 %v6923, %v6914
        %v6931 = vadd.s32 %v6926, %v6928
        %vm6932 = vc.u32 %v6926, %v6928
        %v6933 = vadd.s32 %v6929, 1
        %v6934 = vsel %vm6932, %v6933, %v6929
        %v6935 = vadd.s32 %v6930, %v6934
        %v6936 = vadd.s32 %v6935, 536870912
        %v6937 = vshrl.u32 %v6936, 30
        %v6938 = vshll.u32 %v6937, 30
        %v6939 = vsub.s32 %v6935, %v6938
        %vm6940 = vcmp.lt.s32.totalorder %v6939, 0
        %v6941 = vsub.s32 0, %v6939
        %v6942 = vsel %vm6940, %v6941, %v6939
        %v6943 = vclz %v6942
        %v6944 = vsub.s32 %v6943, 2
        %vm6945 = vcmp.gt.s32.totalorder 0, %v6944
        %v6946 = vsel %vm6945, 0, %v6944
        %v6947 = vsub.s32 32, %v6946
        %v6948 = vshll.u32 %v6939, %v6946
        %v6949 = vshrl.u32 %v6931, %v6947
        %v6950 = vor.u32 %v6948, %v6949
        %v6951 = vsub.s32 4294967266, %v6946
        %v6952 = vadd.s32 %v6951, 127
        %v6953 = vshll.u32 %v6952, 23
        %v6954 = vor.u32 4788187, %v6953
        %v6955 = vand.u32 2147483647, %v6954
        %v6957 = vcvt.s32.f32 %v6950
        %v6958 = vmul.f32 %v6957, %v6955
        %v6959 = vxor.u32 %v6958, 2147483648
        %v6960 = vsel %vm6877, %v6959, %v6958
        %v6961 = vsub.s32 4, %v6937
        %v6962 = vsel %vm6877, %v6961, %v6937
        %v6963 = vsel %vm6876, %v631, %v6960
        %v6964 = vsel %vm6876, 0, %v6962
        %v6965 = vcosq.f32.pop %v6963
        %v6966 = vsinq.f32.pop %v6963
        %vm6967 = vweird.f32 %v631
        %v6968 = vadd.s32 %v6964, 3
        %v6969 = vand.u32 %v6968, 3
        %vm6970 = vcmp.lt.s32.totalorder %v6969, 2
        %vm6971 = vcmp.eq.s32.totalorder %v6969, 0
        %v6972 = vxor.u32 %v6966, 2147483648
        %v6973 = vsel %vm6971, %v6965, %v6972
        %vm6974 = vcmp.eq.s32.totalorder %v6969, 2
        %v6975 = vxor.u32 %v6965, 2147483648
        %v6976 = vsel %vm6974, %v6975, %v6966
        %v6977 = vsel %vm6970, %v6973, %v6976
        %v6978 = vsel %vm6967, nan, %v6977
        %v6979 = vand.u32 2147483647, %v632
        %vm6980 = vcmp.le.f32.partialorder %v6979, 0.7853982
        %vm6981 = vcmp.lt.s32.totalorder %v632, 0
        %v6982 = vand.u32 %v632, 2139095040
        %v6983 = vshrl.u32 %v6982, 23
        %v6984 = vsub.s32 %v6983, 127
        %v6985 = vand.u32 2147483647, %v632
        %v6986 = vand.u32 %v6985, 8388607
        %v6987 = vor.u32 %v6986, 8388608
        %v6988 = vsub.s32 0, %v6987
        %v6989 = vadd.s32 %v6984, 1
        %vm6990 = vcmp.gt.s32.totalorder %v6989, 0
        %v6991 = vsel %vm6990, %v6989, 0
        %v6992 = vshrl.u32 %v6991, 5
        %v6993 = vand.u32 %v6991, 31
        %v6994 = vsub.s32 32, %v6993
        %v6995 = vshrl.u32 683565275, %v6994
        %v6996 = vshll.u32 683565275, %v6993
        %v6997 = vshrl.u32 2475754826, %v6994
        %v6998 = vor.u32 %v6996, %v6997
        %v6999 = vshll.u32 2475754826, %v6993
        %v7000 = vshrl.u32 2131351028, %v6994
        %v7001 = vor.u32 %v6999, %v7000
        %v7002 = vshll.u32 2131351028, %v6993
        %v7003 = vshrl.u32 2102212464, %v6994
        %v7004 = vor.u32 %v7002, %v7003
        %v7005 = vshll.u32 2102212464, %v6993
        %v7006 = vshrl.u32 920167782, %v6994
        %v7007 = vor.u32 %v7005, %v7006
        %v7008 = vshll.u32 920167782, %v6993
        %v7009 = vshrl.u32 1326507024, %v6994
        %v7010 = vor.u32 %v7008, %v7009
        %vm7011 = vcmp.lt.s32.totalorder %v6992, 1
        %vm7012 = vcmp.lt.s32.totalorder %v6992, 2
        %vm7013 = vcmp.lt.s32.totalorder %v6992, 3
        %vm7014 = vcmp.lt.s32.totalorder %v6992, 4
        %v7015 = vsel %vm7011, %v6995, %v6998
        %v7016 = vsel %vm7014, %v7004, 2102212464
        %v7017 = vsel %vm7013, %v7001, %v7016
        %v7018 = vsel %vm7012, %v7015, %v7017
        %v7019 = vsel %vm7011, %v6998, %v7001
        %v7020 = vsel %vm7014, %v7007, 920167782
        %v7021 = vsel %vm7013, %v7004, %v7020
        %v7022 = vsel %vm7012, %v7019, %v7021
        %v7023 = vsel %vm7011, %v7001, %v7004
        %v7024 = vsel %vm7014, %v7010, 1326507024
        %v7025 = vsel %vm7013, %v7007, %v7024
        %v7026 = vsel %vm7012, %v7023, %v7025
        %v7027 = vshll.u32 %v6987, 8
        %v7028 = vmul.u32.u64.compose %v7027, %v7026
        %v7029 = vextract.low.u32 %v7028
        %v7030 = vextract.high.u32 %v7028
        %v7031 = vmul.u32.u64.compose %v7027, %v7022
        %v7032 = vextract.low.u32 %v7031
        %v7033 = vextract.high.u32 %v7031
        %v7034 = vmul.u32 %v7027, %v7018
        %v7035 = vadd.s32 %v7030, %v7032
        %vm7036 = vc.u32 %v7030, %v7032
        %v7037 = vadd.s32 %v7033, 1
        %v7038 = vsel %vm7036, %v7037, %v7033
        %v7039 = vadd.s32 %v7034, %v7038
        %v7040 = vadd.s32 %v7039, 536870912
        %v7041 = vshrl.u32 %v7040, 30
        %v7042 = vshll.u32 %v7041, 30
        %v7043 = vsub.s32 %v7039, %v7042
        %vm7044 = vcmp.lt.s32.totalorder %v7043, 0
        %v7045 = vsub.s32 0, %v7043
        %v7046 = vsel %vm7044, %v7045, %v7043
        %v7047 = vclz %v7046
        %v7048 = vsub.s32 %v7047, 2
        %vm7049 = vcmp.gt.s32.totalorder 0, %v7048
        %v7050 = vsel %vm7049, 0, %v7048
        %v7051 = vsub.s32 32, %v7050
        %v7052 = vshll.u32 %v7043, %v7050
        %v7053 = vshrl.u32 %v7035, %v7051
        %v7054 = vor.u32 %v7052, %v7053
        %v7055 = vsub.s32 4294967266, %v7050
        %v7056 = vadd.s32 %v7055, 127
        %v7057 = vshll.u32 %v7056, 23
        %v7058 = vor.u32 4788187, %v7057
        %v7059 = vand.u32 2147483647, %v7058
        %v7061 = vcvt.s32.f32 %v7054
        %v7062 = vmul.f32 %v7061, %v7059
        %v7063 = vxor.u32 %v7062, 2147483648
        %v7064 = vsel %vm6981, %v7063, %v7062
        %v7065 = vsub.s32 4, %v7041
        %v7066 = vsel %vm6981, %v7065, %v7041
        %v7067 = vsel %vm6980, %v632, %v7064
        %v7068 = vsel %vm6980, 0, %v7066
        %v7069 = vcosq.f32.pop %v7067
        %v7070 = vsinq.f32.pop %v7067
        %vm7071 = vweird.f32 %v632
        %v7072 = vadd.s32 %v7068, 3
        %v7073 = vand.u32 %v7072, 3
        %vm7074 = vcmp.lt.s32.totalorder %v7073, 2
        %vm7075 = vcmp.eq.s32.totalorder %v7073, 0
        %v7076 = vxor.u32 %v7070, 2147483648
        %v7077 = vsel %vm7075, %v7069, %v7076
        %vm7078 = vcmp.eq.s32.totalorder %v7073, 2
        %v7079 = vxor.u32 %v7069, 2147483648
        %v7080 = vsel %vm7078, %v7079, %v7070
        %v7081 = vsel %vm7074, %v7077, %v7080
        %v7082 = vsel %vm7071, nan, %v7081
        %v7083 = vand.u32 2147483647, %v633
        %vm7084 = vcmp.le.f32.partialorder %v7083, 0.7853982
        %vm7085 = vcmp.lt.s32.totalorder %v633, 0
        %v7086 = vand.u32 %v633, 2139095040
        %v7087 = vshrl.u32 %v7086, 23
        %v7088 = vsub.s32 %v7087, 127
        %v7089 = vand.u32 2147483647, %v633
        %v7090 = vand.u32 %v7089, 8388607
        %v7091 = vor.u32 %v7090, 8388608
        %v7092 = vsub.s32 0, %v7091
        %v7093 = vadd.s32 %v7088, 1
        %vm7094 = vcmp.gt.s32.totalorder %v7093, 0
        %v7095 = vsel %vm7094, %v7093, 0
        %v7096 = vshrl.u32 %v7095, 5
        %v7097 = vand.u32 %v7095, 31
        %v7098 = vsub.s32 32, %v7097
        %v7099 = vshrl.u32 683565275, %v7098
        %v7100 = vshll.u32 683565275, %v7097
        %v7101 = vshrl.u32 2475754826, %v7098
        %v7102 = vor.u32 %v7100, %v7101
        %v7103 = vshll.u32 2475754826, %v7097
        %v7104 = vshrl.u32 2131351028, %v7098
        %v7105 = vor.u32 %v7103, %v7104
        %v7106 = vshll.u32 2131351028, %v7097
        %v7107 = vshrl.u32 2102212464, %v7098
        %v7108 = vor.u32 %v7106, %v7107
        %v7109 = vshll.u32 2102212464, %v7097
        %v7110 = vshrl.u32 920167782, %v7098
        %v7111 = vor.u32 %v7109, %v7110
        %v7112 = vshll.u32 920167782, %v7097
        %v7113 = vshrl.u32 1326507024, %v7098
        %v7114 = vor.u32 %v7112, %v7113
        %vm7115 = vcmp.lt.s32.totalorder %v7096, 1
        %vm7116 = vcmp.lt.s32.totalorder %v7096, 2
        %vm7117 = vcmp.lt.s32.totalorder %v7096, 3
        %vm7118 = vcmp.lt.s32.totalorder %v7096, 4
        %v7119 = vsel %vm7115, %v7099, %v7102
        %v7120 = vsel %vm7118, %v7108, 2102212464
        %v7121 = vsel %vm7117, %v7105, %v7120
        %v7122 = vsel %vm7116, %v7119, %v7121
        %v7123 = vsel %vm7115, %v7102, %v7105
        %v7124 = vsel %vm7118, %v7111, 920167782
        %v7125 = vsel %vm7117, %v7108, %v7124
        %v7126 = vsel %vm7116, %v7123, %v7125
        %v7127 = vsel %vm7115, %v7105, %v7108
        %v7128 = vsel %vm7118, %v7114, 1326507024
        %v7129 = vsel %vm7117, %v7111, %v7128
        %v7130 = vsel %vm7116, %v7127, %v7129
        %v7131 = vshll.u32 %v7091, 8
        %v7132 = vmul.u32.u64.compose %v7131, %v7130
        %v7133 = vextract.low.u32 %v7132
        %v7134 = vextract.high.u32 %v7132
        %v7135 = vmul.u32.u64.compose %v7131, %v7126
        %v7136 = vextract.low.u32 %v7135
        %v7137 = vextract.high.u32 %v7135
        %v7138 = vmul.u32 %v7131, %v7122
        %v7139 = vadd.s32 %v7134, %v7136
        %vm7140 = vc.u32 %v7134, %v7136
        %v7141 = vadd.s32 %v7137, 1
        %v7142 = vsel %vm7140, %v7141, %v7137
        %v7143 = vadd.s32 %v7138, %v7142
        %v7144 = vadd.s32 %v7143, 536870912
        %v7145 = vshrl.u32 %v7144, 30
        %v7146 = vshll.u32 %v7145, 30
        %v7147 = vsub.s32 %v7143, %v7146
        %vm7148 = vcmp.lt.s32.totalorder %v7147, 0
        %v7149 = vsub.s32 0, %v7147
        %v7150 = vsel %vm7148, %v7149, %v7147
        %v7151 = vclz %v7150
        %v7152 = vsub.s32 %v7151, 2
        %vm7153 = vcmp.gt.s32.totalorder 0, %v7152
        %v7154 = vsel %vm7153, 0, %v7152
        %v7155 = vsub.s32 32, %v7154
        %v7156 = vshll.u32 %v7147, %v7154
        %v7157 = vshrl.u32 %v7139, %v7155
        %v7158 = vor.u32 %v7156, %v7157
        %v7159 = vsub.s32 4294967266, %v7154
        %v7160 = vadd.s32 %v7159, 127
        %v7161 = vshll.u32 %v7160, 23
        %v7162 = vor.u32 4788187, %v7161
        %v7163 = vand.u32 2147483647, %v7162
        %v7165 = vcvt.s32.f32 %v7158
        %v7166 = vmul.f32 %v7165, %v7163
        %v7167 = vxor.u32 %v7166, 2147483648
        %v7168 = vsel %vm7085, %v7167, %v7166
        %v7169 = vsub.s32 4, %v7145
        %v7170 = vsel %vm7085, %v7169, %v7145
        %v7171 = vsel %vm7084, %v633, %v7168
        %v7172 = vsel %vm7084, 0, %v7170
        %v7173 = vcosq.f32.pop %v7171
        %v7174 = vsinq.f32.pop %v7171
        %vm7175 = vweird.f32 %v633
        %v7176 = vadd.s32 %v7172, 3
        %v7177 = vand.u32 %v7176, 3
        %vm7178 = vcmp.lt.s32.totalorder %v7177, 2
        %vm7179 = vcmp.eq.s32.totalorder %v7177, 0
        %v7180 = vxor.u32 %v7174, 2147483648
        %v7181 = vsel %vm7179, %v7173, %v7180
        %vm7182 = vcmp.eq.s32.totalorder %v7177, 2
        %v7183 = vxor.u32 %v7173, 2147483648
        %v7184 = vsel %vm7182, %v7183, %v7174
        %v7185 = vsel %vm7178, %v7181, %v7184
        %v7186 = vsel %vm7175, nan, %v7185
        %v7187 = vand.u32 2147483647, %v634
        %vm7188 = vcmp.le.f32.partialorder %v7187, 0.7853982
        %vm7189 = vcmp.lt.s32.totalorder %v634, 0
        %v7190 = vand.u32 %v634, 2139095040
        %v7191 = vshrl.u32 %v7190, 23
        %v7192 = vsub.s32 %v7191, 127
        %v7193 = vand.u32 2147483647, %v634
        %v7194 = vand.u32 %v7193, 8388607
        %v7195 = vor.u32 %v7194, 8388608
        %v7196 = vsub.s32 0, %v7195
        %v7197 = vadd.s32 %v7192, 1
        %vm7198 = vcmp.gt.s32.totalorder %v7197, 0
        %v7199 = vsel %vm7198, %v7197, 0
        %v7200 = vshrl.u32 %v7199, 5
        %v7201 = vand.u32 %v7199, 31
        %v7202 = vsub.s32 32, %v7201
        %v7203 = vshrl.u32 683565275, %v7202
        %v7204 = vshll.u32 683565275, %v7201
        %v7205 = vshrl.u32 2475754826, %v7202
        %v7206 = vor.u32 %v7204, %v7205
        %v7207 = vshll.u32 2475754826, %v7201
        %v7208 = vshrl.u32 2131351028, %v7202
        %v7209 = vor.u32 %v7207, %v7208
        %v7210 = vshll.u32 2131351028, %v7201
        %v7211 = vshrl.u32 2102212464, %v7202
        %v7212 = vor.u32 %v7210, %v7211
        %v7213 = vshll.u32 2102212464, %v7201
        %v7214 = vshrl.u32 920167782, %v7202
        %v7215 = vor.u32 %v7213, %v7214
        %v7216 = vshll.u32 920167782, %v7201
        %v7217 = vshrl.u32 1326507024, %v7202
        %v7218 = vor.u32 %v7216, %v7217
        %vm7219 = vcmp.lt.s32.totalorder %v7200, 1
        %vm7220 = vcmp.lt.s32.totalorder %v7200, 2
        %vm7221 = vcmp.lt.s32.totalorder %v7200, 3
        %vm7222 = vcmp.lt.s32.totalorder %v7200, 4
        %v7223 = vsel %vm7219, %v7203, %v7206
        %v7224 = vsel %vm7222, %v7212, 2102212464
        %v7225 = vsel %vm7221, %v7209, %v7224
        %v7226 = vsel %vm7220, %v7223, %v7225
        %v7227 = vsel %vm7219, %v7206, %v7209
        %v7228 = vsel %vm7222, %v7215, 920167782
        %v7229 = vsel %vm7221, %v7212, %v7228
        %v7230 = vsel %vm7220, %v7227, %v7229
        %v7231 = vsel %vm7219, %v7209, %v7212
        %v7232 = vsel %vm7222, %v7218, 1326507024
        %v7233 = vsel %vm7221, %v7215, %v7232
        %v7234 = vsel %vm7220, %v7231, %v7233
        %v7235 = vshll.u32 %v7195, 8
        %v7236 = vmul.u32.u64.compose %v7235, %v7234
        %v7237 = vextract.low.u32 %v7236
        %v7238 = vextract.high.u32 %v7236
        %v7239 = vmul.u32.u64.compose %v7235, %v7230
        %v7240 = vextract.low.u32 %v7239
        %v7241 = vextract.high.u32 %v7239
        %v7242 = vmul.u32 %v7235, %v7226
        %v7243 = vadd.s32 %v7238, %v7240
        %vm7244 = vc.u32 %v7238, %v7240
        %v7245 = vadd.s32 %v7241, 1
        %v7246 = vsel %vm7244, %v7245, %v7241
        %v7247 = vadd.s32 %v7242, %v7246
        %v7248 = vadd.s32 %v7247, 536870912
        %v7249 = vshrl.u32 %v7248, 30
        %v7250 = vshll.u32 %v7249, 30
        %v7251 = vsub.s32 %v7247, %v7250
        %vm7252 = vcmp.lt.s32.totalorder %v7251, 0
        %v7253 = vsub.s32 0, %v7251
        %v7254 = vsel %vm7252, %v7253, %v7251
        %v7255 = vclz %v7254
        %v7256 = vsub.s32 %v7255, 2
        %vm7257 = vcmp.gt.s32.totalorder 0, %v7256
        %v7258 = vsel %vm7257, 0, %v7256
        %v7259 = vsub.s32 32, %v7258
        %v7260 = vshll.u32 %v7251, %v7258
        %v7261 = vshrl.u32 %v7243, %v7259
        %v7262 = vor.u32 %v7260, %v7261
        %v7263 = vsub.s32 4294967266, %v7258
        %v7264 = vadd.s32 %v7263, 127
        %v7265 = vshll.u32 %v7264, 23
        %v7266 = vor.u32 4788187, %v7265
        %v7267 = vand.u32 2147483647, %v7266
        %v7269 = vcvt.s32.f32 %v7262
        %v7270 = vmul.f32 %v7269, %v7267
        %v7271 = vxor.u32 %v7270, 2147483648
        %v7272 = vsel %vm7189, %v7271, %v7270
        %v7273 = vsub.s32 4, %v7249
        %v7274 = vsel %vm7189, %v7273, %v7249
        %v7275 = vsel %vm7188, %v634, %v7272
        %v7276 = vsel %vm7188, 0, %v7274
        %v7277 = vcosq.f32.pop %v7275
        %v7278 = vsinq.f32.pop %v7275
        %vm7279 = vweird.f32 %v634
        %v7280 = vadd.s32 %v7276, 3
        %v7281 = vand.u32 %v7280, 3
        %vm7282 = vcmp.lt.s32.totalorder %v7281, 2
        %vm7283 = vcmp.eq.s32.totalorder %v7281, 0
        %v7284 = vxor.u32 %v7278, 2147483648
        %v7285 = vsel %vm7283, %v7277, %v7284
        %vm7286 = vcmp.eq.s32.totalorder %v7281, 2
        %v7287 = vxor.u32 %v7277, 2147483648
        %v7288 = vsel %vm7286, %v7287, %v7278
        %v7289 = vsel %vm7282, %v7285, %v7288
        %v7290 = vsel %vm7279, nan, %v7289
        %7291 = vst [vmem:[%s161] sm:$0xff] %v738
        %7292 = vst [vmem:[%s161 + $0x8] sm:$0xff] %v842
        %7293 = vst [vmem:[%s161 + $0x10] sm:$0xff] %v946
        %7294 = vst [vmem:[%s161 + $0x18] sm:$0xff] %v1050
        %7295 = vst [vmem:[%s161 + $0x20] sm:$0xff] %v1154
        %7296 = vst [vmem:[%s161 + $0x28] sm:$0xff] %v1258
        %7297 = vst [vmem:[%s161 + $0x30] sm:$0xff] %v1362
        %7298 = vst [vmem:[%s161 + $0x38] sm:$0xff] %v1466
        %7299 = vst [vmem:[%s161 + $0x40] sm:$0xff] %v1570
        %7300 = vst [vmem:[%s161 + $0x48] sm:$0xff] %v1674
        %7301 = vst [vmem:[%s161 + $0x50] sm:$0xff] %v1778
        %7302 = vst [vmem:[%s161 + $0x58] sm:$0xff] %v1882
        %7303 = vst [vmem:[%s161 + $0x60] sm:$0xff] %v1986
        %7304 = vst [vmem:[%s161 + $0x68] sm:$0xff] %v2090
        %7305 = vst [vmem:[%s161 + $0x70] sm:$0xff] %v2194
        %7306 = vst [vmem:[%s161 + $0x78] sm:$0xff] %v2298
        %7307 = vst [vmem:[%s161 + $0x80] sm:$0xff] %v2402
        %7308 = vst [vmem:[%s161 + $0x88] sm:$0xff] %v2506
        %7309 = vst [vmem:[%s161 + $0x90] sm:$0xff] %v2610
        %7310 = vst [vmem:[%s161 + $0x98] sm:$0xff] %v2714
        %7311 = vst [vmem:[%s161 + $0xa0] sm:$0xff] %v2818
        %7312 = vst [vmem:[%s161 + $0xa8] sm:$0xff] %v2922
        %7313 = vst [vmem:[%s161 + $0xb0] sm:$0xff] %v3026
        %7314 = vst [vmem:[%s161 + $0xb8] sm:$0xff] %v3130
        %7315 = vst [vmem:[%s161 + $0xc0] sm:$0xff] %v3234
        %7316 = vst [vmem:[%s161 + $0xc8] sm:$0xff] %v3338
        %7317 = vst [vmem:[%s161 + $0xd0] sm:$0xff] %v3442
        %7318 = vst [vmem:[%s161 + $0xd8] sm:$0xff] %v3546
        %7319 = vst [vmem:[%s161 + $0xe0] sm:$0xff] %v3650
        %7320 = vst [vmem:[%s161 + $0xe8] sm:$0xff] %v3754
        %7321 = vst [vmem:[%s161 + $0xf0] sm:$0xff] %v3858
        %7322 = vst [vmem:[%s161 + $0xf8] sm:$0xff] %v3962
        %7323 = vst [vmem:[%s161 + $0x100] sm:$0xff] %v4066
        %7324 = vst [vmem:[%s161 + $0x108] sm:$0xff] %v4170
        %7325 = vst [vmem:[%s161 + $0x110] sm:$0xff] %v4274
        %7326 = vst [vmem:[%s161 + $0x118] sm:$0xff] %v4378
        %7327 = vst [vmem:[%s161 + $0x120] sm:$0xff] %v4482
        %7328 = vst [vmem:[%s161 + $0x128] sm:$0xff] %v4586
        %7329 = vst [vmem:[%s161 + $0x130] sm:$0xff] %v4690
        %7330 = vst [vmem:[%s161 + $0x138] sm:$0xff] %v4794
        %7331 = vst [vmem:[%s161 + $0x140] sm:$0xff] %v4898
        %7332 = vst [vmem:[%s161 + $0x148] sm:$0xff] %v5002
        %7333 = vst [vmem:[%s161 + $0x150] sm:$0xff] %v5106
        %7334 = vst [vmem:[%s161 + $0x158] sm:$0xff] %v5210
        %7335 = vst [vmem:[%s161 + $0x160] sm:$0xff] %v5314
        %7336 = vst [vmem:[%s161 + $0x168] sm:$0xff] %v5418
        %7337 = vst [vmem:[%s161 + $0x170] sm:$0xff] %v5522
        %7338 = vst [vmem:[%s161 + $0x178] sm:$0xff] %v5626
        %7339 = vst [vmem:[%s161 + $0x180] sm:$0xff] %v5730
        %7340 = vst [vmem:[%s161 + $0x188] sm:$0xff] %v5834
        %7341 = vst [vmem:[%s161 + $0x190] sm:$0xff] %v5938
        %7342 = vst [vmem:[%s161 + $0x198] sm:$0xff] %v6042
        %7343 = vst [vmem:[%s161 + $0x1a0] sm:$0xff] %v6146
        %7344 = vst [vmem:[%s161 + $0x1a8] sm:$0xff] %v6250
        %7345 = vst [vmem:[%s161 + $0x1b0] sm:$0xff] %v6354
        %7346 = vst [vmem:[%s161 + $0x1b8] sm:$0xff] %v6458
        %7347 = vst [vmem:[%s161 + $0x1c0] sm:$0xff] %v6562
        %7348 = vst [vmem:[%s161 + $0x1c8] sm:$0xff] %v6666
        %7349 = vst [vmem:[%s161 + $0x1d0] sm:$0xff] %v6770
        %7350 = vst [vmem:[%s161 + $0x1d8] sm:$0xff] %v6874
        %7351 = vst [vmem:[%s161 + $0x1e0] sm:$0xff] %v6978
        %7352 = vst [vmem:[%s161 + $0x1e8] sm:$0xff] %v7082
        %7353 = vst [vmem:[%s161 + $0x1f0] sm:$0xff] %v7186
        %7354 = vst [vmem:[%s161 + $0x1f8] sm:$0xff] %v7290
        %s7355 = sand.u32 %s89, 1
        %s7356 = scalar_lea.sflag [#allocation4], %s7355
        %s7357 = sand.u32 %s89, 1
        %s7358 = smul.addr %s7357, 512
        %s7359 = scalar_lea.vmem [#allocation5], %s7358
        // Predicated region
        $region37: #{tpu_custom_call.1} parent=31 // pred_check
          %p7360 = pneg %p99
        $region38: #{tpu_custom_call.1} parent=31 // pred_check_branch
          %7362 = sbr.rel (%p7360) target = $region40
        $region39: #{tpu_custom_call.1} parent=31 // pred_region
          %s7363 = smul.u32 64, %s18
          %s7365 = ssub.s32 8192, 8192
          %7366 = vsyncadd %s7356, %s7365
          %s7367 = smul.addr %s7363, 128
          %s7368 = scalar_lea.hbm %s3, %s7367
          %s7369 = sshll.u32 %s7359, 4
          %s7370 = int_to_ptr.vmem [resolvable:$true] %s7369
          %7375 = dma.vmem_to_hbm [thread:$0]  %s7370, 8192, %s7368, %s7356, 128, 128, 8
        $region40: #{tpu_custom_call.1} parent=31 // pred_fallthru
          _
      $region32: #{tpu_custom_call.1} parent=5 // pred_fallthru
        _
      %p7376 = scmp.le.s32.totalorder 2, %s13
      // Predicated region
      $region41: #{tpu_custom_call.1} parent=5 // pred_check
        %p7377 = pneg %p7376
      $region42: #{tpu_custom_call.1} parent=5 // pred_check_branch
        %7379 = sbr.rel (%p7377) target = $region44
      $region43: #{tpu_custom_call.1} parent=5 // pred_region
        %s7380 = ssub.s32 %s13, 2
        // Predicated region
        $region45: #{tpu_custom_call.1} parent=43 // pred_check
          %p7381 = pneg %p105
        $region46: #{tpu_custom_call.1} parent=43 // pred_check_branch
          %7383 = sbr.rel (%p7381) target = $region48
        $region47: #{tpu_custom_call.1} parent=43 // pred_region
          %s7384 = sand.u32 %s90, 1
          %s7385 = scalar_lea.sflag [#allocation4], %s7384
          %s7386 = sand.u32 %s90, 1
          %s7387 = smul.addr %s7386, 512
          %s7388 = scalar_lea.vmem [#allocation5], %s7387
          %7389 = dma.done %s7385, 8192
        $region48: #{tpu_custom_call.1} parent=43 // pred_fallthru
          _
      $region44: #{tpu_custom_call.1} parent=5 // pred_fallthru
        _
    $region6: #{tpu_custom_call.1} parent=1 // loop_footer
      %s17 = sadd.s32 1, %s13
    $region7: #{tpu_custom_call.1} parent=1 // loop_footer_branch
      %12 = sbr.rel target = $region3
    $region8: #{tpu_custom_call.1} parent=1 // loop_exit
      _
    %7390 = vsyncpa [#allocation3], 1
    %s7391 = scalar_lea.sflag [#allocation3], 1
    %7392 = vsyncpa %s7391, 1
    %7393 = vsyncpa [#allocation4], 1
    %s7394 = scalar_lea.sflag [#allocation4], 1
    %7395 = vsyncpa %s7394, 1

</llo_original>
